<compile_context>
chip_gen: v6e
topology: v6e:2x2x1
jax: 0.10.0
libtpu: 0.0.40
codegen_flags: <defaults>
</compile_context>

<pallas_src>
import functools

import jax
import jax.numpy as jnp
from jax.experimental import pallas as pl
from jax.experimental.pallas import tpu as pltpu

# Conv matmul operand dtype (f32 accumulation on the MXU).
MM_DTYPE = jnp.bfloat16
# Explicit scoped-VMEM budget: above the 16 MiB v5e default, within v7x's
# 64 MiB physical VMEM.
VMEM_LIMIT = 32 * 1024 * 1024


# ----------------------------------------------------------------------------
# Budget-aware tile pickers
# ----------------------------------------------------------------------------
def _pick_lane_tile(n, max_tile=1024):
    """Largest multiple-of-128 divisor of n that is <= max_tile, else n."""
    best = None
    t = 128
    while t <= min(max_tile, n):
        if n % t == 0:
            best = t
        t += 128
    return best if best is not None else n


def _pick_row_tile(m, max_tile=256):
    """Largest multiple-of-8 divisor of m that is <= max_tile, else m."""
    best = None
    t = 8
    while t <= min(max_tile, m):
        if m % t == 0:
            best = t
        t += 8
    return best if best is not None else m


def _pick_k_tile(k, max_tile=512):
    """Tile the reduction axis only when K is large (multiple-of-128 tiles)."""
    if k <= max_tile:
        return k
    best = None
    t = 128
    while t <= max_tile:
        if k % t == 0:
            best = t
        t += 128
    return best if best is not None else k


# ----------------------------------------------------------------------------
# Kernel 1: batched detector weighting + ramp filter
#   filtered (V*B, D) = p (V*B, D) @ (diag(w) F) (D, D)
# ----------------------------------------------------------------------------
def _filter_kernel(p_ref, wf_ref, o_ref):
    o_ref[...] = jnp.dot(p_ref[...], wf_ref[...],
                         preferred_element_type=jnp.float32)


def ramp_filter(p_vbd, wf_mat):
    V, B, D = p_vbd.shape
    M = V * B
    p2 = p_vbd.reshape(M, D)
    TM = _pick_row_tile(M, 256)
    out = pl.pallas_call(
        _filter_kernel,
        out_shape=jax.ShapeDtypeStruct((M, D), jnp.float32),
        grid=(M // TM,),
        in_specs=[
            pl.BlockSpec((TM, D), lambda m: (m, 0)),
            pl.BlockSpec((D, D), lambda m: (0, 0)),      # resident ramp matrix
        ],
        out_specs=pl.BlockSpec((TM, D), lambda m: (m, 0)),
        compiler_params=pltpu.CompilerParams(
            dimension_semantics=("parallel",),
            vmem_limit_bytes=VMEM_LIMIT),
    )(p2, wf_mat)
    return out.reshape(V, B, D)


# ----------------------------------------------------------------------------
# Kernel 2: fused per-view backprojection + view-axis ascending sort
#   For each pixel tile:  stack[v] = filt[v] @ hat(u[v]); bitonic-sort stack
#   along v in VMEM; write the sorted (V, B, T) tile to HBM once.
# ----------------------------------------------------------------------------
def _bitonic_stages(n):
    stages = []
    k = 2
    while k <= n:
        j = k // 2
        while j >= 1:
            st = []
            for i in range(n):
                l = i ^ j
                if l > i:
                    st.append((i, l, (i & k) == 0))
            stages.append(st)
            j //= 2
        k *= 2
    return stages


def _fbp_sort_kernel(filt_ref, u_ref, o_ref, stack_ref, *, num_views, vpad):
    # filt_ref:  (V, B, D)   filtered sinogram, VMEM-resident across the grid
    # u_ref:     (V, 1, T)   detector coordinate of each pixel in this tile
    # o_ref:     (V, B, T)   sorted backprojected pixel tile (lanes = pixels)
    # stack_ref: (Vp, B, T)  VMEM scratch holding the per-view stack
    B = filt_ref.shape[1]
    D = filt_ref.shape[2]
    T = u_ref.shape[2]
    det = jax.lax.broadcasted_iota(jnp.int32, (D, T), 0).astype(jnp.float32)

    def backproject_one(v):
        u = u_ref[v]                                           # (1, T)
        # Hat-function linear interpolation weights: identical to the
        # floor/frac one-hot construction (incl. partial edge taps) but with
        # ~half the per-element VPU ops.
        a_mat = jnp.maximum(0.0, 1.0 - jnp.abs(det - u))       # (D, T)
        stack_ref[v] = jnp.dot(filt_ref[v], a_mat,
                               preferred_element_type=jnp.float32)

    if num_views <= 32:
        for v in range(num_views):
            backproject_one(v)
    else:
        def body(v, carry):
            backproject_one(v)
            return carry
        jax.lax.fori_loop(0, num_views, body, 0)

    # Pad to a power of two with +inf so the bitonic network sorts ascending.
    for v in range(num_views, vpad):
        stack_ref[v] = jnp.full((B, T), jnp.inf, jnp.float32)

    # Compare-exchange directly against the VMEM scratch: O(1) live vregs
    # per compare regardless of V (avoids the spill-bound unrolled network).
    for stage in _bitonic_stages(vpad):
        for i, l, asc in stage:
            a = stack_ref[i]
            b = stack_ref[l]
            lo = jnp.minimum(a, b)
            hi = jnp.maximum(a, b)
            stack_ref[i] = lo if asc else hi
            stack_ref[l] = hi if asc else lo

    for v in range(num_views):
        o_ref[v] = stack_ref[v]


def backproject_sort(filt_vbd, u_coords):
    V, B, D = filt_vbd.shape
    _, HW = u_coords.shape
    T = _pick_lane_tile(HW, 512)
    Vp = 1
    while Vp < V:
        Vp *= 2
    u3 = u_coords.reshape(V, 1, HW)
    kern = functools.partial(_fbp_sort_kernel, num_views=V, vpad=Vp)
    return pl.pallas_call(
        kern,
        out_shape=jax.ShapeDtypeStruct((V, B, HW), jnp.float32),
        grid=(HW // T,),
        in_specs=[
            pl.BlockSpec((V, B, D), lambda t: (0, 0, 0)),   # resident sinogram
            pl.BlockSpec((V, 1, T), lambda t: (0, 0, t)),   # streamed pixel coords
        ],
        out_specs=pl.BlockSpec((V, B, T), lambda t: (0, 0, t)),
        scratch_shapes=[pltpu.VMEM((Vp, B, T), jnp.float32)],
        compiler_params=pltpu.CompilerParams(
            dimension_semantics=("parallel",),
            vmem_limit_bytes=VMEM_LIMIT),
    )(filt_vbd, u3)


# ----------------------------------------------------------------------------
# Kernel 3: shared K-tiled matmul + bias (+ fused residual add, + fused ReLU)
#   out (Cout, N) = W (Cout, K) @ patches (K, N),  N = B*H*W, lane-dense output
# ----------------------------------------------------------------------------
def _mm_kernel(*refs, relu, has_res):
    if has_res:
        w_ref, x_ref, b_ref, r_ref, o_ref, acc_ref = refs
    else:
        w_ref, x_ref, b_ref, o_ref, acc_ref = refs
        r_ref = None

    k = pl.program_id(1)

    @pl.when(k == 0)
    def _():
        acc_ref[...] = jnp.zeros_like(acc_ref)

    acc_ref[...] += jnp.dot(w_ref[...], x_ref[...],
                            preferred_element_type=jnp.float32)

    @pl.when(k == pl.num_programs(1) - 1)
    def _():
        out = acc_ref[...] + b_ref[...]
        if has_res:
            out = out + r_ref[...]
        if relu:
            out = jnp.maximum(out, 0.0)
        o_ref[...] = out


def matmul_bias_act(w2, patches, bias, residual=None, relu=False):
    Cout, K = w2.shape
    _, N = patches.shape
    TN = _pick_lane_tile(N, 1024)
    TK = _pick_k_tile(K, 512)
    nk = K // TK

    in_specs = [
        pl.BlockSpec((Cout, TK), lambda n, k: (0, k)),   # weights (bf16, pre-cast)
        pl.BlockSpec((TK, TN), lambda n, k: (k, n)),     # streamed pixel tiles
        pl.BlockSpec((Cout, 1), lambda n, k: (0, 0)),    # bias resident
    ]
    args = [w2, patches, bias.reshape(Cout, 1)]
    if residual is not None:
        in_specs.append(pl.BlockSpec((Cout, TN), lambda n, k: (0, n)))
        args.append(residual)

    kern = functools.partial(_mm_kernel, relu=relu, has_res=residual is not None)
    return pl.pallas_call(
        kern,
        out_shape=jax.ShapeDtypeStruct((Cout, N), jnp.float32),
        grid=(N // TN, nk),
        in_specs=in_specs,
        out_specs=pl.BlockSpec((Cout, TN), lambda n, k: (0, n)),
        scratch_shapes=[pltpu.VMEM((Cout, TN), jnp.float32)],
        compiler_params=pltpu.CompilerParams(
            dimension_semantics=("parallel", "arbitrary"),
            vmem_limit_bytes=VMEM_LIMIT),
    )(*args)


# ----------------------------------------------------------------------------
# Conv glue (channel-major layout (C, B, H, W), stride 1, cross-correlation)
# ----------------------------------------------------------------------------
def conv2d_cbhw(x, layer, pad, relu=False, residual=None):
    w4 = layer['w']                        # (Cout, Cin, k, k) bf16, pre-flipped for convT
    b = layer['b']
    Cout, Cin, k, _ = w4.shape
    _, B, H, W = x.shape
    xp = jnp.pad(x.astype(MM_DTYPE), ((0, 0), (0, 0), (pad, pad), (pad, pad)))
    Ho = H + 2 * pad - k + 1
    Wo = W + 2 * pad - k + 1
    # TODO(synk): im2col patches are still materialized in JAX (now bf16);
    #             fusing the shifted loads into the matmul kernel (halo-tiled
    #             row blocks) is the remaining conv data-movement optimization.
    taps = [xp[:, :, dy:dy + Ho, dx:dx + Wo] for dy in range(k) for dx in range(k)]
    patches = jnp.stack(taps, axis=1).reshape(Cin * k * k, B * Ho * Wo)
    res = None if residual is None else residual.reshape(Cout, B * Ho * Wo)
    out = matmul_bias_act(w4.reshape(Cout, Cin * k * k), patches, b,
                          residual=res, relu=relu)
    return out.reshape(Cout, B, Ho, Wo)


# ----------------------------------------------------------------------------
# red_cnn (canonical RED-CNN forward; residual adds + ReLU fused into matmuls)
# ----------------------------------------------------------------------------
def red_cnn_forward(x, P):
    r1 = x
    out = conv2d_cbhw(x, P['c1'], pad=2, relu=True)
    out = conv2d_cbhw(out, P['c2'], pad=2, relu=True)
    r2 = out
    out = conv2d_cbhw(out, P['c3'], pad=2, relu=True)
    out = conv2d_cbhw(out, P['c4'], pad=2, relu=True)
    r3 = out
    out = conv2d_cbhw(out, P['c5'], pad=2, relu=True)
    # ConvTranspose2d(k=5, stride=1, pad=2) == conv with flipped weights, pad=2.
    out = conv2d_cbhw(out, P['t1'], pad=2, relu=True, residual=r3)  # relu(t1+r3)
    out = conv2d_cbhw(out, P['t2'], pad=2, relu=True)
    out = conv2d_cbhw(out, P['t3'], pad=2, relu=True, residual=r2)  # relu(t3+r2)
    out = conv2d_cbhw(out, P['t4'], pad=2, relu=True)
    out = conv2d_cbhw(out, P['t5'], pad=2, relu=True, residual=r1)  # relu(t5+r1)
    return out


# ----------------------------------------------------------------------------
# Full vvbp_tensor_net forward
# ----------------------------------------------------------------------------
def vvbp_forward(p, P):
    B, _, V, D = p.shape
    H, W = V, D   # per bprj_sv_fun: output image spatial shape == input.shape[2:]

    # 1. detector weighting + ramp filtering (batched M=V*B Pallas matmul)
    p_vbd = jnp.transpose(p[:, 0, :, :], (1, 0, 2))                  # (V, B, D)
    filt = ramp_filter(p_vbd, P['wf_mat'])                           # (V, B, D)

    # 2+3. fused per-view backprojection + torch.sort(x, dim=1) ascending
    x_sorted = backproject_sort(filt, P['u_coords'])                 # (V, B, HW)
    x_sorted = x_sorted.reshape(V, B, H, W)

    # 4. nn.Conv2d(V, 1, 3, padding=1)  (views act as input channels)
    x_in = conv2d_cbhw(x_sorted, P['mix'], pad=1, relu=False)        # (1, B, H, W)

    # 5. red_cnn backbone; back to NCHW at the very end
    out = red_cnn_forward(x_in, P)                                   # (1, B, H, W)
    return jnp.transpose(out, (1, 0, 2, 3))                          # (B, 1, H, W)


# ----------------------------------------------------------------------------
# Synthetic deterministic parameter construction + one-time preparation
# ----------------------------------------------------------------------------
def build_det_coords(views, H, W, D):
    row = jnp.arange(H, dtype=jnp.float32)
    col = jnp.arange(W, dtype=jnp.float32)
    ys = ((H - 1) / 2.0 - row)[:, None]                  # (H, 1)
    xs = (col - (W - 1) / 2.0)[None, :]                  # (1, W)
    cos = jnp.cos(views)[:, None, None]
    sin = jnp.sin(views)[:, None, None]
    u = xs * cos + ys * sin + (D - 1) / 2.0              # (V, H, W)
    return u.reshape(views.shape[0], H * W).astype(jnp.float32)


def init_params(key, V, D, ch=16):
    """Raw torch-layout parameters (f32) + FBP operators."""
    H, W = V, D
    keys = jax.random.split(key, 12)

    def nrm(k, shape):
        return 0.01 * jax.random.normal(k, shape, jnp.float32)

    # projector.weight: per-detector weighting
    det = jnp.arange(D, dtype=jnp.float32) - (D - 1) / 2.0
    proj_weight = 1.0 / jnp.sqrt(1.0 + (det / D) ** 2)

    # projector.filter: discrete Ram-Lak ramp of length 2D-1 as a Toeplitz
    # matrix, with the detector weighting folded in: (p*w) @ F == p @ (diag(w) F)
    n = jnp.arange(-(D - 1), D, dtype=jnp.float32)
    ramp = jnp.where(n == 0, 0.25,
                     jnp.where(jnp.mod(jnp.abs(n), 2.0) == 1.0,
                               -1.0 / (jnp.pi ** 2 * n ** 2), 0.0))
    jj = jnp.arange(D)[:, None]
    dd = jnp.arange(D)[None, :]
    filter_mat = ramp[jj - dd + D - 1].astype(jnp.float32)
    wf_mat = (proj_weight[:, None] * filter_mat).astype(jnp.float32)

    views = jnp.arange(V, dtype=jnp.float32) * (2.0 * jnp.pi / V)
    u_coords = build_det_coords(views, H, W, D)          # (V, H*W)

    raw = dict(wf_mat=wf_mat, u_coords=u_coords)

    # nn.Conv2d(V, 1, 3, padding=1): N(0, 0.01) weights, zero bias
    raw['mix_w'] = nrm(keys[0], (1, V, 3, 3))
    raw['mix_b'] = jnp.zeros((1,), jnp.float32)

    # red_cnn: 5 conv + 5 transposed conv, k=5
    raw['c1_w'] = nrm(keys[1], (ch, 1, 5, 5)); raw['c1_b'] = jnp.zeros((ch,), jnp.float32)
    for i, kk in zip(range(2, 6), keys[2:6]):
        raw[f'c{i}_w'] = nrm(kk, (ch, ch, 5, 5))
        raw[f'c{i}_b'] = jnp.zeros((ch,), jnp.float32)
    for i, kk in zip(range(1, 5), keys[6:10]):
        raw[f't{i}_w'] = nrm(kk, (ch, ch, 5, 5))         # ConvTranspose2d layout (Cin, Cout, k, k)
        raw[f't{i}_b'] = jnp.zeros((ch,), jnp.float32)
    raw['t5_w'] = nrm(keys[10], (ch, 1, 5, 5))
    raw['t5_b'] = jnp.zeros((1,), jnp.float32)
    return raw


def _prep_conv(w, b):
    return dict(w=w.astype(MM_DTYPE), b=b.astype(jnp.float32))


def _prep_convT(w_t, b):
    # ConvTranspose2d(stride=1) == conv2d with spatially flipped, channel-swapped
    # weights (done once here instead of per forward call).
    w_conv = jnp.flip(jnp.flip(w_t, -1), -2).transpose(1, 0, 2, 3)
    return dict(w=w_conv.astype(MM_DTYPE), b=b.astype(jnp.float32))


def prepare_params(raw):
    """One-time bf16 cast / weight flip so no per-call weight preprocessing remains."""
    P = dict(wf_mat=raw['wf_mat'], u_coords=raw['u_coords'])
    P['mix'] = _prep_conv(raw['mix_w'], raw['mix_b'])
    for i in range(1, 6):
        P[f'c{i}'] = _prep_conv(raw[f'c{i}_w'], raw[f'c{i}_b'])
    for i in range(1, 6):
        P[f't{i}'] = _prep_convT(raw[f't{i}_w'], raw[f't{i}_b'])
    return P


if __name__ == "__main__":
    key = jax.random.PRNGKey(0)
    kp, kx = jax.random.split(key)

    B, V, D = 2, 16, 16     # sinogram p: (B, 1, num_views, num_det); image = (V, D)
    ch = 16                 # small red_cnn width for the example

    params = prepare_params(init_params(kp, V, D, ch))
    p = jax.random.normal(kx, (B, 1, V, D), jnp.float32)

    fwd = jax.jit(vvbp_forward)
    out = jax.block_until_ready(fwd(p, params))

    assert out.shape == (B, 1, V, D), out.shape
    assert out.dtype == jnp.float32
    print("KERNEL_OK")
</pallas_src>

<mosaic_0001>
module attributes {stable_mosaic.version = 11 : i64} {
  func.func @_filter_kernel(%arg0: i32, %arg1: memref<32x16xf32, #tpu.memory_space<vmem>>, %arg2: memref<16x16xf32, #tpu.memory_space<vmem>>, %arg3: memref<32x16xf32, #tpu.memory_space<vmem>>) attributes {dimension_semantics = [#tpu.dimension_semantics<parallel>], iteration_bounds = array<i64: 1>, scalar_prefetch = 0 : i64, scratch_operands = 0 : i64, tpu.core_type = #tpu.core_type<tc>, window_params = [{transform_indices = @transform_0, window_bounds = array<i64: 32, 16>}, {pipeline_mode = #tpu.pipeline_mode<synchronous>, transform_indices = @transform_1, window_bounds = array<i64: 16, 16>}, {transform_indices = @transform_2, window_bounds = array<i64: 32, 16>}]} {
    %c0 = arith.constant 0 : index
    %c0_0 = arith.constant 0 : index
    %0 = vector.load %arg1[%c0, %c0_0] : memref<32x16xf32, #tpu.memory_space<vmem>>, vector<32x16xf32>
    %c0_1 = arith.constant 0 : index
    %c0_2 = arith.constant 0 : index
    %1 = vector.load %arg2[%c0_1, %c0_2] : memref<16x16xf32, #tpu.memory_space<vmem>>, vector<16x16xf32>
    %cst = arith.constant dense<0.000000e+00> : vector<32x16xf32>
    %2 = tpu.matmul %0, %1, %cst {dimension_numbers = #tpu.dot_dimension_numbers<[1], [0], [0], [1], [0, 0, 1, 1], [], []>} : vector<32x16xf32>, vector<16x16xf32>, vector<32x16xf32> -> vector<32x16xf32>
    %c0_3 = arith.constant 0 : index
    %c0_4 = arith.constant 0 : index
    %3 = vector.load %arg3[%c0_3, %c0_4] : memref<32x16xf32, #tpu.memory_space<vmem>>, vector<32x16xf32>
    tpu.vector_store %arg3[%c0_3, %c0_4], %2 {strides = array<i32>} : memref<32x16xf32, #tpu.memory_space<vmem>>, vector<32x16xf32>,
    return
  }
  func.func @transform_0(%arg0: i32) -> (i32, i32) {
    %c0_i32 = arith.constant 0 : i32
    %c0_i32_0 = arith.constant 0 : i32
    return %arg0, %c0_i32 : i32, i32
  }
  func.func @transform_1(%arg0: i32) -> (i32, i32) {
    %c0_i32 = arith.constant 0 : i32
    %c0_i32_0 = arith.constant 0 : i32
    %c0_i32_1 = arith.constant 0 : i32
    return %c0_i32, %c0_i32_0 : i32, i32
  }
  func.func @transform_2(%arg0: i32) -> (i32, i32) {
    %c0_i32 = arith.constant 0 : i32
    %c0_i32_0 = arith.constant 0 : i32
    return %arg0, %c0_i32 : i32, i32
  }
}

module attributes {stable_mosaic.version = 11 : i64} {
  func.func @_fbp_sort_kernel(%arg0: i32, %arg1: memref<16x2x16xf32, #tpu.memory_space<vmem>>, %arg2: memref<16x1x256xf32, #tpu.memory_space<vmem>>, %arg3: memref<16x2x256xf32, #tpu.memory_space<vmem>>, %arg4: memref<16x2x256xf32, #tpu.memory_space<vmem>>) attributes {dimension_semantics = [#tpu.dimension_semantics<parallel>], iteration_bounds = array<i64: 1>, scalar_prefetch = 0 : i64, scratch_operands = 1 : i64, tpu.core_type = #tpu.core_type<tc>, window_params = [{pipeline_mode = #tpu.pipeline_mode<synchronous>, transform_indices = @transform_0, window_bounds = array<i64: 16, 2, 16>}, {transform_indices = @transform_1, window_bounds = array<i64: 16, 1, 256>}, {transform_indices = @transform_2, window_bounds = array<i64: 16, 2, 256>}]} {
    %0 = tpu.iota {dimensions = array<i32: 0>} : vector<16x256xi32>
    %1 = arith.sitofp %0 : vector<16x256xi32> to vector<16x256xf32>
    %c0 = arith.constant 0 : index
    %c0_0 = arith.constant 0 : index
    %c0_1 = arith.constant 0 : index
    %2 = vector.load %arg2[%c0, %c0_0, %c0_1] : memref<16x1x256xf32, #tpu.memory_space<vmem>>, vector<1x1x256xf32>
    %3 = vector.shape_cast %2 : vector<1x1x256xf32> to vector<1x256xf32>
    %4 = vector.broadcast %3 : vector<1x256xf32> to vector<16x256xf32>
    %5 = arith.subf %1, %4 : vector<16x256xf32>
    %6 = math.absf %5 : vector<16x256xf32>
    %cst = arith.constant 1.000000e+00 : f32
    %7 = vector.broadcast %cst : f32 to vector<16x256xf32>
    %8 = arith.subf %7, %6 : vector<16x256xf32>
    %cst_2 = arith.constant 0.000000e+00 : f32
    %9 = vector.broadcast %cst_2 : f32 to vector<16x256xf32>
    %10 = arith.maximumf %9, %8 : vector<16x256xf32>
    %c0_3 = arith.constant 0 : index
    %c0_4 = arith.constant 0 : index
    %c0_5 = arith.constant 0 : index
    %11 = vector.load %arg1[%c0_3, %c0_4, %c0_5] : memref<16x2x16xf32, #tpu.memory_space<vmem>>, vector<1x2x16xf32>
    %12 = vector.shape_cast %11 : vector<1x2x16xf32> to vector<2x16xf32>
    %cst_6 = arith.constant dense<0.000000e+00> : vector<2x256xf32>
    %13 = tpu.matmul %12, %10, %cst_6 {dimension_numbers = #tpu.dot_dimension_numbers<[1], [0], [0], [1], [0, 0, 1, 1], [], []>} : vector<2x16xf32>, vector<16x256xf32>, vector<2x256xf32> -> vector<2x256xf32>
    %c0_7 = arith.constant 0 : index
    %c0_8 = arith.constant 0 : index
    %c0_9 = arith.constant 0 : index
    %14 = vector.load %arg4[%c0_7, %c0_8, %c0_9] : memref<16x2x256xf32, #tpu.memory_space<vmem>>, vector<1x2x256xf32>
    %15 = vector.shape_cast %14 : vector<1x2x256xf32> to vector<2x256xf32>
    %16 = vector.shape_cast %13 : vector<2x256xf32> to vector<1x2x256xf32>
    tpu.vector_store %arg4[%c0_7, %c0_8, %c0_9], %16 {strides = array<i32>} : memref<16x2x256xf32, #tpu.memory_space<vmem>>, vector<1x2x256xf32>,
    %c1 = arith.constant 1 : index
    %c0_10 = arith.constant 0 : index
    %c0_11 = arith.constant 0 : index
    %17 = vector.load %arg2[%c1, %c0_10, %c0_11] : memref<16x1x256xf32, #tpu.memory_space<vmem>>, vector<1x1x256xf32>
    %18 = vector.shape_cast %17 : vector<1x1x256xf32> to vector<1x256xf32>
    %19 = vector.broadcast %18 : vector<1x256xf32> to vector<16x256xf32>
    %20 = arith.subf %1, %19 : vector<16x256xf32>
    %21 = math.absf %20 : vector<16x256xf32>
    %cst_12 = arith.constant 1.000000e+00 : f32
    %22 = vector.broadcast %cst_12 : f32 to vector<16x256xf32>
    %23 = arith.subf %22, %21 : vector<16x256xf32>
    %cst_13 = arith.constant 0.000000e+00 : f32
    %24 = vector.broadcast %cst_13 : f32 to vector<16x256xf32>
    %25 = arith.maximumf %24, %23 : vector<16x256xf32>
    %c1_14 = arith.constant 1 : index
    %c0_15 = arith.constant 0 : index
    %c0_16 = arith.constant 0 : index
    %26 = vector.load %arg1[%c1_14, %c0_15, %c0_16] : memref<16x2x16xf32, #tpu.memory_space<vmem>>, vector<1x2x16xf32>
    %27 = vector.shape_cast %26 : vector<1x2x16xf32> to vector<2x16xf32>
    %cst_17 = arith.constant dense<0.000000e+00> : vector<2x256xf32>
    %28 = tpu.matmul %27, %25, %cst_17 {dimension_numbers = #tpu.dot_dimension_numbers<[1], [0], [0], [1], [0, 0, 1, 1], [], []>} : vector<2x16xf32>, vector<16x256xf32>, vector<2x256xf32> -> vector<2x256xf32>
    %c1_18 = arith.constant 1 : index
    %c0_19 = arith.constant 0 : index
    %c0_20 = arith.constant 0 : index
    %29 = vector.load %arg4[%c1_18, %c0_19, %c0_20] : memref<16x2x256xf32, #tpu.memory_space<vmem>>, vector<1x2x256xf32>
    %30 = vector.shape_cast %29 : vector<1x2x256xf32> to vector<2x256xf32>
    %31 = vector.shape_cast %28 : vector<2x256xf32> to vector<1x2x256xf32>
    tpu.vector_store %arg4[%c1_18, %c0_19, %c0_20], %31 {strides = array<i32>} : memref<16x2x256xf32, #tpu.memory_space<vmem>>, vector<1x2x256xf32>,
    %c2 = arith.constant 2 : index
    %c0_21 = arith.constant 0 : index
    %c0_22 = arith.constant 0 : index
    %32 = vector.load %arg2[%c2, %c0_21, %c0_22] : memref<16x1x256xf32, #tpu.memory_space<vmem>>, vector<1x1x256xf32>
    %33 = vector.shape_cast %32 : vector<1x1x256xf32> to vector<1x256xf32>
    %34 = vector.broadcast %33 : vector<1x256xf32> to vector<16x256xf32>
    %35 = arith.subf %1, %34 : vector<16x256xf32>
    %36 = math.absf %35 : vector<16x256xf32>
    %cst_23 = arith.constant 1.000000e+00 : f32
    %37 = vector.broadcast %cst_23 : f32 to vector<16x256xf32>
    %38 = arith.subf %37, %36 : vector<16x256xf32>
    %cst_24 = arith.constant 0.000000e+00 : f32
    %39 = vector.broadcast %cst_24 : f32 to vector<16x256xf32>
    %40 = arith.maximumf %39, %38 : vector<16x256xf32>
    %c2_25 = arith.constant 2 : index
    %c0_26 = arith.constant 0 : index
    %c0_27 = arith.constant 0 : index
    %41 = vector.load %arg1[%c2_25, %c0_26, %c0_27] : memref<16x2x16xf32, #tpu.memory_space<vmem>>, vector<1x2x16xf32>
    %42 = vector.shape_cast %41 : vector<1x2x16xf32> to vector<2x16xf32>
    %cst_28 = arith.constant dense<0.000000e+00> : vector<2x256xf32>
    %43 = tpu.matmul %42, %40, %cst_28 {dimension_numbers = #tpu.dot_dimension_numbers<[1], [0], [0], [1], [0, 0, 1, 1], [], []>} : vector<2x16xf32>, vector<16x256xf32>, vector<2x256xf32> -> vector<2x256xf32>
    %c2_29 = arith.constant 2 : index
    %c0_30 = arith.constant 0 : index
    %c0_31 = arith.constant 0 : index
    %44 = vector.load %arg4[%c2_29, %c0_30, %c0_31] : memref<16x2x256xf32, #tpu.memory_space<vmem>>, vector<1x2x256xf32>
    %45 = vector.shape_cast %44 : vector<1x2x256xf32> to vector<2x256xf32>
    %46 = vector.shape_cast %43 : vector<2x256xf32> to vector<1x2x256xf32>
    tpu.vector_store %arg4[%c2_29, %c0_30, %c0_31], %46 {strides = array<i32>} : memref<16x2x256xf32, #tpu.memory_space<vmem>>, vector<1x2x256xf32>,
    %c3 = arith.constant 3 : index
    %c0_32 = arith.constant 0 : index
    %c0_33 = arith.constant 0 : index
    %47 = vector.load %arg2[%c3, %c0_32, %c0_33] : memref<16x1x256xf32, #tpu.memory_space<vmem>>, vector<1x1x256xf32>
    %48 = vector.shape_cast %47 : vector<1x1x256xf32> to vector<1x256xf32>
    %49 = vector.broadcast %48 : vector<1x256xf32> to vector<16x256xf32>
    %50 = arith.subf %1, %49 : vector<16x256xf32>
    %51 = math.absf %50 : vector<16x256xf32>
    %cst_34 = arith.constant 1.000000e+00 : f32
    %52 = vector.broadcast %cst_34 : f32 to vector<16x256xf32>
    %53 = arith.subf %52, %51 : vector<16x256xf32>
    %cst_35 = arith.constant 0.000000e+00 : f32
    %54 = vector.broadcast %cst_35 : f32 to vector<16x256xf32>
    %55 = arith.maximumf %54, %53 : vector<16x256xf32>
    %c3_36 = arith.constant 3 : index
    %c0_37 = arith.constant 0 : index
    %c0_38 = arith.constant 0 : index
    %56 = vector.load %arg1[%c3_36, %c0_37, %c0_38] : memref<16x2x16xf32, #tpu.memory_space<vmem>>, vector<1x2x16xf32>
    %57 = vector.shape_cast %56 : vector<1x2x16xf32> to vector<2x16xf32>
    %cst_39 = arith.constant dense<0.000000e+00> : vector<2x256xf32>
    %58 = tpu.matmul %57, %55, %cst_39 {dimension_numbers = #tpu.dot_dimension_numbers<[1], [0], [0], [1], [0, 0, 1, 1], [], []>} : vector<2x16xf32>, vector<16x256xf32>, vector<2x256xf32> -> vector<2x256xf32>
    %c3_40 = arith.constant 3 : index
    %c0_41 = arith.constant 0 : index
    %c0_42 = arith.constant 0 : index
    %59 = vector.load %arg4[%c3_40, %c0_41, %c0_42] : memref<16x2x256xf32, #tpu.memory_space<vmem>>, vector<1x2x256xf32>
    %60 = vector.shape_cast %59 : vector<1x2x256xf32> to vector<2x256xf32>
    %61 = vector.shape_cast %58 : vector<2x256xf32> to vector<1x2x256xf32>
    tpu.vector_store %arg4[%c3_40, %c0_41, %c0_42], %61 {strides = array<i32>} : memref<16x2x256xf32, #tpu.memory_space<vmem>>, vector<1x2x256xf32>,
    %c4 = arith.constant 4 : index
    %c0_43 = arith.constant 0 : index
    %c0_44 = arith.constant 0 : index
    %62 = vector.load %arg2[%c4, %c0_43, %c0_44] : memref<16x1x256xf32, #tpu.memory_space<vmem>>, vector<1x1x256xf32>
    %63 = vector.shape_cast %62 : vector<1x1x256xf32> to vector<1x256xf32>
    %64 = vector.broadcast %63 : vector<1x256xf32> to vector<16x256xf32>
    %65 = arith.subf %1, %64 : vector<16x256xf32>
    %66 = math.absf %65 : vector<16x256xf32>
    %cst_45 = arith.constant 1.000000e+00 : f32
    %67 = vector.broadcast %cst_45 : f32 to vector<16x256xf32>
    %68 = arith.subf %67, %66 : vector<16x256xf32>
    %cst_46 = arith.constant 0.000000e+00 : f32
    %69 = vector.broadcast %cst_46 : f32 to vector<16x256xf32>
    %70 = arith.maximumf %69, %68 : vector<16x256xf32>
    %c4_47 = arith.constant 4 : index
    %c0_48 = arith.constant 0 : index
    %c0_49 = arith.constant 0 : index
    %71 = vector.load %arg1[%c4_47, %c0_48, %c0_49] : memref<16x2x16xf32, #tpu.memory_space<vmem>>, vector<1x2x16xf32>
    %72 = vector.shape_cast %71 : vector<1x2x16xf32> to vector<2x16xf32>
    %cst_50 = arith.constant dense<0.000000e+00> : vector<2x256xf32>
    %73 = tpu.matmul %72, %70, %cst_50 {dimension_numbers = #tpu.dot_dimension_numbers<[1], [0], [0], [1], [0, 0, 1, 1], [], []>} : vector<2x16xf32>, vector<16x256xf32>, vector<2x256xf32> -> vector<2x256xf32>
    %c4_51 = arith.constant 4 : index
    %c0_52 = arith.constant 0 : index
    %c0_53 = arith.constant 0 : index
    %74 = vector.load %arg4[%c4_51, %c0_52, %c0_53] : memref<16x2x256xf32, #tpu.memory_space<vmem>>, vector<1x2x256xf32>
    %75 = vector.shape_cast %74 : vector<1x2x256xf32> to vector<2x256xf32>
    %76 = vector.shape_cast %73 : vector<2x256xf32> to vector<1x2x256xf32>
    tpu.vector_store %arg4[%c4_51, %c0_52, %c0_53], %76 {strides = array<i32>} : memref<16x2x256xf32, #tpu.memory_space<vmem>>, vector<1x2x256xf32>,
    %c5 = arith.constant 5 : index
    %c0_54 = arith.constant 0 : index
    %c0_55 = arith.constant 0 : index
    %77 = vector.load %arg2[%c5, %c0_54, %c0_55] : memref<16x1x256xf32, #tpu.memory_space<vmem>>, vector<1x1x256xf32>
    %78 = vector.shape_cast %77 : vector<1x1x256xf32> to vector<1x256xf32>
    %79 = vector.broadcast %78 : vector<1x256xf32> to vector<16x256xf32>
    %80 = arith.subf %1, %79 : vector<16x256xf32>
    %81 = math.absf %80 : vector<16x256xf32>
    %cst_56 = arith.constant 1.000000e+00 : f32
    %82 = vector.broadcast %cst_56 : f32 to vector<16x256xf32>
    %83 = arith.subf %82, %81 : vector<16x256xf32>
    %cst_57 = arith.constant 0.000000e+00 : f32
    %84 = vector.broadcast %cst_57 : f32 to vector<16x256xf32>
    %85 = arith.maximumf %84, %83 : vector<16x256xf32>
    %c5_58 = arith.constant 5 : index
    %c0_59 = arith.constant 0 : index
    %c0_60 = arith.constant 0 : index
    %86 = vector.load %arg1[%c5_58, %c0_59, %c0_60] : memref<16x2x16xf32, #tpu.memory_space<vmem>>, vector<1x2x16xf32>
    %87 = vector.shape_cast %86 : vector<1x2x16xf32> to vector<2x16xf32>
    %cst_61 = arith.constant dense<0.000000e+00> : vector<2x256xf32>
    %88 = tpu.matmul %87, %85, %cst_61 {dimension_numbers = #tpu.dot_dimension_numbers<[1], [0], [0], [1], [0, 0, 1, 1], [], []>} : vector<2x16xf32>, vector<16x256xf32>, vector<2x256xf32> -> vector<2x256xf32>
    %c5_62 = arith.constant 5 : index
    %c0_63 = arith.constant 0 : index
    %c0_64 = arith.constant 0 : index
    %89 = vector.load %arg4[%c5_62, %c0_63, %c0_64] : memref<16x2x256xf32, #tpu.memory_space<vmem>>, vector<1x2x256xf32>
    %90 = vector.shape_cast %89 : vector<1x2x256xf32> to vector<2x256xf32>
    %91 = vector.shape_cast %88 : vector<2x256xf32> to vector<1x2x256xf32>
    tpu.vector_store %arg4[%c5_62, %c0_63, %c0_64], %91 {strides = array<i32>} : memref<16x2x256xf32, #tpu.memory_space<vmem>>, vector<1x2x256xf32>,
    %c6 = arith.constant 6 : index
    %c0_65 = arith.constant 0 : index
    %c0_66 = arith.constant 0 : index
    %92 = vector.load %arg2[%c6, %c0_65, %c0_66] : memref<16x1x256xf32, #tpu.memory_space<vmem>>, vector<1x1x256xf32>
    %93 = vector.shape_cast %92 : vector<1x1x256xf32> to vector<1x256xf32>
    %94 = vector.broadcast %93 : vector<1x256xf32> to vector<16x256xf32>
    %95 = arith.subf %1, %94 : vector<16x256xf32>
    %96 = math.absf %95 : vector<16x256xf32>
    %cst_67 = arith.constant 1.000000e+00 : f32
    %97 = vector.broadcast %cst_67 : f32 to vector<16x256xf32>
    %98 = arith.subf %97, %96 : vector<16x256xf32>
    %cst_68 = arith.constant 0.000000e+00 : f32
    %99 = vector.broadcast %cst_68 : f32 to vector<16x256xf32>
    %100 = arith.maximumf %99, %98 : vector<16x256xf32>
    %c6_69 = arith.constant 6 : index
    %c0_70 = arith.constant 0 : index
    %c0_71 = arith.constant 0 : index
    %101 = vector.load %arg1[%c6_69, %c0_70, %c0_71] : memref<16x2x16xf32, #tpu.memory_space<vmem>>, vector<1x2x16xf32>
    %102 = vector.shape_cast %101 : vector<1x2x16xf32> to vector<2x16xf32>
    %cst_72 = arith.constant dense<0.000000e+00> : vector<2x256xf32>
    %103 = tpu.matmul %102, %100, %cst_72 {dimension_numbers = #tpu.dot_dimension_numbers<[1], [0], [0], [1], [0, 0, 1, 1], [], []>} : vector<2x16xf32>, vector<16x256xf32>, vector<2x256xf32> -> vector<2x256xf32>
    %c6_73 = arith.constant 6 : index
    %c0_74 = arith.constant 0 : index
    %c0_75 = arith.constant 0 : index
    %104 = vector.load %arg4[%c6_73, %c0_74, %c0_75] : memref<16x2x256xf32, #tpu.memory_space<vmem>>, vector<1x2x256xf32>
    %105 = vector.shape_cast %104 : vector<1x2x256xf32> to vector<2x256xf32>
    %106 = vector.shape_cast %103 : vector<2x256xf32> to vector<1x2x256xf32>
    tpu.vector_store %arg4[%c6_73, %c0_74, %c0_75], %106 {strides = array<i32>} : memref<16x2x256xf32, #tpu.memory_space<vmem>>, vector<1x2x256xf32>,
    %c7 = arith.constant 7 : index
    %c0_76 = arith.constant 0 : index
    %c0_77 = arith.constant 0 : index
    %107 = vector.load %arg2[%c7, %c0_76, %c0_77] : memref<16x1x256xf32, #tpu.memory_space<vmem>>, vector<1x1x256xf32>
    %108 = vector.shape_cast %107 : vector<1x1x256xf32> to vector<1x256xf32>
    %109 = vector.broadcast %108 : vector<1x256xf32> to vector<16x256xf32>
    %110 = arith.subf %1, %109 : vector<16x256xf32>
    %111 = math.absf %110 : vector<16x256xf32>
    %cst_78 = arith.constant 1.000000e+00 : f32
    %112 = vector.broadcast %cst_78 : f32 to vector<16x256xf32>
    %113 = arith.subf %112, %111 : vector<16x256xf32>
    %cst_79 = arith.constant 0.000000e+00 : f32
    %114 = vector.broadcast %cst_79 : f32 to vector<16x256xf32>
    %115 = arith.maximumf %114, %113 : vector<16x256xf32>
    %c7_80 = arith.constant 7 : index
    %c0_81 = arith.constant 0 : index
    %c0_82 = arith.constant 0 : index
    %116 = vector.load %arg1[%c7_80, %c0_81, %c0_82] : memref<16x2x16xf32, #tpu.memory_space<vmem>>, vector<1x2x16xf32>
    %117 = vector.shape_cast %116 : vector<1x2x16xf32> to vector<2x16xf32>
    %cst_83 = arith.constant dense<0.000000e+00> : vector<2x256xf32>
    %118 = tpu.matmul %117, %115, %cst_83 {dimension_numbers = #tpu.dot_dimension_numbers<[1], [0], [0], [1], [0, 0, 1, 1], [], []>} : vector<2x16xf32>, vector<16x256xf32>, vector<2x256xf32> -> vector<2x256xf32>
    %c7_84 = arith.constant 7 : index
    %c0_85 = arith.constant 0 : index
    %c0_86 = arith.constant 0 : index
    %119 = vector.load %arg4[%c7_84, %c0_85, %c0_86] : memref<16x2x256xf32, #tpu.memory_space<vmem>>, vector<1x2x256xf32>
    %120 = vector.shape_cast %119 : vector<1x2x256xf32> to vector<2x256xf32>
    %121 = vector.shape_cast %118 : vector<2x256xf32> to vector<1x2x256xf32>
    tpu.vector_store %arg4[%c7_84, %c0_85, %c0_86], %121 {strides = array<i32>} : memref<16x2x256xf32, #tpu.memory_space<vmem>>, vector<1x2x256xf32>,
    %c8 = arith.constant 8 : index
    %c0_87 = arith.constant 0 : index
    %c0_88 = arith.constant 0 : index
    %122 = vector.load %arg2[%c8, %c0_87, %c0_88] : memref<16x1x256xf32, #tpu.memory_space<vmem>>, vector<1x1x256xf32>
    %123 = vector.shape_cast %122 : vector<1x1x256xf32> to vector<1x256xf32>
    %124 = vector.broadcast %123 : vector<1x256xf32> to vector<16x256xf32>
    %125 = arith.subf %1, %124 : vector<16x256xf32>
    %126 = math.absf %125 : vector<16x256xf32>
    %cst_89 = arith.constant 1.000000e+00 : f32
    %127 = vector.broadcast %cst_89 : f32 to vector<16x256xf32>
    %128 = arith.subf %127, %126 : vector<16x256xf32>
    %cst_90 = arith.constant 0.000000e+00 : f32
    %129 = vector.broadcast %cst_90 : f32 to vector<16x256xf32>
    %130 = arith.maximumf %129, %128 : vector<16x256xf32>
    %c8_91 = arith.constant 8 : index
    %c0_92 = arith.constant 0 : index
    %c0_93 = arith.constant 0 : index
    %131 = vector.load %arg1[%c8_91, %c0_92, %c0_93] : memref<16x2x16xf32, #tpu.memory_space<vmem>>, vector<1x2x16xf32>
    %132 = vector.shape_cast %131 : vector<1x2x16xf32> to vector<2x16xf32>
    %cst_94 = arith.constant dense<0.000000e+00> : vector<2x256xf32>
    %133 = tpu.matmul %132, %130, %cst_94 {dimension_numbers = #tpu.dot_dimension_numbers<[1], [0], [0], [1], [0, 0, 1, 1], [], []>} : vector<2x16xf32>, vector<16x256xf32>, vector<2x256xf32> -> vector<2x256xf32>
    %c8_95 = arith.constant 8 : index
    %c0_96 = arith.constant 0 : index
    %c0_97 = arith.constant 0 : index
    %134 = vector.load %arg4[%c8_95, %c0_96, %c0_97] : memref<16x2x256xf32, #tpu.memory_space<vmem>>, vector<1x2x256xf32>
    %135 = vector.shape_cast %134 : vector<1x2x256xf32> to vector<2x256xf32>
    %136 = vector.shape_cast %133 : vector<2x256xf32> to vector<1x2x256xf32>
    tpu.vector_store %arg4[%c8_95, %c0_96, %c0_97], %136 {strides = array<i32>} : memref<16x2x256xf32, #tpu.memory_space<vmem>>, vector<1x2x256xf32>,
    %c9 = arith.constant 9 : index
    %c0_98 = arith.constant 0 : index
    %c0_99 = arith.constant 0 : index
    %137 = vector.load %arg2[%c9, %c0_98, %c0_99] : memref<16x1x256xf32, #tpu.memory_space<vmem>>, vector<1x1x256xf32>
    %138 = vector.shape_cast %137 : vector<1x1x256xf32> to vector<1x256xf32>
    %139 = vector.broadcast %138 : vector<1x256xf32> to vector<16x256xf32>
    %140 = arith.subf %1, %139 : vector<16x256xf32>
    %141 = math.absf %140 : vector<16x256xf32>
    %cst_100 = arith.constant 1.000000e+00 : f32
    %142 = vector.broadcast %cst_100 : f32 to vector<16x256xf32>
    %143 = arith.subf %142, %141 : vector<16x256xf32>
    %cst_101 = arith.constant 0.000000e+00 : f32
    %144 = vector.broadcast %cst_101 : f32 to vector<16x256xf32>
    %145 = arith.maximumf %144, %143 : vector<16x256xf32>
    %c9_102 = arith.constant 9 : index
    %c0_103 = arith.constant 0 : index
    %c0_104 = arith.constant 0 : index
    %146 = vector.load %arg1[%c9_102, %c0_103, %c0_104] : memref<16x2x16xf32, #tpu.memory_space<vmem>>, vector<1x2x16xf32>
    %147 = vector.shape_cast %146 : vector<1x2x16xf32> to vector<2x16xf32>
    %cst_105 = arith.constant dense<0.000000e+00> : vector<2x256xf32>
    %148 = tpu.matmul %147, %145, %cst_105 {dimension_numbers = #tpu.dot_dimension_numbers<[1], [0], [0], [1], [0, 0, 1, 1], [], []>} : vector<2x16xf32>, vector<16x256xf32>, vector<2x256xf32> -> vector<2x256xf32>
    %c9_106 = arith.constant 9 : index
    %c0_107 = arith.constant 0 : index
    %c0_108 = arith.constant 0 : index
    %149 = vector.load %arg4[%c9_106, %c0_107, %c0_108] : memref<16x2x256xf32, #tpu.memory_space<vmem>>, vector<1x2x256xf32>
    %150 = vector.shape_cast %149 : vector<1x2x256xf32> to vector<2x256xf32>
    %151 = vector.shape_cast %148 : vector<2x256xf32> to vector<1x2x256xf32>
    tpu.vector_store %arg4[%c9_106, %c0_107, %c0_108], %151 {strides = array<i32>} : memref<16x2x256xf32, #tpu.memory_space<vmem>>, vector<1x2x256xf32>,
    %c10 = arith.constant 10 : index
    %c0_109 = arith.constant 0 : index
    %c0_110 = arith.constant 0 : index
    %152 = vector.load %arg2[%c10, %c0_109, %c0_110] : memref<16x1x256xf32, #tpu.memory_space<vmem>>, vector<1x1x256xf32>
    %153 = vector.shape_cast %152 : vector<1x1x256xf32> to vector<1x256xf32>
    %154 = vector.broadcast %153 : vector<1x256xf32> to vector<16x256xf32>
    %155 = arith.subf %1, %154 : vector<16x256xf32>
    %156 = math.absf %155 : vector<16x256xf32>
    %cst_111 = arith.constant 1.000000e+00 : f32
    %157 = vector.broadcast %cst_111 : f32 to vector<16x256xf32>
    %158 = arith.subf %157, %156 : vector<16x256xf32>
    %cst_112 = arith.constant 0.000000e+00 : f32
    %159 = vector.broadcast %cst_112 : f32 to vector<16x256xf32>
    %160 = arith.maximumf %159, %158 : vector<16x256xf32>
    %c10_113 = arith.constant 10 : index
    %c0_114 = arith.constant 0 : index
    %c0_115 = arith.constant 0 : index
    %161 = vector.load %arg1[%c10_113, %c0_114, %c0_115] : memref<16x2x16xf32, #tpu.memory_space<vmem>>, vector<1x2x16xf32>
    %162 = vector.shape_cast %161 : vector<1x2x16xf32> to vector<2x16xf32>
    %cst_116 = arith.constant dense<0.000000e+00> : vector<2x256xf32>
    %163 = tpu.matmul %162, %160, %cst_116 {dimension_numbers = #tpu.dot_dimension_numbers<[1], [0], [0], [1], [0, 0, 1, 1], [], []>} : vector<2x16xf32>, vector<16x256xf32>, vector<2x256xf32> -> vector<2x256xf32>
    %c10_117 = arith.constant 10 : index
    %c0_118 = arith.constant 0 : index
    %c0_119 = arith.constant 0 : index
    %164 = vector.load %arg4[%c10_117, %c0_118, %c0_119] : memref<16x2x256xf32, #tpu.memory_space<vmem>>, vector<1x2x256xf32>
    %165 = vector.shape_cast %164 : vector<1x2x256xf32> to vector<2x256xf32>
    %166 = vector.shape_cast %163 : vector<2x256xf32> to vector<1x2x256xf32>
    tpu.vector_store %arg4[%c10_117, %c0_118, %c0_119], %166 {strides = array<i32>} : memref<16x2x256xf32, #tpu.memory_space<vmem>>, vector<1x2x256xf32>,
    %c11 = arith.constant 11 : index
    %c0_120 = arith.constant 0 : index
    %c0_121 = arith.constant 0 : index
    %167 = vector.load %arg2[%c11, %c0_120, %c0_121] : memref<16x1x256xf32, #tpu.memory_space<vmem>>, vector<1x1x256xf32>
    %168 = vector.shape_cast %167 : vector<1x1x256xf32> to vector<1x256xf32>
    %169 = vector.broadcast %168 : vector<1x256xf32> to vector<16x256xf32>
    %170 = arith.subf %1, %169 : vector<16x256xf32>
    %171 = math.absf %170 : vector<16x256xf32>
    %cst_122 = arith.constant 1.000000e+00 : f32
    %172 = vector.broadcast %cst_122 : f32 to vector<16x256xf32>
    %173 = arith.subf %172, %171 : vector<16x256xf32>
    %cst_123 = arith.constant 0.000000e+00 : f32
    %174 = vector.broadcast %cst_123 : f32 to vector<16x256xf32>
    %175 = arith.maximumf %174, %173 : vector<16x256xf32>
    %c11_124 = arith.constant 11 : index
    %c0_125 = arith.constant 0 : index
    %c0_126 = arith.constant 0 : index
    %176 = vector.load %arg1[%c11_124, %c0_125, %c0_126] : memref<16x2x16xf32, #tpu.memory_space<vmem>>, vector<1x2x16xf32>
    %177 = vector.shape_cast %176 : vector<1x2x16xf32> to vector<2x16xf32>
    %cst_127 = arith.constant dense<0.000000e+00> : vector<2x256xf32>
    %178 = tpu.matmul %177, %175, %cst_127 {dimension_numbers = #tpu.dot_dimension_numbers<[1], [0], [0], [1], [0, 0, 1, 1], [], []>} : vector<2x16xf32>, vector<16x256xf32>, vector<2x256xf32> -> vector<2x256xf32>
    %c11_128 = arith.constant 11 : index
    %c0_129 = arith.constant 0 : index
    %c0_130 = arith.constant 0 : index
    %179 = vector.load %arg4[%c11_128, %c0_129, %c0_130] : memref<16x2x256xf32, #tpu.memory_space<vmem>>, vector<1x2x256xf32>
    %180 = vector.shape_cast %179 : vector<1x2x256xf32> to vector<2x256xf32>
    %181 = vector.shape_cast %178 : vector<2x256xf32> to vector<1x2x256xf32>
    tpu.vector_store %arg4[%c11_128, %c0_129, %c0_130], %181 {strides = array<i32>} : memref<16x2x256xf32, #tpu.memory_space<vmem>>, vector<1x2x256xf32>,
    %c12 = arith.constant 12 : index
    %c0_131 = arith.constant 0 : index
    %c0_132 = arith.constant 0 : index
    %182 = vector.load %arg2[%c12, %c0_131, %c0_132] : memref<16x1x256xf32, #tpu.memory_space<vmem>>, vector<1x1x256xf32>
    %183 = vector.shape_cast %182 : vector<1x1x256xf32> to vector<1x256xf32>
    %184 = vector.broadcast %183 : vector<1x256xf32> to vector<16x256xf32>
    %185 = arith.subf %1, %184 : vector<16x256xf32>
    %186 = math.absf %185 : vector<16x256xf32>
    %cst_133 = arith.constant 1.000000e+00 : f32
    %187 = vector.broadcast %cst_133 : f32 to vector<16x256xf32>
    %188 = arith.subf %187, %186 : vector<16x256xf32>
    %cst_134 = arith.constant 0.000000e+00 : f32
    %189 = vector.broadcast %cst_134 : f32 to vector<16x256xf32>
    %190 = arith.maximumf %189, %188 : vector<16x256xf32>
    %c12_135 = arith.constant 12 : index
    %c0_136 = arith.constant 0 : index
    %c0_137 = arith.constant 0 : index
    %191 = vector.load %arg1[%c12_135, %c0_136, %c0_137] : memref<16x2x16xf32, #tpu.memory_space<vmem>>, vector<1x2x16xf32>
    %192 = vector.shape_cast %191 : vector<1x2x16xf32> to vector<2x16xf32>
    %cst_138 = arith.constant dense<0.000000e+00> : vector<2x256xf32>
    %193 = tpu.matmul %192, %190, %cst_138 {dimension_numbers = #tpu.dot_dimension_numbers<[1], [0], [0], [1], [0, 0, 1, 1], [], []>} : vector<2x16xf32>, vector<16x256xf32>, vector<2x256xf32> -> vector<2x256xf32>
    %c12_139 = arith.constant 12 : index
    %c0_140 = arith.constant 0 : index
    %c0_141 = arith.constant 0 : index
    %194 = vector.load %arg4[%c12_139, %c0_140, %c0_141] : memref<16x2x256xf32, #tpu.memory_space<vmem>>, vector<1x2x256xf32>
    %195 = vector.shape_cast %194 : vector<1x2x256xf32> to vector<2x256xf32>
    %196 = vector.shape_cast %193 : vector<2x256xf32> to vector<1x2x256xf32>
    tpu.vector_store %arg4[%c12_139, %c0_140, %c0_141], %196 {strides = array<i32>} : memref<16x2x256xf32, #tpu.memory_space<vmem>>, vector<1x2x256xf32>,
    %c13 = arith.constant 13 : index
    %c0_142 = arith.constant 0 : index
    %c0_143 = arith.constant 0 : index
    %197 = vector.load %arg2[%c13, %c0_142, %c0_143] : memref<16x1x256xf32, #tpu.memory_space<vmem>>, vector<1x1x256xf32>
    %198 = vector.shape_cast %197 : vector<1x1x256xf32> to vector<1x256xf32>
    %199 = vector.broadcast %198 : vector<1x256xf32> to vector<16x256xf32>
    %200 = arith.subf %1, %199 : vector<16x256xf32>
    %201 = math.absf %200 : vector<16x256xf32>
    %cst_144 = arith.constant 1.000000e+00 : f32
    %202 = vector.broadcast %cst_144 : f32 to vector<16x256xf32>
    %203 = arith.subf %202, %201 : vector<16x256xf32>
    %cst_145 = arith.constant 0.000000e+00 : f32
    %204 = vector.broadcast %cst_145 : f32 to vector<16x256xf32>
    %205 = arith.maximumf %204, %203 : vector<16x256xf32>
    %c13_146 = arith.constant 13 : index
    %c0_147 = arith.constant 0 : index
    %c0_148 = arith.constant 0 : index
    %206 = vector.load %arg1[%c13_146, %c0_147, %c0_148] : memref<16x2x16xf32, #tpu.memory_space<vmem>>, vector<1x2x16xf32>
    %207 = vector.shape_cast %206 : vector<1x2x16xf32> to vector<2x16xf32>
    %cst_149 = arith.constant dense<0.000000e+00> : vector<2x256xf32>
    %208 = tpu.matmul %207, %205, %cst_149 {dimension_numbers = #tpu.dot_dimension_numbers<[1], [0], [0], [1], [0, 0, 1, 1], [], []>} : vector<2x16xf32>, vector<16x256xf32>, vector<2x256xf32> -> vector<2x256xf32>
    %c13_150 = arith.constant 13 : index
    %c0_151 = arith.constant 0 : index
    %c0_152 = arith.constant 0 : index
    %209 = vector.load %arg4[%c13_150, %c0_151, %c0_152] : memref<16x2x256xf32, #tpu.memory_space<vmem>>, vector<1x2x256xf32>
    %210 = vector.shape_cast %209 : vector<1x2x256xf32> to vector<2x256xf32>
    %211 = vector.shape_cast %208 : vector<2x256xf32> to vector<1x2x256xf32>
    tpu.vector_store %arg4[%c13_150, %c0_151, %c0_152], %211 {strides = array<i32>} : memref<16x2x256xf32, #tpu.memory_space<vmem>>, vector<1x2x256xf32>,
    %c14 = arith.constant 14 : index
    %c0_153 = arith.constant 0 : index
    %c0_154 = arith.constant 0 : index
    %212 = vector.load %arg2[%c14, %c0_153, %c0_154] : memref<16x1x256xf32, #tpu.memory_space<vmem>>, vector<1x1x256xf32>
    %213 = vector.shape_cast %212 : vector<1x1x256xf32> to vector<1x256xf32>
    %214 = vector.broadcast %213 : vector<1x256xf32> to vector<16x256xf32>
    %215 = arith.subf %1, %214 : vector<16x256xf32>
    %216 = math.absf %215 : vector<16x256xf32>
    %cst_155 = arith.constant 1.000000e+00 : f32
    %217 = vector.broadcast %cst_155 : f32 to vector<16x256xf32>
    %218 = arith.subf %217, %216 : vector<16x256xf32>
    %cst_156 = arith.constant 0.000000e+00 : f32
    %219 = vector.broadcast %cst_156 : f32 to vector<16x256xf32>
    %220 = arith.maximumf %219, %218 : vector<16x256xf32>
    %c14_157 = arith.constant 14 : index
    %c0_158 = arith.constant 0 : index
    %c0_159 = arith.constant 0 : index
    %221 = vector.load %arg1[%c14_157, %c0_158, %c0_159] : memref<16x2x16xf32, #tpu.memory_space<vmem>>, vector<1x2x16xf32>
    %222 = vector.shape_cast %221 : vector<1x2x16xf32> to vector<2x16xf32>
    %cst_160 = arith.constant dense<0.000000e+00> : vector<2x256xf32>
    %223 = tpu.matmul %222, %220, %cst_160 {dimension_numbers = #tpu.dot_dimension_numbers<[1], [0], [0], [1], [0, 0, 1, 1], [], []>} : vector<2x16xf32>, vector<16x256xf32>, vector<2x256xf32> -> vector<2x256xf32>
    %c14_161 = arith.constant 14 : index
    %c0_162 = arith.constant 0 : index
    %c0_163 = arith.constant 0 : index
    %224 = vector.load %arg4[%c14_161, %c0_162, %c0_163] : memref<16x2x256xf32, #tpu.memory_space<vmem>>, vector<1x2x256xf32>
    %225 = vector.shape_cast %224 : vector<1x2x256xf32> to vector<2x256xf32>
    %226 = vector.shape_cast %223 : vector<2x256xf32> to vector<1x2x256xf32>
    tpu.vector_store %arg4[%c14_161, %c0_162, %c0_163], %226 {strides = array<i32>} : memref<16x2x256xf32, #tpu.memory_space<vmem>>, vector<1x2x256xf32>,
    %c15 = arith.constant 15 : index
    %c0_164 = arith.constant 0 : index
    %c0_165 = arith.constant 0 : index
    %227 = vector.load %arg2[%c15, %c0_164, %c0_165] : memref<16x1x256xf32, #tpu.memory_space<vmem>>, vector<1x1x256xf32>
    %228 = vector.shape_cast %227 : vector<1x1x256xf32> to vector<1x256xf32>
    %229 = vector.broadcast %228 : vector<1x256xf32> to vector<16x256xf32>
    %230 = arith.subf %1, %229 : vector<16x256xf32>
    %231 = math.absf %230 : vector<16x256xf32>
    %cst_166 = arith.constant 1.000000e+00 : f32
    %232 = vector.broadcast %cst_166 : f32 to vector<16x256xf32>
    %233 = arith.subf %232, %231 : vector<16x256xf32>
    %cst_167 = arith.constant 0.000000e+00 : f32
    %234 = vector.broadcast %cst_167 : f32 to vector<16x256xf32>
    %235 = arith.maximumf %234, %233 : vector<16x256xf32>
    %c15_168 = arith.constant 15 : index
    %c0_169 = arith.constant 0 : index
    %c0_170 = arith.constant 0 : index
    %236 = vector.load %arg1[%c15_168, %c0_169, %c0_170] : memref<16x2x16xf32, #tpu.memory_space<vmem>>, vector<1x2x16xf32>
    %237 = vector.shape_cast %236 : vector<1x2x16xf32> to vector<2x16xf32>
    %cst_171 = arith.constant dense<0.000000e+00> : vector<2x256xf32>
    %238 = tpu.matmul %237, %235, %cst_171 {dimension_numbers = #tpu.dot_dimension_numbers<[1], [0], [0], [1], [0, 0, 1, 1], [], []>} : vector<2x16xf32>, vector<16x256xf32>, vector<2x256xf32> -> vector<2x256xf32>
    %c15_172 = arith.constant 15 : index
    %c0_173 = arith.constant 0 : index
    %c0_174 = arith.constant 0 : index
    %239 = vector.load %arg4[%c15_172, %c0_173, %c0_174] : memref<16x2x256xf32, #tpu.memory_space<vmem>>, vector<1x2x256xf32>
    %240 = vector.shape_cast %239 : vector<1x2x256xf32> to vector<2x256xf32>
    %241 = vector.shape_cast %238 : vector<2x256xf32> to vector<1x2x256xf32>
    tpu.vector_store %arg4[%c15_172, %c0_173, %c0_174], %241 {strides = array<i32>} : memref<16x2x256xf32, #tpu.memory_space<vmem>>, vector<1x2x256xf32>,
    %c0_175 = arith.constant 0 : index
    %c0_176 = arith.constant 0 : index
    %c0_177 = arith.constant 0 : index
    %242 = vector.load %arg4[%c0_175, %c0_176, %c0_177] : memref<16x2x256xf32, #tpu.memory_space<vmem>>, vector<1x2x256xf32>
    %243 = vector.shape_cast %242 : vector<1x2x256xf32> to vector<2x256xf32>
    %c1_178 = arith.constant 1 : index
    %c0_179 = arith.constant 0 : index
    %c0_180 = arith.constant 0 : index
    %244 = vector.load %arg4[%c1_178, %c0_179, %c0_180] : memref<16x2x256xf32, #tpu.memory_space<vmem>>, vector<1x2x256xf32>
    %245 = vector.shape_cast %244 : vector<1x2x256xf32> to vector<2x256xf32>
    %246 = arith.minimumf %243, %245 : vector<2x256xf32>
    %247 = arith.maximumf %243, %245 : vector<2x256xf32>
    %c0_181 = arith.constant 0 : index
    %c0_182 = arith.constant 0 : index
    %c0_183 = arith.constant 0 : index
    %248 = vector.load %arg4[%c0_181, %c0_182, %c0_183] : memref<16x2x256xf32, #tpu.memory_space<vmem>>, vector<1x2x256xf32>
    %249 = vector.shape_cast %248 : vector<1x2x256xf32> to vector<2x256xf32>
    %250 = vector.shape_cast %246 : vector<2x256xf32> to vector<1x2x256xf32>
    tpu.vector_store %arg4[%c0_181, %c0_182, %c0_183], %250 {strides = array<i32>} : memref<16x2x256xf32, #tpu.memory_space<vmem>>, vector<1x2x256xf32>,
    %c1_184 = arith.constant 1 : index
    %c0_185 = arith.constant 0 : index
    %c0_186 = arith.constant 0 : index
    %251 = vector.load %arg4[%c1_184, %c0_185, %c0_186] : memref<16x2x256xf32, #tpu.memory_space<vmem>>, vector<1x2x256xf32>
    %252 = vector.shape_cast %251 : vector<1x2x256xf32> to vector<2x256xf32>
    %253 = vector.shape_cast %247 : vector<2x256xf32> to vector<1x2x256xf32>
    tpu.vector_store %arg4[%c1_184, %c0_185, %c0_186], %253 {strides = array<i32>} : memref<16x2x256xf32, #tpu.memory_space<vmem>>, vector<1x2x256xf32>,
    %c2_187 = arith.constant 2 : index
    %c0_188 = arith.constant 0 : index
    %c0_189 = arith.constant 0 : index
    %254 = vector.load %arg4[%c2_187, %c0_188, %c0_189] : memref<16x2x256xf32, #tpu.memory_space<vmem>>, vector<1x2x256xf32>
    %255 = vector.shape_cast %254 : vector<1x2x256xf32> to vector<2x256xf32>
    %c3_190 = arith.constant 3 : index
    %c0_191 = arith.constant 0 : index
    %c0_192 = arith.constant 0 : index
    %256 = vector.load %arg4[%c3_190, %c0_191, %c0_192] : memref<16x2x256xf32, #tpu.memory_space<vmem>>, vector<1x2x256xf32>
    %257 = vector.shape_cast %256 : vector<1x2x256xf32> to vector<2x256xf32>
    %258 = arith.minimumf %255, %257 : vector<2x256xf32>
    %259 = arith.maximumf %255, %257 : vector<2x256xf32>
    %c2_193 = arith.constant 2 : index
    %c0_194 = arith.constant 0 : index
    %c0_195 = arith.constant 0 : index
    %260 = vector.load %arg4[%c2_193, %c0_194, %c0_195] : memref<16x2x256xf32, #tpu.memory_space<vmem>>, vector<1x2x256xf32>
    %261 = vector.shape_cast %260 : vector<1x2x256xf32> to vector<2x256xf32>
    %262 = vector.shape_cast %259 : vector<2x256xf32> to vector<1x2x256xf32>
    tpu.vector_store %arg4[%c2_193, %c0_194, %c0_195], %262 {strides = array<i32>} : memref<16x2x256xf32, #tpu.memory_space<vmem>>, vector<1x2x256xf32>,
    %c3_196 = arith.constant 3 : index
    %c0_197 = arith.constant 0 : index
    %c0_198 = arith.constant 0 : index
    %263 = vector.load %arg4[%c3_196, %c0_197, %c0_198] : memref<16x2x256xf32, #tpu.memory_space<vmem>>, vector<1x2x256xf32>
    %264 = vector.shape_cast %263 : vector<1x2x256xf32> to vector<2x256xf32>
    %265 = vector.shape_cast %258 : vector<2x256xf32> to vector<1x2x256xf32>
    tpu.vector_store %arg4[%c3_196, %c0_197, %c0_198], %265 {strides = array<i32>} : memref<16x2x256xf32, #tpu.memory_space<vmem>>, vector<1x2x256xf32>,
    %c4_199 = arith.constant 4 : index
    %c0_200 = arith.constant 0 : index
    %c0_201 = arith.constant 0 : index
    %266 = vector.load %arg4[%c4_199, %c0_200, %c0_201] : memref<16x2x256xf32, #tpu.memory_space<vmem>>, vector<1x2x256xf32>
    %267 = vector.shape_cast %266 : vector<1x2x256xf32> to vector<2x256xf32>
    %c5_202 = arith.constant 5 : index
    %c0_203 = arith.constant 0 : index
    %c0_204 = arith.constant 0 : index
    %268 = vector.load %arg4[%c5_202, %c0_203, %c0_204] : memref<16x2x256xf32, #tpu.memory_space<vmem>>, vector<1x2x256xf32>
    %269 = vector.shape_cast %268 : vector<1x2x256xf32> to vector<2x256xf32>
    %270 = arith.minimumf %267, %269 : vector<2x256xf32>
    %271 = arith.maximumf %267, %269 : vector<2x256xf32>
    %c4_205 = arith.constant 4 : index
    %c0_206 = arith.constant 0 : index
    %c0_207 = arith.constant 0 : index
    %272 = vector.load %arg4[%c4_205, %c0_206, %c0_207] : memref<16x2x256xf32, #tpu.memory_space<vmem>>, vector<1x2x256xf32>
    %273 = vector.shape_cast %272 : vector<1x2x256xf32> to vector<2x256xf32>
    %274 = vector.shape_cast %270 : vector<2x256xf32> to vector<1x2x256xf32>
    tpu.vector_store %arg4[%c4_205, %c0_206, %c0_207], %274 {strides = array<i32>} : memref<16x2x256xf32, #tpu.memory_space<vmem>>, vector<1x2x256xf32>,
    %c5_208 = arith.constant 5 : index
    %c0_209 = arith.constant 0 : index
    %c0_210 = arith.constant 0 : index
    %275 = vector.load %arg4[%c5_208, %c0_209, %c0_210] : memref<16x2x256xf32, #tpu.memory_space<vmem>>, vector<1x2x256xf32>
    %276 = vector.shape_cast %275 : vector<1x2x256xf32> to vector<2x256xf32>
    %277 = vector.shape_cast %271 : vector<2x256xf32> to vector<1x2x256xf32>
    tpu.vector_store %arg4[%c5_208, %c0_209, %c0_210], %277 {strides = array<i32>} : memref<16x2x256xf32, #tpu.memory_space<vmem>>, vector<1x2x256xf32>,
    %c6_211 = arith.constant 6 : index
    %c0_212 = arith.constant 0 : index
    %c0_213 = arith.constant 0 : index
    %278 = vector.load %arg4[%c6_211, %c0_212, %c0_213] : memref<16x2x256xf32, #tpu.memory_space<vmem>>, vector<1x2x256xf32>
    %279 = vector.shape_cast %278 : vector<1x2x256xf32> to vector<2x256xf32>
    %c7_214 = arith.constant 7 : index
    %c0_215 = arith.constant 0 : index
    %c0_216 = arith.constant 0 : index
    %280 = vector.load %arg4[%c7_214, %c0_215, %c0_216] : memref<16x2x256xf32, #tpu.memory_space<vmem>>, vector<1x2x256xf32>
    %281 = vector.shape_cast %280 : vector<1x2x256xf32> to vector<2x256xf32>
    %282 = arith.minimumf %279, %281 : vector<2x256xf32>
    %283 = arith.maximumf %279, %281 : vector<2x256xf32>
    %c6_217 = arith.constant 6 : index
    %c0_218 = arith.constant 0 : index
    %c0_219 = arith.constant 0 : index
    %284 = vector.load %arg4[%c6_217, %c0_218, %c0_219] : memref<16x2x256xf32, #tpu.memory_space<vmem>>, vector<1x2x256xf32>
    %285 = vector.shape_cast %284 : vector<1x2x256xf32> to vector<2x256xf32>
    %286 = vector.shape_cast %283 : vector<2x256xf32> to vector<1x2x256xf32>
    tpu.vector_store %arg4[%c6_217, %c0_218, %c0_219], %286 {strides = array<i32>} : memref<16x2x256xf32, #tpu.memory_space<vmem>>, vector<1x2x256xf32>,
    %c7_220 = arith.constant 7 : index
    %c0_221 = arith.constant 0 : index
    %c0_222 = arith.constant 0 : index
    %287 = vector.load %arg4[%c7_220, %c0_221, %c0_222] : memref<16x2x256xf32, #tpu.memory_space<vmem>>, vector<1x2x256xf32>
    %288 = vector.shape_cast %287 : vector<1x2x256xf32> to vector<2x256xf32>
    %289 = vector.shape_cast %282 : vector<2x256xf32> to vector<1x2x256xf32>
    tpu.vector_store %arg4[%c7_220, %c0_221, %c0_222], %289 {strides = array<i32>} : memref<16x2x256xf32, #tpu.memory_space<vmem>>, vector<1x2x256xf32>,
    %c8_223 = arith.constant 8 : index
    %c0_224 = arith.constant 0 : index
    %c0_225 = arith.constant 0 : index
    %290 = vector.load %arg4[%c8_223, %c0_224, %c0_225] : memref<16x2x256xf32, #tpu.memory_space<vmem>>, vector<1x2x256xf32>
    %291 = vector.shape_cast %290 : vector<1x2x256xf32> to vector<2x256xf32>
    %c9_226 = arith.constant 9 : index
    %c0_227 = arith.constant 0 : index
    %c0_228 = arith.constant 0 : index
    %292 = vector.load %arg4[%c9_226, %c0_227, %c0_228] : memref<16x2x256xf32, #tpu.memory_space<vmem>>, vector<1x2x256xf32>
    %293 = vector.shape_cast %292 : vector<1x2x256xf32> to vector<2x256xf32>
    %294 = arith.minimumf %291, %293 : vector<2x256xf32>
    %295 = arith.maximumf %291, %293 : vector<2x256xf32>
    %c8_229 = arith.constant 8 : index
    %c0_230 = arith.constant 0 : index
    %c0_231 = arith.constant 0 : index
    %296 = vector.load %arg4[%c8_229, %c0_230, %c0_231] : memref<16x2x256xf32, #tpu.memory_space<vmem>>, vector<1x2x256xf32>
    %297 = vector.shape_cast %296 : vector<1x2x256xf32> to vector<2x256xf32>
    %298 = vector.shape_cast %294 : vector<2x256xf32> to vector<1x2x256xf32>
    tpu.vector_store %arg4[%c8_229, %c0_230, %c0_231], %298 {strides = array<i32>} : memref<16x2x256xf32, #tpu.memory_space<vmem>>, vector<1x2x256xf32>,
    %c9_232 = arith.constant 9 : index
    %c0_233 = arith.constant 0 : index
    %c0_234 = arith.constant 0 : index
    %299 = vector.load %arg4[%c9_232, %c0_233, %c0_234] : memref<16x2x256xf32, #tpu.memory_space<vmem>>, vector<1x2x256xf32>
    %300 = vector.shape_cast %299 : vector<1x2x256xf32> to vector<2x256xf32>
    %301 = vector.shape_cast %295 : vector<2x256xf32> to vector<1x2x256xf32>
    tpu.vector_store %arg4[%c9_232, %c0_233, %c0_234], %301 {strides = array<i32>} : memref<16x2x256xf32, #tpu.memory_space<vmem>>, vector<1x2x256xf32>,
    %c10_235 = arith.constant 10 : index
    %c0_236 = arith.constant 0 : index
    %c0_237 = arith.constant 0 : index
    %302 = vector.load %arg4[%c10_235, %c0_236, %c0_237] : memref<16x2x256xf32, #tpu.memory_space<vmem>>, vector<1x2x256xf32>
    %303 = vector.shape_cast %302 : vector<1x2x256xf32> to vector<2x256xf32>
    %c11_238 = arith.constant 11 : index
    %c0_239 = arith.constant 0 : index
    %c0_240 = arith.constant 0 : index
    %304 = vector.load %arg4[%c11_238, %c0_239, %c0_240] : memref<16x2x256xf32, #tpu.memory_space<vmem>>, vector<1x2x256xf32>
    %305 = vector.shape_cast %304 : vector<1x2x256xf32> to vector<2x256xf32>
    %306 = arith.minimumf %303, %305 : vector<2x256xf32>
    %307 = arith.maximumf %303, %305 : vector<2x256xf32>
    %c10_241 = arith.constant 10 : index
    %c0_242 = arith.constant 0 : index
    %c0_243 = arith.constant 0 : index
    %308 = vector.load %arg4[%c10_241, %c0_242, %c0_243] : memref<16x2x256xf32, #tpu.memory_space<vmem>>, vector<1x2x256xf32>
    %309 = vector.shape_cast %308 : vector<1x2x256xf32> to vector<2x256xf32>
    %310 = vector.shape_cast %307 : vector<2x256xf32> to vector<1x2x256xf32>
    tpu.vector_store %arg4[%c10_241, %c0_242, %c0_243], %310 {strides = array<i32>} : memref<16x2x256xf32, #tpu.memory_space<vmem>>, vector<1x2x256xf32>,
    %c11_244 = arith.constant 11 : index
    %c0_245 = arith.constant 0 : index
    %c0_246 = arith.constant 0 : index
    %311 = vector.load %arg4[%c11_244, %c0_245, %c0_246] : memref<16x2x256xf32, #tpu.memory_space<vmem>>, vector<1x2x256xf32>
    %312 = vector.shape_cast %311 : vector<1x2x256xf32> to vector<2x256xf32>
    %313 = vector.shape_cast %306 : vector<2x256xf32> to vector<1x2x256xf32>
    tpu.vector_store %arg4[%c11_244, %c0_245, %c0_246], %313 {strides = array<i32>} : memref<16x2x256xf32, #tpu.memory_space<vmem>>, vector<1x2x256xf32>,
    %c12_247 = arith.constant 12 : index
    %c0_248 = arith.constant 0 : index
    %c0_249 = arith.constant 0 : index
    %314 = vector.load %arg4[%c12_247, %c0_248, %c0_249] : memref<16x2x256xf32, #tpu.memory_space<vmem>>, vector<1x2x256xf32>
    %315 = vector.shape_cast %314 : vector<1x2x256xf32> to vector<2x256xf32>
    %c13_250 = arith.constant 13 : index
    %c0_251 = arith.constant 0 : index
    %c0_252 = arith.constant 0 : index
    %316 = vector.load %arg4[%c13_250, %c0_251, %c0_252] : memref<16x2x256xf32, #tpu.memory_space<vmem>>, vector<1x2x256xf32>
    %317 = vector.shape_cast %316 : vector<1x2x256xf32> to vector<2x256xf32>
    %318 = arith.minimumf %315, %317 : vector<2x256xf32>
    %319 = arith.maximumf %315, %317 : vector<2x256xf32>
    %c12_253 = arith.constant 12 : index
    %c0_254 = arith.constant 0 : index
    %c0_255 = arith.constant 0 : index
    %320 = vector.load %arg4[%c12_253, %c0_254, %c0_255] : memref<16x2x256xf32, #tpu.memory_space<vmem>>, vector<1x2x256xf32>
    %321 = vector.shape_cast %320 : vector<1x2x256xf32> to vector<2x256xf32>
    %322 = vector.shape_cast %318 : vector<2x256xf32> to vector<1x2x256xf32>
    tpu.vector_store %arg4[%c12_253, %c0_254, %c0_255], %322 {strides = array<i32>} : memref<16x2x256xf32, #tpu.memory_space<vmem>>, vector<1x2x256xf32>,
    %c13_256 = arith.constant 13 : index
    %c0_257 = arith.constant 0 : index
    %c0_258 = arith.constant 0 : index
    %323 = vector.load %arg4[%c13_256, %c0_257, %c0_258] : memref<16x2x256xf32, #tpu.memory_space<vmem>>, vector<1x2x256xf32>
    %324 = vector.shape_cast %323 : vector<1x2x256xf32> to vector<2x256xf32>
    %325 = vector.shape_cast %319 : vector<2x256xf32> to vector<1x2x256xf32>
    tpu.vector_store %arg4[%c13_256, %c0_257, %c0_258], %325 {strides = array<i32>} : memref<16x2x256xf32, #tpu.memory_space<vmem>>, vector<1x2x256xf32>,
    %c14_259 = arith.constant 14 : index
    %c0_260 = arith.constant 0 : index
    %c0_261 = arith.constant 0 : index
    %326 = vector.load %arg4[%c14_259, %c0_260, %c0_261] : memref<16x2x256xf32, #tpu.memory_space<vmem>>, vector<1x2x256xf32>
    %327 = vector.shape_cast %326 : vector<1x2x256xf32> to vector<2x256xf32>
    %c15_262 = arith.constant 15 : index
    %c0_263 = arith.constant 0 : index
    %c0_264 = arith.constant 0 : index
    %328 = vector.load %arg4[%c15_262, %c0_263, %c0_264] : memref<16x2x256xf32, #tpu.memory_space<vmem>>, vector<1x2x256xf32>
    %329 = vector.shape_cast %328 : vector<1x2x256xf32> to vector<2x256xf32>
    %330 = arith.minimumf %327, %329 : vector<2x256xf32>
    %331 = arith.maximumf %327, %329 : vector<2x256xf32>
    %c14_265 = arith.constant 14 : index
    %c0_266 = arith.constant 0 : index
    %c0_267 = arith.constant 0 : index
    %332 = vector.load %arg4[%c14_265, %c0_266, %c0_267] : memref<16x2x256xf32, #tpu.memory_space<vmem>>, vector<1x2x256xf32>
    %333 = vector.shape_cast %332 : vector<1x2x256xf32> to vector<2x256xf32>
    %334 = vector.shape_cast %331 : vector<2x256xf32> to vector<1x2x256xf32>
    tpu.vector_store %arg4[%c14_265, %c0_266, %c0_267], %334 {strides = array<i32>} : memref<16x2x256xf32, #tpu.memory_space<vmem>>, vector<1x2x256xf32>,
    %c15_268 = arith.constant 15 : index
    %c0_269 = arith.constant 0 : index
    %c0_270 = arith.constant 0 : index
    %335 = vector.load %arg4[%c15_268, %c0_269, %c0_270] : memref<16x2x256xf32, #tpu.memory_space<vmem>>, vector<1x2x256xf32>
    %336 = vector.shape_cast %335 : vector<1x2x256xf32> to vector<2x256xf32>
    %337 = vector.shape_cast %330 : vector<2x256xf32> to vector<1x2x256xf32>
    tpu.vector_store %arg4[%c15_268, %c0_269, %c0_270], %337 {strides = array<i32>} : memref<16x2x256xf32, #tpu.memory_space<vmem>>, vector<1x2x256xf32>,
    %c0_271 = arith.constant 0 : index
    %c0_272 = arith.constant 0 : index
    %c0_273 = arith.constant 0 : index
    %338 = vector.load %arg4[%c0_271, %c0_272, %c0_273] : memref<16x2x256xf32, #tpu.memory_space<vmem>>, vector<1x2x256xf32>
    %339 = vector.shape_cast %338 : vector<1x2x256xf32> to vector<2x256xf32>
    %c2_274 = arith.constant 2 : index
    %c0_275 = arith.constant 0 : index
    %c0_276 = arith.constant 0 : index
    %340 = vector.load %arg4[%c2_274, %c0_275, %c0_276] : memref<16x2x256xf32, #tpu.memory_space<vmem>>, vector<1x2x256xf32>
    %341 = vector.shape_cast %340 : vector<1x2x256xf32> to vector<2x256xf32>
    %342 = arith.minimumf %339, %341 : vector<2x256xf32>
    %343 = arith.maximumf %339, %341 : vector<2x256xf32>
    %c0_277 = arith.constant 0 : index
    %c0_278 = arith.constant 0 : index
    %c0_279 = arith.constant 0 : index
    %344 = vector.load %arg4[%c0_277, %c0_278, %c0_279] : memref<16x2x256xf32, #tpu.memory_space<vmem>>, vector<1x2x256xf32>
    %345 = vector.shape_cast %344 : vector<1x2x256xf32> to vector<2x256xf32>
    %346 = vector.shape_cast %342 : vector<2x256xf32> to vector<1x2x256xf32>
    tpu.vector_store %arg4[%c0_277, %c0_278, %c0_279], %346 {strides = array<i32>} : memref<16x2x256xf32, #tpu.memory_space<vmem>>, vector<1x2x256xf32>,
    %c2_280 = arith.constant 2 : index
    %c0_281 = arith.constant 0 : index
    %c0_282 = arith.constant 0 : index
    %347 = vector.load %arg4[%c2_280, %c0_281, %c0_282] : memref<16x2x256xf32, #tpu.memory_space<vmem>>, vector<1x2x256xf32>
    %348 = vector.shape_cast %347 : vector<1x2x256xf32> to vector<2x256xf32>
    %349 = vector.shape_cast %343 : vector<2x256xf32> to vector<1x2x256xf32>
    tpu.vector_store %arg4[%c2_280, %c0_281, %c0_282], %349 {strides = array<i32>} : memref<16x2x256xf32, #tpu.memory_space<vmem>>, vector<1x2x256xf32>,
    %c1_283 = arith.constant 1 : index
    %c0_284 = arith.constant 0 : index
    %c0_285 = arith.constant 0 : index
    %350 = vector.load %arg4[%c1_283, %c0_284, %c0_285] : memref<16x2x256xf32, #tpu.memory_space<vmem>>, vector<1x2x256xf32>
    %351 = vector.shape_cast %350 : vector<1x2x256xf32> to vector<2x256xf32>
    %c3_286 = arith.constant 3 : index
    %c0_287 = arith.constant 0 : index
    %c0_288 = arith.constant 0 : index
    %352 = vector.load %arg4[%c3_286, %c0_287, %c0_288] : memref<16x2x256xf32, #tpu.memory_space<vmem>>, vector<1x2x256xf32>
    %353 = vector.shape_cast %352 : vector<1x2x256xf32> to vector<2x256xf32>
    %354 = arith.minimumf %351, %353 : vector<2x256xf32>
    %355 = arith.maximumf %351, %353 : vector<2x256xf32>
    %c1_289 = arith.constant 1 : index
    %c0_290 = arith.constant 0 : index
    %c0_291 = arith.constant 0 : index
    %356 = vector.load %arg4[%c1_289, %c0_290, %c0_291] : memref<16x2x256xf32, #tpu.memory_space<vmem>>, vector<1x2x256xf32>
    %357 = vector.shape_cast %356 : vector<1x2x256xf32> to vector<2x256xf32>
    %358 = vector.shape_cast %354 : vector<2x256xf32> to vector<1x2x256xf32>
    tpu.vector_store %arg4[%c1_289, %c0_290, %c0_291], %358 {strides = array<i32>} : memref<16x2x256xf32, #tpu.memory_space<vmem>>, vector<1x2x256xf32>,
    %c3_292 = arith.constant 3 : index
    %c0_293 = arith.constant 0 : index
    %c0_294 = arith.constant 0 : index
    %359 = vector.load %arg4[%c3_292, %c0_293, %c0_294] : memref<16x2x256xf32, #tpu.memory_space<vmem>>, vector<1x2x256xf32>
    %360 = vector.shape_cast %359 : vector<1x2x256xf32> to vector<2x256xf32>
    %361 = vector.shape_cast %355 : vector<2x256xf32> to vector<1x2x256xf32>
    tpu.vector_store %arg4[%c3_292, %c0_293, %c0_294], %361 {strides = array<i32>} : memref<16x2x256xf32, #tpu.memory_space<vmem>>, vector<1x2x256xf32>,
    %c4_295 = arith.constant 4 : index
    %c0_296 = arith.constant 0 : index
    %c0_297 = arith.constant 0 : index
    %362 = vector.load %arg4[%c4_295, %c0_296, %c0_297] : memref<16x2x256xf32, #tpu.memory_space<vmem>>, vector<1x2x256xf32>
    %363 = vector.shape_cast %362 : vector<1x2x256xf32> to vector<2x256xf32>
    %c6_298 = arith.constant 6 : index
    %c0_299 = arith.constant 0 : index
    %c0_300 = arith.constant 0 : index
    %364 = vector.load %arg4[%c6_298, %c0_299, %c0_300] : memref<16x2x256xf32, #tpu.memory_space<vmem>>, vector<1x2x256xf32>
    %365 = vector.shape_cast %364 : vector<1x2x256xf32> to vector<2x256xf32>
    %366 = arith.minimumf %363, %365 : vector<2x256xf32>
    %367 = arith.maximumf %363, %365 : vector<2x256xf32>
    %c4_301 = arith.constant 4 : index
    %c0_302 = arith.constant 0 : index
    %c0_303 = arith.constant 0 : index
    %368 = vector.load %arg4[%c4_301, %c0_302, %c0_303] : memref<16x2x256xf32, #tpu.memory_space<vmem>>, vector<1x2x256xf32>
    %369 = vector.shape_cast %368 : vector<1x2x256xf32> to vector<2x256xf32>
    %370 = vector.shape_cast %367 : vector<2x256xf32> to vector<1x2x256xf32>
    tpu.vector_store %arg4[%c4_301, %c0_302, %c0_303], %370 {strides = array<i32>} : memref<16x2x256xf32, #tpu.memory_space<vmem>>, vector<1x2x256xf32>,
    %c6_304 = arith.constant 6 : index
    %c0_305 = arith.constant 0 : index
    %c0_306 = arith.constant 0 : index
    %371 = vector.load %arg4[%c6_304, %c0_305, %c0_306] : memref<16x2x256xf32, #tpu.memory_space<vmem>>, vector<1x2x256xf32>
    %372 = vector.shape_cast %371 : vector<1x2x256xf32> to vector<2x256xf32>
    %373 = vector.shape_cast %366 : vector<2x256xf32> to vector<1x2x256xf32>
    tpu.vector_store %arg4[%c6_304, %c0_305, %c0_306], %373 {strides = array<i32>} : memref<16x2x256xf32, #tpu.memory_space<vmem>>, vector<1x2x256xf32>,
    %c5_307 = arith.constant 5 : index
    %c0_308 = arith.constant 0 : index
    %c0_309 = arith.constant 0 : index
    %374 = vector.load %arg4[%c5_307, %c0_308, %c0_309] : memref<16x2x256xf32, #tpu.memory_space<vmem>>, vector<1x2x256xf32>
    %375 = vector.shape_cast %374 : vector<1x2x256xf32> to vector<2x256xf32>
    %c7_310 = arith.constant 7 : index
    %c0_311 = arith.constant 0 : index
    %c0_312 = arith.constant 0 : index
    %376 = vector.load %arg4[%c7_310, %c0_311, %c0_312] : memref<16x2x256xf32, #tpu.memory_space<vmem>>, vector<1x2x256xf32>
    %377 = vector.shape_cast %376 : vector<1x2x256xf32> to vector<2x256xf32>
    %378 = arith.minimumf %375, %377 : vector<2x256xf32>
    %379 = arith.maximumf %375, %377 : vector<2x256xf32>
    %c5_313 = arith.constant 5 : index
    %c0_314 = arith.constant 0 : index
    %c0_315 = arith.constant 0 : index
    %380 = vector.load %arg4[%c5_313, %c0_314, %c0_315] : memref<16x2x256xf32, #tpu.memory_space<vmem>>, vector<1x2x256xf32>
    %381 = vector.shape_cast %380 : vector<1x2x256xf32> to vector<2x256xf32>
    %382 = vector.shape_cast %379 : vector<2x256xf32> to vector<1x2x256xf32>
    tpu.vector_store %arg4[%c5_313, %c0_314, %c0_315], %382 {strides = array<i32>} : memref<16x2x256xf32, #tpu.memory_space<vmem>>, vector<1x2x256xf32>,
    %c7_316 = arith.constant 7 : index
    %c0_317 = arith.constant 0 : index
    %c0_318 = arith.constant 0 : index
    %383 = vector.load %arg4[%c7_316, %c0_317, %c0_318] : memref<16x2x256xf32, #tpu.memory_space<vmem>>, vector<1x2x256xf32>
    %384 = vector.shape_cast %383 : vector<1x2x256xf32> to vector<2x256xf32>
    %385 = vector.shape_cast %378 : vector<2x256xf32> to vector<1x2x256xf32>
    tpu.vector_store %arg4[%c7_316, %c0_317, %c0_318], %385 {strides = array<i32>} : memref<16x2x256xf32, #tpu.memory_space<vmem>>, vector<1x2x256xf32>,
    %c8_319 = arith.constant 8 : index
    %c0_320 = arith.constant 0 : index
    %c0_321 = arith.constant 0 : index
    %386 = vector.load %arg4[%c8_319, %c0_320, %c0_321] : memref<16x2x256xf32, #tpu.memory_space<vmem>>, vector<1x2x256xf32>
    %387 = vector.shape_cast %386 : vector<1x2x256xf32> to vector<2x256xf32>
    %c10_322 = arith.constant 10 : index
    %c0_323 = arith.constant 0 : index
    %c0_324 = arith.constant 0 : index
    %388 = vector.load %arg4[%c10_322, %c0_323, %c0_324] : memref<16x2x256xf32, #tpu.memory_space<vmem>>, vector<1x2x256xf32>
    %389 = vector.shape_cast %388 : vector<1x2x256xf32> to vector<2x256xf32>
    %390 = arith.minimumf %387, %389 : vector<2x256xf32>
    %391 = arith.maximumf %387, %389 : vector<2x256xf32>
    %c8_325 = arith.constant 8 : index
    %c0_326 = arith.constant 0 : index
    %c0_327 = arith.constant 0 : index
    %392 = vector.load %arg4[%c8_325, %c0_326, %c0_327] : memref<16x2x256xf32, #tpu.memory_space<vmem>>, vector<1x2x256xf32>
    %393 = vector.shape_cast %392 : vector<1x2x256xf32> to vector<2x256xf32>
    %394 = vector.shape_cast %390 : vector<2x256xf32> to vector<1x2x256xf32>
    tpu.vector_store %arg4[%c8_325, %c0_326, %c0_327], %394 {strides = array<i32>} : memref<16x2x256xf32, #tpu.memory_space<vmem>>, vector<1x2x256xf32>,
    %c10_328 = arith.constant 10 : index
    %c0_329 = arith.constant 0 : index
    %c0_330 = arith.constant 0 : index
    %395 = vector.load %arg4[%c10_328, %c0_329, %c0_330] : memref<16x2x256xf32, #tpu.memory_space<vmem>>, vector<1x2x256xf32>
    %396 = vector.shape_cast %395 : vector<1x2x256xf32> to vector<2x256xf32>
    %397 = vector.shape_cast %391 : vector<2x256xf32> to vector<1x2x256xf32>
    tpu.vector_store %arg4[%c10_328, %c0_329, %c0_330], %397 {strides = array<i32>} : memref<16x2x256xf32, #tpu.memory_space<vmem>>, vector<1x2x256xf32>,
    %c9_331 = arith.constant 9 : index
    %c0_332 = arith.constant 0 : index
    %c0_333 = arith.constant 0 : index
    %398 = vector.load %arg4[%c9_331, %c0_332, %c0_333] : memref<16x2x256xf32, #tpu.memory_space<vmem>>, vector<1x2x256xf32>
    %399 = vector.shape_cast %398 : vector<1x2x256xf32> to vector<2x256xf32>
    %c11_334 = arith.constant 11 : index
    %c0_335 = arith.constant 0 : index
    %c0_336 = arith.constant 0 : index
    %400 = vector.load %arg4[%c11_334, %c0_335, %c0_336] : memref<16x2x256xf32, #tpu.memory_space<vmem>>, vector<1x2x256xf32>
    %401 = vector.shape_cast %400 : vector<1x2x256xf32> to vector<2x256xf32>
    %402 = arith.minimumf %399, %401 : vector<2x256xf32>
    %403 = arith.maximumf %399, %401 : vector<2x256xf32>
    %c9_337 = arith.constant 9 : index
    %c0_338 = arith.constant 0 : index
    %c0_339 = arith.constant 0 : index
    %404 = vector.load %arg4[%c9_337, %c0_338, %c0_339] : memref<16x2x256xf32, #tpu.memory_space<vmem>>, vector<1x2x256xf32>
    %405 = vector.shape_cast %404 : vector<1x2x256xf32> to vector<2x256xf32>
    %406 = vector.shape_cast %402 : vector<2x256xf32> to vector<1x2x256xf32>
    tpu.vector_store %arg4[%c9_337, %c0_338, %c0_339], %406 {strides = array<i32>} : memref<16x2x256xf32, #tpu.memory_space<vmem>>, vector<1x2x256xf32>,
    %c11_340 = arith.constant 11 : index
    %c0_341 = arith.constant 0 : index
    %c0_342 = arith.constant 0 : index
    %407 = vector.load %arg4[%c11_340, %c0_341, %c0_342] : memref<16x2x256xf32, #tpu.memory_space<vmem>>, vector<1x2x256xf32>
    %408 = vector.shape_cast %407 : vector<1x2x256xf32> to vector<2x256xf32>
    %409 = vector.shape_cast %403 : vector<2x256xf32> to vector<1x2x256xf32>
    tpu.vector_store %arg4[%c11_340, %c0_341, %c0_342], %409 {strides = array<i32>} : memref<16x2x256xf32, #tpu.memory_space<vmem>>, vector<1x2x256xf32>,
    %c12_343 = arith.constant 12 : index
    %c0_344 = arith.constant 0 : index
    %c0_345 = arith.constant 0 : index
    %410 = vector.load %arg4[%c12_343, %c0_344, %c0_345] : memref<16x2x256xf32, #tpu.memory_space<vmem>>, vector<1x2x256xf32>
    %411 = vector.shape_cast %410 : vector<1x2x256xf32> to vector<2x256xf32>
    %c14_346 = arith.constant 14 : index
    %c0_347 = arith.constant 0 : index
    %c0_348 = arith.constant 0 : index
    %412 = vector.load %arg4[%c14_346, %c0_347, %c0_348] : memref<16x2x256xf32, #tpu.memory_space<vmem>>, vector<1x2x256xf32>
    %413 = vector.shape_cast %412 : vector<1x2x256xf32> to vector<2x256xf32>
    %414 = arith.minimumf %411, %413 : vector<2x256xf32>
    %415 = arith.maximumf %411, %413 : vector<2x256xf32>
    %c12_349 = arith.constant 12 : index
    %c0_350 = arith.constant 0 : index
    %c0_351 = arith.constant 0 : index
    %416 = vector.load %arg4[%c12_349, %c0_350, %c0_351] : memref<16x2x256xf32, #tpu.memory_space<vmem>>, vector<1x2x256xf32>
    %417 = vector.shape_cast %416 : vector<1x2x256xf32> to vector<2x256xf32>
    %418 = vector.shape_cast %415 : vector<2x256xf32> to vector<1x2x256xf32>
    tpu.vector_store %arg4[%c12_349, %c0_350, %c0_351], %418 {strides = array<i32>} : memref<16x2x256xf32, #tpu.memory_space<vmem>>, vector<1x2x256xf32>,
    %c14_352 = arith.constant 14 : index
    %c0_353 = arith.constant 0 : index
    %c0_354 = arith.constant 0 : index
    %419 = vector.load %arg4[%c14_352, %c0_353, %c0_354] : memref<16x2x256xf32, #tpu.memory_space<vmem>>, vector<1x2x256xf32>
    %420 = vector.shape_cast %419 : vector<1x2x256xf32> to vector<2x256xf32>
    %421 = vector.shape_cast %414 : vector<2x256xf32> to vector<1x2x256xf32>
    tpu.vector_store %arg4[%c14_352, %c0_353, %c0_354], %421 {strides = array<i32>} : memref<16x2x256xf32, #tpu.memory_space<vmem>>, vector<1x2x256xf32>,
    %c13_355 = arith.constant 13 : index
    %c0_356 = arith.constant 0 : index
    %c0_357 = arith.constant 0 : index
    %422 = vector.load %arg4[%c13_355, %c0_356, %c0_357] : memref<16x2x256xf32, #tpu.memory_space<vmem>>, vector<1x2x256xf32>
    %423 = vector.shape_cast %422 : vector<1x2x256xf32> to vector<2x256xf32>
    %c15_358 = arith.constant 15 : index
    %c0_359 = arith.constant 0 : index
    %c0_360 = arith.constant 0 : index
    %424 = vector.load %arg4[%c15_358, %c0_359, %c0_360] : memref<16x2x256xf32, #tpu.memory_space<vmem>>, vector<1x2x256xf32>
    %425 = vector.shape_cast %424 : vector<1x2x256xf32> to vector<2x256xf32>
    %426 = arith.minimumf %423, %425 : vector<2x256xf32>
    %427 = arith.maximumf %423, %425 : vector<2x256xf32>
    %c13_361 = arith.constant 13 : index
    %c0_362 = arith.constant 0 : index
    %c0_363 = arith.constant 0 : index
    %428 = vector.load %arg4[%c13_361, %c0_362, %c0_363] : memref<16x2x256xf32, #tpu.memory_space<vmem>>, vector<1x2x256xf32>
    %429 = vector.shape_cast %428 : vector<1x2x256xf32> to vector<2x256xf32>
    %430 = vector.shape_cast %427 : vector<2x256xf32> to vector<1x2x256xf32>
    tpu.vector_store %arg4[%c13_361, %c0_362, %c0_363], %430 {strides = array<i32>} : memref<16x2x256xf32, #tpu.memory_space<vmem>>, vector<1x2x256xf32>,
    %c15_364 = arith.constant 15 : index
    %c0_365 = arith.constant 0 : index
    %c0_366 = arith.constant 0 : index
    %431 = vector.load %arg4[%c15_364, %c0_365, %c0_366] : memref<16x2x256xf32, #tpu.memory_space<vmem>>, vector<1x2x256xf32>
    %432 = vector.shape_cast %431 : vector<1x2x256xf32> to vector<2x256xf32>
    %433 = vector.shape_cast %426 : vector<2x256xf32> to vector<1x2x256xf32>
    tpu.vector_store %arg4[%c15_364, %c0_365, %c0_366], %433 {strides = array<i32>} : memref<16x2x256xf32, #tpu.memory_space<vmem>>, vector<1x2x256xf32>,
    %c0_367 = arith.constant 0 : index
    %c0_368 = arith.constant 0 : index
    %c0_369 = arith.constant 0 : index
    %434 = vector.load %arg4[%c0_367, %c0_368, %c0_369] : memref<16x2x256xf32, #tpu.memory_space<vmem>>, vector<1x2x256xf32>
    %435 = vector.shape_cast %434 : vector<1x2x256xf32> to vector<2x256xf32>
    %c1_370 = arith.constant 1 : index
    %c0_371 = arith.constant 0 : index
    %c0_372 = arith.constant 0 : index
    %436 = vector.load %arg4[%c1_370, %c0_371, %c0_372] : memref<16x2x256xf32, #tpu.memory_space<vmem>>, vector<1x2x256xf32>
    %437 = vector.shape_cast %436 : vector<1x2x256xf32> to vector<2x256xf32>
    %438 = arith.minimumf %435, %437 : vector<2x256xf32>
    %439 = arith.maximumf %435, %437 : vector<2x256xf32>
    %c0_373 = arith.constant 0 : index
    %c0_374 = arith.constant 0 : index
    %c0_375 = arith.constant 0 : index
    %440 = vector.load %arg4[%c0_373, %c0_374, %c0_375] : memref<16x2x256xf32, #tpu.memory_space<vmem>>, vector<1x2x256xf32>
    %441 = vector.shape_cast %440 : vector<1x2x256xf32> to vector<2x256xf32>
    %442 = vector.shape_cast %438 : vector<2x256xf32> to vector<1x2x256xf32>
    tpu.vector_store %arg4[%c0_373, %c0_374, %c0_375], %442 {strides = array<i32>} : memref<16x2x256xf32, #tpu.memory_space<vmem>>, vector<1x2x256xf32>,
    %c1_376 = arith.constant 1 : index
    %c0_377 = arith.constant 0 : index
    %c0_378 = arith.constant 0 : index
    %443 = vector.load %arg4[%c1_376, %c0_377, %c0_378] : memref<16x2x256xf32, #tpu.memory_space<vmem>>, vector<1x2x256xf32>
    %444 = vector.shape_cast %443 : vector<1x2x256xf32> to vector<2x256xf32>
    %445 = vector.shape_cast %439 : vector<2x256xf32> to vector<1x2x256xf32>
    tpu.vector_store %arg4[%c1_376, %c0_377, %c0_378], %445 {strides = array<i32>} : memref<16x2x256xf32, #tpu.memory_space<vmem>>, vector<1x2x256xf32>,
    %c2_379 = arith.constant 2 : index
    %c0_380 = arith.constant 0 : index
    %c0_381 = arith.constant 0 : index
    %446 = vector.load %arg4[%c2_379, %c0_380, %c0_381] : memref<16x2x256xf32, #tpu.memory_space<vmem>>, vector<1x2x256xf32>
    %447 = vector.shape_cast %446 : vector<1x2x256xf32> to vector<2x256xf32>
    %c3_382 = arith.constant 3 : index
    %c0_383 = arith.constant 0 : index
    %c0_384 = arith.constant 0 : index
    %448 = vector.load %arg4[%c3_382, %c0_383, %c0_384] : memref<16x2x256xf32, #tpu.memory_space<vmem>>, vector<1x2x256xf32>
    %449 = vector.shape_cast %448 : vector<1x2x256xf32> to vector<2x256xf32>
    %450 = arith.minimumf %447, %449 : vector<2x256xf32>
    %451 = arith.maximumf %447, %449 : vector<2x256xf32>
    %c2_385 = arith.constant 2 : index
    %c0_386 = arith.constant 0 : index
    %c0_387 = arith.constant 0 : index
    %452 = vector.load %arg4[%c2_385, %c0_386, %c0_387] : memref<16x2x256xf32, #tpu.memory_space<vmem>>, vector<1x2x256xf32>
    %453 = vector.shape_cast %452 : vector<1x2x256xf32> to vector<2x256xf32>
    %454 = vector.shape_cast %450 : vector<2x256xf32> to vector<1x2x256xf32>
    tpu.vector_store %arg4[%c2_385, %c0_386, %c0_387], %454 {strides = array<i32>} : memref<16x2x256xf32, #tpu.memory_space<vmem>>, vector<1x2x256xf32>,
    %c3_388 = arith.constant 3 : index
    %c0_389 = arith.constant 0 : index
    %c0_390 = arith.constant 0 : index
    %455 = vector.load %arg4[%c3_388, %c0_389, %c0_390] : memref<16x2x256xf32, #tpu.memory_space<vmem>>, vector<1x2x256xf32>
    %456 = vector.shape_cast %455 : vector<1x2x256xf32> to vector<2x256xf32>
    %457 = vector.shape_cast %451 : vector<2x256xf32> to vector<1x2x256xf32>
    tpu.vector_store %arg4[%c3_388, %c0_389, %c0_390], %457 {strides = array<i32>} : memref<16x2x256xf32, #tpu.memory_space<vmem>>, vector<1x2x256xf32>,
    %c4_391 = arith.constant 4 : index
    %c0_392 = arith.constant 0 : index
    %c0_393 = arith.constant 0 : index
    %458 = vector.load %arg4[%c4_391, %c0_392, %c0_393] : memref<16x2x256xf32, #tpu.memory_space<vmem>>, vector<1x2x256xf32>
    %459 = vector.shape_cast %458 : vector<1x2x256xf32> to vector<2x256xf32>
    %c5_394 = arith.constant 5 : index
    %c0_395 = arith.constant 0 : index
    %c0_396 = arith.constant 0 : index
    %460 = vector.load %arg4[%c5_394, %c0_395, %c0_396] : memref<16x2x256xf32, #tpu.memory_space<vmem>>, vector<1x2x256xf32>
    %461 = vector.shape_cast %460 : vector<1x2x256xf32> to vector<2x256xf32>
    %462 = arith.minimumf %459, %461 : vector<2x256xf32>
    %463 = arith.maximumf %459, %461 : vector<2x256xf32>
    %c4_397 = arith.constant 4 : index
    %c0_398 = arith.constant 0 : index
    %c0_399 = arith.constant 0 : index
    %464 = vector.load %arg4[%c4_397, %c0_398, %c0_399] : memref<16x2x256xf32, #tpu.memory_space<vmem>>, vector<1x2x256xf32>
    %465 = vector.shape_cast %464 : vector<1x2x256xf32> to vector<2x256xf32>
    %466 = vector.shape_cast %463 : vector<2x256xf32> to vector<1x2x256xf32>
    tpu.vector_store %arg4[%c4_397, %c0_398, %c0_399], %466 {strides = array<i32>} : memref<16x2x256xf32, #tpu.memory_space<vmem>>, vector<1x2x256xf32>,
    %c5_400 = arith.constant 5 : index
    %c0_401 = arith.constant 0 : index
    %c0_402 = arith.constant 0 : index
    %467 = vector.load %arg4[%c5_400, %c0_401, %c0_402] : memref<16x2x256xf32, #tpu.memory_space<vmem>>, vector<1x2x256xf32>
    %468 = vector.shape_cast %467 : vector<1x2x256xf32> to vector<2x256xf32>
    %469 = vector.shape_cast %462 : vector<2x256xf32> to vector<1x2x256xf32>
    tpu.vector_store %arg4[%c5_400, %c0_401, %c0_402], %469 {strides = array<i32>} : memref<16x2x256xf32, #tpu.memory_space<vmem>>, vector<1x2x256xf32>,
    %c6_403 = arith.constant 6 : index
    %c0_404 = arith.constant 0 : index
    %c0_405 = arith.constant 0 : index
    %470 = vector.load %arg4[%c6_403, %c0_404, %c0_405] : memref<16x2x256xf32, #tpu.memory_space<vmem>>, vector<1x2x256xf32>
    %471 = vector.shape_cast %470 : vector<1x2x256xf32> to vector<2x256xf32>
    %c7_406 = arith.constant 7 : index
    %c0_407 = arith.constant 0 : index
    %c0_408 = arith.constant 0 : index
    %472 = vector.load %arg4[%c7_406, %c0_407, %c0_408] : memref<16x2x256xf32, #tpu.memory_space<vmem>>, vector<1x2x256xf32>
    %473 = vector.shape_cast %472 : vector<1x2x256xf32> to vector<2x256xf32>
    %474 = arith.minimumf %471, %473 : vector<2x256xf32>
    %475 = arith.maximumf %471, %473 : vector<2x256xf32>
    %c6_409 = arith.constant 6 : index
    %c0_410 = arith.constant 0 : index
    %c0_411 = arith.constant 0 : index
    %476 = vector.load %arg4[%c6_409, %c0_410, %c0_411] : memref<16x2x256xf32, #tpu.memory_space<vmem>>, vector<1x2x256xf32>
    %477 = vector.shape_cast %476 : vector<1x2x256xf32> to vector<2x256xf32>
    %478 = vector.shape_cast %475 : vector<2x256xf32> to vector<1x2x256xf32>
    tpu.vector_store %arg4[%c6_409, %c0_410, %c0_411], %478 {strides = array<i32>} : memref<16x2x256xf32, #tpu.memory_space<vmem>>, vector<1x2x256xf32>,
    %c7_412 = arith.constant 7 : index
    %c0_413 = arith.constant 0 : index
    %c0_414 = arith.constant 0 : index
    %479 = vector.load %arg4[%c7_412, %c0_413, %c0_414] : memref<16x2x256xf32, #tpu.memory_space<vmem>>, vector<1x2x256xf32>
    %480 = vector.shape_cast %479 : vector<1x2x256xf32> to vector<2x256xf32>
    %481 = vector.shape_cast %474 : vector<2x256xf32> to vector<1x2x256xf32>
    tpu.vector_store %arg4[%c7_412, %c0_413, %c0_414], %481 {strides = array<i32>} : memref<16x2x256xf32, #tpu.memory_space<vmem>>, vector<1x2x256xf32>,
    %c8_415 = arith.constant 8 : index
    %c0_416 = arith.constant 0 : index
    %c0_417 = arith.constant 0 : index
    %482 = vector.load %arg4[%c8_415, %c0_416, %c0_417] : memref<16x2x256xf32, #tpu.memory_space<vmem>>, vector<1x2x256xf32>
    %483 = vector.shape_cast %482 : vector<1x2x256xf32> to vector<2x256xf32>
    %c9_418 = arith.constant 9 : index
    %c0_419 = arith.constant 0 : index
    %c0_420 = arith.constant 0 : index
    %484 = vector.load %arg4[%c9_418, %c0_419, %c0_420] : memref<16x2x256xf32, #tpu.memory_space<vmem>>, vector<1x2x256xf32>
    %485 = vector.shape_cast %484 : vector<1x2x256xf32> to vector<2x256xf32>
    %486 = arith.minimumf %483, %485 : vector<2x256xf32>
    %487 = arith.maximumf %483, %485 : vector<2x256xf32>
    %c8_421 = arith.constant 8 : index
    %c0_422 = arith.constant 0 : index
    %c0_423 = arith.constant 0 : index
    %488 = vector.load %arg4[%c8_421, %c0_422, %c0_423] : memref<16x2x256xf32, #tpu.memory_space<vmem>>, vector<1x2x256xf32>
    %489 = vector.shape_cast %488 : vector<1x2x256xf32> to vector<2x256xf32>
    %490 = vector.shape_cast %486 : vector<2x256xf32> to vector<1x2x256xf32>
    tpu.vector_store %arg4[%c8_421, %c0_422, %c0_423], %490 {strides = array<i32>} : memref<16x2x256xf32, #tpu.memory_space<vmem>>, vector<1x2x256xf32>,
    %c9_424 = arith.constant 9 : index
    %c0_425 = arith.constant 0 : index
    %c0_426 = arith.constant 0 : index
    %491 = vector.load %arg4[%c9_424, %c0_425, %c0_426] : memref<16x2x256xf32, #tpu.memory_space<vmem>>, vector<1x2x256xf32>
    %492 = vector.shape_cast %491 : vector<1x2x256xf32> to vector<2x256xf32>
    %493 = vector.shape_cast %487 : vector<2x256xf32> to vector<1x2x256xf32>
    tpu.vector_store %arg4[%c9_424, %c0_425, %c0_426], %493 {strides = array<i32>} : memref<16x2x256xf32, #tpu.memory_space<vmem>>, vector<1x2x256xf32>,
    %c10_427 = arith.constant 10 : index
    %c0_428 = arith.constant 0 : index
    %c0_429 = arith.constant 0 : index
    %494 = vector.load %arg4[%c10_427, %c0_428, %c0_429] : memref<16x2x256xf32, #tpu.memory_space<vmem>>, vector<1x2x256xf32>
    %495 = vector.shape_cast %494 : vector<1x2x256xf32> to vector<2x256xf32>
    %c11_430 = arith.constant 11 : index
    %c0_431 = arith.constant 0 : index
    %c0_432 = arith.constant 0 : index
    %496 = vector.load %arg4[%c11_430, %c0_431, %c0_432] : memref<16x2x256xf32, #tpu.memory_space<vmem>>, vector<1x2x256xf32>
    %497 = vector.shape_cast %496 : vector<1x2x256xf32> to vector<2x256xf32>
    %498 = arith.minimumf %495, %497 : vector<2x256xf32>
    %499 = arith.maximumf %495, %497 : vector<2x256xf32>
    %c10_433 = arith.constant 10 : index
    %c0_434 = arith.constant 0 : index
    %c0_435 = arith.constant 0 : index
    %500 = vector.load %arg4[%c10_433, %c0_434, %c0_435] : memref<16x2x256xf32, #tpu.memory_space<vmem>>, vector<1x2x256xf32>
    %501 = vector.shape_cast %500 : vector<1x2x256xf32> to vector<2x256xf32>
    %502 = vector.shape_cast %498 : vector<2x256xf32> to vector<1x2x256xf32>
    tpu.vector_store %arg4[%c10_433, %c0_434, %c0_435], %502 {strides = array<i32>} : memref<16x2x256xf32, #tpu.memory_space<vmem>>, vector<1x2x256xf32>,
    %c11_436 = arith.constant 11 : index
    %c0_437 = arith.constant 0 : index
    %c0_438 = arith.constant 0 : index
    %503 = vector.load %arg4[%c11_436, %c0_437, %c0_438] : memref<16x2x256xf32, #tpu.memory_space<vmem>>, vector<1x2x256xf32>
    %504 = vector.shape_cast %503 : vector<1x2x256xf32> to vector<2x256xf32>
    %505 = vector.shape_cast %499 : vector<2x256xf32> to vector<1x2x256xf32>
    tpu.vector_store %arg4[%c11_436, %c0_437, %c0_438], %505 {strides = array<i32>} : memref<16x2x256xf32, #tpu.memory_space<vmem>>, vector<1x2x256xf32>,
    %c12_439 = arith.constant 12 : index
    %c0_440 = arith.constant 0 : index
    %c0_441 = arith.constant 0 : index
    %506 = vector.load %arg4[%c12_439, %c0_440, %c0_441] : memref<16x2x256xf32, #tpu.memory_space<vmem>>, vector<1x2x256xf32>
    %507 = vector.shape_cast %506 : vector<1x2x256xf32> to vector<2x256xf32>
    %c13_442 = arith.constant 13 : index
    %c0_443 = arith.constant 0 : index
    %c0_444 = arith.constant 0 : index
    %508 = vector.load %arg4[%c13_442, %c0_443, %c0_444] : memref<16x2x256xf32, #tpu.memory_space<vmem>>, vector<1x2x256xf32>
    %509 = vector.shape_cast %508 : vector<1x2x256xf32> to vector<2x256xf32>
    %510 = arith.minimumf %507, %509 : vector<2x256xf32>
    %511 = arith.maximumf %507, %509 : vector<2x256xf32>
    %c12_445 = arith.constant 12 : index
    %c0_446 = arith.constant 0 : index
    %c0_447 = arith.constant 0 : index
    %512 = vector.load %arg4[%c12_445, %c0_446, %c0_447] : memref<16x2x256xf32, #tpu.memory_space<vmem>>, vector<1x2x256xf32>
    %513 = vector.shape_cast %512 : vector<1x2x256xf32> to vector<2x256xf32>
    %514 = vector.shape_cast %511 : vector<2x256xf32> to vector<1x2x256xf32>
    tpu.vector_store %arg4[%c12_445, %c0_446, %c0_447], %514 {strides = array<i32>} : memref<16x2x256xf32, #tpu.memory_space<vmem>>, vector<1x2x256xf32>,
    %c13_448 = arith.constant 13 : index
    %c0_449 = arith.constant 0 : index
    %c0_450 = arith.constant 0 : index
    %515 = vector.load %arg4[%c13_448, %c0_449, %c0_450] : memref<16x2x256xf32, #tpu.memory_space<vmem>>, vector<1x2x256xf32>
    %516 = vector.shape_cast %515 : vector<1x2x256xf32> to vector<2x256xf32>
    %517 = vector.shape_cast %510 : vector<2x256xf32> to vector<1x2x256xf32>
    tpu.vector_store %arg4[%c13_448, %c0_449, %c0_450], %517 {strides = array<i32>} : memref<16x2x256xf32, #tpu.memory_space<vmem>>, vector<1x2x256xf32>,
    %c14_451 = arith.constant 14 : index
    %c0_452 = arith.constant 0 : index
    %c0_453 = arith.constant 0 : index
    %518 = vector.load %arg4[%c14_451, %c0_452, %c0_453] : memref<16x2x256xf32, #tpu.memory_space<vmem>>, vector<1x2x256xf32>
    %519 = vector.shape_cast %518 : vector<1x2x256xf32> to vector<2x256xf32>
    %c15_454 = arith.constant 15 : index
    %c0_455 = arith.constant 0 : index
    %c0_456 = arith.constant 0 : index
    %520 = vector.load %arg4[%c15_454, %c0_455, %c0_456] : memref<16x2x256xf32, #tpu.memory_space<vmem>>, vector<1x2x256xf32>
    %521 = vector.shape_cast %520 : vector<1x2x256xf32> to vector<2x256xf32>
    %522 = arith.minimumf %519, %521 : vector<2x256xf32>
    %523 = arith.maximumf %519, %521 : vector<2x256xf32>
    %c14_457 = arith.constant 14 : index
    %c0_458 = arith.constant 0 : index
    %c0_459 = arith.constant 0 : index
    %524 = vector.load %arg4[%c14_457, %c0_458, %c0_459] : memref<16x2x256xf32, #tpu.memory_space<vmem>>, vector<1x2x256xf32>
    %525 = vector.shape_cast %524 : vector<1x2x256xf32> to vector<2x256xf32>
    %526 = vector.shape_cast %523 : vector<2x256xf32> to vector<1x2x256xf32>
    tpu.vector_store %arg4[%c14_457, %c0_458, %c0_459], %526 {strides = array<i32>} : memref<16x2x256xf32, #tpu.memory_space<vmem>>, vector<1x2x256xf32>,
    %c15_460 = arith.constant 15 : index
    %c0_461 = arith.constant 0 : index
    %c0_462 = arith.constant 0 : index
    %527 = vector.load %arg4[%c15_460, %c0_461, %c0_462] : memref<16x2x256xf32, #tpu.memory_space<vmem>>, vector<1x2x256xf32>
    %528 = vector.shape_cast %527 : vector<1x2x256xf32> to vector<2x256xf32>
    %529 = vector.shape_cast %522 : vector<2x256xf32> to vector<1x2x256xf32>
    tpu.vector_store %arg4[%c15_460, %c0_461, %c0_462], %529 {strides = array<i32>} : memref<16x2x256xf32, #tpu.memory_space<vmem>>, vector<1x2x256xf32>,
    %c0_463 = arith.constant 0 : index
    %c0_464 = arith.constant 0 : index
    %c0_465 = arith.constant 0 : index
    %530 = vector.load %arg4[%c0_463, %c0_464, %c0_465] : memref<16x2x256xf32, #tpu.memory_space<vmem>>, vector<1x2x256xf32>
    %531 = vector.shape_cast %530 : vector<1x2x256xf32> to vector<2x256xf32>
    %c4_466 = arith.constant 4 : index
    %c0_467 = arith.constant 0 : index
    %c0_468 = arith.constant 0 : index
    %532 = vector.load %arg4[%c4_466, %c0_467, %c0_468] : memref<16x2x256xf32, #tpu.memory_space<vmem>>, vector<1x2x256xf32>
    %533 = vector.shape_cast %532 : vector<1x2x256xf32> to vector<2x256xf32>
    %534 = arith.minimumf %531, %533 : vector<2x256xf32>
    %535 = arith.maximumf %531, %533 : vector<2x256xf32>
    %c0_469 = arith.constant 0 : index
    %c0_470 = arith.constant 0 : index
    %c0_471 = arith.constant 0 : index
    %536 = vector.load %arg4[%c0_469, %c0_470, %c0_471] : memref<16x2x256xf32, #tpu.memory_space<vmem>>, vector<1x2x256xf32>
    %537 = vector.shape_cast %536 : vector<1x2x256xf32> to vector<2x256xf32>
    %538 = vector.shape_cast %534 : vector<2x256xf32> to vector<1x2x256xf32>
    tpu.vector_store %arg4[%c0_469, %c0_470, %c0_471], %538 {strides = array<i32>} : memref<16x2x256xf32, #tpu.memory_space<vmem>>, vector<1x2x256xf32>,
    %c4_472 = arith.constant 4 : index
    %c0_473 = arith.constant 0 : index
    %c0_474 = arith.constant 0 : index
    %539 = vector.load %arg4[%c4_472, %c0_473, %c0_474] : memref<16x2x256xf32, #tpu.memory_space<vmem>>, vector<1x2x256xf32>
    %540 = vector.shape_cast %539 : vector<1x2x256xf32> to vector<2x256xf32>
    %541 = vector.shape_cast %535 : vector<2x256xf32> to vector<1x2x256xf32>
    tpu.vector_store %arg4[%c4_472, %c0_473, %c0_474], %541 {strides = array<i32>} : memref<16x2x256xf32, #tpu.memory_space<vmem>>, vector<1x2x256xf32>,
    %c1_475 = arith.constant 1 : index
    %c0_476 = arith.constant 0 : index
    %c0_477 = arith.constant 0 : index
    %542 = vector.load %arg4[%c1_475, %c0_476, %c0_477] : memref<16x2x256xf32, #tpu.memory_space<vmem>>, vector<1x2x256xf32>
    %543 = vector.shape_cast %542 : vector<1x2x256xf32> to vector<2x256xf32>
    %c5_478 = arith.constant 5 : index
    %c0_479 = arith.constant 0 : index
    %c0_480 = arith.constant 0 : index
    %544 = vector.load %arg4[%c5_478, %c0_479, %c0_480] : memref<16x2x256xf32, #tpu.memory_space<vmem>>, vector<1x2x256xf32>
    %545 = vector.shape_cast %544 : vector<1x2x256xf32> to vector<2x256xf32>
    %546 = arith.minimumf %543, %545 : vector<2x256xf32>
    %547 = arith.maximumf %543, %545 : vector<2x256xf32>
    %c1_481 = arith.constant 1 : index
    %c0_482 = arith.constant 0 : index
    %c0_483 = arith.constant 0 : index
    %548 = vector.load %arg4[%c1_481, %c0_482, %c0_483] : memref<16x2x256xf32, #tpu.memory_space<vmem>>, vector<1x2x256xf32>
    %549 = vector.shape_cast %548 : vector<1x2x256xf32> to vector<2x256xf32>
    %550 = vector.shape_cast %546 : vector<2x256xf32> to vector<1x2x256xf32>
    tpu.vector_store %arg4[%c1_481, %c0_482, %c0_483], %550 {strides = array<i32>} : memref<16x2x256xf32, #tpu.memory_space<vmem>>, vector<1x2x256xf32>,
    %c5_484 = arith.constant 5 : index
    %c0_485 = arith.constant 0 : index
    %c0_486 = arith.constant 0 : index
    %551 = vector.load %arg4[%c5_484, %c0_485, %c0_486] : memref<16x2x256xf32, #tpu.memory_space<vmem>>, vector<1x2x256xf32>
    %552 = vector.shape_cast %551 : vector<1x2x256xf32> to vector<2x256xf32>
    %553 = vector.shape_cast %547 : vector<2x256xf32> to vector<1x2x256xf32>
    tpu.vector_store %arg4[%c5_484, %c0_485, %c0_486], %553 {strides = array<i32>} : memref<16x2x256xf32, #tpu.memory_space<vmem>>, vector<1x2x256xf32>,
    %c2_487 = arith.constant 2 : index
    %c0_488 = arith.constant 0 : index
    %c0_489 = arith.constant 0 : index
    %554 = vector.load %arg4[%c2_487, %c0_488, %c0_489] : memref<16x2x256xf32, #tpu.memory_space<vmem>>, vector<1x2x256xf32>
    %555 = vector.shape_cast %554 : vector<1x2x256xf32> to vector<2x256xf32>
    %c6_490 = arith.constant 6 : index
    %c0_491 = arith.constant 0 : index
    %c0_492 = arith.constant 0 : index
    %556 = vector.load %arg4[%c6_490, %c0_491, %c0_492] : memref<16x2x256xf32, #tpu.memory_space<vmem>>, vector<1x2x256xf32>
    %557 = vector.shape_cast %556 : vector<1x2x256xf32> to vector<2x256xf32>
    %558 = arith.minimumf %555, %557 : vector<2x256xf32>
    %559 = arith.maximumf %555, %557 : vector<2x256xf32>
    %c2_493 = arith.constant 2 : index
    %c0_494 = arith.constant 0 : index
    %c0_495 = arith.constant 0 : index
    %560 = vector.load %arg4[%c2_493, %c0_494, %c0_495] : memref<16x2x256xf32, #tpu.memory_space<vmem>>, vector<1x2x256xf32>
    %561 = vector.shape_cast %560 : vector<1x2x256xf32> to vector<2x256xf32>
    %562 = vector.shape_cast %558 : vector<2x256xf32> to vector<1x2x256xf32>
    tpu.vector_store %arg4[%c2_493, %c0_494, %c0_495], %562 {strides = array<i32>} : memref<16x2x256xf32, #tpu.memory_space<vmem>>, vector<1x2x256xf32>,
    %c6_496 = arith.constant 6 : index
    %c0_497 = arith.constant 0 : index
    %c0_498 = arith.constant 0 : index
    %563 = vector.load %arg4[%c6_496, %c0_497, %c0_498] : memref<16x2x256xf32, #tpu.memory_space<vmem>>, vector<1x2x256xf32>
    %564 = vector.shape_cast %563 : vector<1x2x256xf32> to vector<2x256xf32>
    %565 = vector.shape_cast %559 : vector<2x256xf32> to vector<1x2x256xf32>
    tpu.vector_store %arg4[%c6_496, %c0_497, %c0_498], %565 {strides = array<i32>} : memref<16x2x256xf32, #tpu.memory_space<vmem>>, vector<1x2x256xf32>,
    %c3_499 = arith.constant 3 : index
    %c0_500 = arith.constant 0 : index
    %c0_501 = arith.constant 0 : index
    %566 = vector.load %arg4[%c3_499, %c0_500, %c0_501] : memref<16x2x256xf32, #tpu.memory_space<vmem>>, vector<1x2x256xf32>
    %567 = vector.shape_cast %566 : vector<1x2x256xf32> to vector<2x256xf32>
    %c7_502 = arith.constant 7 : index
    %c0_503 = arith.constant 0 : index
    %c0_504 = arith.constant 0 : index
    %568 = vector.load %arg4[%c7_502, %c0_503, %c0_504] : memref<16x2x256xf32, #tpu.memory_space<vmem>>, vector<1x2x256xf32>
    %569 = vector.shape_cast %568 : vector<1x2x256xf32> to vector<2x256xf32>
    %570 = arith.minimumf %567, %569 : vector<2x256xf32>
    %571 = arith.maximumf %567, %569 : vector<2x256xf32>
    %c3_505 = arith.constant 3 : index
    %c0_506 = arith.constant 0 : index
    %c0_507 = arith.constant 0 : index
    %572 = vector.load %arg4[%c3_505, %c0_506, %c0_507] : memref<16x2x256xf32, #tpu.memory_space<vmem>>, vector<1x2x256xf32>
    %573 = vector.shape_cast %572 : vector<1x2x256xf32> to vector<2x256xf32>
    %574 = vector.shape_cast %570 : vector<2x256xf32> to vector<1x2x256xf32>
    tpu.vector_store %arg4[%c3_505, %c0_506, %c0_507], %574 {strides = array<i32>} : memref<16x2x256xf32, #tpu.memory_space<vmem>>, vector<1x2x256xf32>,
    %c7_508 = arith.constant 7 : index
    %c0_509 = arith.constant 0 : index
    %c0_510 = arith.constant 0 : index
    %575 = vector.load %arg4[%c7_508, %c0_509, %c0_510] : memref<16x2x256xf32, #tpu.memory_space<vmem>>, vector<1x2x256xf32>
    %576 = vector.shape_cast %575 : vector<1x2x256xf32> to vector<2x256xf32>
    %577 = vector.shape_cast %571 : vector<2x256xf32> to vector<1x2x256xf32>
    tpu.vector_store %arg4[%c7_508, %c0_509, %c0_510], %577 {strides = array<i32>} : memref<16x2x256xf32, #tpu.memory_space<vmem>>, vector<1x2x256xf32>,
    %c8_511 = arith.constant 8 : index
    %c0_512 = arith.constant 0 : index
    %c0_513 = arith.constant 0 : index
    %578 = vector.load %arg4[%c8_511, %c0_512, %c0_513] : memref<16x2x256xf32, #tpu.memory_space<vmem>>, vector<1x2x256xf32>
    %579 = vector.shape_cast %578 : vector<1x2x256xf32> to vector<2x256xf32>
    %c12_514 = arith.constant 12 : index
    %c0_515 = arith.constant 0 : index
    %c0_516 = arith.constant 0 : index
    %580 = vector.load %arg4[%c12_514, %c0_515, %c0_516] : memref<16x2x256xf32, #tpu.memory_space<vmem>>, vector<1x2x256xf32>
    %581 = vector.shape_cast %580 : vector<1x2x256xf32> to vector<2x256xf32>
    %582 = arith.minimumf %579, %581 : vector<2x256xf32>
    %583 = arith.maximumf %579, %581 : vector<2x256xf32>
    %c8_517 = arith.constant 8 : index
    %c0_518 = arith.constant 0 : index
    %c0_519 = arith.constant 0 : index
    %584 = vector.load %arg4[%c8_517, %c0_518, %c0_519] : memref<16x2x256xf32, #tpu.memory_space<vmem>>, vector<1x2x256xf32>
    %585 = vector.shape_cast %584 : vector<1x2x256xf32> to vector<2x256xf32>
    %586 = vector.shape_cast %583 : vector<2x256xf32> to vector<1x2x256xf32>
    tpu.vector_store %arg4[%c8_517, %c0_518, %c0_519], %586 {strides = array<i32>} : memref<16x2x256xf32, #tpu.memory_space<vmem>>, vector<1x2x256xf32>,
    %c12_520 = arith.constant 12 : index
    %c0_521 = arith.constant 0 : index
    %c0_522 = arith.constant 0 : index
    %587 = vector.load %arg4[%c12_520, %c0_521, %c0_522] : memref<16x2x256xf32, #tpu.memory_space<vmem>>, vector<1x2x256xf32>
    %588 = vector.shape_cast %587 : vector<1x2x256xf32> to vector<2x256xf32>
    %589 = vector.shape_cast %582 : vector<2x256xf32> to vector<1x2x256xf32>
    tpu.vector_store %arg4[%c12_520, %c0_521, %c0_522], %589 {strides = array<i32>} : memref<16x2x256xf32, #tpu.memory_space<vmem>>, vector<1x2x256xf32>,
    %c9_523 = arith.constant 9 : index
    %c0_524 = arith.constant 0 : index
    %c0_525 = arith.constant 0 : index
    %590 = vector.load %arg4[%c9_523, %c0_524, %c0_525] : memref<16x2x256xf32, #tpu.memory_space<vmem>>, vector<1x2x256xf32>
    %591 = vector.shape_cast %590 : vector<1x2x256xf32> to vector<2x256xf32>
    %c13_526 = arith.constant 13 : index
    %c0_527 = arith.constant 0 : index
    %c0_528 = arith.constant 0 : index
    %592 = vector.load %arg4[%c13_526, %c0_527, %c0_528] : memref<16x2x256xf32, #tpu.memory_space<vmem>>, vector<1x2x256xf32>
    %593 = vector.shape_cast %592 : vector<1x2x256xf32> to vector<2x256xf32>
    %594 = arith.minimumf %591, %593 : vector<2x256xf32>
    %595 = arith.maximumf %591, %593 : vector<2x256xf32>
    %c9_529 = arith.constant 9 : index
    %c0_530 = arith.constant 0 : index
    %c0_531 = arith.constant 0 : index
    %596 = vector.load %arg4[%c9_529, %c0_530, %c0_531] : memref<16x2x256xf32, #tpu.memory_space<vmem>>, vector<1x2x256xf32>
    %597 = vector.shape_cast %596 : vector<1x2x256xf32> to vector<2x256xf32>
    %598 = vector.shape_cast %595 : vector<2x256xf32> to vector<1x2x256xf32>
    tpu.vector_store %arg4[%c9_529, %c0_530, %c0_531], %598 {strides = array<i32>} : memref<16x2x256xf32, #tpu.memory_space<vmem>>, vector<1x2x256xf32>,
    %c13_532 = arith.constant 13 : index
    %c0_533 = arith.constant 0 : index
    %c0_534 = arith.constant 0 : index
    %599 = vector.load %arg4[%c13_532, %c0_533, %c0_534] : memref<16x2x256xf32, #tpu.memory_space<vmem>>, vector<1x2x256xf32>
    %600 = vector.shape_cast %599 : vector<1x2x256xf32> to vector<2x256xf32>
    %601 = vector.shape_cast %594 : vector<2x256xf32> to vector<1x2x256xf32>
    tpu.vector_store %arg4[%c13_532, %c0_533, %c0_534], %601 {strides = array<i32>} : memref<16x2x256xf32, #tpu.memory_space<vmem>>, vector<1x2x256xf32>,
    %c10_535 = arith.constant 10 : index
    %c0_536 = arith.constant 0 : index
    %c0_537 = arith.constant 0 : index
    %602 = vector.load %arg4[%c10_535, %c0_536, %c0_537] : memref<16x2x256xf32, #tpu.memory_space<vmem>>, vector<1x2x256xf32>
    %603 = vector.shape_cast %602 : vector<1x2x256xf32> to vector<2x256xf32>
    %c14_538 = arith.constant 14 : index
    %c0_539 = arith.constant 0 : index
    %c0_540 = arith.constant 0 : index
    %604 = vector.load %arg4[%c14_538, %c0_539, %c0_540] : memref<16x2x256xf32, #tpu.memory_space<vmem>>, vector<1x2x256xf32>
    %605 = vector.shape_cast %604 : vector<1x2x256xf32> to vector<2x256xf32>
    %606 = arith.minimumf %603, %605 : vector<2x256xf32>
    %607 = arith.maximumf %603, %605 : vector<2x256xf32>
    %c10_541 = arith.constant 10 : index
    %c0_542 = arith.constant 0 : index
    %c0_543 = arith.constant 0 : index
    %608 = vector.load %arg4[%c10_541, %c0_542, %c0_543] : memref<16x2x256xf32, #tpu.memory_space<vmem>>, vector<1x2x256xf32>
    %609 = vector.shape_cast %608 : vector<1x2x256xf32> to vector<2x256xf32>
    %610 = vector.shape_cast %607 : vector<2x256xf32> to vector<1x2x256xf32>
    tpu.vector_store %arg4[%c10_541, %c0_542, %c0_543], %610 {strides = array<i32>} : memref<16x2x256xf32, #tpu.memory_space<vmem>>, vector<1x2x256xf32>,
    %c14_544 = arith.constant 14 : index
    %c0_545 = arith.constant 0 : index
    %c0_546 = arith.constant 0 : index
    %611 = vector.load %arg4[%c14_544, %c0_545, %c0_546] : memref<16x2x256xf32, #tpu.memory_space<vmem>>, vector<1x2x256xf32>
    %612 = vector.shape_cast %611 : vector<1x2x256xf32> to vector<2x256xf32>
    %613 = vector.shape_cast %606 : vector<2x256xf32> to vector<1x2x256xf32>
    tpu.vector_store %arg4[%c14_544, %c0_545, %c0_546], %613 {strides = array<i32>} : memref<16x2x256xf32, #tpu.memory_space<vmem>>, vector<1x2x256xf32>,
    %c11_547 = arith.constant 11 : index
    %c0_548 = arith.constant 0 : index
    %c0_549 = arith.constant 0 : index
    %614 = vector.load %arg4[%c11_547, %c0_548, %c0_549] : memref<16x2x256xf32, #tpu.memory_space<vmem>>, vector<1x2x256xf32>
    %615 = vector.shape_cast %614 : vector<1x2x256xf32> to vector<2x256xf32>
    %c15_550 = arith.constant 15 : index
    %c0_551 = arith.constant 0 : index
    %c0_552 = arith.constant 0 : index
    %616 = vector.load %arg4[%c15_550, %c0_551, %c0_552] : memref<16x2x256xf32, #tpu.memory_space<vmem>>, vector<1x2x256xf32>
    %617 = vector.shape_cast %616 : vector<1x2x256xf32> to vector<2x256xf32>
    %618 = arith.minimumf %615, %617 : vector<2x256xf32>
    %619 = arith.maximumf %615, %617 : vector<2x256xf32>
    %c11_553 = arith.constant 11 : index
    %c0_554 = arith.constant 0 : index
    %c0_555 = arith.constant 0 : index
    %620 = vector.load %arg4[%c11_553, %c0_554, %c0_555] : memref<16x2x256xf32, #tpu.memory_space<vmem>>, vector<1x2x256xf32>
    %621 = vector.shape_cast %620 : vector<1x2x256xf32> to vector<2x256xf32>
    %622 = vector.shape_cast %619 : vector<2x256xf32> to vector<1x2x256xf32>
    tpu.vector_store %arg4[%c11_553, %c0_554, %c0_555], %622 {strides = array<i32>} : memref<16x2x256xf32, #tpu.memory_space<vmem>>, vector<1x2x256xf32>,
    %c15_556 = arith.constant 15 : index
    %c0_557 = arith.constant 0 : index
    %c0_558 = arith.constant 0 : index
    %623 = vector.load %arg4[%c15_556, %c0_557, %c0_558] : memref<16x2x256xf32, #tpu.memory_space<vmem>>, vector<1x2x256xf32>
    %624 = vector.shape_cast %623 : vector<1x2x256xf32> to vector<2x256xf32>
    %625 = vector.shape_cast %618 : vector<2x256xf32> to vector<1x2x256xf32>
    tpu.vector_store %arg4[%c15_556, %c0_557, %c0_558], %625 {strides = array<i32>} : memref<16x2x256xf32, #tpu.memory_space<vmem>>, vector<1x2x256xf32>,
    %c0_559 = arith.constant 0 : index
    %c0_560 = arith.constant 0 : index
    %c0_561 = arith.constant 0 : index
    %626 = vector.load %arg4[%c0_559, %c0_560, %c0_561] : memref<16x2x256xf32, #tpu.memory_space<vmem>>, vector<1x2x256xf32>
    %627 = vector.shape_cast %626 : vector<1x2x256xf32> to vector<2x256xf32>
    %c2_562 = arith.constant 2 : index
    %c0_563 = arith.constant 0 : index
    %c0_564 = arith.constant 0 : index
    %628 = vector.load %arg4[%c2_562, %c0_563, %c0_564] : memref<16x2x256xf32, #tpu.memory_space<vmem>>, vector<1x2x256xf32>
    %629 = vector.shape_cast %628 : vector<1x2x256xf32> to vector<2x256xf32>
    %630 = arith.minimumf %627, %629 : vector<2x256xf32>
    %631 = arith.maximumf %627, %629 : vector<2x256xf32>
    %c0_565 = arith.constant 0 : index
    %c0_566 = arith.constant 0 : index
    %c0_567 = arith.constant 0 : index
    %632 = vector.load %arg4[%c0_565, %c0_566, %c0_567] : memref<16x2x256xf32, #tpu.memory_space<vmem>>, vector<1x2x256xf32>
    %633 = vector.shape_cast %632 : vector<1x2x256xf32> to vector<2x256xf32>
    %634 = vector.shape_cast %630 : vector<2x256xf32> to vector<1x2x256xf32>
    tpu.vector_store %arg4[%c0_565, %c0_566, %c0_567], %634 {strides = array<i32>} : memref<16x2x256xf32, #tpu.memory_space<vmem>>, vector<1x2x256xf32>,
    %c2_568 = arith.constant 2 : index
    %c0_569 = arith.constant 0 : index
    %c0_570 = arith.constant 0 : index
    %635 = vector.load %arg4[%c2_568, %c0_569, %c0_570] : memref<16x2x256xf32, #tpu.memory_space<vmem>>, vector<1x2x256xf32>
    %636 = vector.shape_cast %635 : vector<1x2x256xf32> to vector<2x256xf32>
    %637 = vector.shape_cast %631 : vector<2x256xf32> to vector<1x2x256xf32>
    tpu.vector_store %arg4[%c2_568, %c0_569, %c0_570], %637 {strides = array<i32>} : memref<16x2x256xf32, #tpu.memory_space<vmem>>, vector<1x2x256xf32>,
    %c1_571 = arith.constant 1 : index
    %c0_572 = arith.constant 0 : index
    %c0_573 = arith.constant 0 : index
    %638 = vector.load %arg4[%c1_571, %c0_572, %c0_573] : memref<16x2x256xf32, #tpu.memory_space<vmem>>, vector<1x2x256xf32>
    %639 = vector.shape_cast %638 : vector<1x2x256xf32> to vector<2x256xf32>
    %c3_574 = arith.constant 3 : index
    %c0_575 = arith.constant 0 : index
    %c0_576 = arith.constant 0 : index
    %640 = vector.load %arg4[%c3_574, %c0_575, %c0_576] : memref<16x2x256xf32, #tpu.memory_space<vmem>>, vector<1x2x256xf32>
    %641 = vector.shape_cast %640 : vector<1x2x256xf32> to vector<2x256xf32>
    %642 = arith.minimumf %639, %641 : vector<2x256xf32>
    %643 = arith.maximumf %639, %641 : vector<2x256xf32>
    %c1_577 = arith.constant 1 : index
    %c0_578 = arith.constant 0 : index
    %c0_579 = arith.constant 0 : index
    %644 = vector.load %arg4[%c1_577, %c0_578, %c0_579] : memref<16x2x256xf32, #tpu.memory_space<vmem>>, vector<1x2x256xf32>
    %645 = vector.shape_cast %644 : vector<1x2x256xf32> to vector<2x256xf32>
    %646 = vector.shape_cast %642 : vector<2x256xf32> to vector<1x2x256xf32>
    tpu.vector_store %arg4[%c1_577, %c0_578, %c0_579], %646 {strides = array<i32>} : memref<16x2x256xf32, #tpu.memory_space<vmem>>, vector<1x2x256xf32>,
    %c3_580 = arith.constant 3 : index
    %c0_581 = arith.constant 0 : index
    %c0_582 = arith.constant 0 : index
    %647 = vector.load %arg4[%c3_580, %c0_581, %c0_582] : memref<16x2x256xf32, #tpu.memory_space<vmem>>, vector<1x2x256xf32>
    %648 = vector.shape_cast %647 : vector<1x2x256xf32> to vector<2x256xf32>
    %649 = vector.shape_cast %643 : vector<2x256xf32> to vector<1x2x256xf32>
    tpu.vector_store %arg4[%c3_580, %c0_581, %c0_582], %649 {strides = array<i32>} : memref<16x2x256xf32, #tpu.memory_space<vmem>>, vector<1x2x256xf32>,
    %c4_583 = arith.constant 4 : index
    %c0_584 = arith.constant 0 : index
    %c0_585 = arith.constant 0 : index
    %650 = vector.load %arg4[%c4_583, %c0_584, %c0_585] : memref<16x2x256xf32, #tpu.memory_space<vmem>>, vector<1x2x256xf32>
    %651 = vector.shape_cast %650 : vector<1x2x256xf32> to vector<2x256xf32>
    %c6_586 = arith.constant 6 : index
    %c0_587 = arith.constant 0 : index
    %c0_588 = arith.constant 0 : index
    %652 = vector.load %arg4[%c6_586, %c0_587, %c0_588] : memref<16x2x256xf32, #tpu.memory_space<vmem>>, vector<1x2x256xf32>
    %653 = vector.shape_cast %652 : vector<1x2x256xf32> to vector<2x256xf32>
    %654 = arith.minimumf %651, %653 : vector<2x256xf32>
    %655 = arith.maximumf %651, %653 : vector<2x256xf32>
    %c4_589 = arith.constant 4 : index
    %c0_590 = arith.constant 0 : index
    %c0_591 = arith.constant 0 : index
    %656 = vector.load %arg4[%c4_589, %c0_590, %c0_591] : memref<16x2x256xf32, #tpu.memory_space<vmem>>, vector<1x2x256xf32>
    %657 = vector.shape_cast %656 : vector<1x2x256xf32> to vector<2x256xf32>
    %658 = vector.shape_cast %654 : vector<2x256xf32> to vector<1x2x256xf32>
    tpu.vector_store %arg4[%c4_589, %c0_590, %c0_591], %658 {strides = array<i32>} : memref<16x2x256xf32, #tpu.memory_space<vmem>>, vector<1x2x256xf32>,
    %c6_592 = arith.constant 6 : index
    %c0_593 = arith.constant 0 : index
    %c0_594 = arith.constant 0 : index
    %659 = vector.load %arg4[%c6_592, %c0_593, %c0_594] : memref<16x2x256xf32, #tpu.memory_space<vmem>>, vector<1x2x256xf32>
    %660 = vector.shape_cast %659 : vector<1x2x256xf32> to vector<2x256xf32>
    %661 = vector.shape_cast %655 : vector<2x256xf32> to vector<1x2x256xf32>
    tpu.vector_store %arg4[%c6_592, %c0_593, %c0_594], %661 {strides = array<i32>} : memref<16x2x256xf32, #tpu.memory_space<vmem>>, vector<1x2x256xf32>,
    %c5_595 = arith.constant 5 : index
    %c0_596 = arith.constant 0 : index
    %c0_597 = arith.constant 0 : index
    %662 = vector.load %arg4[%c5_595, %c0_596, %c0_597] : memref<16x2x256xf32, #tpu.memory_space<vmem>>, vector<1x2x256xf32>
    %663 = vector.shape_cast %662 : vector<1x2x256xf32> to vector<2x256xf32>
    %c7_598 = arith.constant 7 : index
    %c0_599 = arith.constant 0 : index
    %c0_600 = arith.constant 0 : index
    %664 = vector.load %arg4[%c7_598, %c0_599, %c0_600] : memref<16x2x256xf32, #tpu.memory_space<vmem>>, vector<1x2x256xf32>
    %665 = vector.shape_cast %664 : vector<1x2x256xf32> to vector<2x256xf32>
    %666 = arith.minimumf %663, %665 : vector<2x256xf32>
    %667 = arith.maximumf %663, %665 : vector<2x256xf32>
    %c5_601 = arith.constant 5 : index
    %c0_602 = arith.constant 0 : index
    %c0_603 = arith.constant 0 : index
    %668 = vector.load %arg4[%c5_601, %c0_602, %c0_603] : memref<16x2x256xf32, #tpu.memory_space<vmem>>, vector<1x2x256xf32>
    %669 = vector.shape_cast %668 : vector<1x2x256xf32> to vector<2x256xf32>
    %670 = vector.shape_cast %666 : vector<2x256xf32> to vector<1x2x256xf32>
    tpu.vector_store %arg4[%c5_601, %c0_602, %c0_603], %670 {strides = array<i32>} : memref<16x2x256xf32, #tpu.memory_space<vmem>>, vector<1x2x256xf32>,
    %c7_604 = arith.constant 7 : index
    %c0_605 = arith.constant 0 : index
    %c0_606 = arith.constant 0 : index
    %671 = vector.load %arg4[%c7_604, %c0_605, %c0_606] : memref<16x2x256xf32, #tpu.memory_space<vmem>>, vector<1x2x256xf32>
    %672 = vector.shape_cast %671 : vector<1x2x256xf32> to vector<2x256xf32>
    %673 = vector.shape_cast %667 : vector<2x256xf32> to vector<1x2x256xf32>
    tpu.vector_store %arg4[%c7_604, %c0_605, %c0_606], %673 {strides = array<i32>} : memref<16x2x256xf32, #tpu.memory_space<vmem>>, vector<1x2x256xf32>,
    %c8_607 = arith.constant 8 : index
    %c0_608 = arith.constant 0 : index
    %c0_609 = arith.constant 0 : index
    %674 = vector.load %arg4[%c8_607, %c0_608, %c0_609] : memref<16x2x256xf32, #tpu.memory_space<vmem>>, vector<1x2x256xf32>
    %675 = vector.shape_cast %674 : vector<1x2x256xf32> to vector<2x256xf32>
    %c10_610 = arith.constant 10 : index
    %c0_611 = arith.constant 0 : index
    %c0_612 = arith.constant 0 : index
    %676 = vector.load %arg4[%c10_610, %c0_611, %c0_612] : memref<16x2x256xf32, #tpu.memory_space<vmem>>, vector<1x2x256xf32>
    %677 = vector.shape_cast %676 : vector<1x2x256xf32> to vector<2x256xf32>
    %678 = arith.minimumf %675, %677 : vector<2x256xf32>
    %679 = arith.maximumf %675, %677 : vector<2x256xf32>
    %c8_613 = arith.constant 8 : index
    %c0_614 = arith.constant 0 : index
    %c0_615 = arith.constant 0 : index
    %680 = vector.load %arg4[%c8_613, %c0_614, %c0_615] : memref<16x2x256xf32, #tpu.memory_space<vmem>>, vector<1x2x256xf32>
    %681 = vector.shape_cast %680 : vector<1x2x256xf32> to vector<2x256xf32>
    %682 = vector.shape_cast %679 : vector<2x256xf32> to vector<1x2x256xf32>
    tpu.vector_store %arg4[%c8_613, %c0_614, %c0_615], %682 {strides = array<i32>} : memref<16x2x256xf32, #tpu.memory_space<vmem>>, vector<1x2x256xf32>,
    %c10_616 = arith.constant 10 : index
    %c0_617 = arith.constant 0 : index
    %c0_618 = arith.constant 0 : index
    %683 = vector.load %arg4[%c10_616, %c0_617, %c0_618] : memref<16x2x256xf32, #tpu.memory_space<vmem>>, vector<1x2x256xf32>
    %684 = vector.shape_cast %683 : vector<1x2x256xf32> to vector<2x256xf32>
    %685 = vector.shape_cast %678 : vector<2x256xf32> to vector<1x2x256xf32>
    tpu.vector_store %arg4[%c10_616, %c0_617, %c0_618], %685 {strides = array<i32>} : memref<16x2x256xf32, #tpu.memory_space<vmem>>, vector<1x2x256xf32>,
    %c9_619 = arith.constant 9 : index
    %c0_620 = arith.constant 0 : index
    %c0_621 = arith.constant 0 : index
    %686 = vector.load %arg4[%c9_619, %c0_620, %c0_621] : memref<16x2x256xf32, #tpu.memory_space<vmem>>, vector<1x2x256xf32>
    %687 = vector.shape_cast %686 : vector<1x2x256xf32> to vector<2x256xf32>
    %c11_622 = arith.constant 11 : index
    %c0_623 = arith.constant 0 : index
    %c0_624 = arith.constant 0 : index
    %688 = vector.load %arg4[%c11_622, %c0_623, %c0_624] : memref<16x2x256xf32, #tpu.memory_space<vmem>>, vector<1x2x256xf32>
    %689 = vector.shape_cast %688 : vector<1x2x256xf32> to vector<2x256xf32>
    %690 = arith.minimumf %687, %689 : vector<2x256xf32>
    %691 = arith.maximumf %687, %689 : vector<2x256xf32>
    %c9_625 = arith.constant 9 : index
    %c0_626 = arith.constant 0 : index
    %c0_627 = arith.constant 0 : index
    %692 = vector.load %arg4[%c9_625, %c0_626, %c0_627] : memref<16x2x256xf32, #tpu.memory_space<vmem>>, vector<1x2x256xf32>
    %693 = vector.shape_cast %692 : vector<1x2x256xf32> to vector<2x256xf32>
    %694 = vector.shape_cast %691 : vector<2x256xf32> to vector<1x2x256xf32>
    tpu.vector_store %arg4[%c9_625, %c0_626, %c0_627], %694 {strides = array<i32>} : memref<16x2x256xf32, #tpu.memory_space<vmem>>, vector<1x2x256xf32>,
    %c11_628 = arith.constant 11 : index
    %c0_629 = arith.constant 0 : index
    %c0_630 = arith.constant 0 : index
    %695 = vector.load %arg4[%c11_628, %c0_629, %c0_630] : memref<16x2x256xf32, #tpu.memory_space<vmem>>, vector<1x2x256xf32>
    %696 = vector.shape_cast %695 : vector<1x2x256xf32> to vector<2x256xf32>
    %697 = vector.shape_cast %690 : vector<2x256xf32> to vector<1x2x256xf32>
    tpu.vector_store %arg4[%c11_628, %c0_629, %c0_630], %697 {strides = array<i32>} : memref<16x2x256xf32, #tpu.memory_space<vmem>>, vector<1x2x256xf32>,
    %c12_631 = arith.constant 12 : index
    %c0_632 = arith.constant 0 : index
    %c0_633 = arith.constant 0 : index
    %698 = vector.load %arg4[%c12_631, %c0_632, %c0_633] : memref<16x2x256xf32, #tpu.memory_space<vmem>>, vector<1x2x256xf32>
    %699 = vector.shape_cast %698 : vector<1x2x256xf32> to vector<2x256xf32>
    %c14_634 = arith.constant 14 : index
    %c0_635 = arith.constant 0 : index
    %c0_636 = arith.constant 0 : index
    %700 = vector.load %arg4[%c14_634, %c0_635, %c0_636] : memref<16x2x256xf32, #tpu.memory_space<vmem>>, vector<1x2x256xf32>
    %701 = vector.shape_cast %700 : vector<1x2x256xf32> to vector<2x256xf32>
    %702 = arith.minimumf %699, %701 : vector<2x256xf32>
    %703 = arith.maximumf %699, %701 : vector<2x256xf32>
    %c12_637 = arith.constant 12 : index
    %c0_638 = arith.constant 0 : index
    %c0_639 = arith.constant 0 : index
    %704 = vector.load %arg4[%c12_637, %c0_638, %c0_639] : memref<16x2x256xf32, #tpu.memory_space<vmem>>, vector<1x2x256xf32>
    %705 = vector.shape_cast %704 : vector<1x2x256xf32> to vector<2x256xf32>
    %706 = vector.shape_cast %703 : vector<2x256xf32> to vector<1x2x256xf32>
    tpu.vector_store %arg4[%c12_637, %c0_638, %c0_639], %706 {strides = array<i32>} : memref<16x2x256xf32, #tpu.memory_space<vmem>>, vector<1x2x256xf32>,
    %c14_640 = arith.constant 14 : index
    %c0_641 = arith.constant 0 : index
    %c0_642 = arith.constant 0 : index
    %707 = vector.load %arg4[%c14_640, %c0_641, %c0_642] : memref<16x2x256xf32, #tpu.memory_space<vmem>>, vector<1x2x256xf32>
    %708 = vector.shape_cast %707 : vector<1x2x256xf32> to vector<2x256xf32>
    %709 = vector.shape_cast %702 : vector<2x256xf32> to vector<1x2x256xf32>
    tpu.vector_store %arg4[%c14_640, %c0_641, %c0_642], %709 {strides = array<i32>} : memref<16x2x256xf32, #tpu.memory_space<vmem>>, vector<1x2x256xf32>,
    %c13_643 = arith.constant 13 : index
    %c0_644 = arith.constant 0 : index
    %c0_645 = arith.constant 0 : index
    %710 = vector.load %arg4[%c13_643, %c0_644, %c0_645] : memref<16x2x256xf32, #tpu.memory_space<vmem>>, vector<1x2x256xf32>
    %711 = vector.shape_cast %710 : vector<1x2x256xf32> to vector<2x256xf32>
    %c15_646 = arith.constant 15 : index
    %c0_647 = arith.constant 0 : index
    %c0_648 = arith.constant 0 : index
    %712 = vector.load %arg4[%c15_646, %c0_647, %c0_648] : memref<16x2x256xf32, #tpu.memory_space<vmem>>, vector<1x2x256xf32>
    %713 = vector.shape_cast %712 : vector<1x2x256xf32> to vector<2x256xf32>
    %714 = arith.minimumf %711, %713 : vector<2x256xf32>
    %715 = arith.maximumf %711, %713 : vector<2x256xf32>
    %c13_649 = arith.constant 13 : index
    %c0_650 = arith.constant 0 : index
    %c0_651 = arith.constant 0 : index
    %716 = vector.load %arg4[%c13_649, %c0_650, %c0_651] : memref<16x2x256xf32, #tpu.memory_space<vmem>>, vector<1x2x256xf32>
    %717 = vector.shape_cast %716 : vector<1x2x256xf32> to vector<2x256xf32>
    %718 = vector.shape_cast %715 : vector<2x256xf32> to vector<1x2x256xf32>
    tpu.vector_store %arg4[%c13_649, %c0_650, %c0_651], %718 {strides = array<i32>} : memref<16x2x256xf32, #tpu.memory_space<vmem>>, vector<1x2x256xf32>,
    %c15_652 = arith.constant 15 : index
    %c0_653 = arith.constant 0 : index
    %c0_654 = arith.constant 0 : index
    %719 = vector.load %arg4[%c15_652, %c0_653, %c0_654] : memref<16x2x256xf32, #tpu.memory_space<vmem>>, vector<1x2x256xf32>
    %720 = vector.shape_cast %719 : vector<1x2x256xf32> to vector<2x256xf32>
    %721 = vector.shape_cast %714 : vector<2x256xf32> to vector<1x2x256xf32>
    tpu.vector_store %arg4[%c15_652, %c0_653, %c0_654], %721 {strides = array<i32>} : memref<16x2x256xf32, #tpu.memory_space<vmem>>, vector<1x2x256xf32>,
    %c0_655 = arith.constant 0 : index
    %c0_656 = arith.constant 0 : index
    %c0_657 = arith.constant 0 : index
    %722 = vector.load %arg4[%c0_655, %c0_656, %c0_657] : memref<16x2x256xf32, #tpu.memory_space<vmem>>, vector<1x2x256xf32>
    %723 = vector.shape_cast %722 : vector<1x2x256xf32> to vector<2x256xf32>
    %c1_658 = arith.constant 1 : index
    %c0_659 = arith.constant 0 : index
    %c0_660 = arith.constant 0 : index
    %724 = vector.load %arg4[%c1_658, %c0_659, %c0_660] : memref<16x2x256xf32, #tpu.memory_space<vmem>>, vector<1x2x256xf32>
    %725 = vector.shape_cast %724 : vector<1x2x256xf32> to vector<2x256xf32>
    %726 = arith.minimumf %723, %725 : vector<2x256xf32>
    %727 = arith.maximumf %723, %725 : vector<2x256xf32>
    %c0_661 = arith.constant 0 : index
    %c0_662 = arith.constant 0 : index
    %c0_663 = arith.constant 0 : index
    %728 = vector.load %arg4[%c0_661, %c0_662, %c0_663] : memref<16x2x256xf32, #tpu.memory_space<vmem>>, vector<1x2x256xf32>
    %729 = vector.shape_cast %728 : vector<1x2x256xf32> to vector<2x256xf32>
    %730 = vector.shape_cast %726 : vector<2x256xf32> to vector<1x2x256xf32>
    tpu.vector_store %arg4[%c0_661, %c0_662, %c0_663], %730 {strides = array<i32>} : memref<16x2x256xf32, #tpu.memory_space<vmem>>, vector<1x2x256xf32>,
    %c1_664 = arith.constant 1 : index
    %c0_665 = arith.constant 0 : index
    %c0_666 = arith.constant 0 : index
    %731 = vector.load %arg4[%c1_664, %c0_665, %c0_666] : memref<16x2x256xf32, #tpu.memory_space<vmem>>, vector<1x2x256xf32>
    %732 = vector.shape_cast %731 : vector<1x2x256xf32> to vector<2x256xf32>
    %733 = vector.shape_cast %727 : vector<2x256xf32> to vector<1x2x256xf32>
    tpu.vector_store %arg4[%c1_664, %c0_665, %c0_666], %733 {strides = array<i32>} : memref<16x2x256xf32, #tpu.memory_space<vmem>>, vector<1x2x256xf32>,
    %c2_667 = arith.constant 2 : index
    %c0_668 = arith.constant 0 : index
    %c0_669 = arith.constant 0 : index
    %734 = vector.load %arg4[%c2_667, %c0_668, %c0_669] : memref<16x2x256xf32, #tpu.memory_space<vmem>>, vector<1x2x256xf32>
    %735 = vector.shape_cast %734 : vector<1x2x256xf32> to vector<2x256xf32>
    %c3_670 = arith.constant 3 : index
    %c0_671 = arith.constant 0 : index
    %c0_672 = arith.constant 0 : index
    %736 = vector.load %arg4[%c3_670, %c0_671, %c0_672] : memref<16x2x256xf32, #tpu.memory_space<vmem>>, vector<1x2x256xf32>
    %737 = vector.shape_cast %736 : vector<1x2x256xf32> to vector<2x256xf32>
    %738 = arith.minimumf %735, %737 : vector<2x256xf32>
    %739 = arith.maximumf %735, %737 : vector<2x256xf32>
    %c2_673 = arith.constant 2 : index
    %c0_674 = arith.constant 0 : index
    %c0_675 = arith.constant 0 : index
    %740 = vector.load %arg4[%c2_673, %c0_674, %c0_675] : memref<16x2x256xf32, #tpu.memory_space<vmem>>, vector<1x2x256xf32>
    %741 = vector.shape_cast %740 : vector<1x2x256xf32> to vector<2x256xf32>
    %742 = vector.shape_cast %738 : vector<2x256xf32> to vector<1x2x256xf32>
    tpu.vector_store %arg4[%c2_673, %c0_674, %c0_675], %742 {strides = array<i32>} : memref<16x2x256xf32, #tpu.memory_space<vmem>>, vector<1x2x256xf32>,
    %c3_676 = arith.constant 3 : index
    %c0_677 = arith.constant 0 : index
    %c0_678 = arith.constant 0 : index
    %743 = vector.load %arg4[%c3_676, %c0_677, %c0_678] : memref<16x2x256xf32, #tpu.memory_space<vmem>>, vector<1x2x256xf32>
    %744 = vector.shape_cast %743 : vector<1x2x256xf32> to vector<2x256xf32>
    %745 = vector.shape_cast %739 : vector<2x256xf32> to vector<1x2x256xf32>
    tpu.vector_store %arg4[%c3_676, %c0_677, %c0_678], %745 {strides = array<i32>} : memref<16x2x256xf32, #tpu.memory_space<vmem>>, vector<1x2x256xf32>,
    %c4_679 = arith.constant 4 : index
    %c0_680 = arith.constant 0 : index
    %c0_681 = arith.constant 0 : index
    %746 = vector.load %arg4[%c4_679, %c0_680, %c0_681] : memref<16x2x256xf32, #tpu.memory_space<vmem>>, vector<1x2x256xf32>
    %747 = vector.shape_cast %746 : vector<1x2x256xf32> to vector<2x256xf32>
    %c5_682 = arith.constant 5 : index
    %c0_683 = arith.constant 0 : index
    %c0_684 = arith.constant 0 : index
    %748 = vector.load %arg4[%c5_682, %c0_683, %c0_684] : memref<16x2x256xf32, #tpu.memory_space<vmem>>, vector<1x2x256xf32>
    %749 = vector.shape_cast %748 : vector<1x2x256xf32> to vector<2x256xf32>
    %750 = arith.minimumf %747, %749 : vector<2x256xf32>
    %751 = arith.maximumf %747, %749 : vector<2x256xf32>
    %c4_685 = arith.constant 4 : index
    %c0_686 = arith.constant 0 : index
    %c0_687 = arith.constant 0 : index
    %752 = vector.load %arg4[%c4_685, %c0_686, %c0_687] : memref<16x2x256xf32, #tpu.memory_space<vmem>>, vector<1x2x256xf32>
    %753 = vector.shape_cast %752 : vector<1x2x256xf32> to vector<2x256xf32>
    %754 = vector.shape_cast %750 : vector<2x256xf32> to vector<1x2x256xf32>
    tpu.vector_store %arg4[%c4_685, %c0_686, %c0_687], %754 {strides = array<i32>} : memref<16x2x256xf32, #tpu.memory_space<vmem>>, vector<1x2x256xf32>,
    %c5_688 = arith.constant 5 : index
    %c0_689 = arith.constant 0 : index
    %c0_690 = arith.constant 0 : index
    %755 = vector.load %arg4[%c5_688, %c0_689, %c0_690] : memref<16x2x256xf32, #tpu.memory_space<vmem>>, vector<1x2x256xf32>
    %756 = vector.shape_cast %755 : vector<1x2x256xf32> to vector<2x256xf32>
    %757 = vector.shape_cast %751 : vector<2x256xf32> to vector<1x2x256xf32>
    tpu.vector_store %arg4[%c5_688, %c0_689, %c0_690], %757 {strides = array<i32>} : memref<16x2x256xf32, #tpu.memory_space<vmem>>, vector<1x2x256xf32>,
    %c6_691 = arith.constant 6 : index
    %c0_692 = arith.constant 0 : index
    %c0_693 = arith.constant 0 : index
    %758 = vector.load %arg4[%c6_691, %c0_692, %c0_693] : memref<16x2x256xf32, #tpu.memory_space<vmem>>, vector<1x2x256xf32>
    %759 = vector.shape_cast %758 : vector<1x2x256xf32> to vector<2x256xf32>
    %c7_694 = arith.constant 7 : index
    %c0_695 = arith.constant 0 : index
    %c0_696 = arith.constant 0 : index
    %760 = vector.load %arg4[%c7_694, %c0_695, %c0_696] : memref<16x2x256xf32, #tpu.memory_space<vmem>>, vector<1x2x256xf32>
    %761 = vector.shape_cast %760 : vector<1x2x256xf32> to vector<2x256xf32>
    %762 = arith.minimumf %759, %761 : vector<2x256xf32>
    %763 = arith.maximumf %759, %761 : vector<2x256xf32>
    %c6_697 = arith.constant 6 : index
    %c0_698 = arith.constant 0 : index
    %c0_699 = arith.constant 0 : index
    %764 = vector.load %arg4[%c6_697, %c0_698, %c0_699] : memref<16x2x256xf32, #tpu.memory_space<vmem>>, vector<1x2x256xf32>
    %765 = vector.shape_cast %764 : vector<1x2x256xf32> to vector<2x256xf32>
    %766 = vector.shape_cast %762 : vector<2x256xf32> to vector<1x2x256xf32>
    tpu.vector_store %arg4[%c6_697, %c0_698, %c0_699], %766 {strides = array<i32>} : memref<16x2x256xf32, #tpu.memory_space<vmem>>, vector<1x2x256xf32>,
    %c7_700 = arith.constant 7 : index
    %c0_701 = arith.constant 0 : index
    %c0_702 = arith.constant 0 : index
    %767 = vector.load %arg4[%c7_700, %c0_701, %c0_702] : memref<16x2x256xf32, #tpu.memory_space<vmem>>, vector<1x2x256xf32>
    %768 = vector.shape_cast %767 : vector<1x2x256xf32> to vector<2x256xf32>
    %769 = vector.shape_cast %763 : vector<2x256xf32> to vector<1x2x256xf32>
    tpu.vector_store %arg4[%c7_700, %c0_701, %c0_702], %769 {strides = array<i32>} : memref<16x2x256xf32, #tpu.memory_space<vmem>>, vector<1x2x256xf32>,
    %c8_703 = arith.constant 8 : index
    %c0_704 = arith.constant 0 : index
    %c0_705 = arith.constant 0 : index
    %770 = vector.load %arg4[%c8_703, %c0_704, %c0_705] : memref<16x2x256xf32, #tpu.memory_space<vmem>>, vector<1x2x256xf32>
    %771 = vector.shape_cast %770 : vector<1x2x256xf32> to vector<2x256xf32>
    %c9_706 = arith.constant 9 : index
    %c0_707 = arith.constant 0 : index
    %c0_708 = arith.constant 0 : index
    %772 = vector.load %arg4[%c9_706, %c0_707, %c0_708] : memref<16x2x256xf32, #tpu.memory_space<vmem>>, vector<1x2x256xf32>
    %773 = vector.shape_cast %772 : vector<1x2x256xf32> to vector<2x256xf32>
    %774 = arith.minimumf %771, %773 : vector<2x256xf32>
    %775 = arith.maximumf %771, %773 : vector<2x256xf32>
    %c8_709 = arith.constant 8 : index
    %c0_710 = arith.constant 0 : index
    %c0_711 = arith.constant 0 : index
    %776 = vector.load %arg4[%c8_709, %c0_710, %c0_711] : memref<16x2x256xf32, #tpu.memory_space<vmem>>, vector<1x2x256xf32>
    %777 = vector.shape_cast %776 : vector<1x2x256xf32> to vector<2x256xf32>
    %778 = vector.shape_cast %775 : vector<2x256xf32> to vector<1x2x256xf32>
    tpu.vector_store %arg4[%c8_709, %c0_710, %c0_711], %778 {strides = array<i32>} : memref<16x2x256xf32, #tpu.memory_space<vmem>>, vector<1x2x256xf32>,
    %c9_712 = arith.constant 9 : index
    %c0_713 = arith.constant 0 : index
    %c0_714 = arith.constant 0 : index
    %779 = vector.load %arg4[%c9_712, %c0_713, %c0_714] : memref<16x2x256xf32, #tpu.memory_space<vmem>>, vector<1x2x256xf32>
    %780 = vector.shape_cast %779 : vector<1x2x256xf32> to vector<2x256xf32>
    %781 = vector.shape_cast %774 : vector<2x256xf32> to vector<1x2x256xf32>
    tpu.vector_store %arg4[%c9_712, %c0_713, %c0_714], %781 {strides = array<i32>} : memref<16x2x256xf32, #tpu.memory_space<vmem>>, vector<1x2x256xf32>,
    %c10_715 = arith.constant 10 : index
    %c0_716 = arith.constant 0 : index
    %c0_717 = arith.constant 0 : index
    %782 = vector.load %arg4[%c10_715, %c0_716, %c0_717] : memref<16x2x256xf32, #tpu.memory_space<vmem>>, vector<1x2x256xf32>
    %783 = vector.shape_cast %782 : vector<1x2x256xf32> to vector<2x256xf32>
    %c11_718 = arith.constant 11 : index
    %c0_719 = arith.constant 0 : index
    %c0_720 = arith.constant 0 : index
    %784 = vector.load %arg4[%c11_718, %c0_719, %c0_720] : memref<16x2x256xf32, #tpu.memory_space<vmem>>, vector<1x2x256xf32>
    %785 = vector.shape_cast %784 : vector<1x2x256xf32> to vector<2x256xf32>
    %786 = arith.minimumf %783, %785 : vector<2x256xf32>
    %787 = arith.maximumf %783, %785 : vector<2x256xf32>
    %c10_721 = arith.constant 10 : index
    %c0_722 = arith.constant 0 : index
    %c0_723 = arith.constant 0 : index
    %788 = vector.load %arg4[%c10_721, %c0_722, %c0_723] : memref<16x2x256xf32, #tpu.memory_space<vmem>>, vector<1x2x256xf32>
    %789 = vector.shape_cast %788 : vector<1x2x256xf32> to vector<2x256xf32>
    %790 = vector.shape_cast %787 : vector<2x256xf32> to vector<1x2x256xf32>
    tpu.vector_store %arg4[%c10_721, %c0_722, %c0_723], %790 {strides = array<i32>} : memref<16x2x256xf32, #tpu.memory_space<vmem>>, vector<1x2x256xf32>,
    %c11_724 = arith.constant 11 : index
    %c0_725 = arith.constant 0 : index
    %c0_726 = arith.constant 0 : index
    %791 = vector.load %arg4[%c11_724, %c0_725, %c0_726] : memref<16x2x256xf32, #tpu.memory_space<vmem>>, vector<1x2x256xf32>
    %792 = vector.shape_cast %791 : vector<1x2x256xf32> to vector<2x256xf32>
    %793 = vector.shape_cast %786 : vector<2x256xf32> to vector<1x2x256xf32>
    tpu.vector_store %arg4[%c11_724, %c0_725, %c0_726], %793 {strides = array<i32>} : memref<16x2x256xf32, #tpu.memory_space<vmem>>, vector<1x2x256xf32>,
    %c12_727 = arith.constant 12 : index
    %c0_728 = arith.constant 0 : index
    %c0_729 = arith.constant 0 : index
    %794 = vector.load %arg4[%c12_727, %c0_728, %c0_729] : memref<16x2x256xf32, #tpu.memory_space<vmem>>, vector<1x2x256xf32>
    %795 = vector.shape_cast %794 : vector<1x2x256xf32> to vector<2x256xf32>
    %c13_730 = arith.constant 13 : index
    %c0_731 = arith.constant 0 : index
    %c0_732 = arith.constant 0 : index
    %796 = vector.load %arg4[%c13_730, %c0_731, %c0_732] : memref<16x2x256xf32, #tpu.memory_space<vmem>>, vector<1x2x256xf32>
    %797 = vector.shape_cast %796 : vector<1x2x256xf32> to vector<2x256xf32>
    %798 = arith.minimumf %795, %797 : vector<2x256xf32>
    %799 = arith.maximumf %795, %797 : vector<2x256xf32>
    %c12_733 = arith.constant 12 : index
    %c0_734 = arith.constant 0 : index
    %c0_735 = arith.constant 0 : index
    %800 = vector.load %arg4[%c12_733, %c0_734, %c0_735] : memref<16x2x256xf32, #tpu.memory_space<vmem>>, vector<1x2x256xf32>
    %801 = vector.shape_cast %800 : vector<1x2x256xf32> to vector<2x256xf32>
    %802 = vector.shape_cast %799 : vector<2x256xf32> to vector<1x2x256xf32>
    tpu.vector_store %arg4[%c12_733, %c0_734, %c0_735], %802 {strides = array<i32>} : memref<16x2x256xf32, #tpu.memory_space<vmem>>, vector<1x2x256xf32>,
    %c13_736 = arith.constant 13 : index
    %c0_737 = arith.constant 0 : index
    %c0_738 = arith.constant 0 : index
    %803 = vector.load %arg4[%c13_736, %c0_737, %c0_738] : memref<16x2x256xf32, #tpu.memory_space<vmem>>, vector<1x2x256xf32>
    %804 = vector.shape_cast %803 : vector<1x2x256xf32> to vector<2x256xf32>
    %805 = vector.shape_cast %798 : vector<2x256xf32> to vector<1x2x256xf32>
    tpu.vector_store %arg4[%c13_736, %c0_737, %c0_738], %805 {strides = array<i32>} : memref<16x2x256xf32, #tpu.memory_space<vmem>>, vector<1x2x256xf32>,
    %c14_739 = arith.constant 14 : index
    %c0_740 = arith.constant 0 : index
    %c0_741 = arith.constant 0 : index
    %806 = vector.load %arg4[%c14_739, %c0_740, %c0_741] : memref<16x2x256xf32, #tpu.memory_space<vmem>>, vector<1x2x256xf32>
    %807 = vector.shape_cast %806 : vector<1x2x256xf32> to vector<2x256xf32>
    %c15_742 = arith.constant 15 : index
    %c0_743 = arith.constant 0 : index
    %c0_744 = arith.constant 0 : index
    %808 = vector.load %arg4[%c15_742, %c0_743, %c0_744] : memref<16x2x256xf32, #tpu.memory_space<vmem>>, vector<1x2x256xf32>
    %809 = vector.shape_cast %808 : vector<1x2x256xf32> to vector<2x256xf32>
    %810 = arith.minimumf %807, %809 : vector<2x256xf32>
    %811 = arith.maximumf %807, %809 : vector<2x256xf32>
    %c14_745 = arith.constant 14 : index
    %c0_746 = arith.constant 0 : index
    %c0_747 = arith.constant 0 : index
    %812 = vector.load %arg4[%c14_745, %c0_746, %c0_747] : memref<16x2x256xf32, #tpu.memory_space<vmem>>, vector<1x2x256xf32>
    %813 = vector.shape_cast %812 : vector<1x2x256xf32> to vector<2x256xf32>
    %814 = vector.shape_cast %811 : vector<2x256xf32> to vector<1x2x256xf32>
    tpu.vector_store %arg4[%c14_745, %c0_746, %c0_747], %814 {strides = array<i32>} : memref<16x2x256xf32, #tpu.memory_space<vmem>>, vector<1x2x256xf32>,
    %c15_748 = arith.constant 15 : index
    %c0_749 = arith.constant 0 : index
    %c0_750 = arith.constant 0 : index
    %815 = vector.load %arg4[%c15_748, %c0_749, %c0_750] : memref<16x2x256xf32, #tpu.memory_space<vmem>>, vector<1x2x256xf32>
    %816 = vector.shape_cast %815 : vector<1x2x256xf32> to vector<2x256xf32>
    %817 = vector.shape_cast %810 : vector<2x256xf32> to vector<1x2x256xf32>
    tpu.vector_store %arg4[%c15_748, %c0_749, %c0_750], %817 {strides = array<i32>} : memref<16x2x256xf32, #tpu.memory_space<vmem>>, vector<1x2x256xf32>,
    %c0_751 = arith.constant 0 : index
    %c0_752 = arith.constant 0 : index
    %c0_753 = arith.constant 0 : index
    %818 = vector.load %arg4[%c0_751, %c0_752, %c0_753] : memref<16x2x256xf32, #tpu.memory_space<vmem>>, vector<1x2x256xf32>
    %819 = vector.shape_cast %818 : vector<1x2x256xf32> to vector<2x256xf32>
    %c8_754 = arith.constant 8 : index
    %c0_755 = arith.constant 0 : index
    %c0_756 = arith.constant 0 : index
    %820 = vector.load %arg4[%c8_754, %c0_755, %c0_756] : memref<16x2x256xf32, #tpu.memory_space<vmem>>, vector<1x2x256xf32>
    %821 = vector.shape_cast %820 : vector<1x2x256xf32> to vector<2x256xf32>
    %822 = arith.minimumf %819, %821 : vector<2x256xf32>
    %823 = arith.maximumf %819, %821 : vector<2x256xf32>
    %c0_757 = arith.constant 0 : index
    %c0_758 = arith.constant 0 : index
    %c0_759 = arith.constant 0 : index
    %824 = vector.load %arg4[%c0_757, %c0_758, %c0_759] : memref<16x2x256xf32, #tpu.memory_space<vmem>>, vector<1x2x256xf32>
    %825 = vector.shape_cast %824 : vector<1x2x256xf32> to vector<2x256xf32>
    %826 = vector.shape_cast %822 : vector<2x256xf32> to vector<1x2x256xf32>
    tpu.vector_store %arg4[%c0_757, %c0_758, %c0_759], %826 {strides = array<i32>} : memref<16x2x256xf32, #tpu.memory_space<vmem>>, vector<1x2x256xf32>,
    %c8_760 = arith.constant 8 : index
    %c0_761 = arith.constant 0 : index
    %c0_762 = arith.constant 0 : index
    %827 = vector.load %arg4[%c8_760, %c0_761, %c0_762] : memref<16x2x256xf32, #tpu.memory_space<vmem>>, vector<1x2x256xf32>
    %828 = vector.shape_cast %827 : vector<1x2x256xf32> to vector<2x256xf32>
    %829 = vector.shape_cast %823 : vector<2x256xf32> to vector<1x2x256xf32>
    tpu.vector_store %arg4[%c8_760, %c0_761, %c0_762], %829 {strides = array<i32>} : memref<16x2x256xf32, #tpu.memory_space<vmem>>, vector<1x2x256xf32>,
    %c1_763 = arith.constant 1 : index
    %c0_764 = arith.constant 0 : index
    %c0_765 = arith.constant 0 : index
    %830 = vector.load %arg4[%c1_763, %c0_764, %c0_765] : memref<16x2x256xf32, #tpu.memory_space<vmem>>, vector<1x2x256xf32>
    %831 = vector.shape_cast %830 : vector<1x2x256xf32> to vector<2x256xf32>
    %c9_766 = arith.constant 9 : index
    %c0_767 = arith.constant 0 : index
    %c0_768 = arith.constant 0 : index
    %832 = vector.load %arg4[%c9_766, %c0_767, %c0_768] : memref<16x2x256xf32, #tpu.memory_space<vmem>>, vector<1x2x256xf32>
    %833 = vector.shape_cast %832 : vector<1x2x256xf32> to vector<2x256xf32>
    %834 = arith.minimumf %831, %833 : vector<2x256xf32>
    %835 = arith.maximumf %831, %833 : vector<2x256xf32>
    %c1_769 = arith.constant 1 : index
    %c0_770 = arith.constant 0 : index
    %c0_771 = arith.constant 0 : index
    %836 = vector.load %arg4[%c1_769, %c0_770, %c0_771] : memref<16x2x256xf32, #tpu.memory_space<vmem>>, vector<1x2x256xf32>
    %837 = vector.shape_cast %836 : vector<1x2x256xf32> to vector<2x256xf32>
    %838 = vector.shape_cast %834 : vector<2x256xf32> to vector<1x2x256xf32>
    tpu.vector_store %arg4[%c1_769, %c0_770, %c0_771], %838 {strides = array<i32>} : memref<16x2x256xf32, #tpu.memory_space<vmem>>, vector<1x2x256xf32>,
    %c9_772 = arith.constant 9 : index
    %c0_773 = arith.constant 0 : index
    %c0_774 = arith.constant 0 : index
    %839 = vector.load %arg4[%c9_772, %c0_773, %c0_774] : memref<16x2x256xf32, #tpu.memory_space<vmem>>, vector<1x2x256xf32>
    %840 = vector.shape_cast %839 : vector<1x2x256xf32> to vector<2x256xf32>
    %841 = vector.shape_cast %835 : vector<2x256xf32> to vector<1x2x256xf32>
    tpu.vector_store %arg4[%c9_772, %c0_773, %c0_774], %841 {strides = array<i32>} : memref<16x2x256xf32, #tpu.memory_space<vmem>>, vector<1x2x256xf32>,
    %c2_775 = arith.constant 2 : index
    %c0_776 = arith.constant 0 : index
    %c0_777 = arith.constant 0 : index
    %842 = vector.load %arg4[%c2_775, %c0_776, %c0_777] : memref<16x2x256xf32, #tpu.memory_space<vmem>>, vector<1x2x256xf32>
    %843 = vector.shape_cast %842 : vector<1x2x256xf32> to vector<2x256xf32>
    %c10_778 = arith.constant 10 : index
    %c0_779 = arith.constant 0 : index
    %c0_780 = arith.constant 0 : index
    %844 = vector.load %arg4[%c10_778, %c0_779, %c0_780] : memref<16x2x256xf32, #tpu.memory_space<vmem>>, vector<1x2x256xf32>
    %845 = vector.shape_cast %844 : vector<1x2x256xf32> to vector<2x256xf32>
    %846 = arith.minimumf %843, %845 : vector<2x256xf32>
    %847 = arith.maximumf %843, %845 : vector<2x256xf32>
    %c2_781 = arith.constant 2 : index
    %c0_782 = arith.constant 0 : index
    %c0_783 = arith.constant 0 : index
    %848 = vector.load %arg4[%c2_781, %c0_782, %c0_783] : memref<16x2x256xf32, #tpu.memory_space<vmem>>, vector<1x2x256xf32>
    %849 = vector.shape_cast %848 : vector<1x2x256xf32> to vector<2x256xf32>
    %850 = vector.shape_cast %846 : vector<2x256xf32> to vector<1x2x256xf32>
    tpu.vector_store %arg4[%c2_781, %c0_782, %c0_783], %850 {strides = array<i32>} : memref<16x2x256xf32, #tpu.memory_space<vmem>>, vector<1x2x256xf32>,
    %c10_784 = arith.constant 10 : index
    %c0_785 = arith.constant 0 : index
    %c0_786 = arith.constant 0 : index
    %851 = vector.load %arg4[%c10_784, %c0_785, %c0_786] : memref<16x2x256xf32, #tpu.memory_space<vmem>>, vector<1x2x256xf32>
    %852 = vector.shape_cast %851 : vector<1x2x256xf32> to vector<2x256xf32>
    %853 = vector.shape_cast %847 : vector<2x256xf32> to vector<1x2x256xf32>
    tpu.vector_store %arg4[%c10_784, %c0_785, %c0_786], %853 {strides = array<i32>} : memref<16x2x256xf32, #tpu.memory_space<vmem>>, vector<1x2x256xf32>,
    %c3_787 = arith.constant 3 : index
    %c0_788 = arith.constant 0 : index
    %c0_789 = arith.constant 0 : index
    %854 = vector.load %arg4[%c3_787, %c0_788, %c0_789] : memref<16x2x256xf32, #tpu.memory_space<vmem>>, vector<1x2x256xf32>
    %855 = vector.shape_cast %854 : vector<1x2x256xf32> to vector<2x256xf32>
    %c11_790 = arith.constant 11 : index
    %c0_791 = arith.constant 0 : index
    %c0_792 = arith.constant 0 : index
    %856 = vector.load %arg4[%c11_790, %c0_791, %c0_792] : memref<16x2x256xf32, #tpu.memory_space<vmem>>, vector<1x2x256xf32>
    %857 = vector.shape_cast %856 : vector<1x2x256xf32> to vector<2x256xf32>
    %858 = arith.minimumf %855, %857 : vector<2x256xf32>
    %859 = arith.maximumf %855, %857 : vector<2x256xf32>
    %c3_793 = arith.constant 3 : index
    %c0_794 = arith.constant 0 : index
    %c0_795 = arith.constant 0 : index
    %860 = vector.load %arg4[%c3_793, %c0_794, %c0_795] : memref<16x2x256xf32, #tpu.memory_space<vmem>>, vector<1x2x256xf32>
    %861 = vector.shape_cast %860 : vector<1x2x256xf32> to vector<2x256xf32>
    %862 = vector.shape_cast %858 : vector<2x256xf32> to vector<1x2x256xf32>
    tpu.vector_store %arg4[%c3_793, %c0_794, %c0_795], %862 {strides = array<i32>} : memref<16x2x256xf32, #tpu.memory_space<vmem>>, vector<1x2x256xf32>,
    %c11_796 = arith.constant 11 : index
    %c0_797 = arith.constant 0 : index
    %c0_798 = arith.constant 0 : index
    %863 = vector.load %arg4[%c11_796, %c0_797, %c0_798] : memref<16x2x256xf32, #tpu.memory_space<vmem>>, vector<1x2x256xf32>
    %864 = vector.shape_cast %863 : vector<1x2x256xf32> to vector<2x256xf32>
    %865 = vector.shape_cast %859 : vector<2x256xf32> to vector<1x2x256xf32>
    tpu.vector_store %arg4[%c11_796, %c0_797, %c0_798], %865 {strides = array<i32>} : memref<16x2x256xf32, #tpu.memory_space<vmem>>, vector<1x2x256xf32>,
    %c4_799 = arith.constant 4 : index
    %c0_800 = arith.constant 0 : index
    %c0_801 = arith.constant 0 : index
    %866 = vector.load %arg4[%c4_799, %c0_800, %c0_801] : memref<16x2x256xf32, #tpu.memory_space<vmem>>, vector<1x2x256xf32>
    %867 = vector.shape_cast %866 : vector<1x2x256xf32> to vector<2x256xf32>
    %c12_802 = arith.constant 12 : index
    %c0_803 = arith.constant 0 : index
    %c0_804 = arith.constant 0 : index
    %868 = vector.load %arg4[%c12_802, %c0_803, %c0_804] : memref<16x2x256xf32, #tpu.memory_space<vmem>>, vector<1x2x256xf32>
    %869 = vector.shape_cast %868 : vector<1x2x256xf32> to vector<2x256xf32>
    %870 = arith.minimumf %867, %869 : vector<2x256xf32>
    %871 = arith.maximumf %867, %869 : vector<2x256xf32>
    %c4_805 = arith.constant 4 : index
    %c0_806 = arith.constant 0 : index
    %c0_807 = arith.constant 0 : index
    %872 = vector.load %arg4[%c4_805, %c0_806, %c0_807] : memref<16x2x256xf32, #tpu.memory_space<vmem>>, vector<1x2x256xf32>
    %873 = vector.shape_cast %872 : vector<1x2x256xf32> to vector<2x256xf32>
    %874 = vector.shape_cast %870 : vector<2x256xf32> to vector<1x2x256xf32>
    tpu.vector_store %arg4[%c4_805, %c0_806, %c0_807], %874 {strides = array<i32>} : memref<16x2x256xf32, #tpu.memory_space<vmem>>, vector<1x2x256xf32>,
    %c12_808 = arith.constant 12 : index
    %c0_809 = arith.constant 0 : index
    %c0_810 = arith.constant 0 : index
    %875 = vector.load %arg4[%c12_808, %c0_809, %c0_810] : memref<16x2x256xf32, #tpu.memory_space<vmem>>, vector<1x2x256xf32>
    %876 = vector.shape_cast %875 : vector<1x2x256xf32> to vector<2x256xf32>
    %877 = vector.shape_cast %871 : vector<2x256xf32> to vector<1x2x256xf32>
    tpu.vector_store %arg4[%c12_808, %c0_809, %c0_810], %877 {strides = array<i32>} : memref<16x2x256xf32, #tpu.memory_space<vmem>>, vector<1x2x256xf32>,
    %c5_811 = arith.constant 5 : index
    %c0_812 = arith.constant 0 : index
    %c0_813 = arith.constant 0 : index
    %878 = vector.load %arg4[%c5_811, %c0_812, %c0_813] : memref<16x2x256xf32, #tpu.memory_space<vmem>>, vector<1x2x256xf32>
    %879 = vector.shape_cast %878 : vector<1x2x256xf32> to vector<2x256xf32>
    %c13_814 = arith.constant 13 : index
    %c0_815 = arith.constant 0 : index
    %c0_816 = arith.constant 0 : index
    %880 = vector.load %arg4[%c13_814, %c0_815, %c0_816] : memref<16x2x256xf32, #tpu.memory_space<vmem>>, vector<1x2x256xf32>
    %881 = vector.shape_cast %880 : vector<1x2x256xf32> to vector<2x256xf32>
    %882 = arith.minimumf %879, %881 : vector<2x256xf32>
    %883 = arith.maximumf %879, %881 : vector<2x256xf32>
    %c5_817 = arith.constant 5 : index
    %c0_818 = arith.constant 0 : index
    %c0_819 = arith.constant 0 : index
    %884 = vector.load %arg4[%c5_817, %c0_818, %c0_819] : memref<16x2x256xf32, #tpu.memory_space<vmem>>, vector<1x2x256xf32>
    %885 = vector.shape_cast %884 : vector<1x2x256xf32> to vector<2x256xf32>
    %886 = vector.shape_cast %882 : vector<2x256xf32> to vector<1x2x256xf32>
    tpu.vector_store %arg4[%c5_817, %c0_818, %c0_819], %886 {strides = array<i32>} : memref<16x2x256xf32, #tpu.memory_space<vmem>>, vector<1x2x256xf32>,
    %c13_820 = arith.constant 13 : index
    %c0_821 = arith.constant 0 : index
    %c0_822 = arith.constant 0 : index
    %887 = vector.load %arg4[%c13_820, %c0_821, %c0_822] : memref<16x2x256xf32, #tpu.memory_space<vmem>>, vector<1x2x256xf32>
    %888 = vector.shape_cast %887 : vector<1x2x256xf32> to vector<2x256xf32>
    %889 = vector.shape_cast %883 : vector<2x256xf32> to vector<1x2x256xf32>
    tpu.vector_store %arg4[%c13_820, %c0_821, %c0_822], %889 {strides = array<i32>} : memref<16x2x256xf32, #tpu.memory_space<vmem>>, vector<1x2x256xf32>,
    %c6_823 = arith.constant 6 : index
    %c0_824 = arith.constant 0 : index
    %c0_825 = arith.constant 0 : index
    %890 = vector.load %arg4[%c6_823, %c0_824, %c0_825] : memref<16x2x256xf32, #tpu.memory_space<vmem>>, vector<1x2x256xf32>
    %891 = vector.shape_cast %890 : vector<1x2x256xf32> to vector<2x256xf32>
    %c14_826 = arith.constant 14 : index
    %c0_827 = arith.constant 0 : index
    %c0_828 = arith.constant 0 : index
    %892 = vector.load %arg4[%c14_826, %c0_827, %c0_828] : memref<16x2x256xf32, #tpu.memory_space<vmem>>, vector<1x2x256xf32>
    %893 = vector.shape_cast %892 : vector<1x2x256xf32> to vector<2x256xf32>
    %894 = arith.minimumf %891, %893 : vector<2x256xf32>
    %895 = arith.maximumf %891, %893 : vector<2x256xf32>
    %c6_829 = arith.constant 6 : index
    %c0_830 = arith.constant 0 : index
    %c0_831 = arith.constant 0 : index
    %896 = vector.load %arg4[%c6_829, %c0_830, %c0_831] : memref<16x2x256xf32, #tpu.memory_space<vmem>>, vector<1x2x256xf32>
    %897 = vector.shape_cast %896 : vector<1x2x256xf32> to vector<2x256xf32>
    %898 = vector.shape_cast %894 : vector<2x256xf32> to vector<1x2x256xf32>
    tpu.vector_store %arg4[%c6_829, %c0_830, %c0_831], %898 {strides = array<i32>} : memref<16x2x256xf32, #tpu.memory_space<vmem>>, vector<1x2x256xf32>,
    %c14_832 = arith.constant 14 : index
    %c0_833 = arith.constant 0 : index
    %c0_834 = arith.constant 0 : index
    %899 = vector.load %arg4[%c14_832, %c0_833, %c0_834] : memref<16x2x256xf32, #tpu.memory_space<vmem>>, vector<1x2x256xf32>
    %900 = vector.shape_cast %899 : vector<1x2x256xf32> to vector<2x256xf32>
    %901 = vector.shape_cast %895 : vector<2x256xf32> to vector<1x2x256xf32>
    tpu.vector_store %arg4[%c14_832, %c0_833, %c0_834], %901 {strides = array<i32>} : memref<16x2x256xf32, #tpu.memory_space<vmem>>, vector<1x2x256xf32>,
    %c7_835 = arith.constant 7 : index
    %c0_836 = arith.constant 0 : index
    %c0_837 = arith.constant 0 : index
    %902 = vector.load %arg4[%c7_835, %c0_836, %c0_837] : memref<16x2x256xf32, #tpu.memory_space<vmem>>, vector<1x2x256xf32>
    %903 = vector.shape_cast %902 : vector<1x2x256xf32> to vector<2x256xf32>
    %c15_838 = arith.constant 15 : index
    %c0_839 = arith.constant 0 : index
    %c0_840 = arith.constant 0 : index
    %904 = vector.load %arg4[%c15_838, %c0_839, %c0_840] : memref<16x2x256xf32, #tpu.memory_space<vmem>>, vector<1x2x256xf32>
    %905 = vector.shape_cast %904 : vector<1x2x256xf32> to vector<2x256xf32>
    %906 = arith.minimumf %903, %905 : vector<2x256xf32>
    %907 = arith.maximumf %903, %905 : vector<2x256xf32>
    %c7_841 = arith.constant 7 : index
    %c0_842 = arith.constant 0 : index
    %c0_843 = arith.constant 0 : index
    %908 = vector.load %arg4[%c7_841, %c0_842, %c0_843] : memref<16x2x256xf32, #tpu.memory_space<vmem>>, vector<1x2x256xf32>
    %909 = vector.shape_cast %908 : vector<1x2x256xf32> to vector<2x256xf32>
    %910 = vector.shape_cast %906 : vector<2x256xf32> to vector<1x2x256xf32>
    tpu.vector_store %arg4[%c7_841, %c0_842, %c0_843], %910 {strides = array<i32>} : memref<16x2x256xf32, #tpu.memory_space<vmem>>, vector<1x2x256xf32>,
    %c15_844 = arith.constant 15 : index
    %c0_845 = arith.constant 0 : index
    %c0_846 = arith.constant 0 : index
    %911 = vector.load %arg4[%c15_844, %c0_845, %c0_846] : memref<16x2x256xf32, #tpu.memory_space<vmem>>, vector<1x2x256xf32>
    %912 = vector.shape_cast %911 : vector<1x2x256xf32> to vector<2x256xf32>
    %913 = vector.shape_cast %907 : vector<2x256xf32> to vector<1x2x256xf32>
    tpu.vector_store %arg4[%c15_844, %c0_845, %c0_846], %913 {strides = array<i32>} : memref<16x2x256xf32, #tpu.memory_space<vmem>>, vector<1x2x256xf32>,
    %c0_847 = arith.constant 0 : index
    %c0_848 = arith.constant 0 : index
    %c0_849 = arith.constant 0 : index
    %914 = vector.load %arg4[%c0_847, %c0_848, %c0_849] : memref<16x2x256xf32, #tpu.memory_space<vmem>>, vector<1x2x256xf32>
    %915 = vector.shape_cast %914 : vector<1x2x256xf32> to vector<2x256xf32>
    %c4_850 = arith.constant 4 : index
    %c0_851 = arith.constant 0 : index
    %c0_852 = arith.constant 0 : index
    %916 = vector.load %arg4[%c4_850, %c0_851, %c0_852] : memref<16x2x256xf32, #tpu.memory_space<vmem>>, vector<1x2x256xf32>
    %917 = vector.shape_cast %916 : vector<1x2x256xf32> to vector<2x256xf32>
    %918 = arith.minimumf %915, %917 : vector<2x256xf32>
    %919 = arith.maximumf %915, %917 : vector<2x256xf32>
    %c0_853 = arith.constant 0 : index
    %c0_854 = arith.constant 0 : index
    %c0_855 = arith.constant 0 : index
    %920 = vector.load %arg4[%c0_853, %c0_854, %c0_855] : memref<16x2x256xf32, #tpu.memory_space<vmem>>, vector<1x2x256xf32>
    %921 = vector.shape_cast %920 : vector<1x2x256xf32> to vector<2x256xf32>
    %922 = vector.shape_cast %918 : vector<2x256xf32> to vector<1x2x256xf32>
    tpu.vector_store %arg4[%c0_853, %c0_854, %c0_855], %922 {strides = array<i32>} : memref<16x2x256xf32, #tpu.memory_space<vmem>>, vector<1x2x256xf32>,
    %c4_856 = arith.constant 4 : index
    %c0_857 = arith.constant 0 : index
    %c0_858 = arith.constant 0 : index
    %923 = vector.load %arg4[%c4_856, %c0_857, %c0_858] : memref<16x2x256xf32, #tpu.memory_space<vmem>>, vector<1x2x256xf32>
    %924 = vector.shape_cast %923 : vector<1x2x256xf32> to vector<2x256xf32>
    %925 = vector.shape_cast %919 : vector<2x256xf32> to vector<1x2x256xf32>
    tpu.vector_store %arg4[%c4_856, %c0_857, %c0_858], %925 {strides = array<i32>} : memref<16x2x256xf32, #tpu.memory_space<vmem>>, vector<1x2x256xf32>,
    %c1_859 = arith.constant 1 : index
    %c0_860 = arith.constant 0 : index
    %c0_861 = arith.constant 0 : index
    %926 = vector.load %arg4[%c1_859, %c0_860, %c0_861] : memref<16x2x256xf32, #tpu.memory_space<vmem>>, vector<1x2x256xf32>
    %927 = vector.shape_cast %926 : vector<1x2x256xf32> to vector<2x256xf32>
    %c5_862 = arith.constant 5 : index
    %c0_863 = arith.constant 0 : index
    %c0_864 = arith.constant 0 : index
    %928 = vector.load %arg4[%c5_862, %c0_863, %c0_864] : memref<16x2x256xf32, #tpu.memory_space<vmem>>, vector<1x2x256xf32>
    %929 = vector.shape_cast %928 : vector<1x2x256xf32> to vector<2x256xf32>
    %930 = arith.minimumf %927, %929 : vector<2x256xf32>
    %931 = arith.maximumf %927, %929 : vector<2x256xf32>
    %c1_865 = arith.constant 1 : index
    %c0_866 = arith.constant 0 : index
    %c0_867 = arith.constant 0 : index
    %932 = vector.load %arg4[%c1_865, %c0_866, %c0_867] : memref<16x2x256xf32, #tpu.memory_space<vmem>>, vector<1x2x256xf32>
    %933 = vector.shape_cast %932 : vector<1x2x256xf32> to vector<2x256xf32>
    %934 = vector.shape_cast %930 : vector<2x256xf32> to vector<1x2x256xf32>
    tpu.vector_store %arg4[%c1_865, %c0_866, %c0_867], %934 {strides = array<i32>} : memref<16x2x256xf32, #tpu.memory_space<vmem>>, vector<1x2x256xf32>,
    %c5_868 = arith.constant 5 : index
    %c0_869 = arith.constant 0 : index
    %c0_870 = arith.constant 0 : index
    %935 = vector.load %arg4[%c5_868, %c0_869, %c0_870] : memref<16x2x256xf32, #tpu.memory_space<vmem>>, vector<1x2x256xf32>
    %936 = vector.shape_cast %935 : vector<1x2x256xf32> to vector<2x256xf32>
    %937 = vector.shape_cast %931 : vector<2x256xf32> to vector<1x2x256xf32>
    tpu.vector_store %arg4[%c5_868, %c0_869, %c0_870], %937 {strides = array<i32>} : memref<16x2x256xf32, #tpu.memory_space<vmem>>, vector<1x2x256xf32>,
    %c2_871 = arith.constant 2 : index
    %c0_872 = arith.constant 0 : index
    %c0_873 = arith.constant 0 : index
    %938 = vector.load %arg4[%c2_871, %c0_872, %c0_873] : memref<16x2x256xf32, #tpu.memory_space<vmem>>, vector<1x2x256xf32>
    %939 = vector.shape_cast %938 : vector<1x2x256xf32> to vector<2x256xf32>
    %c6_874 = arith.constant 6 : index
    %c0_875 = arith.constant 0 : index
    %c0_876 = arith.constant 0 : index
    %940 = vector.load %arg4[%c6_874, %c0_875, %c0_876] : memref<16x2x256xf32, #tpu.memory_space<vmem>>, vector<1x2x256xf32>
    %941 = vector.shape_cast %940 : vector<1x2x256xf32> to vector<2x256xf32>
    %942 = arith.minimumf %939, %941 : vector<2x256xf32>
    %943 = arith.maximumf %939, %941 : vector<2x256xf32>
    %c2_877 = arith.constant 2 : index
    %c0_878 = arith.constant 0 : index
    %c0_879 = arith.constant 0 : index
    %944 = vector.load %arg4[%c2_877, %c0_878, %c0_879] : memref<16x2x256xf32, #tpu.memory_space<vmem>>, vector<1x2x256xf32>
    %945 = vector.shape_cast %944 : vector<1x2x256xf32> to vector<2x256xf32>
    %946 = vector.shape_cast %942 : vector<2x256xf32> to vector<1x2x256xf32>
    tpu.vector_store %arg4[%c2_877, %c0_878, %c0_879], %946 {strides = array<i32>} : memref<16x2x256xf32, #tpu.memory_space<vmem>>, vector<1x2x256xf32>,
    %c6_880 = arith.constant 6 : index
    %c0_881 = arith.constant 0 : index
    %c0_882 = arith.constant 0 : index
    %947 = vector.load %arg4[%c6_880, %c0_881, %c0_882] : memref<16x2x256xf32, #tpu.memory_space<vmem>>, vector<1x2x256xf32>
    %948 = vector.shape_cast %947 : vector<1x2x256xf32> to vector<2x256xf32>
    %949 = vector.shape_cast %943 : vector<2x256xf32> to vector<1x2x256xf32>
    tpu.vector_store %arg4[%c6_880, %c0_881, %c0_882], %949 {strides = array<i32>} : memref<16x2x256xf32, #tpu.memory_space<vmem>>, vector<1x2x256xf32>,
    %c3_883 = arith.constant 3 : index
    %c0_884 = arith.constant 0 : index
    %c0_885 = arith.constant 0 : index
    %950 = vector.load %arg4[%c3_883, %c0_884, %c0_885] : memref<16x2x256xf32, #tpu.memory_space<vmem>>, vector<1x2x256xf32>
    %951 = vector.shape_cast %950 : vector<1x2x256xf32> to vector<2x256xf32>
    %c7_886 = arith.constant 7 : index
    %c0_887 = arith.constant 0 : index
    %c0_888 = arith.constant 0 : index
    %952 = vector.load %arg4[%c7_886, %c0_887, %c0_888] : memref<16x2x256xf32, #tpu.memory_space<vmem>>, vector<1x2x256xf32>
    %953 = vector.shape_cast %952 : vector<1x2x256xf32> to vector<2x256xf32>
    %954 = arith.minimumf %951, %953 : vector<2x256xf32>
    %955 = arith.maximumf %951, %953 : vector<2x256xf32>
    %c3_889 = arith.constant 3 : index
    %c0_890 = arith.constant 0 : index
    %c0_891 = arith.constant 0 : index
    %956 = vector.load %arg4[%c3_889, %c0_890, %c0_891] : memref<16x2x256xf32, #tpu.memory_space<vmem>>, vector<1x2x256xf32>
    %957 = vector.shape_cast %956 : vector<1x2x256xf32> to vector<2x256xf32>
    %958 = vector.shape_cast %954 : vector<2x256xf32> to vector<1x2x256xf32>
    tpu.vector_store %arg4[%c3_889, %c0_890, %c0_891], %958 {strides = array<i32>} : memref<16x2x256xf32, #tpu.memory_space<vmem>>, vector<1x2x256xf32>,
    %c7_892 = arith.constant 7 : index
    %c0_893 = arith.constant 0 : index
    %c0_894 = arith.constant 0 : index
    %959 = vector.load %arg4[%c7_892, %c0_893, %c0_894] : memref<16x2x256xf32, #tpu.memory_space<vmem>>, vector<1x2x256xf32>
    %960 = vector.shape_cast %959 : vector<1x2x256xf32> to vector<2x256xf32>
    %961 = vector.shape_cast %955 : vector<2x256xf32> to vector<1x2x256xf32>
    tpu.vector_store %arg4[%c7_892, %c0_893, %c0_894], %961 {strides = array<i32>} : memref<16x2x256xf32, #tpu.memory_space<vmem>>, vector<1x2x256xf32>,
    %c8_895 = arith.constant 8 : index
    %c0_896 = arith.constant 0 : index
    %c0_897 = arith.constant 0 : index
    %962 = vector.load %arg4[%c8_895, %c0_896, %c0_897] : memref<16x2x256xf32, #tpu.memory_space<vmem>>, vector<1x2x256xf32>
    %963 = vector.shape_cast %962 : vector<1x2x256xf32> to vector<2x256xf32>
    %c12_898 = arith.constant 12 : index
    %c0_899 = arith.constant 0 : index
    %c0_900 = arith.constant 0 : index
    %964 = vector.load %arg4[%c12_898, %c0_899, %c0_900] : memref<16x2x256xf32, #tpu.memory_space<vmem>>, vector<1x2x256xf32>
    %965 = vector.shape_cast %964 : vector<1x2x256xf32> to vector<2x256xf32>
    %966 = arith.minimumf %963, %965 : vector<2x256xf32>
    %967 = arith.maximumf %963, %965 : vector<2x256xf32>
    %c8_901 = arith.constant 8 : index
    %c0_902 = arith.constant 0 : index
    %c0_903 = arith.constant 0 : index
    %968 = vector.load %arg4[%c8_901, %c0_902, %c0_903] : memref<16x2x256xf32, #tpu.memory_space<vmem>>, vector<1x2x256xf32>
    %969 = vector.shape_cast %968 : vector<1x2x256xf32> to vector<2x256xf32>
    %970 = vector.shape_cast %966 : vector<2x256xf32> to vector<1x2x256xf32>
    tpu.vector_store %arg4[%c8_901, %c0_902, %c0_903], %970 {strides = array<i32>} : memref<16x2x256xf32, #tpu.memory_space<vmem>>, vector<1x2x256xf32>,
    %c12_904 = arith.constant 12 : index
    %c0_905 = arith.constant 0 : index
    %c0_906 = arith.constant 0 : index
    %971 = vector.load %arg4[%c12_904, %c0_905, %c0_906] : memref<16x2x256xf32, #tpu.memory_space<vmem>>, vector<1x2x256xf32>
    %972 = vector.shape_cast %971 : vector<1x2x256xf32> to vector<2x256xf32>
    %973 = vector.shape_cast %967 : vector<2x256xf32> to vector<1x2x256xf32>
    tpu.vector_store %arg4[%c12_904, %c0_905, %c0_906], %973 {strides = array<i32>} : memref<16x2x256xf32, #tpu.memory_space<vmem>>, vector<1x2x256xf32>,
    %c9_907 = arith.constant 9 : index
    %c0_908 = arith.constant 0 : index
    %c0_909 = arith.constant 0 : index
    %974 = vector.load %arg4[%c9_907, %c0_908, %c0_909] : memref<16x2x256xf32, #tpu.memory_space<vmem>>, vector<1x2x256xf32>
    %975 = vector.shape_cast %974 : vector<1x2x256xf32> to vector<2x256xf32>
    %c13_910 = arith.constant 13 : index
    %c0_911 = arith.constant 0 : index
    %c0_912 = arith.constant 0 : index
    %976 = vector.load %arg4[%c13_910, %c0_911, %c0_912] : memref<16x2x256xf32, #tpu.memory_space<vmem>>, vector<1x2x256xf32>
    %977 = vector.shape_cast %976 : vector<1x2x256xf32> to vector<2x256xf32>
    %978 = arith.minimumf %975, %977 : vector<2x256xf32>
    %979 = arith.maximumf %975, %977 : vector<2x256xf32>
    %c9_913 = arith.constant 9 : index
    %c0_914 = arith.constant 0 : index
    %c0_915 = arith.constant 0 : index
    %980 = vector.load %arg4[%c9_913, %c0_914, %c0_915] : memref<16x2x256xf32, #tpu.memory_space<vmem>>, vector<1x2x256xf32>
    %981 = vector.shape_cast %980 : vector<1x2x256xf32> to vector<2x256xf32>
    %982 = vector.shape_cast %978 : vector<2x256xf32> to vector<1x2x256xf32>
    tpu.vector_store %arg4[%c9_913, %c0_914, %c0_915], %982 {strides = array<i32>} : memref<16x2x256xf32, #tpu.memory_space<vmem>>, vector<1x2x256xf32>,
    %c13_916 = arith.constant 13 : index
    %c0_917 = arith.constant 0 : index
    %c0_918 = arith.constant 0 : index
    %983 = vector.load %arg4[%c13_916, %c0_917, %c0_918] : memref<16x2x256xf32, #tpu.memory_space<vmem>>, vector<1x2x256xf32>
    %984 = vector.shape_cast %983 : vector<1x2x256xf32> to vector<2x256xf32>
    %985 = vector.shape_cast %979 : vector<2x256xf32> to vector<1x2x256xf32>
    tpu.vector_store %arg4[%c13_916, %c0_917, %c0_918], %985 {strides = array<i32>} : memref<16x2x256xf32, #tpu.memory_space<vmem>>, vector<1x2x256xf32>,
    %c10_919 = arith.constant 10 : index
    %c0_920 = arith.constant 0 : index
    %c0_921 = arith.constant 0 : index
    %986 = vector.load %arg4[%c10_919, %c0_920, %c0_921] : memref<16x2x256xf32, #tpu.memory_space<vmem>>, vector<1x2x256xf32>
    %987 = vector.shape_cast %986 : vector<1x2x256xf32> to vector<2x256xf32>
    %c14_922 = arith.constant 14 : index
    %c0_923 = arith.constant 0 : index
    %c0_924 = arith.constant 0 : index
    %988 = vector.load %arg4[%c14_922, %c0_923, %c0_924] : memref<16x2x256xf32, #tpu.memory_space<vmem>>, vector<1x2x256xf32>
    %989 = vector.shape_cast %988 : vector<1x2x256xf32> to vector<2x256xf32>
    %990 = arith.minimumf %987, %989 : vector<2x256xf32>
    %991 = arith.maximumf %987, %989 : vector<2x256xf32>
    %c10_925 = arith.constant 10 : index
    %c0_926 = arith.constant 0 : index
    %c0_927 = arith.constant 0 : index
    %992 = vector.load %arg4[%c10_925, %c0_926, %c0_927] : memref<16x2x256xf32, #tpu.memory_space<vmem>>, vector<1x2x256xf32>
    %993 = vector.shape_cast %992 : vector<1x2x256xf32> to vector<2x256xf32>
    %994 = vector.shape_cast %990 : vector<2x256xf32> to vector<1x2x256xf32>
    tpu.vector_store %arg4[%c10_925, %c0_926, %c0_927], %994 {strides = array<i32>} : memref<16x2x256xf32, #tpu.memory_space<vmem>>, vector<1x2x256xf32>,
    %c14_928 = arith.constant 14 : index
    %c0_929 = arith.constant 0 : index
    %c0_930 = arith.constant 0 : index
    %995 = vector.load %arg4[%c14_928, %c0_929, %c0_930] : memref<16x2x256xf32, #tpu.memory_space<vmem>>, vector<1x2x256xf32>
    %996 = vector.shape_cast %995 : vector<1x2x256xf32> to vector<2x256xf32>
    %997 = vector.shape_cast %991 : vector<2x256xf32> to vector<1x2x256xf32>
    tpu.vector_store %arg4[%c14_928, %c0_929, %c0_930], %997 {strides = array<i32>} : memref<16x2x256xf32, #tpu.memory_space<vmem>>, vector<1x2x256xf32>,
    %c11_931 = arith.constant 11 : index
    %c0_932 = arith.constant 0 : index
    %c0_933 = arith.constant 0 : index
    %998 = vector.load %arg4[%c11_931, %c0_932, %c0_933] : memref<16x2x256xf32, #tpu.memory_space<vmem>>, vector<1x2x256xf32>
    %999 = vector.shape_cast %998 : vector<1x2x256xf32> to vector<2x256xf32>
    %c15_934 = arith.constant 15 : index
    %c0_935 = arith.constant 0 : index
    %c0_936 = arith.constant 0 : index
    %1000 = vector.load %arg4[%c15_934, %c0_935, %c0_936] : memref<16x2x256xf32, #tpu.memory_space<vmem>>, vector<1x2x256xf32>
    %1001 = vector.shape_cast %1000 : vector<1x2x256xf32> to vector<2x256xf32>
    %1002 = arith.minimumf %999, %1001 : vector<2x256xf32>
    %1003 = arith.maximumf %999, %1001 : vector<2x256xf32>
    %c11_937 = arith.constant 11 : index
    %c0_938 = arith.constant 0 : index
    %c0_939 = arith.constant 0 : index
    %1004 = vector.load %arg4[%c11_937, %c0_938, %c0_939] : memref<16x2x256xf32, #tpu.memory_space<vmem>>, vector<1x2x256xf32>
    %1005 = vector.shape_cast %1004 : vector<1x2x256xf32> to vector<2x256xf32>
    %1006 = vector.shape_cast %1002 : vector<2x256xf32> to vector<1x2x256xf32>
    tpu.vector_store %arg4[%c11_937, %c0_938, %c0_939], %1006 {strides = array<i32>} : memref<16x2x256xf32, #tpu.memory_space<vmem>>, vector<1x2x256xf32>,
    %c15_940 = arith.constant 15 : index
    %c0_941 = arith.constant 0 : index
    %c0_942 = arith.constant 0 : index
    %1007 = vector.load %arg4[%c15_940, %c0_941, %c0_942] : memref<16x2x256xf32, #tpu.memory_space<vmem>>, vector<1x2x256xf32>
    %1008 = vector.shape_cast %1007 : vector<1x2x256xf32> to vector<2x256xf32>
    %1009 = vector.shape_cast %1003 : vector<2x256xf32> to vector<1x2x256xf32>
    tpu.vector_store %arg4[%c15_940, %c0_941, %c0_942], %1009 {strides = array<i32>} : memref<16x2x256xf32, #tpu.memory_space<vmem>>, vector<1x2x256xf32>,
    %c0_943 = arith.constant 0 : index
    %c0_944 = arith.constant 0 : index
    %c0_945 = arith.constant 0 : index
    %1010 = vector.load %arg4[%c0_943, %c0_944, %c0_945] : memref<16x2x256xf32, #tpu.memory_space<vmem>>, vector<1x2x256xf32>
    %1011 = vector.shape_cast %1010 : vector<1x2x256xf32> to vector<2x256xf32>
    %c2_946 = arith.constant 2 : index
    %c0_947 = arith.constant 0 : index
    %c0_948 = arith.constant 0 : index
    %1012 = vector.load %arg4[%c2_946, %c0_947, %c0_948] : memref<16x2x256xf32, #tpu.memory_space<vmem>>, vector<1x2x256xf32>
    %1013 = vector.shape_cast %1012 : vector<1x2x256xf32> to vector<2x256xf32>
    %1014 = arith.minimumf %1011, %1013 : vector<2x256xf32>
    %1015 = arith.maximumf %1011, %1013 : vector<2x256xf32>
    %c0_949 = arith.constant 0 : index
    %c0_950 = arith.constant 0 : index
    %c0_951 = arith.constant 0 : index
    %1016 = vector.load %arg4[%c0_949, %c0_950, %c0_951] : memref<16x2x256xf32, #tpu.memory_space<vmem>>, vector<1x2x256xf32>
    %1017 = vector.shape_cast %1016 : vector<1x2x256xf32> to vector<2x256xf32>
    %1018 = vector.shape_cast %1014 : vector<2x256xf32> to vector<1x2x256xf32>
    tpu.vector_store %arg4[%c0_949, %c0_950, %c0_951], %1018 {strides = array<i32>} : memref<16x2x256xf32, #tpu.memory_space<vmem>>, vector<1x2x256xf32>,
    %c2_952 = arith.constant 2 : index
    %c0_953 = arith.constant 0 : index
    %c0_954 = arith.constant 0 : index
    %1019 = vector.load %arg4[%c2_952, %c0_953, %c0_954] : memref<16x2x256xf32, #tpu.memory_space<vmem>>, vector<1x2x256xf32>
    %1020 = vector.shape_cast %1019 : vector<1x2x256xf32> to vector<2x256xf32>
    %1021 = vector.shape_cast %1015 : vector<2x256xf32> to vector<1x2x256xf32>
    tpu.vector_store %arg4[%c2_952, %c0_953, %c0_954], %1021 {strides = array<i32>} : memref<16x2x256xf32, #tpu.memory_space<vmem>>, vector<1x2x256xf32>,
    %c1_955 = arith.constant 1 : index
    %c0_956 = arith.constant 0 : index
    %c0_957 = arith.constant 0 : index
    %1022 = vector.load %arg4[%c1_955, %c0_956, %c0_957] : memref<16x2x256xf32, #tpu.memory_space<vmem>>, vector<1x2x256xf32>
    %1023 = vector.shape_cast %1022 : vector<1x2x256xf32> to vector<2x256xf32>
    %c3_958 = arith.constant 3 : index
    %c0_959 = arith.constant 0 : index
    %c0_960 = arith.constant 0 : index
    %1024 = vector.load %arg4[%c3_958, %c0_959, %c0_960] : memref<16x2x256xf32, #tpu.memory_space<vmem>>, vector<1x2x256xf32>
    %1025 = vector.shape_cast %1024 : vector<1x2x256xf32> to vector<2x256xf32>
    %1026 = arith.minimumf %1023, %1025 : vector<2x256xf32>
    %1027 = arith.maximumf %1023, %1025 : vector<2x256xf32>
    %c1_961 = arith.constant 1 : index
    %c0_962 = arith.constant 0 : index
    %c0_963 = arith.constant 0 : index
    %1028 = vector.load %arg4[%c1_961, %c0_962, %c0_963] : memref<16x2x256xf32, #tpu.memory_space<vmem>>, vector<1x2x256xf32>
    %1029 = vector.shape_cast %1028 : vector<1x2x256xf32> to vector<2x256xf32>
    %1030 = vector.shape_cast %1026 : vector<2x256xf32> to vector<1x2x256xf32>
    tpu.vector_store %arg4[%c1_961, %c0_962, %c0_963], %1030 {strides = array<i32>} : memref<16x2x256xf32, #tpu.memory_space<vmem>>, vector<1x2x256xf32>,
    %c3_964 = arith.constant 3 : index
    %c0_965 = arith.constant 0 : index
    %c0_966 = arith.constant 0 : index
    %1031 = vector.load %arg4[%c3_964, %c0_965, %c0_966] : memref<16x2x256xf32, #tpu.memory_space<vmem>>, vector<1x2x256xf32>
    %1032 = vector.shape_cast %1031 : vector<1x2x256xf32> to vector<2x256xf32>
    %1033 = vector.shape_cast %1027 : vector<2x256xf32> to vector<1x2x256xf32>
    tpu.vector_store %arg4[%c3_964, %c0_965, %c0_966], %1033 {strides = array<i32>} : memref<16x2x256xf32, #tpu.memory_space<vmem>>, vector<1x2x256xf32>,
    %c4_967 = arith.constant 4 : index
    %c0_968 = arith.constant 0 : index
    %c0_969 = arith.constant 0 : index
    %1034 = vector.load %arg4[%c4_967, %c0_968, %c0_969] : memref<16x2x256xf32, #tpu.memory_space<vmem>>, vector<1x2x256xf32>
    %1035 = vector.shape_cast %1034 : vector<1x2x256xf32> to vector<2x256xf32>
    %c6_970 = arith.constant 6 : index
    %c0_971 = arith.constant 0 : index
    %c0_972 = arith.constant 0 : index
    %1036 = vector.load %arg4[%c6_970, %c0_971, %c0_972] : memref<16x2x256xf32, #tpu.memory_space<vmem>>, vector<1x2x256xf32>
    %1037 = vector.shape_cast %1036 : vector<1x2x256xf32> to vector<2x256xf32>
    %1038 = arith.minimumf %1035, %1037 : vector<2x256xf32>
    %1039 = arith.maximumf %1035, %1037 : vector<2x256xf32>
    %c4_973 = arith.constant 4 : index
    %c0_974 = arith.constant 0 : index
    %c0_975 = arith.constant 0 : index
    %1040 = vector.load %arg4[%c4_973, %c0_974, %c0_975] : memref<16x2x256xf32, #tpu.memory_space<vmem>>, vector<1x2x256xf32>
    %1041 = vector.shape_cast %1040 : vector<1x2x256xf32> to vector<2x256xf32>
    %1042 = vector.shape_cast %1038 : vector<2x256xf32> to vector<1x2x256xf32>
    tpu.vector_store %arg4[%c4_973, %c0_974, %c0_975], %1042 {strides = array<i32>} : memref<16x2x256xf32, #tpu.memory_space<vmem>>, vector<1x2x256xf32>,
    %c6_976 = arith.constant 6 : index
    %c0_977 = arith.constant 0 : index
    %c0_978 = arith.constant 0 : index
    %1043 = vector.load %arg4[%c6_976, %c0_977, %c0_978] : memref<16x2x256xf32, #tpu.memory_space<vmem>>, vector<1x2x256xf32>
    %1044 = vector.shape_cast %1043 : vector<1x2x256xf32> to vector<2x256xf32>
    %1045 = vector.shape_cast %1039 : vector<2x256xf32> to vector<1x2x256xf32>
    tpu.vector_store %arg4[%c6_976, %c0_977, %c0_978], %1045 {strides = array<i32>} : memref<16x2x256xf32, #tpu.memory_space<vmem>>, vector<1x2x256xf32>,
    %c5_979 = arith.constant 5 : index
    %c0_980 = arith.constant 0 : index
    %c0_981 = arith.constant 0 : index
    %1046 = vector.load %arg4[%c5_979, %c0_980, %c0_981] : memref<16x2x256xf32, #tpu.memory_space<vmem>>, vector<1x2x256xf32>
    %1047 = vector.shape_cast %1046 : vector<1x2x256xf32> to vector<2x256xf32>
    %c7_982 = arith.constant 7 : index
    %c0_983 = arith.constant 0 : index
    %c0_984 = arith.constant 0 : index
    %1048 = vector.load %arg4[%c7_982, %c0_983, %c0_984] : memref<16x2x256xf32, #tpu.memory_space<vmem>>, vector<1x2x256xf32>
    %1049 = vector.shape_cast %1048 : vector<1x2x256xf32> to vector<2x256xf32>
    %1050 = arith.minimumf %1047, %1049 : vector<2x256xf32>
    %1051 = arith.maximumf %1047, %1049 : vector<2x256xf32>
    %c5_985 = arith.constant 5 : index
    %c0_986 = arith.constant 0 : index
    %c0_987 = arith.constant 0 : index
    %1052 = vector.load %arg4[%c5_985, %c0_986, %c0_987] : memref<16x2x256xf32, #tpu.memory_space<vmem>>, vector<1x2x256xf32>
    %1053 = vector.shape_cast %1052 : vector<1x2x256xf32> to vector<2x256xf32>
    %1054 = vector.shape_cast %1050 : vector<2x256xf32> to vector<1x2x256xf32>
    tpu.vector_store %arg4[%c5_985, %c0_986, %c0_987], %1054 {strides = array<i32>} : memref<16x2x256xf32, #tpu.memory_space<vmem>>, vector<1x2x256xf32>,
    %c7_988 = arith.constant 7 : index
    %c0_989 = arith.constant 0 : index
    %c0_990 = arith.constant 0 : index
    %1055 = vector.load %arg4[%c7_988, %c0_989, %c0_990] : memref<16x2x256xf32, #tpu.memory_space<vmem>>, vector<1x2x256xf32>
    %1056 = vector.shape_cast %1055 : vector<1x2x256xf32> to vector<2x256xf32>
    %1057 = vector.shape_cast %1051 : vector<2x256xf32> to vector<1x2x256xf32>
    tpu.vector_store %arg4[%c7_988, %c0_989, %c0_990], %1057 {strides = array<i32>} : memref<16x2x256xf32, #tpu.memory_space<vmem>>, vector<1x2x256xf32>,
    %c8_991 = arith.constant 8 : index
    %c0_992 = arith.constant 0 : index
    %c0_993 = arith.constant 0 : index
    %1058 = vector.load %arg4[%c8_991, %c0_992, %c0_993] : memref<16x2x256xf32, #tpu.memory_space<vmem>>, vector<1x2x256xf32>
    %1059 = vector.shape_cast %1058 : vector<1x2x256xf32> to vector<2x256xf32>
    %c10_994 = arith.constant 10 : index
    %c0_995 = arith.constant 0 : index
    %c0_996 = arith.constant 0 : index
    %1060 = vector.load %arg4[%c10_994, %c0_995, %c0_996] : memref<16x2x256xf32, #tpu.memory_space<vmem>>, vector<1x2x256xf32>
    %1061 = vector.shape_cast %1060 : vector<1x2x256xf32> to vector<2x256xf32>
    %1062 = arith.minimumf %1059, %1061 : vector<2x256xf32>
    %1063 = arith.maximumf %1059, %1061 : vector<2x256xf32>
    %c8_997 = arith.constant 8 : index
    %c0_998 = arith.constant 0 : index
    %c0_999 = arith.constant 0 : index
    %1064 = vector.load %arg4[%c8_997, %c0_998, %c0_999] : memref<16x2x256xf32, #tpu.memory_space<vmem>>, vector<1x2x256xf32>
    %1065 = vector.shape_cast %1064 : vector<1x2x256xf32> to vector<2x256xf32>
    %1066 = vector.shape_cast %1062 : vector<2x256xf32> to vector<1x2x256xf32>
    tpu.vector_store %arg4[%c8_997, %c0_998, %c0_999], %1066 {strides = array<i32>} : memref<16x2x256xf32, #tpu.memory_space<vmem>>, vector<1x2x256xf32>,
    %c10_1000 = arith.constant 10 : index
    %c0_1001 = arith.constant 0 : index
    %c0_1002 = arith.constant 0 : index
    %1067 = vector.load %arg4[%c10_1000, %c0_1001, %c0_1002] : memref<16x2x256xf32, #tpu.memory_space<vmem>>, vector<1x2x256xf32>
    %1068 = vector.shape_cast %1067 : vector<1x2x256xf32> to vector<2x256xf32>
    %1069 = vector.shape_cast %1063 : vector<2x256xf32> to vector<1x2x256xf32>
    tpu.vector_store %arg4[%c10_1000, %c0_1001, %c0_1002], %1069 {strides = array<i32>} : memref<16x2x256xf32, #tpu.memory_space<vmem>>, vector<1x2x256xf32>,
    %c9_1003 = arith.constant 9 : index
    %c0_1004 = arith.constant 0 : index
    %c0_1005 = arith.constant 0 : index
    %1070 = vector.load %arg4[%c9_1003, %c0_1004, %c0_1005] : memref<16x2x256xf32, #tpu.memory_space<vmem>>, vector<1x2x256xf32>
    %1071 = vector.shape_cast %1070 : vector<1x2x256xf32> to vector<2x256xf32>
    %c11_1006 = arith.constant 11 : index
    %c0_1007 = arith.constant 0 : index
    %c0_1008 = arith.constant 0 : index
    %1072 = vector.load %arg4[%c11_1006, %c0_1007, %c0_1008] : memref<16x2x256xf32, #tpu.memory_space<vmem>>, vector<1x2x256xf32>
    %1073 = vector.shape_cast %1072 : vector<1x2x256xf32> to vector<2x256xf32>
    %1074 = arith.minimumf %1071, %1073 : vector<2x256xf32>
    %1075 = arith.maximumf %1071, %1073 : vector<2x256xf32>
    %c9_1009 = arith.constant 9 : index
    %c0_1010 = arith.constant 0 : index
    %c0_1011 = arith.constant 0 : index
    %1076 = vector.load %arg4[%c9_1009, %c0_1010, %c0_1011] : memref<16x2x256xf32, #tpu.memory_space<vmem>>, vector<1x2x256xf32>
    %1077 = vector.shape_cast %1076 : vector<1x2x256xf32> to vector<2x256xf32>
    %1078 = vector.shape_cast %1074 : vector<2x256xf32> to vector<1x2x256xf32>
    tpu.vector_store %arg4[%c9_1009, %c0_1010, %c0_1011], %1078 {strides = array<i32>} : memref<16x2x256xf32, #tpu.memory_space<vmem>>, vector<1x2x256xf32>,
    %c11_1012 = arith.constant 11 : index
    %c0_1013 = arith.constant 0 : index
    %c0_1014 = arith.constant 0 : index
    %1079 = vector.load %arg4[%c11_1012, %c0_1013, %c0_1014] : memref<16x2x256xf32, #tpu.memory_space<vmem>>, vector<1x2x256xf32>
    %1080 = vector.shape_cast %1079 : vector<1x2x256xf32> to vector<2x256xf32>
    %1081 = vector.shape_cast %1075 : vector<2x256xf32> to vector<1x2x256xf32>
    tpu.vector_store %arg4[%c11_1012, %c0_1013, %c0_1014], %1081 {strides = array<i32>} : memref<16x2x256xf32, #tpu.memory_space<vmem>>, vector<1x2x256xf32>,
    %c12_1015 = arith.constant 12 : index
    %c0_1016 = arith.constant 0 : index
    %c0_1017 = arith.constant 0 : index
    %1082 = vector.load %arg4[%c12_1015, %c0_1016, %c0_1017] : memref<16x2x256xf32, #tpu.memory_space<vmem>>, vector<1x2x256xf32>
    %1083 = vector.shape_cast %1082 : vector<1x2x256xf32> to vector<2x256xf32>
    %c14_1018 = arith.constant 14 : index
    %c0_1019 = arith.constant 0 : index
    %c0_1020 = arith.constant 0 : index
    %1084 = vector.load %arg4[%c14_1018, %c0_1019, %c0_1020] : memref<16x2x256xf32, #tpu.memory_space<vmem>>, vector<1x2x256xf32>
    %1085 = vector.shape_cast %1084 : vector<1x2x256xf32> to vector<2x256xf32>
    %1086 = arith.minimumf %1083, %1085 : vector<2x256xf32>
    %1087 = arith.maximumf %1083, %1085 : vector<2x256xf32>
    %c12_1021 = arith.constant 12 : index
    %c0_1022 = arith.constant 0 : index
    %c0_1023 = arith.constant 0 : index
    %1088 = vector.load %arg4[%c12_1021, %c0_1022, %c0_1023] : memref<16x2x256xf32, #tpu.memory_space<vmem>>, vector<1x2x256xf32>
    %1089 = vector.shape_cast %1088 : vector<1x2x256xf32> to vector<2x256xf32>
    %1090 = vector.shape_cast %1086 : vector<2x256xf32> to vector<1x2x256xf32>
    tpu.vector_store %arg4[%c12_1021, %c0_1022, %c0_1023], %1090 {strides = array<i32>} : memref<16x2x256xf32, #tpu.memory_space<vmem>>, vector<1x2x256xf32>,
    %c14_1024 = arith.constant 14 : index
    %c0_1025 = arith.constant 0 : index
    %c0_1026 = arith.constant 0 : index
    %1091 = vector.load %arg4[%c14_1024, %c0_1025, %c0_1026] : memref<16x2x256xf32, #tpu.memory_space<vmem>>, vector<1x2x256xf32>
    %1092 = vector.shape_cast %1091 : vector<1x2x256xf32> to vector<2x256xf32>
    %1093 = vector.shape_cast %1087 : vector<2x256xf32> to vector<1x2x256xf32>
    tpu.vector_store %arg4[%c14_1024, %c0_1025, %c0_1026], %1093 {strides = array<i32>} : memref<16x2x256xf32, #tpu.memory_space<vmem>>, vector<1x2x256xf32>,
    %c13_1027 = arith.constant 13 : index
    %c0_1028 = arith.constant 0 : index
    %c0_1029 = arith.constant 0 : index
    %1094 = vector.load %arg4[%c13_1027, %c0_1028, %c0_1029] : memref<16x2x256xf32, #tpu.memory_space<vmem>>, vector<1x2x256xf32>
    %1095 = vector.shape_cast %1094 : vector<1x2x256xf32> to vector<2x256xf32>
    %c15_1030 = arith.constant 15 : index
    %c0_1031 = arith.constant 0 : index
    %c0_1032 = arith.constant 0 : index
    %1096 = vector.load %arg4[%c15_1030, %c0_1031, %c0_1032] : memref<16x2x256xf32, #tpu.memory_space<vmem>>, vector<1x2x256xf32>
    %1097 = vector.shape_cast %1096 : vector<1x2x256xf32> to vector<2x256xf32>
    %1098 = arith.minimumf %1095, %1097 : vector<2x256xf32>
    %1099 = arith.maximumf %1095, %1097 : vector<2x256xf32>
    %c13_1033 = arith.constant 13 : index
    %c0_1034 = arith.constant 0 : index
    %c0_1035 = arith.constant 0 : index
    %1100 = vector.load %arg4[%c13_1033, %c0_1034, %c0_1035] : memref<16x2x256xf32, #tpu.memory_space<vmem>>, vector<1x2x256xf32>
    %1101 = vector.shape_cast %1100 : vector<1x2x256xf32> to vector<2x256xf32>
    %1102 = vector.shape_cast %1098 : vector<2x256xf32> to vector<1x2x256xf32>
    tpu.vector_store %arg4[%c13_1033, %c0_1034, %c0_1035], %1102 {strides = array<i32>} : memref<16x2x256xf32, #tpu.memory_space<vmem>>, vector<1x2x256xf32>,
    %c15_1036 = arith.constant 15 : index
    %c0_1037 = arith.constant 0 : index
    %c0_1038 = arith.constant 0 : index
    %1103 = vector.load %arg4[%c15_1036, %c0_1037, %c0_1038] : memref<16x2x256xf32, #tpu.memory_space<vmem>>, vector<1x2x256xf32>
    %1104 = vector.shape_cast %1103 : vector<1x2x256xf32> to vector<2x256xf32>
    %1105 = vector.shape_cast %1099 : vector<2x256xf32> to vector<1x2x256xf32>
    tpu.vector_store %arg4[%c15_1036, %c0_1037, %c0_1038], %1105 {strides = array<i32>} : memref<16x2x256xf32, #tpu.memory_space<vmem>>, vector<1x2x256xf32>,
    %c0_1039 = arith.constant 0 : index
    %c0_1040 = arith.constant 0 : index
    %c0_1041 = arith.constant 0 : index
    %1106 = vector.load %arg4[%c0_1039, %c0_1040, %c0_1041] : memref<16x2x256xf32, #tpu.memory_space<vmem>>, vector<1x2x256xf32>
    %1107 = vector.shape_cast %1106 : vector<1x2x256xf32> to vector<2x256xf32>
    %c1_1042 = arith.constant 1 : index
    %c0_1043 = arith.constant 0 : index
    %c0_1044 = arith.constant 0 : index
    %1108 = vector.load %arg4[%c1_1042, %c0_1043, %c0_1044] : memref<16x2x256xf32, #tpu.memory_space<vmem>>, vector<1x2x256xf32>
    %1109 = vector.shape_cast %1108 : vector<1x2x256xf32> to vector<2x256xf32>
    %1110 = arith.minimumf %1107, %1109 : vector<2x256xf32>
    %1111 = arith.maximumf %1107, %1109 : vector<2x256xf32>
    %c0_1045 = arith.constant 0 : index
    %c0_1046 = arith.constant 0 : index
    %c0_1047 = arith.constant 0 : index
    %1112 = vector.load %arg4[%c0_1045, %c0_1046, %c0_1047] : memref<16x2x256xf32, #tpu.memory_space<vmem>>, vector<1x2x256xf32>
    %1113 = vector.shape_cast %1112 : vector<1x2x256xf32> to vector<2x256xf32>
    %1114 = vector.shape_cast %1110 : vector<2x256xf32> to vector<1x2x256xf32>
    tpu.vector_store %arg4[%c0_1045, %c0_1046, %c0_1047], %1114 {strides = array<i32>} : memref<16x2x256xf32, #tpu.memory_space<vmem>>, vector<1x2x256xf32>,
    %c1_1048 = arith.constant 1 : index
    %c0_1049 = arith.constant 0 : index
    %c0_1050 = arith.constant 0 : index
    %1115 = vector.load %arg4[%c1_1048, %c0_1049, %c0_1050] : memref<16x2x256xf32, #tpu.memory_space<vmem>>, vector<1x2x256xf32>
    %1116 = vector.shape_cast %1115 : vector<1x2x256xf32> to vector<2x256xf32>
    %1117 = vector.shape_cast %1111 : vector<2x256xf32> to vector<1x2x256xf32>
    tpu.vector_store %arg4[%c1_1048, %c0_1049, %c0_1050], %1117 {strides = array<i32>} : memref<16x2x256xf32, #tpu.memory_space<vmem>>, vector<1x2x256xf32>,
    %c2_1051 = arith.constant 2 : index
    %c0_1052 = arith.constant 0 : index
    %c0_1053 = arith.constant 0 : index
    %1118 = vector.load %arg4[%c2_1051, %c0_1052, %c0_1053] : memref<16x2x256xf32, #tpu.memory_space<vmem>>, vector<1x2x256xf32>
    %1119 = vector.shape_cast %1118 : vector<1x2x256xf32> to vector<2x256xf32>
    %c3_1054 = arith.constant 3 : index
    %c0_1055 = arith.constant 0 : index
    %c0_1056 = arith.constant 0 : index
    %1120 = vector.load %arg4[%c3_1054, %c0_1055, %c0_1056] : memref<16x2x256xf32, #tpu.memory_space<vmem>>, vector<1x2x256xf32>
    %1121 = vector.shape_cast %1120 : vector<1x2x256xf32> to vector<2x256xf32>
    %1122 = arith.minimumf %1119, %1121 : vector<2x256xf32>
    %1123 = arith.maximumf %1119, %1121 : vector<2x256xf32>
    %c2_1057 = arith.constant 2 : index
    %c0_1058 = arith.constant 0 : index
    %c0_1059 = arith.constant 0 : index
    %1124 = vector.load %arg4[%c2_1057, %c0_1058, %c0_1059] : memref<16x2x256xf32, #tpu.memory_space<vmem>>, vector<1x2x256xf32>
    %1125 = vector.shape_cast %1124 : vector<1x2x256xf32> to vector<2x256xf32>
    %1126 = vector.shape_cast %1122 : vector<2x256xf32> to vector<1x2x256xf32>
    tpu.vector_store %arg4[%c2_1057, %c0_1058, %c0_1059], %1126 {strides = array<i32>} : memref<16x2x256xf32, #tpu.memory_space<vmem>>, vector<1x2x256xf32>,
    %c3_1060 = arith.constant 3 : index
    %c0_1061 = arith.constant 0 : index
    %c0_1062 = arith.constant 0 : index
    %1127 = vector.load %arg4[%c3_1060, %c0_1061, %c0_1062] : memref<16x2x256xf32, #tpu.memory_space<vmem>>, vector<1x2x256xf32>
    %1128 = vector.shape_cast %1127 : vector<1x2x256xf32> to vector<2x256xf32>
    %1129 = vector.shape_cast %1123 : vector<2x256xf32> to vector<1x2x256xf32>
    tpu.vector_store %arg4[%c3_1060, %c0_1061, %c0_1062], %1129 {strides = array<i32>} : memref<16x2x256xf32, #tpu.memory_space<vmem>>, vector<1x2x256xf32>,
    %c4_1063 = arith.constant 4 : index
    %c0_1064 = arith.constant 0 : index
    %c0_1065 = arith.constant 0 : index
    %1130 = vector.load %arg4[%c4_1063, %c0_1064, %c0_1065] : memref<16x2x256xf32, #tpu.memory_space<vmem>>, vector<1x2x256xf32>
    %1131 = vector.shape_cast %1130 : vector<1x2x256xf32> to vector<2x256xf32>
    %c5_1066 = arith.constant 5 : index
    %c0_1067 = arith.constant 0 : index
    %c0_1068 = arith.constant 0 : index
    %1132 = vector.load %arg4[%c5_1066, %c0_1067, %c0_1068] : memref<16x2x256xf32, #tpu.memory_space<vmem>>, vector<1x2x256xf32>
    %1133 = vector.shape_cast %1132 : vector<1x2x256xf32> to vector<2x256xf32>
    %1134 = arith.minimumf %1131, %1133 : vector<2x256xf32>
    %1135 = arith.maximumf %1131, %1133 : vector<2x256xf32>
    %c4_1069 = arith.constant 4 : index
    %c0_1070 = arith.constant 0 : index
    %c0_1071 = arith.constant 0 : index
    %1136 = vector.load %arg4[%c4_1069, %c0_1070, %c0_1071] : memref<16x2x256xf32, #tpu.memory_space<vmem>>, vector<1x2x256xf32>
    %1137 = vector.shape_cast %1136 : vector<1x2x256xf32> to vector<2x256xf32>
    %1138 = vector.shape_cast %1134 : vector<2x256xf32> to vector<1x2x256xf32>
    tpu.vector_store %arg4[%c4_1069, %c0_1070, %c0_1071], %1138 {strides = array<i32>} : memref<16x2x256xf32, #tpu.memory_space<vmem>>, vector<1x2x256xf32>,
    %c5_1072 = arith.constant 5 : index
    %c0_1073 = arith.constant 0 : index
    %c0_1074 = arith.constant 0 : index
    %1139 = vector.load %arg4[%c5_1072, %c0_1073, %c0_1074] : memref<16x2x256xf32, #tpu.memory_space<vmem>>, vector<1x2x256xf32>
    %1140 = vector.shape_cast %1139 : vector<1x2x256xf32> to vector<2x256xf32>
    %1141 = vector.shape_cast %1135 : vector<2x256xf32> to vector<1x2x256xf32>
    tpu.vector_store %arg4[%c5_1072, %c0_1073, %c0_1074], %1141 {strides = array<i32>} : memref<16x2x256xf32, #tpu.memory_space<vmem>>, vector<1x2x256xf32>,
    %c6_1075 = arith.constant 6 : index
    %c0_1076 = arith.constant 0 : index
    %c0_1077 = arith.constant 0 : index
    %1142 = vector.load %arg4[%c6_1075, %c0_1076, %c0_1077] : memref<16x2x256xf32, #tpu.memory_space<vmem>>, vector<1x2x256xf32>
    %1143 = vector.shape_cast %1142 : vector<1x2x256xf32> to vector<2x256xf32>
    %c7_1078 = arith.constant 7 : index
    %c0_1079 = arith.constant 0 : index
    %c0_1080 = arith.constant 0 : index
    %1144 = vector.load %arg4[%c7_1078, %c0_1079, %c0_1080] : memref<16x2x256xf32, #tpu.memory_space<vmem>>, vector<1x2x256xf32>
    %1145 = vector.shape_cast %1144 : vector<1x2x256xf32> to vector<2x256xf32>
    %1146 = arith.minimumf %1143, %1145 : vector<2x256xf32>
    %1147 = arith.maximumf %1143, %1145 : vector<2x256xf32>
    %c6_1081 = arith.constant 6 : index
    %c0_1082 = arith.constant 0 : index
    %c0_1083 = arith.constant 0 : index
    %1148 = vector.load %arg4[%c6_1081, %c0_1082, %c0_1083] : memref<16x2x256xf32, #tpu.memory_space<vmem>>, vector<1x2x256xf32>
    %1149 = vector.shape_cast %1148 : vector<1x2x256xf32> to vector<2x256xf32>
    %1150 = vector.shape_cast %1146 : vector<2x256xf32> to vector<1x2x256xf32>
    tpu.vector_store %arg4[%c6_1081, %c0_1082, %c0_1083], %1150 {strides = array<i32>} : memref<16x2x256xf32, #tpu.memory_space<vmem>>, vector<1x2x256xf32>,
    %c7_1084 = arith.constant 7 : index
    %c0_1085 = arith.constant 0 : index
    %c0_1086 = arith.constant 0 : index
    %1151 = vector.load %arg4[%c7_1084, %c0_1085, %c0_1086] : memref<16x2x256xf32, #tpu.memory_space<vmem>>, vector<1x2x256xf32>
    %1152 = vector.shape_cast %1151 : vector<1x2x256xf32> to vector<2x256xf32>
    %1153 = vector.shape_cast %1147 : vector<2x256xf32> to vector<1x2x256xf32>
    tpu.vector_store %arg4[%c7_1084, %c0_1085, %c0_1086], %1153 {strides = array<i32>} : memref<16x2x256xf32, #tpu.memory_space<vmem>>, vector<1x2x256xf32>,
    %c8_1087 = arith.constant 8 : index
    %c0_1088 = arith.constant 0 : index
    %c0_1089 = arith.constant 0 : index
    %1154 = vector.load %arg4[%c8_1087, %c0_1088, %c0_1089] : memref<16x2x256xf32, #tpu.memory_space<vmem>>, vector<1x2x256xf32>
    %1155 = vector.shape_cast %1154 : vector<1x2x256xf32> to vector<2x256xf32>
    %c9_1090 = arith.constant 9 : index
    %c0_1091 = arith.constant 0 : index
    %c0_1092 = arith.constant 0 : index
    %1156 = vector.load %arg4[%c9_1090, %c0_1091, %c0_1092] : memref<16x2x256xf32, #tpu.memory_space<vmem>>, vector<1x2x256xf32>
    %1157 = vector.shape_cast %1156 : vector<1x2x256xf32> to vector<2x256xf32>
    %1158 = arith.minimumf %1155, %1157 : vector<2x256xf32>
    %1159 = arith.maximumf %1155, %1157 : vector<2x256xf32>
    %c8_1093 = arith.constant 8 : index
    %c0_1094 = arith.constant 0 : index
    %c0_1095 = arith.constant 0 : index
    %1160 = vector.load %arg4[%c8_1093, %c0_1094, %c0_1095] : memref<16x2x256xf32, #tpu.memory_space<vmem>>, vector<1x2x256xf32>
    %1161 = vector.shape_cast %1160 : vector<1x2x256xf32> to vector<2x256xf32>
    %1162 = vector.shape_cast %1158 : vector<2x256xf32> to vector<1x2x256xf32>
    tpu.vector_store %arg4[%c8_1093, %c0_1094, %c0_1095], %1162 {strides = array<i32>} : memref<16x2x256xf32, #tpu.memory_space<vmem>>, vector<1x2x256xf32>,
    %c9_1096 = arith.constant 9 : index
    %c0_1097 = arith.constant 0 : index
    %c0_1098 = arith.constant 0 : index
    %1163 = vector.load %arg4[%c9_1096, %c0_1097, %c0_1098] : memref<16x2x256xf32, #tpu.memory_space<vmem>>, vector<1x2x256xf32>
    %1164 = vector.shape_cast %1163 : vector<1x2x256xf32> to vector<2x256xf32>
    %1165 = vector.shape_cast %1159 : vector<2x256xf32> to vector<1x2x256xf32>
    tpu.vector_store %arg4[%c9_1096, %c0_1097, %c0_1098], %1165 {strides = array<i32>} : memref<16x2x256xf32, #tpu.memory_space<vmem>>, vector<1x2x256xf32>,
    %c10_1099 = arith.constant 10 : index
    %c0_1100 = arith.constant 0 : index
    %c0_1101 = arith.constant 0 : index
    %1166 = vector.load %arg4[%c10_1099, %c0_1100, %c0_1101] : memref<16x2x256xf32, #tpu.memory_space<vmem>>, vector<1x2x256xf32>
    %1167 = vector.shape_cast %1166 : vector<1x2x256xf32> to vector<2x256xf32>
    %c11_1102 = arith.constant 11 : index
    %c0_1103 = arith.constant 0 : index
    %c0_1104 = arith.constant 0 : index
    %1168 = vector.load %arg4[%c11_1102, %c0_1103, %c0_1104] : memref<16x2x256xf32, #tpu.memory_space<vmem>>, vector<1x2x256xf32>
    %1169 = vector.shape_cast %1168 : vector<1x2x256xf32> to vector<2x256xf32>
    %1170 = arith.minimumf %1167, %1169 : vector<2x256xf32>
    %1171 = arith.maximumf %1167, %1169 : vector<2x256xf32>
    %c10_1105 = arith.constant 10 : index
    %c0_1106 = arith.constant 0 : index
    %c0_1107 = arith.constant 0 : index
    %1172 = vector.load %arg4[%c10_1105, %c0_1106, %c0_1107] : memref<16x2x256xf32, #tpu.memory_space<vmem>>, vector<1x2x256xf32>
    %1173 = vector.shape_cast %1172 : vector<1x2x256xf32> to vector<2x256xf32>
    %1174 = vector.shape_cast %1170 : vector<2x256xf32> to vector<1x2x256xf32>
    tpu.vector_store %arg4[%c10_1105, %c0_1106, %c0_1107], %1174 {strides = array<i32>} : memref<16x2x256xf32, #tpu.memory_space<vmem>>, vector<1x2x256xf32>,
    %c11_1108 = arith.constant 11 : index
    %c0_1109 = arith.constant 0 : index
    %c0_1110 = arith.constant 0 : index
    %1175 = vector.load %arg4[%c11_1108, %c0_1109, %c0_1110] : memref<16x2x256xf32, #tpu.memory_space<vmem>>, vector<1x2x256xf32>
    %1176 = vector.shape_cast %1175 : vector<1x2x256xf32> to vector<2x256xf32>
    %1177 = vector.shape_cast %1171 : vector<2x256xf32> to vector<1x2x256xf32>
    tpu.vector_store %arg4[%c11_1108, %c0_1109, %c0_1110], %1177 {strides = array<i32>} : memref<16x2x256xf32, #tpu.memory_space<vmem>>, vector<1x2x256xf32>,
    %c12_1111 = arith.constant 12 : index
    %c0_1112 = arith.constant 0 : index
    %c0_1113 = arith.constant 0 : index
    %1178 = vector.load %arg4[%c12_1111, %c0_1112, %c0_1113] : memref<16x2x256xf32, #tpu.memory_space<vmem>>, vector<1x2x256xf32>
    %1179 = vector.shape_cast %1178 : vector<1x2x256xf32> to vector<2x256xf32>
    %c13_1114 = arith.constant 13 : index
    %c0_1115 = arith.constant 0 : index
    %c0_1116 = arith.constant 0 : index
    %1180 = vector.load %arg4[%c13_1114, %c0_1115, %c0_1116] : memref<16x2x256xf32, #tpu.memory_space<vmem>>, vector<1x2x256xf32>
    %1181 = vector.shape_cast %1180 : vector<1x2x256xf32> to vector<2x256xf32>
    %1182 = arith.minimumf %1179, %1181 : vector<2x256xf32>
    %1183 = arith.maximumf %1179, %1181 : vector<2x256xf32>
    %c12_1117 = arith.constant 12 : index
    %c0_1118 = arith.constant 0 : index
    %c0_1119 = arith.constant 0 : index
    %1184 = vector.load %arg4[%c12_1117, %c0_1118, %c0_1119] : memref<16x2x256xf32, #tpu.memory_space<vmem>>, vector<1x2x256xf32>
    %1185 = vector.shape_cast %1184 : vector<1x2x256xf32> to vector<2x256xf32>
    %1186 = vector.shape_cast %1182 : vector<2x256xf32> to vector<1x2x256xf32>
    tpu.vector_store %arg4[%c12_1117, %c0_1118, %c0_1119], %1186 {strides = array<i32>} : memref<16x2x256xf32, #tpu.memory_space<vmem>>, vector<1x2x256xf32>,
    %c13_1120 = arith.constant 13 : index
    %c0_1121 = arith.constant 0 : index
    %c0_1122 = arith.constant 0 : index
    %1187 = vector.load %arg4[%c13_1120, %c0_1121, %c0_1122] : memref<16x2x256xf32, #tpu.memory_space<vmem>>, vector<1x2x256xf32>
    %1188 = vector.shape_cast %1187 : vector<1x2x256xf32> to vector<2x256xf32>
    %1189 = vector.shape_cast %1183 : vector<2x256xf32> to vector<1x2x256xf32>
    tpu.vector_store %arg4[%c13_1120, %c0_1121, %c0_1122], %1189 {strides = array<i32>} : memref<16x2x256xf32, #tpu.memory_space<vmem>>, vector<1x2x256xf32>,
    %c14_1123 = arith.constant 14 : index
    %c0_1124 = arith.constant 0 : index
    %c0_1125 = arith.constant 0 : index
    %1190 = vector.load %arg4[%c14_1123, %c0_1124, %c0_1125] : memref<16x2x256xf32, #tpu.memory_space<vmem>>, vector<1x2x256xf32>
    %1191 = vector.shape_cast %1190 : vector<1x2x256xf32> to vector<2x256xf32>
    %c15_1126 = arith.constant 15 : index
    %c0_1127 = arith.constant 0 : index
    %c0_1128 = arith.constant 0 : index
    %1192 = vector.load %arg4[%c15_1126, %c0_1127, %c0_1128] : memref<16x2x256xf32, #tpu.memory_space<vmem>>, vector<1x2x256xf32>
    %1193 = vector.shape_cast %1192 : vector<1x2x256xf32> to vector<2x256xf32>
    %1194 = arith.minimumf %1191, %1193 : vector<2x256xf32>
    %1195 = arith.maximumf %1191, %1193 : vector<2x256xf32>
    %c14_1129 = arith.constant 14 : index
    %c0_1130 = arith.constant 0 : index
    %c0_1131 = arith.constant 0 : index
    %1196 = vector.load %arg4[%c14_1129, %c0_1130, %c0_1131] : memref<16x2x256xf32, #tpu.memory_space<vmem>>, vector<1x2x256xf32>
    %1197 = vector.shape_cast %1196 : vector<1x2x256xf32> to vector<2x256xf32>
    %1198 = vector.shape_cast %1194 : vector<2x256xf32> to vector<1x2x256xf32>
    tpu.vector_store %arg4[%c14_1129, %c0_1130, %c0_1131], %1198 {strides = array<i32>} : memref<16x2x256xf32, #tpu.memory_space<vmem>>, vector<1x2x256xf32>,
    %c15_1132 = arith.constant 15 : index
    %c0_1133 = arith.constant 0 : index
    %c0_1134 = arith.constant 0 : index
    %1199 = vector.load %arg4[%c15_1132, %c0_1133, %c0_1134] : memref<16x2x256xf32, #tpu.memory_space<vmem>>, vector<1x2x256xf32>
    %1200 = vector.shape_cast %1199 : vector<1x2x256xf32> to vector<2x256xf32>
    %1201 = vector.shape_cast %1195 : vector<2x256xf32> to vector<1x2x256xf32>
    tpu.vector_store %arg4[%c15_1132, %c0_1133, %c0_1134], %1201 {strides = array<i32>} : memref<16x2x256xf32, #tpu.memory_space<vmem>>, vector<1x2x256xf32>,
    %c0_1135 = arith.constant 0 : index
    %c0_1136 = arith.constant 0 : index
    %c0_1137 = arith.constant 0 : index
    %1202 = vector.load %arg4[%c0_1135, %c0_1136, %c0_1137] : memref<16x2x256xf32, #tpu.memory_space<vmem>>, vector<1x2x256xf32>
    %1203 = vector.shape_cast %1202 : vector<1x2x256xf32> to vector<2x256xf32>
    %c0_1138 = arith.constant 0 : index
    %c0_1139 = arith.constant 0 : index
    %c0_1140 = arith.constant 0 : index
    %1204 = vector.load %arg3[%c0_1138, %c0_1139, %c0_1140] : memref<16x2x256xf32, #tpu.memory_space<vmem>>, vector<1x2x256xf32>
    %1205 = vector.shape_cast %1204 : vector<1x2x256xf32> to vector<2x256xf32>
    %1206 = vector.shape_cast %1203 : vector<2x256xf32> to vector<1x2x256xf32>
    tpu.vector_store %arg3[%c0_1138, %c0_1139, %c0_1140], %1206 {strides = array<i32>} : memref<16x2x256xf32, #tpu.memory_space<vmem>>, vector<1x2x256xf32>,
    %c1_1141 = arith.constant 1 : index
    %c0_1142 = arith.constant 0 : index
    %c0_1143 = arith.constant 0 : index
    %1207 = vector.load %arg4[%c1_1141, %c0_1142, %c0_1143] : memref<16x2x256xf32, #tpu.memory_space<vmem>>, vector<1x2x256xf32>
    %1208 = vector.shape_cast %1207 : vector<1x2x256xf32> to vector<2x256xf32>
    %c1_1144 = arith.constant 1 : index
    %c0_1145 = arith.constant 0 : index
    %c0_1146 = arith.constant 0 : index
    %1209 = vector.load %arg3[%c1_1144, %c0_1145, %c0_1146] : memref<16x2x256xf32, #tpu.memory_space<vmem>>, vector<1x2x256xf32>
    %1210 = vector.shape_cast %1209 : vector<1x2x256xf32> to vector<2x256xf32>
    %1211 = vector.shape_cast %1208 : vector<2x256xf32> to vector<1x2x256xf32>
    tpu.vector_store %arg3[%c1_1144, %c0_1145, %c0_1146], %1211 {strides = array<i32>} : memref<16x2x256xf32, #tpu.memory_space<vmem>>, vector<1x2x256xf32>,
    %c2_1147 = arith.constant 2 : index
    %c0_1148 = arith.constant 0 : index
    %c0_1149 = arith.constant 0 : index
    %1212 = vector.load %arg4[%c2_1147, %c0_1148, %c0_1149] : memref<16x2x256xf32, #tpu.memory_space<vmem>>, vector<1x2x256xf32>
    %1213 = vector.shape_cast %1212 : vector<1x2x256xf32> to vector<2x256xf32>
    %c2_1150 = arith.constant 2 : index
    %c0_1151 = arith.constant 0 : index
    %c0_1152 = arith.constant 0 : index
    %1214 = vector.load %arg3[%c2_1150, %c0_1151, %c0_1152] : memref<16x2x256xf32, #tpu.memory_space<vmem>>, vector<1x2x256xf32>
    %1215 = vector.shape_cast %1214 : vector<1x2x256xf32> to vector<2x256xf32>
    %1216 = vector.shape_cast %1213 : vector<2x256xf32> to vector<1x2x256xf32>
    tpu.vector_store %arg3[%c2_1150, %c0_1151, %c0_1152], %1216 {strides = array<i32>} : memref<16x2x256xf32, #tpu.memory_space<vmem>>, vector<1x2x256xf32>,
    %c3_1153 = arith.constant 3 : index
    %c0_1154 = arith.constant 0 : index
    %c0_1155 = arith.constant 0 : index
    %1217 = vector.load %arg4[%c3_1153, %c0_1154, %c0_1155] : memref<16x2x256xf32, #tpu.memory_space<vmem>>, vector<1x2x256xf32>
    %1218 = vector.shape_cast %1217 : vector<1x2x256xf32> to vector<2x256xf32>
    %c3_1156 = arith.constant 3 : index
    %c0_1157 = arith.constant 0 : index
    %c0_1158 = arith.constant 0 : index
    %1219 = vector.load %arg3[%c3_1156, %c0_1157, %c0_1158] : memref<16x2x256xf32, #tpu.memory_space<vmem>>, vector<1x2x256xf32>
    %1220 = vector.shape_cast %1219 : vector<1x2x256xf32> to vector<2x256xf32>
    %1221 = vector.shape_cast %1218 : vector<2x256xf32> to vector<1x2x256xf32>
    tpu.vector_store %arg3[%c3_1156, %c0_1157, %c0_1158], %1221 {strides = array<i32>} : memref<16x2x256xf32, #tpu.memory_space<vmem>>, vector<1x2x256xf32>,
    %c4_1159 = arith.constant 4 : index
    %c0_1160 = arith.constant 0 : index
    %c0_1161 = arith.constant 0 : index
    %1222 = vector.load %arg4[%c4_1159, %c0_1160, %c0_1161] : memref<16x2x256xf32, #tpu.memory_space<vmem>>, vector<1x2x256xf32>
    %1223 = vector.shape_cast %1222 : vector<1x2x256xf32> to vector<2x256xf32>
    %c4_1162 = arith.constant 4 : index
    %c0_1163 = arith.constant 0 : index
    %c0_1164 = arith.constant 0 : index
    %1224 = vector.load %arg3[%c4_1162, %c0_1163, %c0_1164] : memref<16x2x256xf32, #tpu.memory_space<vmem>>, vector<1x2x256xf32>
    %1225 = vector.shape_cast %1224 : vector<1x2x256xf32> to vector<2x256xf32>
    %1226 = vector.shape_cast %1223 : vector<2x256xf32> to vector<1x2x256xf32>
    tpu.vector_store %arg3[%c4_1162, %c0_1163, %c0_1164], %1226 {strides = array<i32>} : memref<16x2x256xf32, #tpu.memory_space<vmem>>, vector<1x2x256xf32>,
    %c5_1165 = arith.constant 5 : index
    %c0_1166 = arith.constant 0 : index
    %c0_1167 = arith.constant 0 : index
    %1227 = vector.load %arg4[%c5_1165, %c0_1166, %c0_1167] : memref<16x2x256xf32, #tpu.memory_space<vmem>>, vector<1x2x256xf32>
    %1228 = vector.shape_cast %1227 : vector<1x2x256xf32> to vector<2x256xf32>
    %c5_1168 = arith.constant 5 : index
    %c0_1169 = arith.constant 0 : index
    %c0_1170 = arith.constant 0 : index
    %1229 = vector.load %arg3[%c5_1168, %c0_1169, %c0_1170] : memref<16x2x256xf32, #tpu.memory_space<vmem>>, vector<1x2x256xf32>
    %1230 = vector.shape_cast %1229 : vector<1x2x256xf32> to vector<2x256xf32>
    %1231 = vector.shape_cast %1228 : vector<2x256xf32> to vector<1x2x256xf32>
    tpu.vector_store %arg3[%c5_1168, %c0_1169, %c0_1170], %1231 {strides = array<i32>} : memref<16x2x256xf32, #tpu.memory_space<vmem>>, vector<1x2x256xf32>,
    %c6_1171 = arith.constant 6 : index
    %c0_1172 = arith.constant 0 : index
    %c0_1173 = arith.constant 0 : index
    %1232 = vector.load %arg4[%c6_1171, %c0_1172, %c0_1173] : memref<16x2x256xf32, #tpu.memory_space<vmem>>, vector<1x2x256xf32>
    %1233 = vector.shape_cast %1232 : vector<1x2x256xf32> to vector<2x256xf32>
    %c6_1174 = arith.constant 6 : index
    %c0_1175 = arith.constant 0 : index
    %c0_1176 = arith.constant 0 : index
    %1234 = vector.load %arg3[%c6_1174, %c0_1175, %c0_1176] : memref<16x2x256xf32, #tpu.memory_space<vmem>>, vector<1x2x256xf32>
    %1235 = vector.shape_cast %1234 : vector<1x2x256xf32> to vector<2x256xf32>
    %1236 = vector.shape_cast %1233 : vector<2x256xf32> to vector<1x2x256xf32>
    tpu.vector_store %arg3[%c6_1174, %c0_1175, %c0_1176], %1236 {strides = array<i32>} : memref<16x2x256xf32, #tpu.memory_space<vmem>>, vector<1x2x256xf32>,
    %c7_1177 = arith.constant 7 : index
    %c0_1178 = arith.constant 0 : index
    %c0_1179 = arith.constant 0 : index
    %1237 = vector.load %arg4[%c7_1177, %c0_1178, %c0_1179] : memref<16x2x256xf32, #tpu.memory_space<vmem>>, vector<1x2x256xf32>
    %1238 = vector.shape_cast %1237 : vector<1x2x256xf32> to vector<2x256xf32>
    %c7_1180 = arith.constant 7 : index
    %c0_1181 = arith.constant 0 : index
    %c0_1182 = arith.constant 0 : index
    %1239 = vector.load %arg3[%c7_1180, %c0_1181, %c0_1182] : memref<16x2x256xf32, #tpu.memory_space<vmem>>, vector<1x2x256xf32>
    %1240 = vector.shape_cast %1239 : vector<1x2x256xf32> to vector<2x256xf32>
    %1241 = vector.shape_cast %1238 : vector<2x256xf32> to vector<1x2x256xf32>
    tpu.vector_store %arg3[%c7_1180, %c0_1181, %c0_1182], %1241 {strides = array<i32>} : memref<16x2x256xf32, #tpu.memory_space<vmem>>, vector<1x2x256xf32>,
    %c8_1183 = arith.constant 8 : index
    %c0_1184 = arith.constant 0 : index
    %c0_1185 = arith.constant 0 : index
    %1242 = vector.load %arg4[%c8_1183, %c0_1184, %c0_1185] : memref<16x2x256xf32, #tpu.memory_space<vmem>>, vector<1x2x256xf32>
    %1243 = vector.shape_cast %1242 : vector<1x2x256xf32> to vector<2x256xf32>
    %c8_1186 = arith.constant 8 : index
    %c0_1187 = arith.constant 0 : index
    %c0_1188 = arith.constant 0 : index
    %1244 = vector.load %arg3[%c8_1186, %c0_1187, %c0_1188] : memref<16x2x256xf32, #tpu.memory_space<vmem>>, vector<1x2x256xf32>
    %1245 = vector.shape_cast %1244 : vector<1x2x256xf32> to vector<2x256xf32>
    %1246 = vector.shape_cast %1243 : vector<2x256xf32> to vector<1x2x256xf32>
    tpu.vector_store %arg3[%c8_1186, %c0_1187, %c0_1188], %1246 {strides = array<i32>} : memref<16x2x256xf32, #tpu.memory_space<vmem>>, vector<1x2x256xf32>,
    %c9_1189 = arith.constant 9 : index
    %c0_1190 = arith.constant 0 : index
    %c0_1191 = arith.constant 0 : index
    %1247 = vector.load %arg4[%c9_1189, %c0_1190, %c0_1191] : memref<16x2x256xf32, #tpu.memory_space<vmem>>, vector<1x2x256xf32>
    %1248 = vector.shape_cast %1247 : vector<1x2x256xf32> to vector<2x256xf32>
    %c9_1192 = arith.constant 9 : index
    %c0_1193 = arith.constant 0 : index
    %c0_1194 = arith.constant 0 : index
    %1249 = vector.load %arg3[%c9_1192, %c0_1193, %c0_1194] : memref<16x2x256xf32, #tpu.memory_space<vmem>>, vector<1x2x256xf32>
    %1250 = vector.shape_cast %1249 : vector<1x2x256xf32> to vector<2x256xf32>
    %1251 = vector.shape_cast %1248 : vector<2x256xf32> to vector<1x2x256xf32>
    tpu.vector_store %arg3[%c9_1192, %c0_1193, %c0_1194], %1251 {strides = array<i32>} : memref<16x2x256xf32, #tpu.memory_space<vmem>>, vector<1x2x256xf32>,
    %c10_1195 = arith.constant 10 : index
    %c0_1196 = arith.constant 0 : index
    %c0_1197 = arith.constant 0 : index
    %1252 = vector.load %arg4[%c10_1195, %c0_1196, %c0_1197] : memref<16x2x256xf32, #tpu.memory_space<vmem>>, vector<1x2x256xf32>
    %1253 = vector.shape_cast %1252 : vector<1x2x256xf32> to vector<2x256xf32>
    %c10_1198 = arith.constant 10 : index
    %c0_1199 = arith.constant 0 : index
    %c0_1200 = arith.constant 0 : index
    %1254 = vector.load %arg3[%c10_1198, %c0_1199, %c0_1200] : memref<16x2x256xf32, #tpu.memory_space<vmem>>, vector<1x2x256xf32>
    %1255 = vector.shape_cast %1254 : vector<1x2x256xf32> to vector<2x256xf32>
    %1256 = vector.shape_cast %1253 : vector<2x256xf32> to vector<1x2x256xf32>
    tpu.vector_store %arg3[%c10_1198, %c0_1199, %c0_1200], %1256 {strides = array<i32>} : memref<16x2x256xf32, #tpu.memory_space<vmem>>, vector<1x2x256xf32>,
    %c11_1201 = arith.constant 11 : index
    %c0_1202 = arith.constant 0 : index
    %c0_1203 = arith.constant 0 : index
    %1257 = vector.load %arg4[%c11_1201, %c0_1202, %c0_1203] : memref<16x2x256xf32, #tpu.memory_space<vmem>>, vector<1x2x256xf32>
    %1258 = vector.shape_cast %1257 : vector<1x2x256xf32> to vector<2x256xf32>
    %c11_1204 = arith.constant 11 : index
    %c0_1205 = arith.constant 0 : index
    %c0_1206 = arith.constant 0 : index
    %1259 = vector.load %arg3[%c11_1204, %c0_1205, %c0_1206] : memref<16x2x256xf32, #tpu.memory_space<vmem>>, vector<1x2x256xf32>
    %1260 = vector.shape_cast %1259 : vector<1x2x256xf32> to vector<2x256xf32>
    %1261 = vector.shape_cast %1258 : vector<2x256xf32> to vector<1x2x256xf32>
    tpu.vector_store %arg3[%c11_1204, %c0_1205, %c0_1206], %1261 {strides = array<i32>} : memref<16x2x256xf32, #tpu.memory_space<vmem>>, vector<1x2x256xf32>,
    %c12_1207 = arith.constant 12 : index
    %c0_1208 = arith.constant 0 : index
    %c0_1209 = arith.constant 0 : index
    %1262 = vector.load %arg4[%c12_1207, %c0_1208, %c0_1209] : memref<16x2x256xf32, #tpu.memory_space<vmem>>, vector<1x2x256xf32>
    %1263 = vector.shape_cast %1262 : vector<1x2x256xf32> to vector<2x256xf32>
    %c12_1210 = arith.constant 12 : index
    %c0_1211 = arith.constant 0 : index
    %c0_1212 = arith.constant 0 : index
    %1264 = vector.load %arg3[%c12_1210, %c0_1211, %c0_1212] : memref<16x2x256xf32, #tpu.memory_space<vmem>>, vector<1x2x256xf32>
    %1265 = vector.shape_cast %1264 : vector<1x2x256xf32> to vector<2x256xf32>
    %1266 = vector.shape_cast %1263 : vector<2x256xf32> to vector<1x2x256xf32>
    tpu.vector_store %arg3[%c12_1210, %c0_1211, %c0_1212], %1266 {strides = array<i32>} : memref<16x2x256xf32, #tpu.memory_space<vmem>>, vector<1x2x256xf32>,
    %c13_1213 = arith.constant 13 : index
    %c0_1214 = arith.constant 0 : index
    %c0_1215 = arith.constant 0 : index
    %1267 = vector.load %arg4[%c13_1213, %c0_1214, %c0_1215] : memref<16x2x256xf32, #tpu.memory_space<vmem>>, vector<1x2x256xf32>
    %1268 = vector.shape_cast %1267 : vector<1x2x256xf32> to vector<2x256xf32>
    %c13_1216 = arith.constant 13 : index
    %c0_1217 = arith.constant 0 : index
    %c0_1218 = arith.constant 0 : index
    %1269 = vector.load %arg3[%c13_1216, %c0_1217, %c0_1218] : memref<16x2x256xf32, #tpu.memory_space<vmem>>, vector<1x2x256xf32>
    %1270 = vector.shape_cast %1269 : vector<1x2x256xf32> to vector<2x256xf32>
    %1271 = vector.shape_cast %1268 : vector<2x256xf32> to vector<1x2x256xf32>
    tpu.vector_store %arg3[%c13_1216, %c0_1217, %c0_1218], %1271 {strides = array<i32>} : memref<16x2x256xf32, #tpu.memory_space<vmem>>, vector<1x2x256xf32>,
    %c14_1219 = arith.constant 14 : index
    %c0_1220 = arith.constant 0 : index
    %c0_1221 = arith.constant 0 : index
    %1272 = vector.load %arg4[%c14_1219, %c0_1220, %c0_1221] : memref<16x2x256xf32, #tpu.memory_space<vmem>>, vector<1x2x256xf32>
    %1273 = vector.shape_cast %1272 : vector<1x2x256xf32> to vector<2x256xf32>
    %c14_1222 = arith.constant 14 : index
    %c0_1223 = arith.constant 0 : index
    %c0_1224 = arith.constant 0 : index
    %1274 = vector.load %arg3[%c14_1222, %c0_1223, %c0_1224] : memref<16x2x256xf32, #tpu.memory_space<vmem>>, vector<1x2x256xf32>
    %1275 = vector.shape_cast %1274 : vector<1x2x256xf32> to vector<2x256xf32>
    %1276 = vector.shape_cast %1273 : vector<2x256xf32> to vector<1x2x256xf32>
    tpu.vector_store %arg3[%c14_1222, %c0_1223, %c0_1224], %1276 {strides = array<i32>} : memref<16x2x256xf32, #tpu.memory_space<vmem>>, vector<1x2x256xf32>,
    %c15_1225 = arith.constant 15 : index
    %c0_1226 = arith.constant 0 : index
    %c0_1227 = arith.constant 0 : index
    %1277 = vector.load %arg4[%c15_1225, %c0_1226, %c0_1227] : memref<16x2x256xf32, #tpu.memory_space<vmem>>, vector<1x2x256xf32>
    %1278 = vector.shape_cast %1277 : vector<1x2x256xf32> to vector<2x256xf32>
    %c15_1228 = arith.constant 15 : index
    %c0_1229 = arith.constant 0 : index
    %c0_1230 = arith.constant 0 : index
    %1279 = vector.load %arg3[%c15_1228, %c0_1229, %c0_1230] : memref<16x2x256xf32, #tpu.memory_space<vmem>>, vector<1x2x256xf32>
    %1280 = vector.shape_cast %1279 : vector<1x2x256xf32> to vector<2x256xf32>
    %1281 = vector.shape_cast %1278 : vector<2x256xf32> to vector<1x2x256xf32>
    tpu.vector_store %arg3[%c15_1228, %c0_1229, %c0_1230], %1281 {strides = array<i32>} : memref<16x2x256xf32, #tpu.memory_space<vmem>>, vector<1x2x256xf32>,
    return
  }
  func.func @transform_0(%arg0: i32) -> (i32, i32, i32) {
    %c0_i32 = arith.constant 0 : i32
    %c0_i32_0 = arith.constant 0 : i32
    %c0_i32_1 = arith.constant 0 : i32
    %c0_i32_2 = arith.constant 0 : i32
    return %c0_i32, %c0_i32_0, %c0_i32_1 : i32, i32, i32
  }
  func.func @transform_1(%arg0: i32) -> (i32, i32, i32) {
    %c0_i32 = arith.constant 0 : i32
    %c0_i32_0 = arith.constant 0 : i32
    %c0_i32_1 = arith.constant 0 : i32
    return %c0_i32, %c0_i32_0, %arg0 : i32, i32, i32
  }
  func.func @transform_2(%arg0: i32) -> (i32, i32, i32) {
    %c0_i32 = arith.constant 0 : i32
    %c0_i32_0 = arith.constant 0 : i32
    %c0_i32_1 = arith.constant 0 : i32
    return %c0_i32, %c0_i32_0, %arg0 : i32, i32, i32
  }
}

module attributes {stable_mosaic.version = 11 : i64} {
  func.func @_mm_kernel(%arg0: i32, %arg1: i32, %arg2: memref<1x144xbf16, #tpu.memory_space<vmem>>, %arg3: memref<144x512xbf16, #tpu.memory_space<vmem>>, %arg4: memref<1x1xf32, #tpu.memory_space<vmem>>, %arg5: memref<1x512xf32, #tpu.memory_space<vmem>>, %arg6: memref<1x512xf32, #tpu.memory_space<vmem>>) attributes {dimension_semantics = [#tpu.dimension_semantics<parallel>, #tpu.dimension_semantics<arbitrary>], iteration_bounds = array<i64: 1, 1>, scalar_prefetch = 0 : i64, scratch_operands = 1 : i64, tpu.core_type = #tpu.core_type<tc>, window_params = [{transform_indices = @transform_0, window_bounds = array<i64: 1, 144>}, {transform_indices = @transform_1, window_bounds = array<i64: 144, 512>}, {pipeline_mode = #tpu.pipeline_mode<synchronous>, transform_indices = @transform_2, window_bounds = array<i64: 1, 1>}, {transform_indices = @transform_3, window_bounds = array<i64: 1, 512>}]} {
    %c0_i32 = arith.constant 0 : i32
    %0 = arith.cmpi eq, %arg1, %c0_i32 : i32
    %1 = arith.extui %0 : i1 to i32
    %c0_i32_0 = arith.constant 0 : i32
    %2 = arith.cmpi ne, %1, %c0_i32_0 : i32
    scf.if %2 {
      %cst_10 = arith.constant 0.000000e+00 : f32
      %12 = vector.broadcast %cst_10 : f32 to vector<1x512xf32>
      %c0_11 = arith.constant 0 : index
      %c0_12 = arith.constant 0 : index
      %13 = vector.load %arg6[%c0_11, %c0_12] : memref<1x512xf32, #tpu.memory_space<vmem>>, vector<1x512xf32>
      tpu.vector_store %arg6[%c0_11, %c0_12], %12 {strides = array<i32>} : memref<1x512xf32, #tpu.memory_space<vmem>>, vector<1x512xf32>,
    } else {
    }
    %c0 = arith.constant 0 : index
    %c0_1 = arith.constant 0 : index
    %3 = vector.load %arg6[%c0, %c0_1] : memref<1x512xf32, #tpu.memory_space<vmem>>, vector<1x512xf32>
    %c0_2 = arith.constant 0 : index
    %c0_3 = arith.constant 0 : index
    %4 = vector.load %arg2[%c0_2, %c0_3] : memref<1x144xbf16, #tpu.memory_space<vmem>>, vector<1x144xbf16>
    %c0_4 = arith.constant 0 : index
    %c0_5 = arith.constant 0 : index
    %5 = vector.load %arg3[%c0_4, %c0_5] : memref<144x512xbf16, #tpu.memory_space<vmem>>, vector<144x512xbf16>
    %cst = arith.constant dense<0.000000e+00> : vector<1x512xf32>
    %6 = tpu.matmul %4, %5, %cst {dimension_numbers = #tpu.dot_dimension_numbers<[1], [0], [0], [1], [0, 0, 1, 1], [], []>} : vector<1x144xbf16>, vector<144x512xbf16>, vector<1x512xf32> -> vector<1x512xf32>
    %7 = arith.addf %3, %6 : vector<1x512xf32>
    %c0_6 = arith.constant 0 : index
    %c0_7 = arith.constant 0 : index
    %8 = vector.load %arg6[%c0_6, %c0_7] : memref<1x512xf32, #tpu.memory_space<vmem>>, vector<1x512xf32>
    tpu.vector_store %arg6[%c0_6, %c0_7], %7 {strides = array<i32>} : memref<1x512xf32, #tpu.memory_space<vmem>>, vector<1x512xf32>,
    %c0_i32_8 = arith.constant 0 : i32
    %9 = arith.cmpi eq, %arg1, %c0_i32_8 : i32
    %10 = arith.extui %9 : i1 to i32
    %c0_i32_9 = arith.constant 0 : i32
    %11 = arith.cmpi ne, %10, %c0_i32_9 : i32
    scf.if %11 {
      %c0_10 = arith.constant 0 : index
      %c0_11 = arith.constant 0 : index
      %12 = vector.load %arg6[%c0_10, %c0_11] : memref<1x512xf32, #tpu.memory_space<vmem>>, vector<1x512xf32>
      %c0_12 = arith.constant 0 : index
      %c0_13 = arith.constant 0 : index
      %13 = vector.load %arg4[%c0_12, %c0_13] : memref<1x1xf32, #tpu.memory_space<vmem>>, vector<1x1xf32>
      %14 = vector.broadcast %13 : vector<1x1xf32> to vector<1x512xf32>
      %15 = arith.addf %12, %14 : vector<1x512xf32>
      %c0_14 = arith.constant 0 : index
      %c0_15 = arith.constant 0 : index
      %16 = vector.load %arg5[%c0_14, %c0_15] : memref<1x512xf32, #tpu.memory_space<vmem>>, vector<1x512xf32>
      tpu.vector_store %arg5[%c0_14, %c0_15], %15 {strides = array<i32>} : memref<1x512xf32, #tpu.memory_space<vmem>>, vector<1x512xf32>,
    } else {
    }
    return
  }
  func.func @transform_0(%arg0: i32, %arg1: i32) -> (i32, i32) {
    %c0_i32 = arith.constant 0 : i32
    %c0_i32_0 = arith.constant 0 : i32
    return %c0_i32, %arg1 : i32, i32
  }
  func.func @transform_1(%arg0: i32, %arg1: i32) -> (i32, i32) {
    %c0_i32 = arith.constant 0 : i32
    return %arg1, %arg0 : i32, i32
  }
  func.func @transform_2(%arg0: i32, %arg1: i32) -> (i32, i32) {
    %c0_i32 = arith.constant 0 : i32
    %c0_i32_0 = arith.constant 0 : i32
    %c0_i32_1 = arith.constant 0 : i32
    return %c0_i32, %c0_i32_0 : i32, i32
  }
  func.func @transform_3(%arg0: i32, %arg1: i32) -> (i32, i32) {
    %c0_i32 = arith.constant 0 : i32
    %c0_i32_0 = arith.constant 0 : i32
    return %c0_i32, %arg0 : i32, i32
  }
}

module attributes {stable_mosaic.version = 11 : i64} {
  func.func @_mm_kernel(%arg0: i32, %arg1: i32, %arg2: memref<16x25xbf16, #tpu.memory_space<vmem>>, %arg3: memref<25x512xbf16, #tpu.memory_space<vmem>>, %arg4: memref<16x1xf32, #tpu.memory_space<vmem>>, %arg5: memref<16x512xf32, #tpu.memory_space<vmem>>, %arg6: memref<16x512xf32, #tpu.memory_space<vmem>>) attributes {dimension_semantics = [#tpu.dimension_semantics<parallel>, #tpu.dimension_semantics<arbitrary>], iteration_bounds = array<i64: 1, 1>, scalar_prefetch = 0 : i64, scratch_operands = 1 : i64, tpu.core_type = #tpu.core_type<tc>, window_params = [{transform_indices = @transform_0, window_bounds = array<i64: 16, 25>}, {transform_indices = @transform_1, window_bounds = array<i64: 25, 512>}, {pipeline_mode = #tpu.pipeline_mode<synchronous>, transform_indices = @transform_2, window_bounds = array<i64: 16, 1>}, {transform_indices = @transform_3, window_bounds = array<i64: 16, 512>}]} {
    %c0_i32 = arith.constant 0 : i32
    %0 = arith.cmpi eq, %arg1, %c0_i32 : i32
    %1 = arith.extui %0 : i1 to i32
    %c0_i32_0 = arith.constant 0 : i32
    %2 = arith.cmpi ne, %1, %c0_i32_0 : i32
    scf.if %2 {
      %cst_10 = arith.constant 0.000000e+00 : f32
      %12 = vector.broadcast %cst_10 : f32 to vector<16x512xf32>
      %c0_11 = arith.constant 0 : index
      %c0_12 = arith.constant 0 : index
      %13 = vector.load %arg6[%c0_11, %c0_12] : memref<16x512xf32, #tpu.memory_space<vmem>>, vector<16x512xf32>
      tpu.vector_store %arg6[%c0_11, %c0_12], %12 {strides = array<i32>} : memref<16x512xf32, #tpu.memory_space<vmem>>, vector<16x512xf32>,
    } else {
    }
    %c0 = arith.constant 0 : index
    %c0_1 = arith.constant 0 : index
    %3 = vector.load %arg6[%c0, %c0_1] : memref<16x512xf32, #tpu.memory_space<vmem>>, vector<16x512xf32>
    %c0_2 = arith.constant 0 : index
    %c0_3 = arith.constant 0 : index
    %4 = vector.load %arg2[%c0_2, %c0_3] : memref<16x25xbf16, #tpu.memory_space<vmem>>, vector<16x25xbf16>
    %c0_4 = arith.constant 0 : index
    %c0_5 = arith.constant 0 : index
    %5 = vector.load %arg3[%c0_4, %c0_5] : memref<25x512xbf16, #tpu.memory_space<vmem>>, vector<25x512xbf16>
    %cst = arith.constant dense<0.000000e+00> : vector<16x512xf32>
    %6 = tpu.matmul %4, %5, %cst {dimension_numbers = #tpu.dot_dimension_numbers<[1], [0], [0], [1], [0, 0, 1, 1], [], []>} : vector<16x25xbf16>, vector<25x512xbf16>, vector<16x512xf32> -> vector<16x512xf32>
    %7 = arith.addf %3, %6 : vector<16x512xf32>
    %c0_6 = arith.constant 0 : index
    %c0_7 = arith.constant 0 : index
    %8 = vector.load %arg6[%c0_6, %c0_7] : memref<16x512xf32, #tpu.memory_space<vmem>>, vector<16x512xf32>
    tpu.vector_store %arg6[%c0_6, %c0_7], %7 {strides = array<i32>} : memref<16x512xf32, #tpu.memory_space<vmem>>, vector<16x512xf32>,
    %c0_i32_8 = arith.constant 0 : i32
    %9 = arith.cmpi eq, %arg1, %c0_i32_8 : i32
    %10 = arith.extui %9 : i1 to i32
    %c0_i32_9 = arith.constant 0 : i32
    %11 = arith.cmpi ne, %10, %c0_i32_9 : i32
    scf.if %11 {
      %c0_10 = arith.constant 0 : index
      %c0_11 = arith.constant 0 : index
      %12 = vector.load %arg6[%c0_10, %c0_11] : memref<16x512xf32, #tpu.memory_space<vmem>>, vector<16x512xf32>
      %c0_12 = arith.constant 0 : index
      %c0_13 = arith.constant 0 : index
      %13 = vector.load %arg4[%c0_12, %c0_13] : memref<16x1xf32, #tpu.memory_space<vmem>>, vector<16x1xf32>
      %14 = vector.broadcast %13 : vector<16x1xf32> to vector<16x512xf32>
      %15 = arith.addf %12, %14 : vector<16x512xf32>
      %cst_14 = arith.constant 0.000000e+00 : f32
      %16 = vector.broadcast %cst_14 : f32 to vector<16x512xf32>
      %17 = arith.maximumf %15, %16 : vector<16x512xf32>
      %c0_15 = arith.constant 0 : index
      %c0_16 = arith.constant 0 : index
      %18 = vector.load %arg5[%c0_15, %c0_16] : memref<16x512xf32, #tpu.memory_space<vmem>>, vector<16x512xf32>
      tpu.vector_store %arg5[%c0_15, %c0_16], %17 {strides = array<i32>} : memref<16x512xf32, #tpu.memory_space<vmem>>, vector<16x512xf32>,
    } else {
    }
    return
  }
  func.func @transform_0(%arg0: i32, %arg1: i32) -> (i32, i32) {
    %c0_i32 = arith.constant 0 : i32
    %c0_i32_0 = arith.constant 0 : i32
    return %c0_i32, %arg1 : i32, i32
  }
  func.func @transform_1(%arg0: i32, %arg1: i32) -> (i32, i32) {
    %c0_i32 = arith.constant 0 : i32
    return %arg1, %arg0 : i32, i32
  }
  func.func @transform_2(%arg0: i32, %arg1: i32) -> (i32, i32) {
    %c0_i32 = arith.constant 0 : i32
    %c0_i32_0 = arith.constant 0 : i32
    %c0_i32_1 = arith.constant 0 : i32
    return %c0_i32, %c0_i32_0 : i32, i32
  }
  func.func @transform_3(%arg0: i32, %arg1: i32) -> (i32, i32) {
    %c0_i32 = arith.constant 0 : i32
    %c0_i32_0 = arith.constant 0 : i32
    return %c0_i32, %arg0 : i32, i32
  }
}

module attributes {stable_mosaic.version = 11 : i64} {
  func.func @_mm_kernel(%arg0: i32, %arg1: i32, %arg2: memref<16x400xbf16, #tpu.memory_space<vmem>>, %arg3: memref<400x512xbf16, #tpu.memory_space<vmem>>, %arg4: memref<16x1xf32, #tpu.memory_space<vmem>>, %arg5: memref<16x512xf32, #tpu.memory_space<vmem>>, %arg6: memref<16x512xf32, #tpu.memory_space<vmem>>) attributes {dimension_semantics = [#tpu.dimension_semantics<parallel>, #tpu.dimension_semantics<arbitrary>], iteration_bounds = array<i64: 1, 1>, scalar_prefetch = 0 : i64, scratch_operands = 1 : i64, tpu.core_type = #tpu.core_type<tc>, window_params = [{transform_indices = @transform_0, window_bounds = array<i64: 16, 400>}, {transform_indices = @transform_1, window_bounds = array<i64: 400, 512>}, {pipeline_mode = #tpu.pipeline_mode<synchronous>, transform_indices = @transform_2, window_bounds = array<i64: 16, 1>}, {transform_indices = @transform_3, window_bounds = array<i64: 16, 512>}]} {
    %c0_i32 = arith.constant 0 : i32
    %0 = arith.cmpi eq, %arg1, %c0_i32 : i32
    %1 = arith.extui %0 : i1 to i32
    %c0_i32_0 = arith.constant 0 : i32
    %2 = arith.cmpi ne, %1, %c0_i32_0 : i32
    scf.if %2 {
      %cst_10 = arith.constant 0.000000e+00 : f32
      %12 = vector.broadcast %cst_10 : f32 to vector<16x512xf32>
      %c0_11 = arith.constant 0 : index
      %c0_12 = arith.constant 0 : index
      %13 = vector.load %arg6[%c0_11, %c0_12] : memref<16x512xf32, #tpu.memory_space<vmem>>, vector<16x512xf32>
      tpu.vector_store %arg6[%c0_11, %c0_12], %12 {strides = array<i32>} : memref<16x512xf32, #tpu.memory_space<vmem>>, vector<16x512xf32>,
    } else {
    }
    %c0 = arith.constant 0 : index
    %c0_1 = arith.constant 0 : index
    %3 = vector.load %arg6[%c0, %c0_1] : memref<16x512xf32, #tpu.memory_space<vmem>>, vector<16x512xf32>
    %c0_2 = arith.constant 0 : index
    %c0_3 = arith.constant 0 : index
    %4 = vector.load %arg2[%c0_2, %c0_3] : memref<16x400xbf16, #tpu.memory_space<vmem>>, vector<16x400xbf16>
    %c0_4 = arith.constant 0 : index
    %c0_5 = arith.constant 0 : index
    %5 = vector.load %arg3[%c0_4, %c0_5] : memref<400x512xbf16, #tpu.memory_space<vmem>>, vector<400x512xbf16>
    %cst = arith.constant dense<0.000000e+00> : vector<16x512xf32>
    %6 = tpu.matmul %4, %5, %cst {dimension_numbers = #tpu.dot_dimension_numbers<[1], [0], [0], [1], [0, 0, 1, 1], [], []>} : vector<16x400xbf16>, vector<400x512xbf16>, vector<16x512xf32> -> vector<16x512xf32>
    %7 = arith.addf %3, %6 : vector<16x512xf32>
    %c0_6 = arith.constant 0 : index
    %c0_7 = arith.constant 0 : index
    %8 = vector.load %arg6[%c0_6, %c0_7] : memref<16x512xf32, #tpu.memory_space<vmem>>, vector<16x512xf32>
    tpu.vector_store %arg6[%c0_6, %c0_7], %7 {strides = array<i32>} : memref<16x512xf32, #tpu.memory_space<vmem>>, vector<16x512xf32>,
    %c0_i32_8 = arith.constant 0 : i32
    %9 = arith.cmpi eq, %arg1, %c0_i32_8 : i32
    %10 = arith.extui %9 : i1 to i32
    %c0_i32_9 = arith.constant 0 : i32
    %11 = arith.cmpi ne, %10, %c0_i32_9 : i32
    scf.if %11 {
      %c0_10 = arith.constant 0 : index
      %c0_11 = arith.constant 0 : index
      %12 = vector.load %arg6[%c0_10, %c0_11] : memref<16x512xf32, #tpu.memory_space<vmem>>, vector<16x512xf32>
      %c0_12 = arith.constant 0 : index
      %c0_13 = arith.constant 0 : index
      %13 = vector.load %arg4[%c0_12, %c0_13] : memref<16x1xf32, #tpu.memory_space<vmem>>, vector<16x1xf32>
      %14 = vector.broadcast %13 : vector<16x1xf32> to vector<16x512xf32>
      %15 = arith.addf %12, %14 : vector<16x512xf32>
      %cst_14 = arith.constant 0.000000e+00 : f32
      %16 = vector.broadcast %cst_14 : f32 to vector<16x512xf32>
      %17 = arith.maximumf %15, %16 : vector<16x512xf32>
      %c0_15 = arith.constant 0 : index
      %c0_16 = arith.constant 0 : index
      %18 = vector.load %arg5[%c0_15, %c0_16] : memref<16x512xf32, #tpu.memory_space<vmem>>, vector<16x512xf32>
      tpu.vector_store %arg5[%c0_15, %c0_16], %17 {strides = array<i32>} : memref<16x512xf32, #tpu.memory_space<vmem>>, vector<16x512xf32>,
    } else {
    }
    return
  }
  func.func @transform_0(%arg0: i32, %arg1: i32) -> (i32, i32) {
    %c0_i32 = arith.constant 0 : i32
    %c0_i32_0 = arith.constant 0 : i32
    return %c0_i32, %arg1 : i32, i32
  }
  func.func @transform_1(%arg0: i32, %arg1: i32) -> (i32, i32) {
    %c0_i32 = arith.constant 0 : i32
    return %arg1, %arg0 : i32, i32
  }
  func.func @transform_2(%arg0: i32, %arg1: i32) -> (i32, i32) {
    %c0_i32 = arith.constant 0 : i32
    %c0_i32_0 = arith.constant 0 : i32
    %c0_i32_1 = arith.constant 0 : i32
    return %c0_i32, %c0_i32_0 : i32, i32
  }
  func.func @transform_3(%arg0: i32, %arg1: i32) -> (i32, i32) {
    %c0_i32 = arith.constant 0 : i32
    %c0_i32_0 = arith.constant 0 : i32
    return %c0_i32, %arg0 : i32, i32
  }
}

module attributes {stable_mosaic.version = 11 : i64} {
  func.func @_mm_kernel(%arg0: i32, %arg1: i32, %arg2: memref<16x400xbf16, #tpu.memory_space<vmem>>, %arg3: memref<400x512xbf16, #tpu.memory_space<vmem>>, %arg4: memref<16x1xf32, #tpu.memory_space<vmem>>, %arg5: memref<16x512xf32, #tpu.memory_space<vmem>>, %arg6: memref<16x512xf32, #tpu.memory_space<vmem>>, %arg7: memref<16x512xf32, #tpu.memory_space<vmem>>) attributes {dimension_semantics = [#tpu.dimension_semantics<parallel>, #tpu.dimension_semantics<arbitrary>], iteration_bounds = array<i64: 1, 1>, scalar_prefetch = 0 : i64, scratch_operands = 1 : i64, tpu.core_type = #tpu.core_type<tc>, window_params = [{transform_indices = @transform_0, window_bounds = array<i64: 16, 400>}, {transform_indices = @transform_1, window_bounds = array<i64: 400, 512>}, {pipeline_mode = #tpu.pipeline_mode<synchronous>, transform_indices = @transform_2, window_bounds = array<i64: 16, 1>}, {transform_indices = @transform_3, window_bounds = array<i64: 16, 512>}, {transform_indices = @transform_4, window_bounds = array<i64: 16, 512>}]} {
    %c0_i32 = arith.constant 0 : i32
    %0 = arith.cmpi eq, %arg1, %c0_i32 : i32
    %1 = arith.extui %0 : i1 to i32
    %c0_i32_0 = arith.constant 0 : i32
    %2 = arith.cmpi ne, %1, %c0_i32_0 : i32
    scf.if %2 {
      %cst_10 = arith.constant 0.000000e+00 : f32
      %12 = vector.broadcast %cst_10 : f32 to vector<16x512xf32>
      %c0_11 = arith.constant 0 : index
      %c0_12 = arith.constant 0 : index
      %13 = vector.load %arg7[%c0_11, %c0_12] : memref<16x512xf32, #tpu.memory_space<vmem>>, vector<16x512xf32>
      tpu.vector_store %arg7[%c0_11, %c0_12], %12 {strides = array<i32>} : memref<16x512xf32, #tpu.memory_space<vmem>>, vector<16x512xf32>,
    } else {
    }
    %c0 = arith.constant 0 : index
    %c0_1 = arith.constant 0 : index
    %3 = vector.load %arg7[%c0, %c0_1] : memref<16x512xf32, #tpu.memory_space<vmem>>, vector<16x512xf32>
    %c0_2 = arith.constant 0 : index
    %c0_3 = arith.constant 0 : index
    %4 = vector.load %arg2[%c0_2, %c0_3] : memref<16x400xbf16, #tpu.memory_space<vmem>>, vector<16x400xbf16>
    %c0_4 = arith.constant 0 : index
    %c0_5 = arith.constant 0 : index
    %5 = vector.load %arg3[%c0_4, %c0_5] : memref<400x512xbf16, #tpu.memory_space<vmem>>, vector<400x512xbf16>
    %cst = arith.constant dense<0.000000e+00> : vector<16x512xf32>
    %6 = tpu.matmul %4, %5, %cst {dimension_numbers = #tpu.dot_dimension_numbers<[1], [0], [0], [1], [0, 0, 1, 1], [], []>} : vector<16x400xbf16>, vector<400x512xbf16>, vector<16x512xf32> -> vector<16x512xf32>
    %7 = arith.addf %3, %6 : vector<16x512xf32>
    %c0_6 = arith.constant 0 : index
    %c0_7 = arith.constant 0 : index
    %8 = vector.load %arg7[%c0_6, %c0_7] : memref<16x512xf32, #tpu.memory_space<vmem>>, vector<16x512xf32>
    tpu.vector_store %arg7[%c0_6, %c0_7], %7 {strides = array<i32>} : memref<16x512xf32, #tpu.memory_space<vmem>>, vector<16x512xf32>,
    %c0_i32_8 = arith.constant 0 : i32
    %9 = arith.cmpi eq, %arg1, %c0_i32_8 : i32
    %10 = arith.extui %9 : i1 to i32
    %c0_i32_9 = arith.constant 0 : i32
    %11 = arith.cmpi ne, %10, %c0_i32_9 : i32
    scf.if %11 {
      %c0_10 = arith.constant 0 : index
      %c0_11 = arith.constant 0 : index
      %12 = vector.load %arg7[%c0_10, %c0_11] : memref<16x512xf32, #tpu.memory_space<vmem>>, vector<16x512xf32>
      %c0_12 = arith.constant 0 : index
      %c0_13 = arith.constant 0 : index
      %13 = vector.load %arg4[%c0_12, %c0_13] : memref<16x1xf32, #tpu.memory_space<vmem>>, vector<16x1xf32>
      %14 = vector.broadcast %13 : vector<16x1xf32> to vector<16x512xf32>
      %15 = arith.addf %12, %14 : vector<16x512xf32>
      %c0_14 = arith.constant 0 : index
      %c0_15 = arith.constant 0 : index
      %16 = vector.load %arg5[%c0_14, %c0_15] : memref<16x512xf32, #tpu.memory_space<vmem>>, vector<16x512xf32>
      %17 = arith.addf %15, %16 : vector<16x512xf32>
      %cst_16 = arith.constant 0.000000e+00 : f32
      %18 = vector.broadcast %cst_16 : f32 to vector<16x512xf32>
      %19 = arith.maximumf %17, %18 : vector<16x512xf32>
      %c0_17 = arith.constant 0 : index
      %c0_18 = arith.constant 0 : index
      %20 = vector.load %arg6[%c0_17, %c0_18] : memref<16x512xf32, #tpu.memory_space<vmem>>, vector<16x512xf32>
      tpu.vector_store %arg6[%c0_17, %c0_18], %19 {strides = array<i32>} : memref<16x512xf32, #tpu.memory_space<vmem>>, vector<16x512xf32>,
    } else {
    }
    return
  }
  func.func @transform_0(%arg0: i32, %arg1: i32) -> (i32, i32) {
    %c0_i32 = arith.constant 0 : i32
    %c0_i32_0 = arith.constant 0 : i32
    return %c0_i32, %arg1 : i32, i32
  }
  func.func @transform_1(%arg0: i32, %arg1: i32) -> (i32, i32) {
    %c0_i32 = arith.constant 0 : i32
    return %arg1, %arg0 : i32, i32
  }
  func.func @transform_2(%arg0: i32, %arg1: i32) -> (i32, i32) {
    %c0_i32 = arith.constant 0 : i32
    %c0_i32_0 = arith.constant 0 : i32
    %c0_i32_1 = arith.constant 0 : i32
    return %c0_i32, %c0_i32_0 : i32, i32
  }
  func.func @transform_3(%arg0: i32, %arg1: i32) -> (i32, i32) {
    %c0_i32 = arith.constant 0 : i32
    %c0_i32_0 = arith.constant 0 : i32
    return %c0_i32, %arg0 : i32, i32
  }
  func.func @transform_4(%arg0: i32, %arg1: i32) -> (i32, i32) {
    %c0_i32 = arith.constant 0 : i32
    %c0_i32_0 = arith.constant 0 : i32
    return %c0_i32, %arg0 : i32, i32
  }
}

module attributes {stable_mosaic.version = 11 : i64} {
  func.func @_mm_kernel(%arg0: i32, %arg1: i32, %arg2: memref<1x400xbf16, #tpu.memory_space<vmem>>, %arg3: memref<400x512xbf16, #tpu.memory_space<vmem>>, %arg4: memref<1x1xf32, #tpu.memory_space<vmem>>, %arg5: memref<1x512xf32, #tpu.memory_space<vmem>>, %arg6: memref<1x512xf32, #tpu.memory_space<vmem>>, %arg7: memref<1x512xf32, #tpu.memory_space<vmem>>) attributes {dimension_semantics = [#tpu.dimension_semantics<parallel>, #tpu.dimension_semantics<arbitrary>], iteration_bounds = array<i64: 1, 1>, scalar_prefetch = 0 : i64, scratch_operands = 1 : i64, tpu.core_type = #tpu.core_type<tc>, window_params = [{transform_indices = @transform_0, window_bounds = array<i64: 1, 400>}, {transform_indices = @transform_1, window_bounds = array<i64: 400, 512>}, {pipeline_mode = #tpu.pipeline_mode<synchronous>, transform_indices = @transform_2, window_bounds = array<i64: 1, 1>}, {transform_indices = @transform_3, window_bounds = array<i64: 1, 512>}, {transform_indices = @transform_4, window_bounds = array<i64: 1, 512>}]} {
    %c0_i32 = arith.constant 0 : i32
    %0 = arith.cmpi eq, %arg1, %c0_i32 : i32
    %1 = arith.extui %0 : i1 to i32
    %c0_i32_0 = arith.constant 0 : i32
    %2 = arith.cmpi ne, %1, %c0_i32_0 : i32
    scf.if %2 {
      %cst_10 = arith.constant 0.000000e+00 : f32
      %12 = vector.broadcast %cst_10 : f32 to vector<1x512xf32>
      %c0_11 = arith.constant 0 : index
      %c0_12 = arith.constant 0 : index
      %13 = vector.load %arg7[%c0_11, %c0_12] : memref<1x512xf32, #tpu.memory_space<vmem>>, vector<1x512xf32>
      tpu.vector_store %arg7[%c0_11, %c0_12], %12 {strides = array<i32>} : memref<1x512xf32, #tpu.memory_space<vmem>>, vector<1x512xf32>,
    } else {
    }
    %c0 = arith.constant 0 : index
    %c0_1 = arith.constant 0 : index
    %3 = vector.load %arg7[%c0, %c0_1] : memref<1x512xf32, #tpu.memory_space<vmem>>, vector<1x512xf32>
    %c0_2 = arith.constant 0 : index
    %c0_3 = arith.constant 0 : index
    %4 = vector.load %arg2[%c0_2, %c0_3] : memref<1x400xbf16, #tpu.memory_space<vmem>>, vector<1x400xbf16>
    %c0_4 = arith.constant 0 : index
    %c0_5 = arith.constant 0 : index
    %5 = vector.load %arg3[%c0_4, %c0_5] : memref<400x512xbf16, #tpu.memory_space<vmem>>, vector<400x512xbf16>
    %cst = arith.constant dense<0.000000e+00> : vector<1x512xf32>
    %6 = tpu.matmul %4, %5, %cst {dimension_numbers = #tpu.dot_dimension_numbers<[1], [0], [0], [1], [0, 0, 1, 1], [], []>} : vector<1x400xbf16>, vector<400x512xbf16>, vector<1x512xf32> -> vector<1x512xf32>
    %7 = arith.addf %3, %6 : vector<1x512xf32>
    %c0_6 = arith.constant 0 : index
    %c0_7 = arith.constant 0 : index
    %8 = vector.load %arg7[%c0_6, %c0_7] : memref<1x512xf32, #tpu.memory_space<vmem>>, vector<1x512xf32>
    tpu.vector_store %arg7[%c0_6, %c0_7], %7 {strides = array<i32>} : memref<1x512xf32, #tpu.memory_space<vmem>>, vector<1x512xf32>,
    %c0_i32_8 = arith.constant 0 : i32
    %9 = arith.cmpi eq, %arg1, %c0_i32_8 : i32
    %10 = arith.extui %9 : i1 to i32
    %c0_i32_9 = arith.constant 0 : i32
    %11 = arith.cmpi ne, %10, %c0_i32_9 : i32
    scf.if %11 {
      %c0_10 = arith.constant 0 : index
      %c0_11 = arith.constant 0 : index
      %12 = vector.load %arg7[%c0_10, %c0_11] : memref<1x512xf32, #tpu.memory_space<vmem>>, vector<1x512xf32>
      %c0_12 = arith.constant 0 : index
      %c0_13 = arith.constant 0 : index
      %13 = vector.load %arg4[%c0_12, %c0_13] : memref<1x1xf32, #tpu.memory_space<vmem>>, vector<1x1xf32>
      %14 = vector.broadcast %13 : vector<1x1xf32> to vector<1x512xf32>
      %15 = arith.addf %12, %14 : vector<1x512xf32>
      %c0_14 = arith.constant 0 : index
      %c0_15 = arith.constant 0 : index
      %16 = vector.load %arg5[%c0_14, %c0_15] : memref<1x512xf32, #tpu.memory_space<vmem>>, vector<1x512xf32>
      %17 = arith.addf %15, %16 : vector<1x512xf32>
      %cst_16 = arith.constant 0.000000e+00 : f32
      %18 = vector.broadcast %cst_16 : f32 to vector<1x512xf32>
      %19 = arith.maximumf %17, %18 : vector<1x512xf32>
      %c0_17 = arith.constant 0 : index
      %c0_18 = arith.constant 0 : index
      %20 = vector.load %arg6[%c0_17, %c0_18] : memref<1x512xf32, #tpu.memory_space<vmem>>, vector<1x512xf32>
      tpu.vector_store %arg6[%c0_17, %c0_18], %19 {strides = array<i32>} : memref<1x512xf32, #tpu.memory_space<vmem>>, vector<1x512xf32>,
    } else {
    }
    return
  }
  func.func @transform_0(%arg0: i32, %arg1: i32) -> (i32, i32) {
    %c0_i32 = arith.constant 0 : i32
    %c0_i32_0 = arith.constant 0 : i32
    return %c0_i32, %arg1 : i32, i32
  }
  func.func @transform_1(%arg0: i32, %arg1: i32) -> (i32, i32) {
    %c0_i32 = arith.constant 0 : i32
    return %arg1, %arg0 : i32, i32
  }
  func.func @transform_2(%arg0: i32, %arg1: i32) -> (i32, i32) {
    %c0_i32 = arith.constant 0 : i32
    %c0_i32_0 = arith.constant 0 : i32
    %c0_i32_1 = arith.constant 0 : i32
    return %c0_i32, %c0_i32_0 : i32, i32
  }
  func.func @transform_3(%arg0: i32, %arg1: i32) -> (i32, i32) {
    %c0_i32 = arith.constant 0 : i32
    %c0_i32_0 = arith.constant 0 : i32
    return %c0_i32, %arg0 : i32, i32
  }
  func.func @transform_4(%arg0: i32, %arg1: i32) -> (i32, i32) {
    %c0_i32 = arith.constant 0 : i32
    %c0_i32_0 = arith.constant 0 : i32
    return %c0_i32, %arg0 : i32, i32
  }
}

</mosaic_0001>

<llo_original>
// kernel: vvbp_forward.13
$region0: #{vvbp_forward.13}
  #allocation0 [shape = 'u32[]', space=smem, size = 0x4, offset = 0x4, fixed_abs, tag = 'smem constant byte address 0x4 - core index']
  #allocation1 [shape = 'u32[144,128]{1,0:T(1,128)}', space=vmem, size = 0x12000, scoped, tag = 'internal scratch']
  %s0 = inlined_call_operand.vmem [shape: f32[32,16], index: 0, kind: input, shape index: {}]
  %s1 = inlined_call_operand.hbm [shape: f32[16,16], index: 1, kind: input, shape index: {}]
  %s2 = inlined_call_operand.vmem [shape: f32[32,16], index: 2, kind: output, shape index: {}]
  %s3 = sld [smem:[#allocation0]]
  $region22: #{vvbp_forward.13} parent=0
    _
  %s5 = ssub.s32 1, %s3
  %s6 = scalar_select 0, %s5, %s3
  $region1: #{vvbp_forward.13} parent=0
    #allocation2 [shape = 'u8[8192]{0}', space=vmem, size = 0x2000, scoped, tag = 'input window, operand 1, single buffered']
    #allocation3 [shape = 's32[1]{0}', space=sflag, size = 0x4, scoped, tag = 'scoped memory for vvbp_forward.13']
    %7 = vsyncpa [#allocation3], 0
    // Predicated region
    $region2: #{vvbp_forward.13} parent=1 // pred_check
      _
    $region3: #{vvbp_forward.13} parent=1 // pred_check_branch
      %9 = sbr.rel (0) target = $region5
    $region4: #{vvbp_forward.13} parent=1 // pred_region
      _
    $region5: #{vvbp_forward.13} parent=1 // pred_fallthru
      _
    // Predicated region
    $region6: #{vvbp_forward.13} parent=1 // pred_check
      _
    $region7: #{vvbp_forward.13} parent=1 // pred_check_branch
      %11 = sbr.rel (0) target = $region9
    $region8: #{vvbp_forward.13} parent=1 // pred_region
      %s13 = ssub.s32 256, 256
      %14 = vsyncadd [#allocation3], %s13
      %s15 = sshll.u32 [#allocation2], 4
      %s16 = int_to_ptr.vmem [resolvable:$true] %s15
      %21 = dma.hbm_to_vmem [thread:$0]  %s1, 256, %s16, [#allocation3], 128, 128, 8
    $region9: #{vvbp_forward.13} parent=1 // pred_fallthru
      _
    // Predicated region
    $region10: #{vvbp_forward.13} parent=1 // pred_check
      _
    $region11: #{vvbp_forward.13} parent=1 // pred_check_branch
      %23 = sbr.rel (0) target = $region13
    $region12: #{vvbp_forward.13} parent=1 // pred_region
      %24 = dma.done [#allocation3], 256
    $region13: #{vvbp_forward.13} parent=1 // pred_fallthru
      _
    %v25 = vld [vmem:[%s0] sm:$0xff]
    %v26 = vld [vmem:[%s0 + $0x8] sm:$0xff]
    %v27 = vld [vmem:[%s0 + $0x10] sm:$0xff]
    %v28 = vld [vmem:[%s0 + $0x18] sm:$0xff]
    %v29 = vld [vmem:[#allocation2] sm:$0xff]
    %v30 = vld [vmem:[#allocation2 + $0x8] sm:$0xff]
    %vm31 = vcmask 130048
    %v33 = vsel %vm31, %v25, 0
    %v36 = vsel %vm31, %v26, 0
    %v39 = vsel %vm31, %v27, 0
    %v42 = vsel %vm31, %v28, 0
    %44 = vmatprep.subr.mxu0 0.0
    %45 = vmatpush1.msra.mxu0 0.0
    %46 = vmatprep.subr.mxu0 0.0
    %47 = vmatpush1.msra.mxu0 0.0
    %48 = vmatprep.subr.mxu0 0.0
    %49 = vmatpush1.msra.mxu0 0.0
    %50 = vmatprep.subr.mxu0 0.0
    %51 = vmatpush1.msra.mxu0 0.0
    %52 = vmatprep.subr.mxu0 0.0
    %53 = vmatpush1.msra.mxu0 0.0
    %54 = vmatprep.subr.mxu0 0.0
    %55 = vmatpush1.msra.mxu0 0.0
    %56 = vmatprep.subr.mxu0 0.0
    %57 = vmatpush1.msra.mxu0 0.0
    %58 = vmatprep.subr.mxu0 0.0
    %59 = vmatpush1.msra.mxu0 0.0
    %60 = vmatprep.subr.mxu0 0.0
    %61 = vmatpush1.msra.mxu0 0.0
    %62 = vmatprep.subr.mxu0 0.0
    %63 = vmatpush1.msra.mxu0 0.0
    %64 = vmatprep.subr.mxu0 0.0
    %65 = vmatpush1.msra.mxu0 0.0
    %66 = vmatprep.subr.mxu0 0.0
    %67 = vmatpush1.msra.mxu0 0.0
    %68 = vmatprep.subr.mxu0 0.0
    %69 = vmatpush1.msra.mxu0 0.0
    %70 = vmatprep.subr.mxu0 0.0
    %71 = vmatpush1.msra.mxu0 0.0
    %72 = vmatprep.subr.mxu0 0.0
    %73 = vmatpush1.msra.mxu0 %v30
    %74 = vmatprep.subr.mxu0 0.0
    %75 = vmatpush1.msra.mxu0 %v29
    %76 = vmatprep.subr.mxu0 0.0
    %77 = vmatpush2.msra.mxu0 0.0
    %78 = vmatprep.subr.mxu0 0.0
    %79 = vmatpush2.msra.mxu0 0.0
    %80 = vmatprep.subr.mxu0 0.0
    %81 = vmatpush2.msra.mxu0 0.0
    %82 = vmatprep.subr.mxu0 0.0
    %83 = vmatpush2.msra.mxu0 0.0
    %84 = vmatprep.subr.mxu0 0.0
    %85 = vmatpush2.msra.mxu0 0.0
    %86 = vmatprep.subr.mxu0 0.0
    %87 = vmatpush2.msra.mxu0 0.0
    %88 = vmatprep.subr.mxu0 0.0
    %89 = vmatpush2.msra.mxu0 0.0
    %90 = vmatprep.subr.mxu0 0.0
    %91 = vmatpush2.msra.mxu0 0.0
    %92 = vmatprep.subr.mxu0 0.0
    %93 = vmatpush2.msra.mxu0 0.0
    %94 = vmatprep.subr.mxu0 0.0
    %95 = vmatpush2.msra.mxu0 0.0
    %96 = vmatprep.subr.mxu0 0.0
    %97 = vmatpush2.msra.mxu0 0.0
    %98 = vmatprep.subr.mxu0 0.0
    %99 = vmatpush2.msra.mxu0 0.0
    %100 = vmatprep.subr.mxu0 0.0
    %101 = vmatpush2.msra.mxu0 0.0
    %102 = vmatprep.subr.mxu0 0.0
    %103 = vmatpush2.msra.mxu0 0.0
    %104 = vmatprep.subr.mxu0 0.0
    %105 = vmatpush2.msra.mxu0 0.0
    %106 = vmatprep.subr.mxu0 0.0
    %107 = vmatpush2.msra.mxu0 0.0
    %108 = vmatprep.mubr.f32.mxu0 0.0
    %109 = vmatmul.mubr.f32.gmra.mxu0 %v33
    %v110 = vpop.f32.mrf.mxu0
    %v111 = vadd.f32 0.0, %v110
    %v112 = vpop.f32.mrf.mxu0
    %113 = vmatprep.mubr.f32.mxu0 0.0
    %114 = vmatmul.mubr.f32.gmra.mxu0 %v36
    %v115 = vpop.f32.mrf.mxu0
    %v116 = vadd.f32 0.0, %v115
    %v117 = vpop.f32.mrf.mxu0
    %118 = vmatprep.mubr.f32.mxu0 0.0
    %119 = vmatmul.mubr.f32.gmra.mxu0 %v39
    %v120 = vpop.f32.mrf.mxu0
    %v121 = vadd.f32 0.0, %v120
    %v122 = vpop.f32.mrf.mxu0
    %123 = vmatprep.mubr.f32.mxu0 0.0
    %124 = vmatmul.mubr.f32.gmra.mxu0 %v42
    %v125 = vpop.f32.mrf.mxu0
    %v126 = vadd.f32 0.0, %v125
    %v127 = vpop.f32.mrf.mxu0
    %128 = vdwg.mxu0
    %129 = vst.msk [vmem:[%s2] sm:$0xff] %vm31, %v111
    %130 = vst.msk [vmem:[%s2 + $0x8] sm:$0xff] %vm31, %v116
    %131 = vst.msk [vmem:[%s2 + $0x10] sm:$0xff] %vm31, %v121
    %132 = vst.msk [vmem:[%s2 + $0x18] sm:$0xff] %vm31, %v126
    // Predicated region
    $region14: #{vvbp_forward.13} parent=1 // pred_check
      _
    $region15: #{vvbp_forward.13} parent=1 // pred_check_branch
      %134 = sbr.rel (0) target = $region17
    $region16: #{vvbp_forward.13} parent=1 // pred_region
      _
    $region17: #{vvbp_forward.13} parent=1 // pred_fallthru
      _
    // Predicated region
    $region18: #{vvbp_forward.13} parent=1 // pred_check
      _
    $region19: #{vvbp_forward.13} parent=1 // pred_check_branch
      %136 = sbr.rel (0) target = $region21
    $region20: #{vvbp_forward.13} parent=1 // pred_region
      _
    $region21: #{vvbp_forward.13} parent=1 // pred_fallthru
      _
    %137 = vsyncpa [#allocation3], 1

// kernel: vvbp_forward.14
$region0: #{vvbp_forward.14}
  #allocation0 [shape = 'u32[]', space=smem, size = 0x4, offset = 0x4, fixed_abs, tag = 'smem constant byte address 0x4 - core index']
  #allocation1 [shape = 'u32[144,128]{1,0:T(1,128)}', space=vmem, size = 0x12000, scoped, tag = 'internal scratch']
  #allocation2 [shape = 'f32[16,2,256]{2,1,0:T(2,128)}', space=vmem, size = 0x8000, scoped, tag = 'scratch operand']
  %s0 = inlined_call_operand.vmem [shape: f32[16,2,16], index: 0, kind: input, shape index: {}]
  %s1 = inlined_call_operand.vmem [shape: f32[16,1,256], index: 1, kind: input, shape index: {}]
  %s2 = inlined_call_operand.vmem [shape: f32[16,2,256], index: 2, kind: output, shape index: {}]
  %s3 = sld [smem:[#allocation0]]
  $region18: #{vvbp_forward.14} parent=0
    _
  %s5 = ssub.s32 1, %s3
  %s6 = scalar_select 0, %s5, %s3
  // Predicated region
  $region2: #{vvbp_forward.14} parent=0 // pred_check
    _
  $region3: #{vvbp_forward.14} parent=0 // pred_check_branch
    %8 = sbr.rel (0) target = $region5
  $region4: #{vvbp_forward.14} parent=0 // pred_region
    _
  $region5: #{vvbp_forward.14} parent=0 // pred_fallthru
    _
  // Predicated region
  $region6: #{vvbp_forward.14} parent=0 // pred_check
    _
  $region7: #{vvbp_forward.14} parent=0 // pred_check_branch
    %10 = sbr.rel (0) target = $region9
  $region8: #{vvbp_forward.14} parent=0 // pred_region
    _
  $region9: #{vvbp_forward.14} parent=0 // pred_fallthru
    _
  %v11 = vlaneseq
  %v12 = vshrl.u32 %v11, 7
  %v13 = vadd.s32 %v12, 8
  %v14 = vcvt.s32.f32 %v12
  %v15 = vcvt.s32.f32 %v13
  %v16 = vld [vmem:[%s1] sm:$0x3]
  %v18 = vlaneseq
  %v19 = vshrl.u32 %v18, 7
  %v20 = vsub.s32 0, %v19
  %v21 = vrot.slane %v16, %v20
  %v22 = vlaneseq
  %v23 = vshrl.u32 %v22, 7
  %v24 = vsub.s32 1, %v23
  %v25 = vrot.slane %v16, %v24
  %v28 = vsub.f32 %v14, %v21
  %v29 = vsub.f32 %v14, %v25
  %v30 = vsub.f32 %v15, %v21
  %v31 = vsub.f32 %v15, %v25
  %v32 = vand.u32 2147483647, %v28
  %v33 = vand.u32 2147483647, %v29
  %v34 = vand.u32 2147483647, %v30
  %v35 = vand.u32 2147483647, %v31
  %v36 = vsub.f32 1.0, %v32
  %v37 = vsub.f32 1.0, %v33
  %v38 = vsub.f32 1.0, %v34
  %v39 = vsub.f32 1.0, %v35
  %v40 = vmax.f32 %v36, 0.0
  %v41 = vmax.f32 %v37, 0.0
  %v42 = vmax.f32 %v38, 0.0
  %v43 = vmax.f32 %v39, 0.0
  %v44 = vld [vmem:[%s0] sm:$0x3]
  %vm45 = vcmask 130048
  %v47 = vsel %vm45, %v44, 0
  %49 = vmatprep.subr.mxu0 0.0
  %50 = vmatpush1.msra.mxu0 0.0
  %51 = vmatprep.subr.mxu0 0.0
  %52 = vmatpush1.msra.mxu0 0.0
  %53 = vmatprep.subr.mxu0 0.0
  %54 = vmatpush1.msra.mxu0 0.0
  %55 = vmatprep.subr.mxu0 0.0
  %56 = vmatpush1.msra.mxu0 0.0
  %57 = vmatprep.subr.mxu0 0.0
  %58 = vmatpush1.msra.mxu0 0.0
  %59 = vmatprep.subr.mxu0 0.0
  %60 = vmatpush1.msra.mxu0 0.0
  %61 = vmatprep.subr.mxu0 0.0
  %62 = vmatpush1.msra.mxu0 0.0
  %63 = vmatprep.subr.mxu0 0.0
  %64 = vmatpush1.msra.mxu0 0.0
  %65 = vmatprep.subr.mxu0 0.0
  %66 = vmatpush1.msra.mxu0 0.0
  %67 = vmatprep.subr.mxu0 0.0
  %68 = vmatpush1.msra.mxu0 0.0
  %69 = vmatprep.subr.mxu0 0.0
  %70 = vmatpush1.msra.mxu0 0.0
  %71 = vmatprep.subr.mxu0 0.0
  %72 = vmatpush1.msra.mxu0 0.0
  %73 = vmatprep.subr.mxu0 0.0
  %74 = vmatpush1.msra.mxu0 0.0
  %75 = vmatprep.subr.mxu0 0.0
  %76 = vmatpush1.msra.mxu0 0.0
  %77 = vmatprep.subr.mxu0 %v43
  %78 = vmatpush1.msra.mxu0 %v42
  %79 = vmatprep.subr.mxu0 %v41
  %80 = vmatpush1.msra.mxu0 %v40
  %81 = vmatprep.subr.mxu0 0.0
  %82 = vmatpush2.msra.mxu0 0.0
  %83 = vmatprep.subr.mxu0 0.0
  %84 = vmatpush2.msra.mxu0 0.0
  %85 = vmatprep.subr.mxu0 0.0
  %86 = vmatpush2.msra.mxu0 0.0
  %87 = vmatprep.subr.mxu0 0.0
  %88 = vmatpush2.msra.mxu0 0.0
  %89 = vmatprep.subr.mxu0 0.0
  %90 = vmatpush2.msra.mxu0 0.0
  %91 = vmatprep.subr.mxu0 0.0
  %92 = vmatpush2.msra.mxu0 0.0
  %93 = vmatprep.subr.mxu0 0.0
  %94 = vmatpush2.msra.mxu0 0.0
  %95 = vmatprep.subr.mxu0 0.0
  %96 = vmatpush2.msra.mxu0 0.0
  %97 = vmatprep.subr.mxu0 0.0
  %98 = vmatpush2.msra.mxu0 0.0
  %99 = vmatprep.subr.mxu0 0.0
  %100 = vmatpush2.msra.mxu0 0.0
  %101 = vmatprep.subr.mxu0 0.0
  %102 = vmatpush2.msra.mxu0 0.0
  %103 = vmatprep.subr.mxu0 0.0
  %104 = vmatpush2.msra.mxu0 0.0
  %105 = vmatprep.subr.mxu0 0.0
  %106 = vmatpush2.msra.mxu0 0.0
  %107 = vmatprep.subr.mxu0 0.0
  %108 = vmatpush2.msra.mxu0 0.0
  %109 = vmatprep.subr.mxu0 0.0
  %110 = vmatpush2.msra.mxu0 0.0
  %111 = vmatprep.subr.mxu0 0.0
  %112 = vmatpush2.msra.mxu0 0.0
  %113 = vmatprep.mubr.f32.mxu0 0.0
  %114 = vmatmul.mubr.f32.gmra.mxu0 %v47
  %v115 = vpop.f32.mrf.mxu0
  %v116 = vadd.f32 0.0, %v115
  %v117 = vpop.f32.mrf.mxu0
  %v118 = vadd.f32 0.0, %v117
  %119 = vdwg.mxu0
  %v122 = vcombine.low %v116, %v118
  %v124 = vunpack.c.l.s4 1983009808
  %v125 = vunpack.c.0.s8 %v124
  %v126 = vlaneseq
  %v127 = vshrl.u32 %v126, 7
  %v128 = vsub.s32 %v125, %v127
  %v129 = vrot.slane %v122, %v128
  %131 = vst [vmem:[#allocation2] sm:$0xf] %v129
  %s132 = scalar_lea.vmem %s1, 2
  %v133 = vld [vmem:[%s132] sm:$0x3]
  %v135 = vlaneseq
  %v136 = vshrl.u32 %v135, 7
  %v137 = vsub.s32 0, %v136
  %v138 = vrot.slane %v133, %v137
  %v139 = vlaneseq
  %v140 = vshrl.u32 %v139, 7
  %v141 = vsub.s32 1, %v140
  %v142 = vrot.slane %v133, %v141
  %v145 = vsub.f32 %v14, %v138
  %v146 = vsub.f32 %v14, %v142
  %v147 = vsub.f32 %v15, %v138
  %v148 = vsub.f32 %v15, %v142
  %v149 = vand.u32 2147483647, %v145
  %v150 = vand.u32 2147483647, %v146
  %v151 = vand.u32 2147483647, %v147
  %v152 = vand.u32 2147483647, %v148
  %v153 = vsub.f32 1.0, %v149
  %v154 = vsub.f32 1.0, %v150
  %v155 = vsub.f32 1.0, %v151
  %v156 = vsub.f32 1.0, %v152
  %v157 = vmax.f32 %v153, 0.0
  %v158 = vmax.f32 %v154, 0.0
  %v159 = vmax.f32 %v155, 0.0
  %v160 = vmax.f32 %v156, 0.0
  %s161 = scalar_lea.vmem %s0, 2
  %v162 = vld [vmem:[%s161] sm:$0x3]
  %v164 = vsel %vm45, %v162, 0
  %166 = vmatprep.subr.mxu0 0.0
  %167 = vmatpush1.msra.mxu0 0.0
  %168 = vmatprep.subr.mxu0 0.0
  %169 = vmatpush1.msra.mxu0 0.0
  %170 = vmatprep.subr.mxu0 0.0
  %171 = vmatpush1.msra.mxu0 0.0
  %172 = vmatprep.subr.mxu0 0.0
  %173 = vmatpush1.msra.mxu0 0.0
  %174 = vmatprep.subr.mxu0 0.0
  %175 = vmatpush1.msra.mxu0 0.0
  %176 = vmatprep.subr.mxu0 0.0
  %177 = vmatpush1.msra.mxu0 0.0
  %178 = vmatprep.subr.mxu0 0.0
  %179 = vmatpush1.msra.mxu0 0.0
  %180 = vmatprep.subr.mxu0 0.0
  %181 = vmatpush1.msra.mxu0 0.0
  %182 = vmatprep.subr.mxu0 0.0
  %183 = vmatpush1.msra.mxu0 0.0
  %184 = vmatprep.subr.mxu0 0.0
  %185 = vmatpush1.msra.mxu0 0.0
  %186 = vmatprep.subr.mxu0 0.0
  %187 = vmatpush1.msra.mxu0 0.0
  %188 = vmatprep.subr.mxu0 0.0
  %189 = vmatpush1.msra.mxu0 0.0
  %190 = vmatprep.subr.mxu0 0.0
  %191 = vmatpush1.msra.mxu0 0.0
  %192 = vmatprep.subr.mxu0 0.0
  %193 = vmatpush1.msra.mxu0 0.0
  %194 = vmatprep.subr.mxu0 %v160
  %195 = vmatpush1.msra.mxu0 %v159
  %196 = vmatprep.subr.mxu0 %v158
  %197 = vmatpush1.msra.mxu0 %v157
  %198 = vmatprep.subr.mxu0 0.0
  %199 = vmatpush2.msra.mxu0 0.0
  %200 = vmatprep.subr.mxu0 0.0
  %201 = vmatpush2.msra.mxu0 0.0
  %202 = vmatprep.subr.mxu0 0.0
  %203 = vmatpush2.msra.mxu0 0.0
  %204 = vmatprep.subr.mxu0 0.0
  %205 = vmatpush2.msra.mxu0 0.0
  %206 = vmatprep.subr.mxu0 0.0
  %207 = vmatpush2.msra.mxu0 0.0
  %208 = vmatprep.subr.mxu0 0.0
  %209 = vmatpush2.msra.mxu0 0.0
  %210 = vmatprep.subr.mxu0 0.0
  %211 = vmatpush2.msra.mxu0 0.0
  %212 = vmatprep.subr.mxu0 0.0
  %213 = vmatpush2.msra.mxu0 0.0
  %214 = vmatprep.subr.mxu0 0.0
  %215 = vmatpush2.msra.mxu0 0.0
  %216 = vmatprep.subr.mxu0 0.0
  %217 = vmatpush2.msra.mxu0 0.0
  %218 = vmatprep.subr.mxu0 0.0
  %219 = vmatpush2.msra.mxu0 0.0
  %220 = vmatprep.subr.mxu0 0.0
  %221 = vmatpush2.msra.mxu0 0.0
  %222 = vmatprep.subr.mxu0 0.0
  %223 = vmatpush2.msra.mxu0 0.0
  %224 = vmatprep.subr.mxu0 0.0
  %225 = vmatpush2.msra.mxu0 0.0
  %226 = vmatprep.subr.mxu0 0.0
  %227 = vmatpush2.msra.mxu0 0.0
  %228 = vmatprep.subr.mxu0 0.0
  %229 = vmatpush2.msra.mxu0 0.0
  %230 = vmatprep.mubr.f32.mxu0 0.0
  %231 = vmatmul.mubr.f32.gmra.mxu0 %v164
  %v232 = vpop.f32.mrf.mxu0
  %v233 = vadd.f32 0.0, %v232
  %v234 = vpop.f32.mrf.mxu0
  %v235 = vadd.f32 0.0, %v234
  %236 = vdwg.mxu0
  %v239 = vcombine.low %v233, %v235
  %v241 = vunpack.c.l.s4 1983009808
  %v242 = vunpack.c.0.s8 %v241
  %v243 = vlaneseq
  %v244 = vshrl.u32 %v243, 7
  %v245 = vsub.s32 %v242, %v244
  %v246 = vrot.slane %v239, %v245
  %s248 = scalar_lea.vmem [#allocation2], 4
  %249 = vst [vmem:[%s248] sm:$0xf] %v246
  %s250 = scalar_lea.vmem %s1, 4
  %v251 = vld [vmem:[%s250] sm:$0x3]
  %v253 = vlaneseq
  %v254 = vshrl.u32 %v253, 7
  %v255 = vsub.s32 0, %v254
  %v256 = vrot.slane %v251, %v255
  %v257 = vlaneseq
  %v258 = vshrl.u32 %v257, 7
  %v259 = vsub.s32 1, %v258
  %v260 = vrot.slane %v251, %v259
  %v263 = vsub.f32 %v14, %v256
  %v264 = vsub.f32 %v14, %v260
  %v265 = vsub.f32 %v15, %v256
  %v266 = vsub.f32 %v15, %v260
  %v267 = vand.u32 2147483647, %v263
  %v268 = vand.u32 2147483647, %v264
  %v269 = vand.u32 2147483647, %v265
  %v270 = vand.u32 2147483647, %v266
  %v271 = vsub.f32 1.0, %v267
  %v272 = vsub.f32 1.0, %v268
  %v273 = vsub.f32 1.0, %v269
  %v274 = vsub.f32 1.0, %v270
  %v275 = vmax.f32 %v271, 0.0
  %v276 = vmax.f32 %v272, 0.0
  %v277 = vmax.f32 %v273, 0.0
  %v278 = vmax.f32 %v274, 0.0
  %s279 = scalar_lea.vmem %s0, 4
  %v280 = vld [vmem:[%s279] sm:$0x3]
  %v282 = vsel %vm45, %v280, 0
  %284 = vmatprep.subr.mxu0 0.0
  %285 = vmatpush1.msra.mxu0 0.0
  %286 = vmatprep.subr.mxu0 0.0
  %287 = vmatpush1.msra.mxu0 0.0
  %288 = vmatprep.subr.mxu0 0.0
  %289 = vmatpush1.msra.mxu0 0.0
  %290 = vmatprep.subr.mxu0 0.0
  %291 = vmatpush1.msra.mxu0 0.0
  %292 = vmatprep.subr.mxu0 0.0
  %293 = vmatpush1.msra.mxu0 0.0
  %294 = vmatprep.subr.mxu0 0.0
  %295 = vmatpush1.msra.mxu0 0.0
  %296 = vmatprep.subr.mxu0 0.0
  %297 = vmatpush1.msra.mxu0 0.0
  %298 = vmatprep.subr.mxu0 0.0
  %299 = vmatpush1.msra.mxu0 0.0
  %300 = vmatprep.subr.mxu0 0.0
  %301 = vmatpush1.msra.mxu0 0.0
  %302 = vmatprep.subr.mxu0 0.0
  %303 = vmatpush1.msra.mxu0 0.0
  %304 = vmatprep.subr.mxu0 0.0
  %305 = vmatpush1.msra.mxu0 0.0
  %306 = vmatprep.subr.mxu0 0.0
  %307 = vmatpush1.msra.mxu0 0.0
  %308 = vmatprep.subr.mxu0 0.0
  %309 = vmatpush1.msra.mxu0 0.0
  %310 = vmatprep.subr.mxu0 0.0
  %311 = vmatpush1.msra.mxu0 0.0
  %312 = vmatprep.subr.mxu0 %v278
  %313 = vmatpush1.msra.mxu0 %v277
  %314 = vmatprep.subr.mxu0 %v276
  %315 = vmatpush1.msra.mxu0 %v275
  %316 = vmatprep.subr.mxu0 0.0
  %317 = vmatpush2.msra.mxu0 0.0
  %318 = vmatprep.subr.mxu0 0.0
  %319 = vmatpush2.msra.mxu0 0.0
  %320 = vmatprep.subr.mxu0 0.0
  %321 = vmatpush2.msra.mxu0 0.0
  %322 = vmatprep.subr.mxu0 0.0
  %323 = vmatpush2.msra.mxu0 0.0
  %324 = vmatprep.subr.mxu0 0.0
  %325 = vmatpush2.msra.mxu0 0.0
  %326 = vmatprep.subr.mxu0 0.0
  %327 = vmatpush2.msra.mxu0 0.0
  %328 = vmatprep.subr.mxu0 0.0
  %329 = vmatpush2.msra.mxu0 0.0
  %330 = vmatprep.subr.mxu0 0.0
  %331 = vmatpush2.msra.mxu0 0.0
  %332 = vmatprep.subr.mxu0 0.0
  %333 = vmatpush2.msra.mxu0 0.0
  %334 = vmatprep.subr.mxu0 0.0
  %335 = vmatpush2.msra.mxu0 0.0
  %336 = vmatprep.subr.mxu0 0.0
  %337 = vmatpush2.msra.mxu0 0.0
  %338 = vmatprep.subr.mxu0 0.0
  %339 = vmatpush2.msra.mxu0 0.0
  %340 = vmatprep.subr.mxu0 0.0
  %341 = vmatpush2.msra.mxu0 0.0
  %342 = vmatprep.subr.mxu0 0.0
  %343 = vmatpush2.msra.mxu0 0.0
  %344 = vmatprep.subr.mxu0 0.0
  %345 = vmatpush2.msra.mxu0 0.0
  %346 = vmatprep.subr.mxu0 0.0
  %347 = vmatpush2.msra.mxu0 0.0
  %348 = vmatprep.mubr.f32.mxu0 0.0
  %349 = vmatmul.mubr.f32.gmra.mxu0 %v282
  %v350 = vpop.f32.mrf.mxu0
  %v351 = vadd.f32 0.0, %v350
  %v352 = vpop.f32.mrf.mxu0
  %v353 = vadd.f32 0.0, %v352
  %354 = vdwg.mxu0
  %v357 = vcombine.low %v351, %v353
  %v359 = vunpack.c.l.s4 1983009808
  %v360 = vunpack.c.0.s8 %v359
  %v361 = vlaneseq
  %v362 = vshrl.u32 %v361, 7
  %v363 = vsub.s32 %v360, %v362
  %v364 = vrot.slane %v357, %v363
  %s366 = scalar_lea.vmem [#allocation2], 8
  %367 = vst [vmem:[%s366] sm:$0xf] %v364
  %s368 = scalar_lea.vmem %s1, 6
  %v369 = vld [vmem:[%s368] sm:$0x3]
  %v371 = vlaneseq
  %v372 = vshrl.u32 %v371, 7
  %v373 = vsub.s32 0, %v372
  %v374 = vrot.slane %v369, %v373
  %v375 = vlaneseq
  %v376 = vshrl.u32 %v375, 7
  %v377 = vsub.s32 1, %v376
  %v378 = vrot.slane %v369, %v377
  %v381 = vsub.f32 %v14, %v374
  %v382 = vsub.f32 %v14, %v378
  %v383 = vsub.f32 %v15, %v374
  %v384 = vsub.f32 %v15, %v378
  %v385 = vand.u32 2147483647, %v381
  %v386 = vand.u32 2147483647, %v382
  %v387 = vand.u32 2147483647, %v383
  %v388 = vand.u32 2147483647, %v384
  %v389 = vsub.f32 1.0, %v385
  %v390 = vsub.f32 1.0, %v386
  %v391 = vsub.f32 1.0, %v387
  %v392 = vsub.f32 1.0, %v388
  %v393 = vmax.f32 %v389, 0.0
  %v394 = vmax.f32 %v390, 0.0
  %v395 = vmax.f32 %v391, 0.0
  %v396 = vmax.f32 %v392, 0.0
  %s397 = scalar_lea.vmem %s0, 6
  %v398 = vld [vmem:[%s397] sm:$0x3]
  %v400 = vsel %vm45, %v398, 0
  %402 = vmatprep.subr.mxu0 0.0
  %403 = vmatpush1.msra.mxu0 0.0
  %404 = vmatprep.subr.mxu0 0.0
  %405 = vmatpush1.msra.mxu0 0.0
  %406 = vmatprep.subr.mxu0 0.0
  %407 = vmatpush1.msra.mxu0 0.0
  %408 = vmatprep.subr.mxu0 0.0
  %409 = vmatpush1.msra.mxu0 0.0
  %410 = vmatprep.subr.mxu0 0.0
  %411 = vmatpush1.msra.mxu0 0.0
  %412 = vmatprep.subr.mxu0 0.0
  %413 = vmatpush1.msra.mxu0 0.0
  %414 = vmatprep.subr.mxu0 0.0
  %415 = vmatpush1.msra.mxu0 0.0
  %416 = vmatprep.subr.mxu0 0.0
  %417 = vmatpush1.msra.mxu0 0.0
  %418 = vmatprep.subr.mxu0 0.0
  %419 = vmatpush1.msra.mxu0 0.0
  %420 = vmatprep.subr.mxu0 0.0
  %421 = vmatpush1.msra.mxu0 0.0
  %422 = vmatprep.subr.mxu0 0.0
  %423 = vmatpush1.msra.mxu0 0.0
  %424 = vmatprep.subr.mxu0 0.0
  %425 = vmatpush1.msra.mxu0 0.0
  %426 = vmatprep.subr.mxu0 0.0
  %427 = vmatpush1.msra.mxu0 0.0
  %428 = vmatprep.subr.mxu0 0.0
  %429 = vmatpush1.msra.mxu0 0.0
  %430 = vmatprep.subr.mxu0 %v396
  %431 = vmatpush1.msra.mxu0 %v395
  %432 = vmatprep.subr.mxu0 %v394
  %433 = vmatpush1.msra.mxu0 %v393
  %434 = vmatprep.subr.mxu0 0.0
  %435 = vmatpush2.msra.mxu0 0.0
  %436 = vmatprep.subr.mxu0 0.0
  %437 = vmatpush2.msra.mxu0 0.0
  %438 = vmatprep.subr.mxu0 0.0
  %439 = vmatpush2.msra.mxu0 0.0
  %440 = vmatprep.subr.mxu0 0.0
  %441 = vmatpush2.msra.mxu0 0.0
  %442 = vmatprep.subr.mxu0 0.0
  %443 = vmatpush2.msra.mxu0 0.0
  %444 = vmatprep.subr.mxu0 0.0
  %445 = vmatpush2.msra.mxu0 0.0
  %446 = vmatprep.subr.mxu0 0.0
  %447 = vmatpush2.msra.mxu0 0.0
  %448 = vmatprep.subr.mxu0 0.0
  %449 = vmatpush2.msra.mxu0 0.0
  %450 = vmatprep.subr.mxu0 0.0
  %451 = vmatpush2.msra.mxu0 0.0
  %452 = vmatprep.subr.mxu0 0.0
  %453 = vmatpush2.msra.mxu0 0.0
  %454 = vmatprep.subr.mxu0 0.0
  %455 = vmatpush2.msra.mxu0 0.0
  %456 = vmatprep.subr.mxu0 0.0
  %457 = vmatpush2.msra.mxu0 0.0
  %458 = vmatprep.subr.mxu0 0.0
  %459 = vmatpush2.msra.mxu0 0.0
  %460 = vmatprep.subr.mxu0 0.0
  %461 = vmatpush2.msra.mxu0 0.0
  %462 = vmatprep.subr.mxu0 0.0
  %463 = vmatpush2.msra.mxu0 0.0
  %464 = vmatprep.subr.mxu0 0.0
  %465 = vmatpush2.msra.mxu0 0.0
  %466 = vmatprep.mubr.f32.mxu0 0.0
  %467 = vmatmul.mubr.f32.gmra.mxu0 %v400
  %v468 = vpop.f32.mrf.mxu0
  %v469 = vadd.f32 0.0, %v468
  %v470 = vpop.f32.mrf.mxu0
  %v471 = vadd.f32 0.0, %v470
  %472 = vdwg.mxu0
  %v475 = vcombine.low %v469, %v471
  %v477 = vunpack.c.l.s4 1983009808
  %v478 = vunpack.c.0.s8 %v477
  %v479 = vlaneseq
  %v480 = vshrl.u32 %v479, 7
  %v481 = vsub.s32 %v478, %v480
  %v482 = vrot.slane %v475, %v481
  %s484 = scalar_lea.vmem [#allocation2], 12
  %485 = vst [vmem:[%s484] sm:$0xf] %v482
  %s486 = scalar_lea.vmem %s1, 8
  %v487 = vld [vmem:[%s486] sm:$0x3]
  %v489 = vlaneseq
  %v490 = vshrl.u32 %v489, 7
  %v491 = vsub.s32 0, %v490
  %v492 = vrot.slane %v487, %v491
  %v493 = vlaneseq
  %v494 = vshrl.u32 %v493, 7
  %v495 = vsub.s32 1, %v494
  %v496 = vrot.slane %v487, %v495
  %v499 = vsub.f32 %v14, %v492
  %v500 = vsub.f32 %v14, %v496
  %v501 = vsub.f32 %v15, %v492
  %v502 = vsub.f32 %v15, %v496
  %v503 = vand.u32 2147483647, %v499
  %v504 = vand.u32 2147483647, %v500
  %v505 = vand.u32 2147483647, %v501
  %v506 = vand.u32 2147483647, %v502
  %v507 = vsub.f32 1.0, %v503
  %v508 = vsub.f32 1.0, %v504
  %v509 = vsub.f32 1.0, %v505
  %v510 = vsub.f32 1.0, %v506
  %v511 = vmax.f32 %v507, 0.0
  %v512 = vmax.f32 %v508, 0.0
  %v513 = vmax.f32 %v509, 0.0
  %v514 = vmax.f32 %v510, 0.0
  %s515 = scalar_lea.vmem %s0, 8
  %v516 = vld [vmem:[%s515] sm:$0x3]
  %v518 = vsel %vm45, %v516, 0
  %520 = vmatprep.subr.mxu0 0.0
  %521 = vmatpush1.msra.mxu0 0.0
  %522 = vmatprep.subr.mxu0 0.0
  %523 = vmatpush1.msra.mxu0 0.0
  %524 = vmatprep.subr.mxu0 0.0
  %525 = vmatpush1.msra.mxu0 0.0
  %526 = vmatprep.subr.mxu0 0.0
  %527 = vmatpush1.msra.mxu0 0.0
  %528 = vmatprep.subr.mxu0 0.0
  %529 = vmatpush1.msra.mxu0 0.0
  %530 = vmatprep.subr.mxu0 0.0
  %531 = vmatpush1.msra.mxu0 0.0
  %532 = vmatprep.subr.mxu0 0.0
  %533 = vmatpush1.msra.mxu0 0.0
  %534 = vmatprep.subr.mxu0 0.0
  %535 = vmatpush1.msra.mxu0 0.0
  %536 = vmatprep.subr.mxu0 0.0
  %537 = vmatpush1.msra.mxu0 0.0
  %538 = vmatprep.subr.mxu0 0.0
  %539 = vmatpush1.msra.mxu0 0.0
  %540 = vmatprep.subr.mxu0 0.0
  %541 = vmatpush1.msra.mxu0 0.0
  %542 = vmatprep.subr.mxu0 0.0
  %543 = vmatpush1.msra.mxu0 0.0
  %544 = vmatprep.subr.mxu0 0.0
  %545 = vmatpush1.msra.mxu0 0.0
  %546 = vmatprep.subr.mxu0 0.0
  %547 = vmatpush1.msra.mxu0 0.0
  %548 = vmatprep.subr.mxu0 %v514
  %549 = vmatpush1.msra.mxu0 %v513
  %550 = vmatprep.subr.mxu0 %v512
  %551 = vmatpush1.msra.mxu0 %v511
  %552 = vmatprep.subr.mxu0 0.0
  %553 = vmatpush2.msra.mxu0 0.0
  %554 = vmatprep.subr.mxu0 0.0
  %555 = vmatpush2.msra.mxu0 0.0
  %556 = vmatprep.subr.mxu0 0.0
  %557 = vmatpush2.msra.mxu0 0.0
  %558 = vmatprep.subr.mxu0 0.0
  %559 = vmatpush2.msra.mxu0 0.0
  %560 = vmatprep.subr.mxu0 0.0
  %561 = vmatpush2.msra.mxu0 0.0
  %562 = vmatprep.subr.mxu0 0.0
  %563 = vmatpush2.msra.mxu0 0.0
  %564 = vmatprep.subr.mxu0 0.0
  %565 = vmatpush2.msra.mxu0 0.0
  %566 = vmatprep.subr.mxu0 0.0
  %567 = vmatpush2.msra.mxu0 0.0
  %568 = vmatprep.subr.mxu0 0.0
  %569 = vmatpush2.msra.mxu0 0.0
  %570 = vmatprep.subr.mxu0 0.0
  %571 = vmatpush2.msra.mxu0 0.0
  %572 = vmatprep.subr.mxu0 0.0
  %573 = vmatpush2.msra.mxu0 0.0
  %574 = vmatprep.subr.mxu0 0.0
  %575 = vmatpush2.msra.mxu0 0.0
  %576 = vmatprep.subr.mxu0 0.0
  %577 = vmatpush2.msra.mxu0 0.0
  %578 = vmatprep.subr.mxu0 0.0
  %579 = vmatpush2.msra.mxu0 0.0
  %580 = vmatprep.subr.mxu0 0.0
  %581 = vmatpush2.msra.mxu0 0.0
  %582 = vmatprep.subr.mxu0 0.0
  %583 = vmatpush2.msra.mxu0 0.0
  %584 = vmatprep.mubr.f32.mxu0 0.0
  %585 = vmatmul.mubr.f32.gmra.mxu0 %v518
  %v586 = vpop.f32.mrf.mxu0
  %v587 = vadd.f32 0.0, %v586
  %v588 = vpop.f32.mrf.mxu0
  %v589 = vadd.f32 0.0, %v588
  %590 = vdwg.mxu0
  %v593 = vcombine.low %v587, %v589
  %v595 = vunpack.c.l.s4 1983009808
  %v596 = vunpack.c.0.s8 %v595
  %v597 = vlaneseq
  %v598 = vshrl.u32 %v597, 7
  %v599 = vsub.s32 %v596, %v598
  %v600 = vrot.slane %v593, %v599
  %s602 = scalar_lea.vmem [#allocation2], 16
  %603 = vst [vmem:[%s602] sm:$0xf] %v600
  %s604 = scalar_lea.vmem %s1, 10
  %v605 = vld [vmem:[%s604] sm:$0x3]
  %v607 = vlaneseq
  %v608 = vshrl.u32 %v607, 7
  %v609 = vsub.s32 0, %v608
  %v610 = vrot.slane %v605, %v609
  %v611 = vlaneseq
  %v612 = vshrl.u32 %v611, 7
  %v613 = vsub.s32 1, %v612
  %v614 = vrot.slane %v605, %v613
  %v617 = vsub.f32 %v14, %v610
  %v618 = vsub.f32 %v14, %v614
  %v619 = vsub.f32 %v15, %v610
  %v620 = vsub.f32 %v15, %v614
  %v621 = vand.u32 2147483647, %v617
  %v622 = vand.u32 2147483647, %v618
  %v623 = vand.u32 2147483647, %v619
  %v624 = vand.u32 2147483647, %v620
  %v625 = vsub.f32 1.0, %v621
  %v626 = vsub.f32 1.0, %v622
  %v627 = vsub.f32 1.0, %v623
  %v628 = vsub.f32 1.0, %v624
  %v629 = vmax.f32 %v625, 0.0
  %v630 = vmax.f32 %v626, 0.0
  %v631 = vmax.f32 %v627, 0.0
  %v632 = vmax.f32 %v628, 0.0
  %s633 = scalar_lea.vmem %s0, 10
  %v634 = vld [vmem:[%s633] sm:$0x3]
  %v636 = vsel %vm45, %v634, 0
  %638 = vmatprep.subr.mxu0 0.0
  %639 = vmatpush1.msra.mxu0 0.0
  %640 = vmatprep.subr.mxu0 0.0
  %641 = vmatpush1.msra.mxu0 0.0
  %642 = vmatprep.subr.mxu0 0.0
  %643 = vmatpush1.msra.mxu0 0.0
  %644 = vmatprep.subr.mxu0 0.0
  %645 = vmatpush1.msra.mxu0 0.0
  %646 = vmatprep.subr.mxu0 0.0
  %647 = vmatpush1.msra.mxu0 0.0
  %648 = vmatprep.subr.mxu0 0.0
  %649 = vmatpush1.msra.mxu0 0.0
  %650 = vmatprep.subr.mxu0 0.0
  %651 = vmatpush1.msra.mxu0 0.0
  %652 = vmatprep.subr.mxu0 0.0
  %653 = vmatpush1.msra.mxu0 0.0
  %654 = vmatprep.subr.mxu0 0.0
  %655 = vmatpush1.msra.mxu0 0.0
  %656 = vmatprep.subr.mxu0 0.0
  %657 = vmatpush1.msra.mxu0 0.0
  %658 = vmatprep.subr.mxu0 0.0
  %659 = vmatpush1.msra.mxu0 0.0
  %660 = vmatprep.subr.mxu0 0.0
  %661 = vmatpush1.msra.mxu0 0.0
  %662 = vmatprep.subr.mxu0 0.0
  %663 = vmatpush1.msra.mxu0 0.0
  %664 = vmatprep.subr.mxu0 0.0
  %665 = vmatpush1.msra.mxu0 0.0
  %666 = vmatprep.subr.mxu0 %v632
  %667 = vmatpush1.msra.mxu0 %v631
  %668 = vmatprep.subr.mxu0 %v630
  %669 = vmatpush1.msra.mxu0 %v629
  %670 = vmatprep.subr.mxu0 0.0
  %671 = vmatpush2.msra.mxu0 0.0
  %672 = vmatprep.subr.mxu0 0.0
  %673 = vmatpush2.msra.mxu0 0.0
  %674 = vmatprep.subr.mxu0 0.0
  %675 = vmatpush2.msra.mxu0 0.0
  %676 = vmatprep.subr.mxu0 0.0
  %677 = vmatpush2.msra.mxu0 0.0
  %678 = vmatprep.subr.mxu0 0.0
  %679 = vmatpush2.msra.mxu0 0.0
  %680 = vmatprep.subr.mxu0 0.0
  %681 = vmatpush2.msra.mxu0 0.0
  %682 = vmatprep.subr.mxu0 0.0
  %683 = vmatpush2.msra.mxu0 0.0
  %684 = vmatprep.subr.mxu0 0.0
  %685 = vmatpush2.msra.mxu0 0.0
  %686 = vmatprep.subr.mxu0 0.0
  %687 = vmatpush2.msra.mxu0 0.0
  %688 = vmatprep.subr.mxu0 0.0
  %689 = vmatpush2.msra.mxu0 0.0
  %690 = vmatprep.subr.mxu0 0.0
  %691 = vmatpush2.msra.mxu0 0.0
  %692 = vmatprep.subr.mxu0 0.0
  %693 = vmatpush2.msra.mxu0 0.0
  %694 = vmatprep.subr.mxu0 0.0
  %695 = vmatpush2.msra.mxu0 0.0
  %696 = vmatprep.subr.mxu0 0.0
  %697 = vmatpush2.msra.mxu0 0.0
  %698 = vmatprep.subr.mxu0 0.0
  %699 = vmatpush2.msra.mxu0 0.0
  %700 = vmatprep.subr.mxu0 0.0
  %701 = vmatpush2.msra.mxu0 0.0
  %702 = vmatprep.mubr.f32.mxu0 0.0
  %703 = vmatmul.mubr.f32.gmra.mxu0 %v636
  %v704 = vpop.f32.mrf.mxu0
  %v705 = vadd.f32 0.0, %v704
  %v706 = vpop.f32.mrf.mxu0
  %v707 = vadd.f32 0.0, %v706
  %708 = vdwg.mxu0
  %v711 = vcombine.low %v705, %v707
  %v713 = vunpack.c.l.s4 1983009808
  %v714 = vunpack.c.0.s8 %v713
  %v715 = vlaneseq
  %v716 = vshrl.u32 %v715, 7
  %v717 = vsub.s32 %v714, %v716
  %v718 = vrot.slane %v711, %v717
  %s720 = scalar_lea.vmem [#allocation2], 20
  %721 = vst [vmem:[%s720] sm:$0xf] %v718
  %s722 = scalar_lea.vmem %s1, 12
  %v723 = vld [vmem:[%s722] sm:$0x3]
  %v725 = vlaneseq
  %v726 = vshrl.u32 %v725, 7
  %v727 = vsub.s32 0, %v726
  %v728 = vrot.slane %v723, %v727
  %v729 = vlaneseq
  %v730 = vshrl.u32 %v729, 7
  %v731 = vsub.s32 1, %v730
  %v732 = vrot.slane %v723, %v731
  %v735 = vsub.f32 %v14, %v728
  %v736 = vsub.f32 %v14, %v732
  %v737 = vsub.f32 %v15, %v728
  %v738 = vsub.f32 %v15, %v732
  %v739 = vand.u32 2147483647, %v735
  %v740 = vand.u32 2147483647, %v736
  %v741 = vand.u32 2147483647, %v737
  %v742 = vand.u32 2147483647, %v738
  %v743 = vsub.f32 1.0, %v739
  %v744 = vsub.f32 1.0, %v740
  %v745 = vsub.f32 1.0, %v741
  %v746 = vsub.f32 1.0, %v742
  %v747 = vmax.f32 %v743, 0.0
  %v748 = vmax.f32 %v744, 0.0
  %v749 = vmax.f32 %v745, 0.0
  %v750 = vmax.f32 %v746, 0.0
  %s751 = scalar_lea.vmem %s0, 12
  %v752 = vld [vmem:[%s751] sm:$0x3]
  %v754 = vsel %vm45, %v752, 0
  %756 = vmatprep.subr.mxu0 0.0
  %757 = vmatpush1.msra.mxu0 0.0
  %758 = vmatprep.subr.mxu0 0.0
  %759 = vmatpush1.msra.mxu0 0.0
  %760 = vmatprep.subr.mxu0 0.0
  %761 = vmatpush1.msra.mxu0 0.0
  %762 = vmatprep.subr.mxu0 0.0
  %763 = vmatpush1.msra.mxu0 0.0
  %764 = vmatprep.subr.mxu0 0.0
  %765 = vmatpush1.msra.mxu0 0.0
  %766 = vmatprep.subr.mxu0 0.0
  %767 = vmatpush1.msra.mxu0 0.0
  %768 = vmatprep.subr.mxu0 0.0
  %769 = vmatpush1.msra.mxu0 0.0
  %770 = vmatprep.subr.mxu0 0.0
  %771 = vmatpush1.msra.mxu0 0.0
  %772 = vmatprep.subr.mxu0 0.0
  %773 = vmatpush1.msra.mxu0 0.0
  %774 = vmatprep.subr.mxu0 0.0
  %775 = vmatpush1.msra.mxu0 0.0
  %776 = vmatprep.subr.mxu0 0.0
  %777 = vmatpush1.msra.mxu0 0.0
  %778 = vmatprep.subr.mxu0 0.0
  %779 = vmatpush1.msra.mxu0 0.0
  %780 = vmatprep.subr.mxu0 0.0
  %781 = vmatpush1.msra.mxu0 0.0
  %782 = vmatprep.subr.mxu0 0.0
  %783 = vmatpush1.msra.mxu0 0.0
  %784 = vmatprep.subr.mxu0 %v750
  %785 = vmatpush1.msra.mxu0 %v749
  %786 = vmatprep.subr.mxu0 %v748
  %787 = vmatpush1.msra.mxu0 %v747
  %788 = vmatprep.subr.mxu0 0.0
  %789 = vmatpush2.msra.mxu0 0.0
  %790 = vmatprep.subr.mxu0 0.0
  %791 = vmatpush2.msra.mxu0 0.0
  %792 = vmatprep.subr.mxu0 0.0
  %793 = vmatpush2.msra.mxu0 0.0
  %794 = vmatprep.subr.mxu0 0.0
  %795 = vmatpush2.msra.mxu0 0.0
  %796 = vmatprep.subr.mxu0 0.0
  %797 = vmatpush2.msra.mxu0 0.0
  %798 = vmatprep.subr.mxu0 0.0
  %799 = vmatpush2.msra.mxu0 0.0
  %800 = vmatprep.subr.mxu0 0.0
  %801 = vmatpush2.msra.mxu0 0.0
  %802 = vmatprep.subr.mxu0 0.0
  %803 = vmatpush2.msra.mxu0 0.0
  %804 = vmatprep.subr.mxu0 0.0
  %805 = vmatpush2.msra.mxu0 0.0
  %806 = vmatprep.subr.mxu0 0.0
  %807 = vmatpush2.msra.mxu0 0.0
  %808 = vmatprep.subr.mxu0 0.0
  %809 = vmatpush2.msra.mxu0 0.0
  %810 = vmatprep.subr.mxu0 0.0
  %811 = vmatpush2.msra.mxu0 0.0
  %812 = vmatprep.subr.mxu0 0.0
  %813 = vmatpush2.msra.mxu0 0.0
  %814 = vmatprep.subr.mxu0 0.0
  %815 = vmatpush2.msra.mxu0 0.0
  %816 = vmatprep.subr.mxu0 0.0
  %817 = vmatpush2.msra.mxu0 0.0
  %818 = vmatprep.subr.mxu0 0.0
  %819 = vmatpush2.msra.mxu0 0.0
  %820 = vmatprep.mubr.f32.mxu0 0.0
  %821 = vmatmul.mubr.f32.gmra.mxu0 %v754
  %v822 = vpop.f32.mrf.mxu0
  %v823 = vadd.f32 0.0, %v822
  %v824 = vpop.f32.mrf.mxu0
  %v825 = vadd.f32 0.0, %v824
  %826 = vdwg.mxu0
  %v829 = vcombine.low %v823, %v825
  %v831 = vunpack.c.l.s4 1983009808
  %v832 = vunpack.c.0.s8 %v831
  %v833 = vlaneseq
  %v834 = vshrl.u32 %v833, 7
  %v835 = vsub.s32 %v832, %v834
  %v836 = vrot.slane %v829, %v835
  %s838 = scalar_lea.vmem [#allocation2], 24
  %839 = vst [vmem:[%s838] sm:$0xf] %v836
  %s840 = scalar_lea.vmem %s1, 14
  %v841 = vld [vmem:[%s840] sm:$0x3]
  %v843 = vlaneseq
  %v844 = vshrl.u32 %v843, 7
  %v845 = vsub.s32 0, %v844
  %v846 = vrot.slane %v841, %v845
  %v847 = vlaneseq
  %v848 = vshrl.u32 %v847, 7
  %v849 = vsub.s32 1, %v848
  %v850 = vrot.slane %v841, %v849
  %v853 = vsub.f32 %v14, %v846
  %v854 = vsub.f32 %v14, %v850
  %v855 = vsub.f32 %v15, %v846
  %v856 = vsub.f32 %v15, %v850
  %v857 = vand.u32 2147483647, %v853
  %v858 = vand.u32 2147483647, %v854
  %v859 = vand.u32 2147483647, %v855
  %v860 = vand.u32 2147483647, %v856
  %v861 = vsub.f32 1.0, %v857
  %v862 = vsub.f32 1.0, %v858
  %v863 = vsub.f32 1.0, %v859
  %v864 = vsub.f32 1.0, %v860
  %v865 = vmax.f32 %v861, 0.0
  %v866 = vmax.f32 %v862, 0.0
  %v867 = vmax.f32 %v863, 0.0
  %v868 = vmax.f32 %v864, 0.0
  %s869 = scalar_lea.vmem %s0, 14
  %v870 = vld [vmem:[%s869] sm:$0x3]
  %v872 = vsel %vm45, %v870, 0
  %874 = vmatprep.subr.mxu0 0.0
  %875 = vmatpush1.msra.mxu0 0.0
  %876 = vmatprep.subr.mxu0 0.0
  %877 = vmatpush1.msra.mxu0 0.0
  %878 = vmatprep.subr.mxu0 0.0
  %879 = vmatpush1.msra.mxu0 0.0
  %880 = vmatprep.subr.mxu0 0.0
  %881 = vmatpush1.msra.mxu0 0.0
  %882 = vmatprep.subr.mxu0 0.0
  %883 = vmatpush1.msra.mxu0 0.0
  %884 = vmatprep.subr.mxu0 0.0
  %885 = vmatpush1.msra.mxu0 0.0
  %886 = vmatprep.subr.mxu0 0.0
  %887 = vmatpush1.msra.mxu0 0.0
  %888 = vmatprep.subr.mxu0 0.0
  %889 = vmatpush1.msra.mxu0 0.0
  %890 = vmatprep.subr.mxu0 0.0
  %891 = vmatpush1.msra.mxu0 0.0
  %892 = vmatprep.subr.mxu0 0.0
  %893 = vmatpush1.msra.mxu0 0.0
  %894 = vmatprep.subr.mxu0 0.0
  %895 = vmatpush1.msra.mxu0 0.0
  %896 = vmatprep.subr.mxu0 0.0
  %897 = vmatpush1.msra.mxu0 0.0
  %898 = vmatprep.subr.mxu0 0.0
  %899 = vmatpush1.msra.mxu0 0.0
  %900 = vmatprep.subr.mxu0 0.0
  %901 = vmatpush1.msra.mxu0 0.0
  %902 = vmatprep.subr.mxu0 %v868
  %903 = vmatpush1.msra.mxu0 %v867
  %904 = vmatprep.subr.mxu0 %v866
  %905 = vmatpush1.msra.mxu0 %v865
  %906 = vmatprep.subr.mxu0 0.0
  %907 = vmatpush2.msra.mxu0 0.0
  %908 = vmatprep.subr.mxu0 0.0
  %909 = vmatpush2.msra.mxu0 0.0
  %910 = vmatprep.subr.mxu0 0.0
  %911 = vmatpush2.msra.mxu0 0.0
  %912 = vmatprep.subr.mxu0 0.0
  %913 = vmatpush2.msra.mxu0 0.0
  %914 = vmatprep.subr.mxu0 0.0
  %915 = vmatpush2.msra.mxu0 0.0
  %916 = vmatprep.subr.mxu0 0.0
  %917 = vmatpush2.msra.mxu0 0.0
  %918 = vmatprep.subr.mxu0 0.0
  %919 = vmatpush2.msra.mxu0 0.0
  %920 = vmatprep.subr.mxu0 0.0
  %921 = vmatpush2.msra.mxu0 0.0
  %922 = vmatprep.subr.mxu0 0.0
  %923 = vmatpush2.msra.mxu0 0.0
  %924 = vmatprep.subr.mxu0 0.0
  %925 = vmatpush2.msra.mxu0 0.0
  %926 = vmatprep.subr.mxu0 0.0
  %927 = vmatpush2.msra.mxu0 0.0
  %928 = vmatprep.subr.mxu0 0.0
  %929 = vmatpush2.msra.mxu0 0.0
  %930 = vmatprep.subr.mxu0 0.0
  %931 = vmatpush2.msra.mxu0 0.0
  %932 = vmatprep.subr.mxu0 0.0
  %933 = vmatpush2.msra.mxu0 0.0
  %934 = vmatprep.subr.mxu0 0.0
  %935 = vmatpush2.msra.mxu0 0.0
  %936 = vmatprep.subr.mxu0 0.0
  %937 = vmatpush2.msra.mxu0 0.0
  %938 = vmatprep.mubr.f32.mxu0 0.0
  %939 = vmatmul.mubr.f32.gmra.mxu0 %v872
  %v940 = vpop.f32.mrf.mxu0
  %v941 = vadd.f32 0.0, %v940
  %v942 = vpop.f32.mrf.mxu0
  %v943 = vadd.f32 0.0, %v942
  %944 = vdwg.mxu0
  %v947 = vcombine.low %v941, %v943
  %v949 = vunpack.c.l.s4 1983009808
  %v950 = vunpack.c.0.s8 %v949
  %v951 = vlaneseq
  %v952 = vshrl.u32 %v951, 7
  %v953 = vsub.s32 %v950, %v952
  %v954 = vrot.slane %v947, %v953
  %s956 = scalar_lea.vmem [#allocation2], 28
  %957 = vst [vmem:[%s956] sm:$0xf] %v954
  %s958 = scalar_lea.vmem %s1, 16
  %v959 = vld [vmem:[%s958] sm:$0x3]
  %v961 = vlaneseq
  %v962 = vshrl.u32 %v961, 7
  %v963 = vsub.s32 0, %v962
  %v964 = vrot.slane %v959, %v963
  %v965 = vlaneseq
  %v966 = vshrl.u32 %v965, 7
  %v967 = vsub.s32 1, %v966
  %v968 = vrot.slane %v959, %v967
  %v971 = vsub.f32 %v14, %v964
  %v972 = vsub.f32 %v14, %v968
  %v973 = vsub.f32 %v15, %v964
  %v974 = vsub.f32 %v15, %v968
  %v975 = vand.u32 2147483647, %v971
  %v976 = vand.u32 2147483647, %v972
  %v977 = vand.u32 2147483647, %v973
  %v978 = vand.u32 2147483647, %v974
  %v979 = vsub.f32 1.0, %v975
  %v980 = vsub.f32 1.0, %v976
  %v981 = vsub.f32 1.0, %v977
  %v982 = vsub.f32 1.0, %v978
  %v983 = vmax.f32 %v979, 0.0
  %v984 = vmax.f32 %v980, 0.0
  %v985 = vmax.f32 %v981, 0.0
  %v986 = vmax.f32 %v982, 0.0
  %s987 = scalar_lea.vmem %s0, 16
  %v988 = vld [vmem:[%s987] sm:$0x3]
  %v990 = vsel %vm45, %v988, 0
  %992 = vmatprep.subr.mxu0 0.0
  %993 = vmatpush1.msra.mxu0 0.0
  %994 = vmatprep.subr.mxu0 0.0
  %995 = vmatpush1.msra.mxu0 0.0
  %996 = vmatprep.subr.mxu0 0.0
  %997 = vmatpush1.msra.mxu0 0.0
  %998 = vmatprep.subr.mxu0 0.0
  %999 = vmatpush1.msra.mxu0 0.0
  %1000 = vmatprep.subr.mxu0 0.0
  %1001 = vmatpush1.msra.mxu0 0.0
  %1002 = vmatprep.subr.mxu0 0.0
  %1003 = vmatpush1.msra.mxu0 0.0
  %1004 = vmatprep.subr.mxu0 0.0
  %1005 = vmatpush1.msra.mxu0 0.0
  %1006 = vmatprep.subr.mxu0 0.0
  %1007 = vmatpush1.msra.mxu0 0.0
  %1008 = vmatprep.subr.mxu0 0.0
  %1009 = vmatpush1.msra.mxu0 0.0
  %1010 = vmatprep.subr.mxu0 0.0
  %1011 = vmatpush1.msra.mxu0 0.0
  %1012 = vmatprep.subr.mxu0 0.0
  %1013 = vmatpush1.msra.mxu0 0.0
  %1014 = vmatprep.subr.mxu0 0.0
  %1015 = vmatpush1.msra.mxu0 0.0
  %1016 = vmatprep.subr.mxu0 0.0
  %1017 = vmatpush1.msra.mxu0 0.0
  %1018 = vmatprep.subr.mxu0 0.0
  %1019 = vmatpush1.msra.mxu0 0.0
  %1020 = vmatprep.subr.mxu0 %v986
  %1021 = vmatpush1.msra.mxu0 %v985
  %1022 = vmatprep.subr.mxu0 %v984
  %1023 = vmatpush1.msra.mxu0 %v983
  %1024 = vmatprep.subr.mxu0 0.0
  %1025 = vmatpush2.msra.mxu0 0.0
  %1026 = vmatprep.subr.mxu0 0.0
  %1027 = vmatpush2.msra.mxu0 0.0
  %1028 = vmatprep.subr.mxu0 0.0
  %1029 = vmatpush2.msra.mxu0 0.0
  %1030 = vmatprep.subr.mxu0 0.0
  %1031 = vmatpush2.msra.mxu0 0.0
  %1032 = vmatprep.subr.mxu0 0.0
  %1033 = vmatpush2.msra.mxu0 0.0
  %1034 = vmatprep.subr.mxu0 0.0
  %1035 = vmatpush2.msra.mxu0 0.0
  %1036 = vmatprep.subr.mxu0 0.0
  %1037 = vmatpush2.msra.mxu0 0.0
  %1038 = vmatprep.subr.mxu0 0.0
  %1039 = vmatpush2.msra.mxu0 0.0
  %1040 = vmatprep.subr.mxu0 0.0
  %1041 = vmatpush2.msra.mxu0 0.0
  %1042 = vmatprep.subr.mxu0 0.0
  %1043 = vmatpush2.msra.mxu0 0.0
  %1044 = vmatprep.subr.mxu0 0.0
  %1045 = vmatpush2.msra.mxu0 0.0
  %1046 = vmatprep.subr.mxu0 0.0
  %1047 = vmatpush2.msra.mxu0 0.0
  %1048 = vmatprep.subr.mxu0 0.0
  %1049 = vmatpush2.msra.mxu0 0.0
  %1050 = vmatprep.subr.mxu0 0.0
  %1051 = vmatpush2.msra.mxu0 0.0
  %1052 = vmatprep.subr.mxu0 0.0
  %1053 = vmatpush2.msra.mxu0 0.0
  %1054 = vmatprep.subr.mxu0 0.0
  %1055 = vmatpush2.msra.mxu0 0.0
  %1056 = vmatprep.mubr.f32.mxu0 0.0
  %1057 = vmatmul.mubr.f32.gmra.mxu0 %v990
  %v1058 = vpop.f32.mrf.mxu0
  %v1059 = vadd.f32 0.0, %v1058
  %v1060 = vpop.f32.mrf.mxu0
  %v1061 = vadd.f32 0.0, %v1060
  %1062 = vdwg.mxu0
  %v1065 = vcombine.low %v1059, %v1061
  %v1067 = vunpack.c.l.s4 1983009808
  %v1068 = vunpack.c.0.s8 %v1067
  %v1069 = vlaneseq
  %v1070 = vshrl.u32 %v1069, 7
  %v1071 = vsub.s32 %v1068, %v1070
  %v1072 = vrot.slane %v1065, %v1071
  %s1074 = scalar_lea.vmem [#allocation2], 32
  %1075 = vst [vmem:[%s1074] sm:$0xf] %v1072
  %s1076 = scalar_lea.vmem %s1, 18
  %v1077 = vld [vmem:[%s1076] sm:$0x3]
  %v1079 = vlaneseq
  %v1080 = vshrl.u32 %v1079, 7
  %v1081 = vsub.s32 0, %v1080
  %v1082 = vrot.slane %v1077, %v1081
  %v1083 = vlaneseq
  %v1084 = vshrl.u32 %v1083, 7
  %v1085 = vsub.s32 1, %v1084
  %v1086 = vrot.slane %v1077, %v1085
  %v1089 = vsub.f32 %v14, %v1082
  %v1090 = vsub.f32 %v14, %v1086
  %v1091 = vsub.f32 %v15, %v1082
  %v1092 = vsub.f32 %v15, %v1086
  %v1093 = vand.u32 2147483647, %v1089
  %v1094 = vand.u32 2147483647, %v1090
  %v1095 = vand.u32 2147483647, %v1091
  %v1096 = vand.u32 2147483647, %v1092
  %v1097 = vsub.f32 1.0, %v1093
  %v1098 = vsub.f32 1.0, %v1094
  %v1099 = vsub.f32 1.0, %v1095
  %v1100 = vsub.f32 1.0, %v1096
  %v1101 = vmax.f32 %v1097, 0.0
  %v1102 = vmax.f32 %v1098, 0.0
  %v1103 = vmax.f32 %v1099, 0.0
  %v1104 = vmax.f32 %v1100, 0.0
  %s1105 = scalar_lea.vmem %s0, 18
  %v1106 = vld [vmem:[%s1105] sm:$0x3]
  %v1108 = vsel %vm45, %v1106, 0
  %1110 = vmatprep.subr.mxu0 0.0
  %1111 = vmatpush1.msra.mxu0 0.0
  %1112 = vmatprep.subr.mxu0 0.0
  %1113 = vmatpush1.msra.mxu0 0.0
  %1114 = vmatprep.subr.mxu0 0.0
  %1115 = vmatpush1.msra.mxu0 0.0
  %1116 = vmatprep.subr.mxu0 0.0
  %1117 = vmatpush1.msra.mxu0 0.0
  %1118 = vmatprep.subr.mxu0 0.0
  %1119 = vmatpush1.msra.mxu0 0.0
  %1120 = vmatprep.subr.mxu0 0.0
  %1121 = vmatpush1.msra.mxu0 0.0
  %1122 = vmatprep.subr.mxu0 0.0
  %1123 = vmatpush1.msra.mxu0 0.0
  %1124 = vmatprep.subr.mxu0 0.0
  %1125 = vmatpush1.msra.mxu0 0.0
  %1126 = vmatprep.subr.mxu0 0.0
  %1127 = vmatpush1.msra.mxu0 0.0
  %1128 = vmatprep.subr.mxu0 0.0
  %1129 = vmatpush1.msra.mxu0 0.0
  %1130 = vmatprep.subr.mxu0 0.0
  %1131 = vmatpush1.msra.mxu0 0.0
  %1132 = vmatprep.subr.mxu0 0.0
  %1133 = vmatpush1.msra.mxu0 0.0
  %1134 = vmatprep.subr.mxu0 0.0
  %1135 = vmatpush1.msra.mxu0 0.0
  %1136 = vmatprep.subr.mxu0 0.0
  %1137 = vmatpush1.msra.mxu0 0.0
  %1138 = vmatprep.subr.mxu0 %v1104
  %1139 = vmatpush1.msra.mxu0 %v1103
  %1140 = vmatprep.subr.mxu0 %v1102
  %1141 = vmatpush1.msra.mxu0 %v1101
  %1142 = vmatprep.subr.mxu0 0.0
  %1143 = vmatpush2.msra.mxu0 0.0
  %1144 = vmatprep.subr.mxu0 0.0
  %1145 = vmatpush2.msra.mxu0 0.0
  %1146 = vmatprep.subr.mxu0 0.0
  %1147 = vmatpush2.msra.mxu0 0.0
  %1148 = vmatprep.subr.mxu0 0.0
  %1149 = vmatpush2.msra.mxu0 0.0
  %1150 = vmatprep.subr.mxu0 0.0
  %1151 = vmatpush2.msra.mxu0 0.0
  %1152 = vmatprep.subr.mxu0 0.0
  %1153 = vmatpush2.msra.mxu0 0.0
  %1154 = vmatprep.subr.mxu0 0.0
  %1155 = vmatpush2.msra.mxu0 0.0
  %1156 = vmatprep.subr.mxu0 0.0
  %1157 = vmatpush2.msra.mxu0 0.0
  %1158 = vmatprep.subr.mxu0 0.0
  %1159 = vmatpush2.msra.mxu0 0.0
  %1160 = vmatprep.subr.mxu0 0.0
  %1161 = vmatpush2.msra.mxu0 0.0
  %1162 = vmatprep.subr.mxu0 0.0
  %1163 = vmatpush2.msra.mxu0 0.0
  %1164 = vmatprep.subr.mxu0 0.0
  %1165 = vmatpush2.msra.mxu0 0.0
  %1166 = vmatprep.subr.mxu0 0.0
  %1167 = vmatpush2.msra.mxu0 0.0
  %1168 = vmatprep.subr.mxu0 0.0
  %1169 = vmatpush2.msra.mxu0 0.0
  %1170 = vmatprep.subr.mxu0 0.0
  %1171 = vmatpush2.msra.mxu0 0.0
  %1172 = vmatprep.subr.mxu0 0.0
  %1173 = vmatpush2.msra.mxu0 0.0
  %1174 = vmatprep.mubr.f32.mxu0 0.0
  %1175 = vmatmul.mubr.f32.gmra.mxu0 %v1108
  %v1176 = vpop.f32.mrf.mxu0
  %v1177 = vadd.f32 0.0, %v1176
  %v1178 = vpop.f32.mrf.mxu0
  %v1179 = vadd.f32 0.0, %v1178
  %1180 = vdwg.mxu0
  %v1183 = vcombine.low %v1177, %v1179
  %v1185 = vunpack.c.l.s4 1983009808
  %v1186 = vunpack.c.0.s8 %v1185
  %v1187 = vlaneseq
  %v1188 = vshrl.u32 %v1187, 7
  %v1189 = vsub.s32 %v1186, %v1188
  %v1190 = vrot.slane %v1183, %v1189
  %s1192 = scalar_lea.vmem [#allocation2], 36
  %1193 = vst [vmem:[%s1192] sm:$0xf] %v1190
  %s1194 = scalar_lea.vmem %s1, 20
  %v1195 = vld [vmem:[%s1194] sm:$0x3]
  %v1197 = vlaneseq
  %v1198 = vshrl.u32 %v1197, 7
  %v1199 = vsub.s32 0, %v1198
  %v1200 = vrot.slane %v1195, %v1199
  %v1201 = vlaneseq
  %v1202 = vshrl.u32 %v1201, 7
  %v1203 = vsub.s32 1, %v1202
  %v1204 = vrot.slane %v1195, %v1203
  %v1207 = vsub.f32 %v14, %v1200
  %v1208 = vsub.f32 %v14, %v1204
  %v1209 = vsub.f32 %v15, %v1200
  %v1210 = vsub.f32 %v15, %v1204
  %v1211 = vand.u32 2147483647, %v1207
  %v1212 = vand.u32 2147483647, %v1208
  %v1213 = vand.u32 2147483647, %v1209
  %v1214 = vand.u32 2147483647, %v1210
  %v1215 = vsub.f32 1.0, %v1211
  %v1216 = vsub.f32 1.0, %v1212
  %v1217 = vsub.f32 1.0, %v1213
  %v1218 = vsub.f32 1.0, %v1214
  %v1219 = vmax.f32 %v1215, 0.0
  %v1220 = vmax.f32 %v1216, 0.0
  %v1221 = vmax.f32 %v1217, 0.0
  %v1222 = vmax.f32 %v1218, 0.0
  %s1223 = scalar_lea.vmem %s0, 20
  %v1224 = vld [vmem:[%s1223] sm:$0x3]
  %v1226 = vsel %vm45, %v1224, 0
  %1228 = vmatprep.subr.mxu0 0.0
  %1229 = vmatpush1.msra.mxu0 0.0
  %1230 = vmatprep.subr.mxu0 0.0
  %1231 = vmatpush1.msra.mxu0 0.0
  %1232 = vmatprep.subr.mxu0 0.0
  %1233 = vmatpush1.msra.mxu0 0.0
  %1234 = vmatprep.subr.mxu0 0.0
  %1235 = vmatpush1.msra.mxu0 0.0
  %1236 = vmatprep.subr.mxu0 0.0
  %1237 = vmatpush1.msra.mxu0 0.0
  %1238 = vmatprep.subr.mxu0 0.0
  %1239 = vmatpush1.msra.mxu0 0.0
  %1240 = vmatprep.subr.mxu0 0.0
  %1241 = vmatpush1.msra.mxu0 0.0
  %1242 = vmatprep.subr.mxu0 0.0
  %1243 = vmatpush1.msra.mxu0 0.0
  %1244 = vmatprep.subr.mxu0 0.0
  %1245 = vmatpush1.msra.mxu0 0.0
  %1246 = vmatprep.subr.mxu0 0.0
  %1247 = vmatpush1.msra.mxu0 0.0
  %1248 = vmatprep.subr.mxu0 0.0
  %1249 = vmatpush1.msra.mxu0 0.0
  %1250 = vmatprep.subr.mxu0 0.0
  %1251 = vmatpush1.msra.mxu0 0.0
  %1252 = vmatprep.subr.mxu0 0.0
  %1253 = vmatpush1.msra.mxu0 0.0
  %1254 = vmatprep.subr.mxu0 0.0
  %1255 = vmatpush1.msra.mxu0 0.0
  %1256 = vmatprep.subr.mxu0 %v1222
  %1257 = vmatpush1.msra.mxu0 %v1221
  %1258 = vmatprep.subr.mxu0 %v1220
  %1259 = vmatpush1.msra.mxu0 %v1219
  %1260 = vmatprep.subr.mxu0 0.0
  %1261 = vmatpush2.msra.mxu0 0.0
  %1262 = vmatprep.subr.mxu0 0.0
  %1263 = vmatpush2.msra.mxu0 0.0
  %1264 = vmatprep.subr.mxu0 0.0
  %1265 = vmatpush2.msra.mxu0 0.0
  %1266 = vmatprep.subr.mxu0 0.0
  %1267 = vmatpush2.msra.mxu0 0.0
  %1268 = vmatprep.subr.mxu0 0.0
  %1269 = vmatpush2.msra.mxu0 0.0
  %1270 = vmatprep.subr.mxu0 0.0
  %1271 = vmatpush2.msra.mxu0 0.0
  %1272 = vmatprep.subr.mxu0 0.0
  %1273 = vmatpush2.msra.mxu0 0.0
  %1274 = vmatprep.subr.mxu0 0.0
  %1275 = vmatpush2.msra.mxu0 0.0
  %1276 = vmatprep.subr.mxu0 0.0
  %1277 = vmatpush2.msra.mxu0 0.0
  %1278 = vmatprep.subr.mxu0 0.0
  %1279 = vmatpush2.msra.mxu0 0.0
  %1280 = vmatprep.subr.mxu0 0.0
  %1281 = vmatpush2.msra.mxu0 0.0
  %1282 = vmatprep.subr.mxu0 0.0
  %1283 = vmatpush2.msra.mxu0 0.0
  %1284 = vmatprep.subr.mxu0 0.0
  %1285 = vmatpush2.msra.mxu0 0.0
  %1286 = vmatprep.subr.mxu0 0.0
  %1287 = vmatpush2.msra.mxu0 0.0
  %1288 = vmatprep.subr.mxu0 0.0
  %1289 = vmatpush2.msra.mxu0 0.0
  %1290 = vmatprep.subr.mxu0 0.0
  %1291 = vmatpush2.msra.mxu0 0.0
  %1292 = vmatprep.mubr.f32.mxu0 0.0
  %1293 = vmatmul.mubr.f32.gmra.mxu0 %v1226
  %v1294 = vpop.f32.mrf.mxu0
  %v1295 = vadd.f32 0.0, %v1294
  %v1296 = vpop.f32.mrf.mxu0
  %v1297 = vadd.f32 0.0, %v1296
  %1298 = vdwg.mxu0
  %v1301 = vcombine.low %v1295, %v1297
  %v1303 = vunpack.c.l.s4 1983009808
  %v1304 = vunpack.c.0.s8 %v1303
  %v1305 = vlaneseq
  %v1306 = vshrl.u32 %v1305, 7
  %v1307 = vsub.s32 %v1304, %v1306
  %v1308 = vrot.slane %v1301, %v1307
  %s1310 = scalar_lea.vmem [#allocation2], 40
  %1311 = vst [vmem:[%s1310] sm:$0xf] %v1308
  %s1312 = scalar_lea.vmem %s1, 22
  %v1313 = vld [vmem:[%s1312] sm:$0x3]
  %v1315 = vlaneseq
  %v1316 = vshrl.u32 %v1315, 7
  %v1317 = vsub.s32 0, %v1316
  %v1318 = vrot.slane %v1313, %v1317
  %v1319 = vlaneseq
  %v1320 = vshrl.u32 %v1319, 7
  %v1321 = vsub.s32 1, %v1320
  %v1322 = vrot.slane %v1313, %v1321
  %v1325 = vsub.f32 %v14, %v1318
  %v1326 = vsub.f32 %v14, %v1322
  %v1327 = vsub.f32 %v15, %v1318
  %v1328 = vsub.f32 %v15, %v1322
  %v1329 = vand.u32 2147483647, %v1325
  %v1330 = vand.u32 2147483647, %v1326
  %v1331 = vand.u32 2147483647, %v1327
  %v1332 = vand.u32 2147483647, %v1328
  %v1333 = vsub.f32 1.0, %v1329
  %v1334 = vsub.f32 1.0, %v1330
  %v1335 = vsub.f32 1.0, %v1331
  %v1336 = vsub.f32 1.0, %v1332
  %v1337 = vmax.f32 %v1333, 0.0
  %v1338 = vmax.f32 %v1334, 0.0
  %v1339 = vmax.f32 %v1335, 0.0
  %v1340 = vmax.f32 %v1336, 0.0
  %s1341 = scalar_lea.vmem %s0, 22
  %v1342 = vld [vmem:[%s1341] sm:$0x3]
  %v1344 = vsel %vm45, %v1342, 0
  %1346 = vmatprep.subr.mxu0 0.0
  %1347 = vmatpush1.msra.mxu0 0.0
  %1348 = vmatprep.subr.mxu0 0.0
  %1349 = vmatpush1.msra.mxu0 0.0
  %1350 = vmatprep.subr.mxu0 0.0
  %1351 = vmatpush1.msra.mxu0 0.0
  %1352 = vmatprep.subr.mxu0 0.0
  %1353 = vmatpush1.msra.mxu0 0.0
  %1354 = vmatprep.subr.mxu0 0.0
  %1355 = vmatpush1.msra.mxu0 0.0
  %1356 = vmatprep.subr.mxu0 0.0
  %1357 = vmatpush1.msra.mxu0 0.0
  %1358 = vmatprep.subr.mxu0 0.0
  %1359 = vmatpush1.msra.mxu0 0.0
  %1360 = vmatprep.subr.mxu0 0.0
  %1361 = vmatpush1.msra.mxu0 0.0
  %1362 = vmatprep.subr.mxu0 0.0
  %1363 = vmatpush1.msra.mxu0 0.0
  %1364 = vmatprep.subr.mxu0 0.0
  %1365 = vmatpush1.msra.mxu0 0.0
  %1366 = vmatprep.subr.mxu0 0.0
  %1367 = vmatpush1.msra.mxu0 0.0
  %1368 = vmatprep.subr.mxu0 0.0
  %1369 = vmatpush1.msra.mxu0 0.0
  %1370 = vmatprep.subr.mxu0 0.0
  %1371 = vmatpush1.msra.mxu0 0.0
  %1372 = vmatprep.subr.mxu0 0.0
  %1373 = vmatpush1.msra.mxu0 0.0
  %1374 = vmatprep.subr.mxu0 %v1340
  %1375 = vmatpush1.msra.mxu0 %v1339
  %1376 = vmatprep.subr.mxu0 %v1338
  %1377 = vmatpush1.msra.mxu0 %v1337
  %1378 = vmatprep.subr.mxu0 0.0
  %1379 = vmatpush2.msra.mxu0 0.0
  %1380 = vmatprep.subr.mxu0 0.0
  %1381 = vmatpush2.msra.mxu0 0.0
  %1382 = vmatprep.subr.mxu0 0.0
  %1383 = vmatpush2.msra.mxu0 0.0
  %1384 = vmatprep.subr.mxu0 0.0
  %1385 = vmatpush2.msra.mxu0 0.0
  %1386 = vmatprep.subr.mxu0 0.0
  %1387 = vmatpush2.msra.mxu0 0.0
  %1388 = vmatprep.subr.mxu0 0.0
  %1389 = vmatpush2.msra.mxu0 0.0
  %1390 = vmatprep.subr.mxu0 0.0
  %1391 = vmatpush2.msra.mxu0 0.0
  %1392 = vmatprep.subr.mxu0 0.0
  %1393 = vmatpush2.msra.mxu0 0.0
  %1394 = vmatprep.subr.mxu0 0.0
  %1395 = vmatpush2.msra.mxu0 0.0
  %1396 = vmatprep.subr.mxu0 0.0
  %1397 = vmatpush2.msra.mxu0 0.0
  %1398 = vmatprep.subr.mxu0 0.0
  %1399 = vmatpush2.msra.mxu0 0.0
  %1400 = vmatprep.subr.mxu0 0.0
  %1401 = vmatpush2.msra.mxu0 0.0
  %1402 = vmatprep.subr.mxu0 0.0
  %1403 = vmatpush2.msra.mxu0 0.0
  %1404 = vmatprep.subr.mxu0 0.0
  %1405 = vmatpush2.msra.mxu0 0.0
  %1406 = vmatprep.subr.mxu0 0.0
  %1407 = vmatpush2.msra.mxu0 0.0
  %1408 = vmatprep.subr.mxu0 0.0
  %1409 = vmatpush2.msra.mxu0 0.0
  %1410 = vmatprep.mubr.f32.mxu0 0.0
  %1411 = vmatmul.mubr.f32.gmra.mxu0 %v1344
  %v1412 = vpop.f32.mrf.mxu0
  %v1413 = vadd.f32 0.0, %v1412
  %v1414 = vpop.f32.mrf.mxu0
  %v1415 = vadd.f32 0.0, %v1414
  %1416 = vdwg.mxu0
  %v1419 = vcombine.low %v1413, %v1415
  %v1421 = vunpack.c.l.s4 1983009808
  %v1422 = vunpack.c.0.s8 %v1421
  %v1423 = vlaneseq
  %v1424 = vshrl.u32 %v1423, 7
  %v1425 = vsub.s32 %v1422, %v1424
  %v1426 = vrot.slane %v1419, %v1425
  %s1428 = scalar_lea.vmem [#allocation2], 44
  %1429 = vst [vmem:[%s1428] sm:$0xf] %v1426
  %s1430 = scalar_lea.vmem %s1, 24
  %v1431 = vld [vmem:[%s1430] sm:$0x3]
  %v1433 = vlaneseq
  %v1434 = vshrl.u32 %v1433, 7
  %v1435 = vsub.s32 0, %v1434
  %v1436 = vrot.slane %v1431, %v1435
  %v1437 = vlaneseq
  %v1438 = vshrl.u32 %v1437, 7
  %v1439 = vsub.s32 1, %v1438
  %v1440 = vrot.slane %v1431, %v1439
  %v1443 = vsub.f32 %v14, %v1436
  %v1444 = vsub.f32 %v14, %v1440
  %v1445 = vsub.f32 %v15, %v1436
  %v1446 = vsub.f32 %v15, %v1440
  %v1447 = vand.u32 2147483647, %v1443
  %v1448 = vand.u32 2147483647, %v1444
  %v1449 = vand.u32 2147483647, %v1445
  %v1450 = vand.u32 2147483647, %v1446
  %v1451 = vsub.f32 1.0, %v1447
  %v1452 = vsub.f32 1.0, %v1448
  %v1453 = vsub.f32 1.0, %v1449
  %v1454 = vsub.f32 1.0, %v1450
  %v1455 = vmax.f32 %v1451, 0.0
  %v1456 = vmax.f32 %v1452, 0.0
  %v1457 = vmax.f32 %v1453, 0.0
  %v1458 = vmax.f32 %v1454, 0.0
  %s1459 = scalar_lea.vmem %s0, 24
  %v1460 = vld [vmem:[%s1459] sm:$0x3]
  %v1462 = vsel %vm45, %v1460, 0
  %1464 = vmatprep.subr.mxu0 0.0
  %1465 = vmatpush1.msra.mxu0 0.0
  %1466 = vmatprep.subr.mxu0 0.0
  %1467 = vmatpush1.msra.mxu0 0.0
  %1468 = vmatprep.subr.mxu0 0.0
  %1469 = vmatpush1.msra.mxu0 0.0
  %1470 = vmatprep.subr.mxu0 0.0
  %1471 = vmatpush1.msra.mxu0 0.0
  %1472 = vmatprep.subr.mxu0 0.0
  %1473 = vmatpush1.msra.mxu0 0.0
  %1474 = vmatprep.subr.mxu0 0.0
  %1475 = vmatpush1.msra.mxu0 0.0
  %1476 = vmatprep.subr.mxu0 0.0
  %1477 = vmatpush1.msra.mxu0 0.0
  %1478 = vmatprep.subr.mxu0 0.0
  %1479 = vmatpush1.msra.mxu0 0.0
  %1480 = vmatprep.subr.mxu0 0.0
  %1481 = vmatpush1.msra.mxu0 0.0
  %1482 = vmatprep.subr.mxu0 0.0
  %1483 = vmatpush1.msra.mxu0 0.0
  %1484 = vmatprep.subr.mxu0 0.0
  %1485 = vmatpush1.msra.mxu0 0.0
  %1486 = vmatprep.subr.mxu0 0.0
  %1487 = vmatpush1.msra.mxu0 0.0
  %1488 = vmatprep.subr.mxu0 0.0
  %1489 = vmatpush1.msra.mxu0 0.0
  %1490 = vmatprep.subr.mxu0 0.0
  %1491 = vmatpush1.msra.mxu0 0.0
  %1492 = vmatprep.subr.mxu0 %v1458
  %1493 = vmatpush1.msra.mxu0 %v1457
  %1494 = vmatprep.subr.mxu0 %v1456
  %1495 = vmatpush1.msra.mxu0 %v1455
  %1496 = vmatprep.subr.mxu0 0.0
  %1497 = vmatpush2.msra.mxu0 0.0
  %1498 = vmatprep.subr.mxu0 0.0
  %1499 = vmatpush2.msra.mxu0 0.0
  %1500 = vmatprep.subr.mxu0 0.0
  %1501 = vmatpush2.msra.mxu0 0.0
  %1502 = vmatprep.subr.mxu0 0.0
  %1503 = vmatpush2.msra.mxu0 0.0
  %1504 = vmatprep.subr.mxu0 0.0
  %1505 = vmatpush2.msra.mxu0 0.0
  %1506 = vmatprep.subr.mxu0 0.0
  %1507 = vmatpush2.msra.mxu0 0.0
  %1508 = vmatprep.subr.mxu0 0.0
  %1509 = vmatpush2.msra.mxu0 0.0
  %1510 = vmatprep.subr.mxu0 0.0
  %1511 = vmatpush2.msra.mxu0 0.0
  %1512 = vmatprep.subr.mxu0 0.0
  %1513 = vmatpush2.msra.mxu0 0.0
  %1514 = vmatprep.subr.mxu0 0.0
  %1515 = vmatpush2.msra.mxu0 0.0
  %1516 = vmatprep.subr.mxu0 0.0
  %1517 = vmatpush2.msra.mxu0 0.0
  %1518 = vmatprep.subr.mxu0 0.0
  %1519 = vmatpush2.msra.mxu0 0.0
  %1520 = vmatprep.subr.mxu0 0.0
  %1521 = vmatpush2.msra.mxu0 0.0
  %1522 = vmatprep.subr.mxu0 0.0
  %1523 = vmatpush2.msra.mxu0 0.0
  %1524 = vmatprep.subr.mxu0 0.0
  %1525 = vmatpush2.msra.mxu0 0.0
  %1526 = vmatprep.subr.mxu0 0.0
  %1527 = vmatpush2.msra.mxu0 0.0
  %1528 = vmatprep.mubr.f32.mxu0 0.0
  %1529 = vmatmul.mubr.f32.gmra.mxu0 %v1462
  %v1530 = vpop.f32.mrf.mxu0
  %v1531 = vadd.f32 0.0, %v1530
  %v1532 = vpop.f32.mrf.mxu0
  %v1533 = vadd.f32 0.0, %v1532
  %1534 = vdwg.mxu0
  %v1537 = vcombine.low %v1531, %v1533
  %v1539 = vunpack.c.l.s4 1983009808
  %v1540 = vunpack.c.0.s8 %v1539
  %v1541 = vlaneseq
  %v1542 = vshrl.u32 %v1541, 7
  %v1543 = vsub.s32 %v1540, %v1542
  %v1544 = vrot.slane %v1537, %v1543
  %s1546 = scalar_lea.vmem [#allocation2], 48
  %1547 = vst [vmem:[%s1546] sm:$0xf] %v1544
  %s1548 = scalar_lea.vmem %s1, 26
  %v1549 = vld [vmem:[%s1548] sm:$0x3]
  %v1551 = vlaneseq
  %v1552 = vshrl.u32 %v1551, 7
  %v1553 = vsub.s32 0, %v1552
  %v1554 = vrot.slane %v1549, %v1553
  %v1555 = vlaneseq
  %v1556 = vshrl.u32 %v1555, 7
  %v1557 = vsub.s32 1, %v1556
  %v1558 = vrot.slane %v1549, %v1557
  %v1561 = vsub.f32 %v14, %v1554
  %v1562 = vsub.f32 %v14, %v1558
  %v1563 = vsub.f32 %v15, %v1554
  %v1564 = vsub.f32 %v15, %v1558
  %v1565 = vand.u32 2147483647, %v1561
  %v1566 = vand.u32 2147483647, %v1562
  %v1567 = vand.u32 2147483647, %v1563
  %v1568 = vand.u32 2147483647, %v1564
  %v1569 = vsub.f32 1.0, %v1565
  %v1570 = vsub.f32 1.0, %v1566
  %v1571 = vsub.f32 1.0, %v1567
  %v1572 = vsub.f32 1.0, %v1568
  %v1573 = vmax.f32 %v1569, 0.0
  %v1574 = vmax.f32 %v1570, 0.0
  %v1575 = vmax.f32 %v1571, 0.0
  %v1576 = vmax.f32 %v1572, 0.0
  %s1577 = scalar_lea.vmem %s0, 26
  %v1578 = vld [vmem:[%s1577] sm:$0x3]
  %v1580 = vsel %vm45, %v1578, 0
  %1582 = vmatprep.subr.mxu0 0.0
  %1583 = vmatpush1.msra.mxu0 0.0
  %1584 = vmatprep.subr.mxu0 0.0
  %1585 = vmatpush1.msra.mxu0 0.0
  %1586 = vmatprep.subr.mxu0 0.0
  %1587 = vmatpush1.msra.mxu0 0.0
  %1588 = vmatprep.subr.mxu0 0.0
  %1589 = vmatpush1.msra.mxu0 0.0
  %1590 = vmatprep.subr.mxu0 0.0
  %1591 = vmatpush1.msra.mxu0 0.0
  %1592 = vmatprep.subr.mxu0 0.0
  %1593 = vmatpush1.msra.mxu0 0.0
  %1594 = vmatprep.subr.mxu0 0.0
  %1595 = vmatpush1.msra.mxu0 0.0
  %1596 = vmatprep.subr.mxu0 0.0
  %1597 = vmatpush1.msra.mxu0 0.0
  %1598 = vmatprep.subr.mxu0 0.0
  %1599 = vmatpush1.msra.mxu0 0.0
  %1600 = vmatprep.subr.mxu0 0.0
  %1601 = vmatpush1.msra.mxu0 0.0
  %1602 = vmatprep.subr.mxu0 0.0
  %1603 = vmatpush1.msra.mxu0 0.0
  %1604 = vmatprep.subr.mxu0 0.0
  %1605 = vmatpush1.msra.mxu0 0.0
  %1606 = vmatprep.subr.mxu0 0.0
  %1607 = vmatpush1.msra.mxu0 0.0
  %1608 = vmatprep.subr.mxu0 0.0
  %1609 = vmatpush1.msra.mxu0 0.0
  %1610 = vmatprep.subr.mxu0 %v1576
  %1611 = vmatpush1.msra.mxu0 %v1575
  %1612 = vmatprep.subr.mxu0 %v1574
  %1613 = vmatpush1.msra.mxu0 %v1573
  %1614 = vmatprep.subr.mxu0 0.0
  %1615 = vmatpush2.msra.mxu0 0.0
  %1616 = vmatprep.subr.mxu0 0.0
  %1617 = vmatpush2.msra.mxu0 0.0
  %1618 = vmatprep.subr.mxu0 0.0
  %1619 = vmatpush2.msra.mxu0 0.0
  %1620 = vmatprep.subr.mxu0 0.0
  %1621 = vmatpush2.msra.mxu0 0.0
  %1622 = vmatprep.subr.mxu0 0.0
  %1623 = vmatpush2.msra.mxu0 0.0
  %1624 = vmatprep.subr.mxu0 0.0
  %1625 = vmatpush2.msra.mxu0 0.0
  %1626 = vmatprep.subr.mxu0 0.0
  %1627 = vmatpush2.msra.mxu0 0.0
  %1628 = vmatprep.subr.mxu0 0.0
  %1629 = vmatpush2.msra.mxu0 0.0
  %1630 = vmatprep.subr.mxu0 0.0
  %1631 = vmatpush2.msra.mxu0 0.0
  %1632 = vmatprep.subr.mxu0 0.0
  %1633 = vmatpush2.msra.mxu0 0.0
  %1634 = vmatprep.subr.mxu0 0.0
  %1635 = vmatpush2.msra.mxu0 0.0
  %1636 = vmatprep.subr.mxu0 0.0
  %1637 = vmatpush2.msra.mxu0 0.0
  %1638 = vmatprep.subr.mxu0 0.0
  %1639 = vmatpush2.msra.mxu0 0.0
  %1640 = vmatprep.subr.mxu0 0.0
  %1641 = vmatpush2.msra.mxu0 0.0
  %1642 = vmatprep.subr.mxu0 0.0
  %1643 = vmatpush2.msra.mxu0 0.0
  %1644 = vmatprep.subr.mxu0 0.0
  %1645 = vmatpush2.msra.mxu0 0.0
  %1646 = vmatprep.mubr.f32.mxu0 0.0
  %1647 = vmatmul.mubr.f32.gmra.mxu0 %v1580
  %v1648 = vpop.f32.mrf.mxu0
  %v1649 = vadd.f32 0.0, %v1648
  %v1650 = vpop.f32.mrf.mxu0
  %v1651 = vadd.f32 0.0, %v1650
  %1652 = vdwg.mxu0
  %v1655 = vcombine.low %v1649, %v1651
  %v1657 = vunpack.c.l.s4 1983009808
  %v1658 = vunpack.c.0.s8 %v1657
  %v1659 = vlaneseq
  %v1660 = vshrl.u32 %v1659, 7
  %v1661 = vsub.s32 %v1658, %v1660
  %v1662 = vrot.slane %v1655, %v1661
  %s1664 = scalar_lea.vmem [#allocation2], 52
  %1665 = vst [vmem:[%s1664] sm:$0xf] %v1662
  %s1666 = scalar_lea.vmem %s1, 28
  %v1667 = vld [vmem:[%s1666] sm:$0x3]
  %v1669 = vlaneseq
  %v1670 = vshrl.u32 %v1669, 7
  %v1671 = vsub.s32 0, %v1670
  %v1672 = vrot.slane %v1667, %v1671
  %v1673 = vlaneseq
  %v1674 = vshrl.u32 %v1673, 7
  %v1675 = vsub.s32 1, %v1674
  %v1676 = vrot.slane %v1667, %v1675
  %v1679 = vsub.f32 %v14, %v1672
  %v1680 = vsub.f32 %v14, %v1676
  %v1681 = vsub.f32 %v15, %v1672
  %v1682 = vsub.f32 %v15, %v1676
  %v1683 = vand.u32 2147483647, %v1679
  %v1684 = vand.u32 2147483647, %v1680
  %v1685 = vand.u32 2147483647, %v1681
  %v1686 = vand.u32 2147483647, %v1682
  %v1687 = vsub.f32 1.0, %v1683
  %v1688 = vsub.f32 1.0, %v1684
  %v1689 = vsub.f32 1.0, %v1685
  %v1690 = vsub.f32 1.0, %v1686
  %v1691 = vmax.f32 %v1687, 0.0
  %v1692 = vmax.f32 %v1688, 0.0
  %v1693 = vmax.f32 %v1689, 0.0
  %v1694 = vmax.f32 %v1690, 0.0
  %s1695 = scalar_lea.vmem %s0, 28
  %v1696 = vld [vmem:[%s1695] sm:$0x3]
  %v1698 = vsel %vm45, %v1696, 0
  %1700 = vmatprep.subr.mxu0 0.0
  %1701 = vmatpush1.msra.mxu0 0.0
  %1702 = vmatprep.subr.mxu0 0.0
  %1703 = vmatpush1.msra.mxu0 0.0
  %1704 = vmatprep.subr.mxu0 0.0
  %1705 = vmatpush1.msra.mxu0 0.0
  %1706 = vmatprep.subr.mxu0 0.0
  %1707 = vmatpush1.msra.mxu0 0.0
  %1708 = vmatprep.subr.mxu0 0.0
  %1709 = vmatpush1.msra.mxu0 0.0
  %1710 = vmatprep.subr.mxu0 0.0
  %1711 = vmatpush1.msra.mxu0 0.0
  %1712 = vmatprep.subr.mxu0 0.0
  %1713 = vmatpush1.msra.mxu0 0.0
  %1714 = vmatprep.subr.mxu0 0.0
  %1715 = vmatpush1.msra.mxu0 0.0
  %1716 = vmatprep.subr.mxu0 0.0
  %1717 = vmatpush1.msra.mxu0 0.0
  %1718 = vmatprep.subr.mxu0 0.0
  %1719 = vmatpush1.msra.mxu0 0.0
  %1720 = vmatprep.subr.mxu0 0.0
  %1721 = vmatpush1.msra.mxu0 0.0
  %1722 = vmatprep.subr.mxu0 0.0
  %1723 = vmatpush1.msra.mxu0 0.0
  %1724 = vmatprep.subr.mxu0 0.0
  %1725 = vmatpush1.msra.mxu0 0.0
  %1726 = vmatprep.subr.mxu0 0.0
  %1727 = vmatpush1.msra.mxu0 0.0
  %1728 = vmatprep.subr.mxu0 %v1694
  %1729 = vmatpush1.msra.mxu0 %v1693
  %1730 = vmatprep.subr.mxu0 %v1692
  %1731 = vmatpush1.msra.mxu0 %v1691
  %1732 = vmatprep.subr.mxu0 0.0
  %1733 = vmatpush2.msra.mxu0 0.0
  %1734 = vmatprep.subr.mxu0 0.0
  %1735 = vmatpush2.msra.mxu0 0.0
  %1736 = vmatprep.subr.mxu0 0.0
  %1737 = vmatpush2.msra.mxu0 0.0
  %1738 = vmatprep.subr.mxu0 0.0
  %1739 = vmatpush2.msra.mxu0 0.0
  %1740 = vmatprep.subr.mxu0 0.0
  %1741 = vmatpush2.msra.mxu0 0.0
  %1742 = vmatprep.subr.mxu0 0.0
  %1743 = vmatpush2.msra.mxu0 0.0
  %1744 = vmatprep.subr.mxu0 0.0
  %1745 = vmatpush2.msra.mxu0 0.0
  %1746 = vmatprep.subr.mxu0 0.0
  %1747 = vmatpush2.msra.mxu0 0.0
  %1748 = vmatprep.subr.mxu0 0.0
  %1749 = vmatpush2.msra.mxu0 0.0
  %1750 = vmatprep.subr.mxu0 0.0
  %1751 = vmatpush2.msra.mxu0 0.0
  %1752 = vmatprep.subr.mxu0 0.0
  %1753 = vmatpush2.msra.mxu0 0.0
  %1754 = vmatprep.subr.mxu0 0.0
  %1755 = vmatpush2.msra.mxu0 0.0
  %1756 = vmatprep.subr.mxu0 0.0
  %1757 = vmatpush2.msra.mxu0 0.0
  %1758 = vmatprep.subr.mxu0 0.0
  %1759 = vmatpush2.msra.mxu0 0.0
  %1760 = vmatprep.subr.mxu0 0.0
  %1761 = vmatpush2.msra.mxu0 0.0
  %1762 = vmatprep.subr.mxu0 0.0
  %1763 = vmatpush2.msra.mxu0 0.0
  %1764 = vmatprep.mubr.f32.mxu0 0.0
  %1765 = vmatmul.mubr.f32.gmra.mxu0 %v1698
  %v1766 = vpop.f32.mrf.mxu0
  %v1767 = vadd.f32 0.0, %v1766
  %v1768 = vpop.f32.mrf.mxu0
  %v1769 = vadd.f32 0.0, %v1768
  %1770 = vdwg.mxu0
  %v1773 = vcombine.low %v1767, %v1769
  %v1775 = vunpack.c.l.s4 1983009808
  %v1776 = vunpack.c.0.s8 %v1775
  %v1777 = vlaneseq
  %v1778 = vshrl.u32 %v1777, 7
  %v1779 = vsub.s32 %v1776, %v1778
  %v1780 = vrot.slane %v1773, %v1779
  %s1782 = scalar_lea.vmem [#allocation2], 56
  %1783 = vst [vmem:[%s1782] sm:$0xf] %v1780
  %s1784 = scalar_lea.vmem %s1, 30
  %v1785 = vld [vmem:[%s1784] sm:$0x3]
  %v1787 = vlaneseq
  %v1788 = vshrl.u32 %v1787, 7
  %v1789 = vsub.s32 0, %v1788
  %v1790 = vrot.slane %v1785, %v1789
  %v1791 = vlaneseq
  %v1792 = vshrl.u32 %v1791, 7
  %v1793 = vsub.s32 1, %v1792
  %v1794 = vrot.slane %v1785, %v1793
  %v1797 = vsub.f32 %v14, %v1790
  %v1798 = vsub.f32 %v14, %v1794
  %v1799 = vsub.f32 %v15, %v1790
  %v1800 = vsub.f32 %v15, %v1794
  %v1801 = vand.u32 2147483647, %v1797
  %v1802 = vand.u32 2147483647, %v1798
  %v1803 = vand.u32 2147483647, %v1799
  %v1804 = vand.u32 2147483647, %v1800
  %v1805 = vsub.f32 1.0, %v1801
  %v1806 = vsub.f32 1.0, %v1802
  %v1807 = vsub.f32 1.0, %v1803
  %v1808 = vsub.f32 1.0, %v1804
  %v1809 = vmax.f32 %v1805, 0.0
  %v1810 = vmax.f32 %v1806, 0.0
  %v1811 = vmax.f32 %v1807, 0.0
  %v1812 = vmax.f32 %v1808, 0.0
  %s1813 = scalar_lea.vmem %s0, 30
  %v1814 = vld [vmem:[%s1813] sm:$0x3]
  %v1816 = vsel %vm45, %v1814, 0
  %1818 = vmatprep.subr.mxu0 0.0
  %1819 = vmatpush1.msra.mxu0 0.0
  %1820 = vmatprep.subr.mxu0 0.0
  %1821 = vmatpush1.msra.mxu0 0.0
  %1822 = vmatprep.subr.mxu0 0.0
  %1823 = vmatpush1.msra.mxu0 0.0
  %1824 = vmatprep.subr.mxu0 0.0
  %1825 = vmatpush1.msra.mxu0 0.0
  %1826 = vmatprep.subr.mxu0 0.0
  %1827 = vmatpush1.msra.mxu0 0.0
  %1828 = vmatprep.subr.mxu0 0.0
  %1829 = vmatpush1.msra.mxu0 0.0
  %1830 = vmatprep.subr.mxu0 0.0
  %1831 = vmatpush1.msra.mxu0 0.0
  %1832 = vmatprep.subr.mxu0 0.0
  %1833 = vmatpush1.msra.mxu0 0.0
  %1834 = vmatprep.subr.mxu0 0.0
  %1835 = vmatpush1.msra.mxu0 0.0
  %1836 = vmatprep.subr.mxu0 0.0
  %1837 = vmatpush1.msra.mxu0 0.0
  %1838 = vmatprep.subr.mxu0 0.0
  %1839 = vmatpush1.msra.mxu0 0.0
  %1840 = vmatprep.subr.mxu0 0.0
  %1841 = vmatpush1.msra.mxu0 0.0
  %1842 = vmatprep.subr.mxu0 0.0
  %1843 = vmatpush1.msra.mxu0 0.0
  %1844 = vmatprep.subr.mxu0 0.0
  %1845 = vmatpush1.msra.mxu0 0.0
  %1846 = vmatprep.subr.mxu0 %v1812
  %1847 = vmatpush1.msra.mxu0 %v1811
  %1848 = vmatprep.subr.mxu0 %v1810
  %1849 = vmatpush1.msra.mxu0 %v1809
  %1850 = vmatprep.subr.mxu0 0.0
  %1851 = vmatpush2.msra.mxu0 0.0
  %1852 = vmatprep.subr.mxu0 0.0
  %1853 = vmatpush2.msra.mxu0 0.0
  %1854 = vmatprep.subr.mxu0 0.0
  %1855 = vmatpush2.msra.mxu0 0.0
  %1856 = vmatprep.subr.mxu0 0.0
  %1857 = vmatpush2.msra.mxu0 0.0
  %1858 = vmatprep.subr.mxu0 0.0
  %1859 = vmatpush2.msra.mxu0 0.0
  %1860 = vmatprep.subr.mxu0 0.0
  %1861 = vmatpush2.msra.mxu0 0.0
  %1862 = vmatprep.subr.mxu0 0.0
  %1863 = vmatpush2.msra.mxu0 0.0
  %1864 = vmatprep.subr.mxu0 0.0
  %1865 = vmatpush2.msra.mxu0 0.0
  %1866 = vmatprep.subr.mxu0 0.0
  %1867 = vmatpush2.msra.mxu0 0.0
  %1868 = vmatprep.subr.mxu0 0.0
  %1869 = vmatpush2.msra.mxu0 0.0
  %1870 = vmatprep.subr.mxu0 0.0
  %1871 = vmatpush2.msra.mxu0 0.0
  %1872 = vmatprep.subr.mxu0 0.0
  %1873 = vmatpush2.msra.mxu0 0.0
  %1874 = vmatprep.subr.mxu0 0.0
  %1875 = vmatpush2.msra.mxu0 0.0
  %1876 = vmatprep.subr.mxu0 0.0
  %1877 = vmatpush2.msra.mxu0 0.0
  %1878 = vmatprep.subr.mxu0 0.0
  %1879 = vmatpush2.msra.mxu0 0.0
  %1880 = vmatprep.subr.mxu0 0.0
  %1881 = vmatpush2.msra.mxu0 0.0
  %1882 = vmatprep.mubr.f32.mxu0 0.0
  %1883 = vmatmul.mubr.f32.gmra.mxu0 %v1816
  %v1884 = vpop.f32.mrf.mxu0
  %v1885 = vadd.f32 0.0, %v1884
  %v1886 = vpop.f32.mrf.mxu0
  %v1887 = vadd.f32 0.0, %v1886
  %1888 = vdwg.mxu0
  %v1891 = vcombine.low %v1885, %v1887
  %v1893 = vunpack.c.l.s4 1983009808
  %v1894 = vunpack.c.0.s8 %v1893
  %v1895 = vlaneseq
  %v1896 = vshrl.u32 %v1895, 7
  %v1897 = vsub.s32 %v1894, %v1896
  %v1898 = vrot.slane %v1891, %v1897
  %s1900 = scalar_lea.vmem [#allocation2], 60
  %1901 = vst [vmem:[%s1900] sm:$0xf] %v1898
  %v1902 = vld [vmem:[#allocation2] sm:$0xf]
  %v1903 = vld [vmem:[%s248] sm:$0xf]
  %v1904 = vmin.f32 %v1902, %v1903
  %v1905 = vmax.f32 %v1902, %v1903
  %1906 = vst [vmem:[#allocation2] sm:$0xf] %v1904
  %1907 = vst [vmem:[%s248] sm:$0xf] %v1905
  %v1908 = vld [vmem:[%s366] sm:$0xf]
  %v1909 = vld [vmem:[%s484] sm:$0xf]
  %v1910 = vmin.f32 %v1908, %v1909
  %v1911 = vmax.f32 %v1908, %v1909
  %1912 = vst [vmem:[%s366] sm:$0xf] %v1911
  %1913 = vst [vmem:[%s484] sm:$0xf] %v1910
  %v1914 = vld [vmem:[%s602] sm:$0xf]
  %v1915 = vld [vmem:[%s720] sm:$0xf]
  %v1916 = vmin.f32 %v1914, %v1915
  %v1917 = vmax.f32 %v1914, %v1915
  %1918 = vst [vmem:[%s602] sm:$0xf] %v1916
  %1919 = vst [vmem:[%s720] sm:$0xf] %v1917
  %v1920 = vld [vmem:[%s838] sm:$0xf]
  %v1921 = vld [vmem:[%s956] sm:$0xf]
  %v1922 = vmin.f32 %v1920, %v1921
  %v1923 = vmax.f32 %v1920, %v1921
  %1924 = vst [vmem:[%s838] sm:$0xf] %v1923
  %1925 = vst [vmem:[%s956] sm:$0xf] %v1922
  %v1926 = vld [vmem:[%s1074] sm:$0xf]
  %v1927 = vld [vmem:[%s1192] sm:$0xf]
  %v1928 = vmin.f32 %v1926, %v1927
  %v1929 = vmax.f32 %v1926, %v1927
  %1930 = vst [vmem:[%s1074] sm:$0xf] %v1928
  %1931 = vst [vmem:[%s1192] sm:$0xf] %v1929
  %v1932 = vld [vmem:[%s1310] sm:$0xf]
  %v1933 = vld [vmem:[%s1428] sm:$0xf]
  %v1934 = vmin.f32 %v1932, %v1933
  %v1935 = vmax.f32 %v1932, %v1933
  %1936 = vst [vmem:[%s1310] sm:$0xf] %v1935
  %1937 = vst [vmem:[%s1428] sm:$0xf] %v1934
  %v1938 = vld [vmem:[%s1546] sm:$0xf]
  %v1939 = vld [vmem:[%s1664] sm:$0xf]
  %v1940 = vmin.f32 %v1938, %v1939
  %v1941 = vmax.f32 %v1938, %v1939
  %1942 = vst [vmem:[%s1546] sm:$0xf] %v1940
  %1943 = vst [vmem:[%s1664] sm:$0xf] %v1941
  %v1944 = vld [vmem:[%s1782] sm:$0xf]
  %v1945 = vld [vmem:[%s1900] sm:$0xf]
  %v1946 = vmin.f32 %v1944, %v1945
  %v1947 = vmax.f32 %v1944, %v1945
  %1948 = vst [vmem:[%s1782] sm:$0xf] %v1947
  %1949 = vst [vmem:[%s1900] sm:$0xf] %v1946
  %v1950 = vld [vmem:[#allocation2] sm:$0xf]
  %v1951 = vld [vmem:[%s366] sm:$0xf]
  %v1952 = vmin.f32 %v1950, %v1951
  %v1953 = vmax.f32 %v1950, %v1951
  %1954 = vst [vmem:[#allocation2] sm:$0xf] %v1952
  %1955 = vst [vmem:[%s366] sm:$0xf] %v1953
  %v1956 = vld [vmem:[%s248] sm:$0xf]
  %v1957 = vld [vmem:[%s484] sm:$0xf]
  %v1958 = vmin.f32 %v1956, %v1957
  %v1959 = vmax.f32 %v1956, %v1957
  %1960 = vst [vmem:[%s248] sm:$0xf] %v1958
  %1961 = vst [vmem:[%s484] sm:$0xf] %v1959
  %v1962 = vld [vmem:[%s602] sm:$0xf]
  %v1963 = vld [vmem:[%s838] sm:$0xf]
  %v1964 = vmin.f32 %v1962, %v1963
  %v1965 = vmax.f32 %v1962, %v1963
  %1966 = vst [vmem:[%s602] sm:$0xf] %v1965
  %1967 = vst [vmem:[%s838] sm:$0xf] %v1964
  %v1968 = vld [vmem:[%s720] sm:$0xf]
  %v1969 = vld [vmem:[%s956] sm:$0xf]
  %v1970 = vmin.f32 %v1968, %v1969
  %v1971 = vmax.f32 %v1968, %v1969
  %1972 = vst [vmem:[%s720] sm:$0xf] %v1971
  %1973 = vst [vmem:[%s956] sm:$0xf] %v1970
  %v1974 = vld [vmem:[%s1074] sm:$0xf]
  %v1975 = vld [vmem:[%s1310] sm:$0xf]
  %v1976 = vmin.f32 %v1974, %v1975
  %v1977 = vmax.f32 %v1974, %v1975
  %1978 = vst [vmem:[%s1074] sm:$0xf] %v1976
  %1979 = vst [vmem:[%s1310] sm:$0xf] %v1977
  %v1980 = vld [vmem:[%s1192] sm:$0xf]
  %v1981 = vld [vmem:[%s1428] sm:$0xf]
  %v1982 = vmin.f32 %v1980, %v1981
  %v1983 = vmax.f32 %v1980, %v1981
  %1984 = vst [vmem:[%s1192] sm:$0xf] %v1982
  %1985 = vst [vmem:[%s1428] sm:$0xf] %v1983
  %v1986 = vld [vmem:[%s1546] sm:$0xf]
  %v1987 = vld [vmem:[%s1782] sm:$0xf]
  %v1988 = vmin.f32 %v1986, %v1987
  %v1989 = vmax.f32 %v1986, %v1987
  %1990 = vst [vmem:[%s1546] sm:$0xf] %v1989
  %1991 = vst [vmem:[%s1782] sm:$0xf] %v1988
  %v1992 = vld [vmem:[%s1664] sm:$0xf]
  %v1993 = vld [vmem:[%s1900] sm:$0xf]
  %v1994 = vmin.f32 %v1992, %v1993
  %v1995 = vmax.f32 %v1992, %v1993
  %1996 = vst [vmem:[%s1664] sm:$0xf] %v1995
  %1997 = vst [vmem:[%s1900] sm:$0xf] %v1994
  %v1998 = vld [vmem:[#allocation2] sm:$0xf]
  %v1999 = vld [vmem:[%s248] sm:$0xf]
  %v2000 = vmin.f32 %v1998, %v1999
  %v2001 = vmax.f32 %v1998, %v1999
  %2002 = vst [vmem:[#allocation2] sm:$0xf] %v2000
  %2003 = vst [vmem:[%s248] sm:$0xf] %v2001
  %v2004 = vld [vmem:[%s366] sm:$0xf]
  %v2005 = vld [vmem:[%s484] sm:$0xf]
  %v2006 = vmin.f32 %v2004, %v2005
  %v2007 = vmax.f32 %v2004, %v2005
  %2008 = vst [vmem:[%s366] sm:$0xf] %v2006
  %2009 = vst [vmem:[%s484] sm:$0xf] %v2007
  %v2010 = vld [vmem:[%s602] sm:$0xf]
  %v2011 = vld [vmem:[%s720] sm:$0xf]
  %v2012 = vmin.f32 %v2010, %v2011
  %v2013 = vmax.f32 %v2010, %v2011
  %2014 = vst [vmem:[%s602] sm:$0xf] %v2013
  %2015 = vst [vmem:[%s720] sm:$0xf] %v2012
  %v2016 = vld [vmem:[%s838] sm:$0xf]
  %v2017 = vld [vmem:[%s956] sm:$0xf]
  %v2018 = vmin.f32 %v2016, %v2017
  %v2019 = vmax.f32 %v2016, %v2017
  %2020 = vst [vmem:[%s838] sm:$0xf] %v2019
  %2021 = vst [vmem:[%s956] sm:$0xf] %v2018
  %v2022 = vld [vmem:[%s1074] sm:$0xf]
  %v2023 = vld [vmem:[%s1192] sm:$0xf]
  %v2024 = vmin.f32 %v2022, %v2023
  %v2025 = vmax.f32 %v2022, %v2023
  %2026 = vst [vmem:[%s1074] sm:$0xf] %v2024
  %2027 = vst [vmem:[%s1192] sm:$0xf] %v2025
  %v2028 = vld [vmem:[%s1310] sm:$0xf]
  %v2029 = vld [vmem:[%s1428] sm:$0xf]
  %v2030 = vmin.f32 %v2028, %v2029
  %v2031 = vmax.f32 %v2028, %v2029
  %2032 = vst [vmem:[%s1310] sm:$0xf] %v2030
  %2033 = vst [vmem:[%s1428] sm:$0xf] %v2031
  %v2034 = vld [vmem:[%s1546] sm:$0xf]
  %v2035 = vld [vmem:[%s1664] sm:$0xf]
  %v2036 = vmin.f32 %v2034, %v2035
  %v2037 = vmax.f32 %v2034, %v2035
  %2038 = vst [vmem:[%s1546] sm:$0xf] %v2037
  %2039 = vst [vmem:[%s1664] sm:$0xf] %v2036
  %v2040 = vld [vmem:[%s1782] sm:$0xf]
  %v2041 = vld [vmem:[%s1900] sm:$0xf]
  %v2042 = vmin.f32 %v2040, %v2041
  %v2043 = vmax.f32 %v2040, %v2041
  %2044 = vst [vmem:[%s1782] sm:$0xf] %v2043
  %2045 = vst [vmem:[%s1900] sm:$0xf] %v2042
  %v2046 = vld [vmem:[#allocation2] sm:$0xf]
  %v2047 = vld [vmem:[%s602] sm:$0xf]
  %v2048 = vmin.f32 %v2046, %v2047
  %v2049 = vmax.f32 %v2046, %v2047
  %2050 = vst [vmem:[#allocation2] sm:$0xf] %v2048
  %2051 = vst [vmem:[%s602] sm:$0xf] %v2049
  %v2052 = vld [vmem:[%s248] sm:$0xf]
  %v2053 = vld [vmem:[%s720] sm:$0xf]
  %v2054 = vmin.f32 %v2052, %v2053
  %v2055 = vmax.f32 %v2052, %v2053
  %2056 = vst [vmem:[%s248] sm:$0xf] %v2054
  %2057 = vst [vmem:[%s720] sm:$0xf] %v2055
  %v2058 = vld [vmem:[%s366] sm:$0xf]
  %v2059 = vld [vmem:[%s838] sm:$0xf]
  %v2060 = vmin.f32 %v2058, %v2059
  %v2061 = vmax.f32 %v2058, %v2059
  %2062 = vst [vmem:[%s366] sm:$0xf] %v2060
  %2063 = vst [vmem:[%s838] sm:$0xf] %v2061
  %v2064 = vld [vmem:[%s484] sm:$0xf]
  %v2065 = vld [vmem:[%s956] sm:$0xf]
  %v2066 = vmin.f32 %v2064, %v2065
  %v2067 = vmax.f32 %v2064, %v2065
  %2068 = vst [vmem:[%s484] sm:$0xf] %v2066
  %2069 = vst [vmem:[%s956] sm:$0xf] %v2067
  %v2070 = vld [vmem:[%s1074] sm:$0xf]
  %v2071 = vld [vmem:[%s1546] sm:$0xf]
  %v2072 = vmin.f32 %v2070, %v2071
  %v2073 = vmax.f32 %v2070, %v2071
  %2074 = vst [vmem:[%s1074] sm:$0xf] %v2073
  %2075 = vst [vmem:[%s1546] sm:$0xf] %v2072
  %v2076 = vld [vmem:[%s1192] sm:$0xf]
  %v2077 = vld [vmem:[%s1664] sm:$0xf]
  %v2078 = vmin.f32 %v2076, %v2077
  %v2079 = vmax.f32 %v2076, %v2077
  %2080 = vst [vmem:[%s1192] sm:$0xf] %v2079
  %2081 = vst [vmem:[%s1664] sm:$0xf] %v2078
  %v2082 = vld [vmem:[%s1310] sm:$0xf]
  %v2083 = vld [vmem:[%s1782] sm:$0xf]
  %v2084 = vmin.f32 %v2082, %v2083
  %v2085 = vmax.f32 %v2082, %v2083
  %2086 = vst [vmem:[%s1310] sm:$0xf] %v2085
  %2087 = vst [vmem:[%s1782] sm:$0xf] %v2084
  %v2088 = vld [vmem:[%s1428] sm:$0xf]
  %v2089 = vld [vmem:[%s1900] sm:$0xf]
  %v2090 = vmin.f32 %v2088, %v2089
  %v2091 = vmax.f32 %v2088, %v2089
  %2092 = vst [vmem:[%s1428] sm:$0xf] %v2091
  %2093 = vst [vmem:[%s1900] sm:$0xf] %v2090
  %v2094 = vld [vmem:[#allocation2] sm:$0xf]
  %v2095 = vld [vmem:[%s366] sm:$0xf]
  %v2096 = vmin.f32 %v2094, %v2095
  %v2097 = vmax.f32 %v2094, %v2095
  %2098 = vst [vmem:[#allocation2] sm:$0xf] %v2096
  %2099 = vst [vmem:[%s366] sm:$0xf] %v2097
  %v2100 = vld [vmem:[%s248] sm:$0xf]
  %v2101 = vld [vmem:[%s484] sm:$0xf]
  %v2102 = vmin.f32 %v2100, %v2101
  %v2103 = vmax.f32 %v2100, %v2101
  %2104 = vst [vmem:[%s248] sm:$0xf] %v2102
  %2105 = vst [vmem:[%s484] sm:$0xf] %v2103
  %v2106 = vld [vmem:[%s602] sm:$0xf]
  %v2107 = vld [vmem:[%s838] sm:$0xf]
  %v2108 = vmin.f32 %v2106, %v2107
  %v2109 = vmax.f32 %v2106, %v2107
  %2110 = vst [vmem:[%s602] sm:$0xf] %v2108
  %2111 = vst [vmem:[%s838] sm:$0xf] %v2109
  %v2112 = vld [vmem:[%s720] sm:$0xf]
  %v2113 = vld [vmem:[%s956] sm:$0xf]
  %v2114 = vmin.f32 %v2112, %v2113
  %v2115 = vmax.f32 %v2112, %v2113
  %2116 = vst [vmem:[%s720] sm:$0xf] %v2114
  %2117 = vst [vmem:[%s956] sm:$0xf] %v2115
  %v2118 = vld [vmem:[%s1074] sm:$0xf]
  %v2119 = vld [vmem:[%s1310] sm:$0xf]
  %v2120 = vmin.f32 %v2118, %v2119
  %v2121 = vmax.f32 %v2118, %v2119
  %2122 = vst [vmem:[%s1074] sm:$0xf] %v2121
  %2123 = vst [vmem:[%s1310] sm:$0xf] %v2120
  %v2124 = vld [vmem:[%s1192] sm:$0xf]
  %v2125 = vld [vmem:[%s1428] sm:$0xf]
  %v2126 = vmin.f32 %v2124, %v2125
  %v2127 = vmax.f32 %v2124, %v2125
  %2128 = vst [vmem:[%s1192] sm:$0xf] %v2127
  %2129 = vst [vmem:[%s1428] sm:$0xf] %v2126
  %v2130 = vld [vmem:[%s1546] sm:$0xf]
  %v2131 = vld [vmem:[%s1782] sm:$0xf]
  %v2132 = vmin.f32 %v2130, %v2131
  %v2133 = vmax.f32 %v2130, %v2131
  %2134 = vst [vmem:[%s1546] sm:$0xf] %v2133
  %2135 = vst [vmem:[%s1782] sm:$0xf] %v2132
  %v2136 = vld [vmem:[%s1664] sm:$0xf]
  %v2137 = vld [vmem:[%s1900] sm:$0xf]
  %v2138 = vmin.f32 %v2136, %v2137
  %v2139 = vmax.f32 %v2136, %v2137
  %2140 = vst [vmem:[%s1664] sm:$0xf] %v2139
  %2141 = vst [vmem:[%s1900] sm:$0xf] %v2138
  %v2142 = vld [vmem:[#allocation2] sm:$0xf]
  %v2143 = vld [vmem:[%s248] sm:$0xf]
  %v2144 = vmin.f32 %v2142, %v2143
  %v2145 = vmax.f32 %v2142, %v2143
  %2146 = vst [vmem:[#allocation2] sm:$0xf] %v2144
  %2147 = vst [vmem:[%s248] sm:$0xf] %v2145
  %v2148 = vld [vmem:[%s366] sm:$0xf]
  %v2149 = vld [vmem:[%s484] sm:$0xf]
  %v2150 = vmin.f32 %v2148, %v2149
  %v2151 = vmax.f32 %v2148, %v2149
  %2152 = vst [vmem:[%s366] sm:$0xf] %v2150
  %2153 = vst [vmem:[%s484] sm:$0xf] %v2151
  %v2154 = vld [vmem:[%s602] sm:$0xf]
  %v2155 = vld [vmem:[%s720] sm:$0xf]
  %v2156 = vmin.f32 %v2154, %v2155
  %v2157 = vmax.f32 %v2154, %v2155
  %2158 = vst [vmem:[%s602] sm:$0xf] %v2156
  %2159 = vst [vmem:[%s720] sm:$0xf] %v2157
  %v2160 = vld [vmem:[%s838] sm:$0xf]
  %v2161 = vld [vmem:[%s956] sm:$0xf]
  %v2162 = vmin.f32 %v2160, %v2161
  %v2163 = vmax.f32 %v2160, %v2161
  %2164 = vst [vmem:[%s838] sm:$0xf] %v2162
  %2165 = vst [vmem:[%s956] sm:$0xf] %v2163
  %v2166 = vld [vmem:[%s1074] sm:$0xf]
  %v2167 = vld [vmem:[%s1192] sm:$0xf]
  %v2168 = vmin.f32 %v2166, %v2167
  %v2169 = vmax.f32 %v2166, %v2167
  %2170 = vst [vmem:[%s1074] sm:$0xf] %v2169
  %2171 = vst [vmem:[%s1192] sm:$0xf] %v2168
  %v2172 = vld [vmem:[%s1310] sm:$0xf]
  %v2173 = vld [vmem:[%s1428] sm:$0xf]
  %v2174 = vmin.f32 %v2172, %v2173
  %v2175 = vmax.f32 %v2172, %v2173
  %2176 = vst [vmem:[%s1310] sm:$0xf] %v2175
  %2177 = vst [vmem:[%s1428] sm:$0xf] %v2174
  %v2178 = vld [vmem:[%s1546] sm:$0xf]
  %v2179 = vld [vmem:[%s1664] sm:$0xf]
  %v2180 = vmin.f32 %v2178, %v2179
  %v2181 = vmax.f32 %v2178, %v2179
  %2182 = vst [vmem:[%s1546] sm:$0xf] %v2181
  %2183 = vst [vmem:[%s1664] sm:$0xf] %v2180
  %v2184 = vld [vmem:[%s1782] sm:$0xf]
  %v2185 = vld [vmem:[%s1900] sm:$0xf]
  %v2186 = vmin.f32 %v2184, %v2185
  %v2187 = vmax.f32 %v2184, %v2185
  %2188 = vst [vmem:[%s1782] sm:$0xf] %v2187
  %2189 = vst [vmem:[%s1900] sm:$0xf] %v2186
  %v2190 = vld [vmem:[#allocation2] sm:$0xf]
  %v2191 = vld [vmem:[%s1074] sm:$0xf]
  %v2192 = vmin.f32 %v2190, %v2191
  %v2193 = vmax.f32 %v2190, %v2191
  %2194 = vst [vmem:[#allocation2] sm:$0xf] %v2192
  %2195 = vst [vmem:[%s1074] sm:$0xf] %v2193
  %v2196 = vld [vmem:[%s248] sm:$0xf]
  %v2197 = vld [vmem:[%s1192] sm:$0xf]
  %v2198 = vmin.f32 %v2196, %v2197
  %v2199 = vmax.f32 %v2196, %v2197
  %2200 = vst [vmem:[%s248] sm:$0xf] %v2198
  %2201 = vst [vmem:[%s1192] sm:$0xf] %v2199
  %v2202 = vld [vmem:[%s366] sm:$0xf]
  %v2203 = vld [vmem:[%s1310] sm:$0xf]
  %v2204 = vmin.f32 %v2202, %v2203
  %v2205 = vmax.f32 %v2202, %v2203
  %2206 = vst [vmem:[%s366] sm:$0xf] %v2204
  %2207 = vst [vmem:[%s1310] sm:$0xf] %v2205
  %v2208 = vld [vmem:[%s484] sm:$0xf]
  %v2209 = vld [vmem:[%s1428] sm:$0xf]
  %v2210 = vmin.f32 %v2208, %v2209
  %v2211 = vmax.f32 %v2208, %v2209
  %2212 = vst [vmem:[%s484] sm:$0xf] %v2210
  %2213 = vst [vmem:[%s1428] sm:$0xf] %v2211
  %v2214 = vld [vmem:[%s602] sm:$0xf]
  %v2215 = vld [vmem:[%s1546] sm:$0xf]
  %v2216 = vmin.f32 %v2214, %v2215
  %v2217 = vmax.f32 %v2214, %v2215
  %2218 = vst [vmem:[%s602] sm:$0xf] %v2216
  %2219 = vst [vmem:[%s1546] sm:$0xf] %v2217
  %v2220 = vld [vmem:[%s720] sm:$0xf]
  %v2221 = vld [vmem:[%s1664] sm:$0xf]
  %v2222 = vmin.f32 %v2220, %v2221
  %v2223 = vmax.f32 %v2220, %v2221
  %2224 = vst [vmem:[%s720] sm:$0xf] %v2222
  %2225 = vst [vmem:[%s1664] sm:$0xf] %v2223
  %v2226 = vld [vmem:[%s838] sm:$0xf]
  %v2227 = vld [vmem:[%s1782] sm:$0xf]
  %v2228 = vmin.f32 %v2226, %v2227
  %v2229 = vmax.f32 %v2226, %v2227
  %2230 = vst [vmem:[%s838] sm:$0xf] %v2228
  %2231 = vst [vmem:[%s1782] sm:$0xf] %v2229
  %v2232 = vld [vmem:[%s956] sm:$0xf]
  %v2233 = vld [vmem:[%s1900] sm:$0xf]
  %v2234 = vmin.f32 %v2232, %v2233
  %v2235 = vmax.f32 %v2232, %v2233
  %2236 = vst [vmem:[%s956] sm:$0xf] %v2234
  %2237 = vst [vmem:[%s1900] sm:$0xf] %v2235
  %v2238 = vld [vmem:[#allocation2] sm:$0xf]
  %v2239 = vld [vmem:[%s602] sm:$0xf]
  %v2240 = vmin.f32 %v2238, %v2239
  %v2241 = vmax.f32 %v2238, %v2239
  %2242 = vst [vmem:[#allocation2] sm:$0xf] %v2240
  %2243 = vst [vmem:[%s602] sm:$0xf] %v2241
  %v2244 = vld [vmem:[%s248] sm:$0xf]
  %v2245 = vld [vmem:[%s720] sm:$0xf]
  %v2246 = vmin.f32 %v2244, %v2245
  %v2247 = vmax.f32 %v2244, %v2245
  %2248 = vst [vmem:[%s248] sm:$0xf] %v2246
  %2249 = vst [vmem:[%s720] sm:$0xf] %v2247
  %v2250 = vld [vmem:[%s366] sm:$0xf]
  %v2251 = vld [vmem:[%s838] sm:$0xf]
  %v2252 = vmin.f32 %v2250, %v2251
  %v2253 = vmax.f32 %v2250, %v2251
  %2254 = vst [vmem:[%s366] sm:$0xf] %v2252
  %2255 = vst [vmem:[%s838] sm:$0xf] %v2253
  %v2256 = vld [vmem:[%s484] sm:$0xf]
  %v2257 = vld [vmem:[%s956] sm:$0xf]
  %v2258 = vmin.f32 %v2256, %v2257
  %v2259 = vmax.f32 %v2256, %v2257
  %2260 = vst [vmem:[%s484] sm:$0xf] %v2258
  %2261 = vst [vmem:[%s956] sm:$0xf] %v2259
  %v2262 = vld [vmem:[%s1074] sm:$0xf]
  %v2263 = vld [vmem:[%s1546] sm:$0xf]
  %v2264 = vmin.f32 %v2262, %v2263
  %v2265 = vmax.f32 %v2262, %v2263
  %2266 = vst [vmem:[%s1074] sm:$0xf] %v2264
  %2267 = vst [vmem:[%s1546] sm:$0xf] %v2265
  %v2268 = vld [vmem:[%s1192] sm:$0xf]
  %v2269 = vld [vmem:[%s1664] sm:$0xf]
  %v2270 = vmin.f32 %v2268, %v2269
  %v2271 = vmax.f32 %v2268, %v2269
  %2272 = vst [vmem:[%s1192] sm:$0xf] %v2270
  %2273 = vst [vmem:[%s1664] sm:$0xf] %v2271
  %v2274 = vld [vmem:[%s1310] sm:$0xf]
  %v2275 = vld [vmem:[%s1782] sm:$0xf]
  %v2276 = vmin.f32 %v2274, %v2275
  %v2277 = vmax.f32 %v2274, %v2275
  %2278 = vst [vmem:[%s1310] sm:$0xf] %v2276
  %2279 = vst [vmem:[%s1782] sm:$0xf] %v2277
  %v2280 = vld [vmem:[%s1428] sm:$0xf]
  %v2281 = vld [vmem:[%s1900] sm:$0xf]
  %v2282 = vmin.f32 %v2280, %v2281
  %v2283 = vmax.f32 %v2280, %v2281
  %2284 = vst [vmem:[%s1428] sm:$0xf] %v2282
  %2285 = vst [vmem:[%s1900] sm:$0xf] %v2283
  %v2286 = vld [vmem:[#allocation2] sm:$0xf]
  %v2287 = vld [vmem:[%s366] sm:$0xf]
  %v2288 = vmin.f32 %v2286, %v2287
  %v2289 = vmax.f32 %v2286, %v2287
  %2290 = vst [vmem:[#allocation2] sm:$0xf] %v2288
  %2291 = vst [vmem:[%s366] sm:$0xf] %v2289
  %v2292 = vld [vmem:[%s248] sm:$0xf]
  %v2293 = vld [vmem:[%s484] sm:$0xf]
  %v2294 = vmin.f32 %v2292, %v2293
  %v2295 = vmax.f32 %v2292, %v2293
  %2296 = vst [vmem:[%s248] sm:$0xf] %v2294
  %2297 = vst [vmem:[%s484] sm:$0xf] %v2295
  %v2298 = vld [vmem:[%s602] sm:$0xf]
  %v2299 = vld [vmem:[%s838] sm:$0xf]
  %v2300 = vmin.f32 %v2298, %v2299
  %v2301 = vmax.f32 %v2298, %v2299
  %2302 = vst [vmem:[%s602] sm:$0xf] %v2300
  %2303 = vst [vmem:[%s838] sm:$0xf] %v2301
  %v2304 = vld [vmem:[%s720] sm:$0xf]
  %v2305 = vld [vmem:[%s956] sm:$0xf]
  %v2306 = vmin.f32 %v2304, %v2305
  %v2307 = vmax.f32 %v2304, %v2305
  %2308 = vst [vmem:[%s720] sm:$0xf] %v2306
  %2309 = vst [vmem:[%s956] sm:$0xf] %v2307
  %v2310 = vld [vmem:[%s1074] sm:$0xf]
  %v2311 = vld [vmem:[%s1310] sm:$0xf]
  %v2312 = vmin.f32 %v2310, %v2311
  %v2313 = vmax.f32 %v2310, %v2311
  %2314 = vst [vmem:[%s1074] sm:$0xf] %v2312
  %2315 = vst [vmem:[%s1310] sm:$0xf] %v2313
  %v2316 = vld [vmem:[%s1192] sm:$0xf]
  %v2317 = vld [vmem:[%s1428] sm:$0xf]
  %v2318 = vmin.f32 %v2316, %v2317
  %v2319 = vmax.f32 %v2316, %v2317
  %2320 = vst [vmem:[%s1192] sm:$0xf] %v2318
  %2321 = vst [vmem:[%s1428] sm:$0xf] %v2319
  %v2322 = vld [vmem:[%s1546] sm:$0xf]
  %v2323 = vld [vmem:[%s1782] sm:$0xf]
  %v2324 = vmin.f32 %v2322, %v2323
  %v2325 = vmax.f32 %v2322, %v2323
  %2326 = vst [vmem:[%s1546] sm:$0xf] %v2324
  %2327 = vst [vmem:[%s1782] sm:$0xf] %v2325
  %v2328 = vld [vmem:[%s1664] sm:$0xf]
  %v2329 = vld [vmem:[%s1900] sm:$0xf]
  %v2330 = vmin.f32 %v2328, %v2329
  %v2331 = vmax.f32 %v2328, %v2329
  %2332 = vst [vmem:[%s1664] sm:$0xf] %v2330
  %2333 = vst [vmem:[%s1900] sm:$0xf] %v2331
  %v2334 = vld [vmem:[#allocation2] sm:$0xf]
  %v2335 = vld [vmem:[%s248] sm:$0xf]
  %v2336 = vmin.f32 %v2334, %v2335
  %v2337 = vmax.f32 %v2334, %v2335
  %2338 = vst [vmem:[#allocation2] sm:$0xf] %v2336
  %2339 = vst [vmem:[%s248] sm:$0xf] %v2337
  %v2340 = vld [vmem:[%s366] sm:$0xf]
  %v2341 = vld [vmem:[%s484] sm:$0xf]
  %v2342 = vmin.f32 %v2340, %v2341
  %v2343 = vmax.f32 %v2340, %v2341
  %2344 = vst [vmem:[%s366] sm:$0xf] %v2342
  %2345 = vst [vmem:[%s484] sm:$0xf] %v2343
  %v2346 = vld [vmem:[%s602] sm:$0xf]
  %v2347 = vld [vmem:[%s720] sm:$0xf]
  %v2348 = vmin.f32 %v2346, %v2347
  %v2349 = vmax.f32 %v2346, %v2347
  %2350 = vst [vmem:[%s602] sm:$0xf] %v2348
  %2351 = vst [vmem:[%s720] sm:$0xf] %v2349
  %v2352 = vld [vmem:[%s838] sm:$0xf]
  %v2353 = vld [vmem:[%s956] sm:$0xf]
  %v2354 = vmin.f32 %v2352, %v2353
  %v2355 = vmax.f32 %v2352, %v2353
  %2356 = vst [vmem:[%s838] sm:$0xf] %v2354
  %2357 = vst [vmem:[%s956] sm:$0xf] %v2355
  %v2358 = vld [vmem:[%s1074] sm:$0xf]
  %v2359 = vld [vmem:[%s1192] sm:$0xf]
  %v2360 = vmin.f32 %v2358, %v2359
  %v2361 = vmax.f32 %v2358, %v2359
  %2362 = vst [vmem:[%s1074] sm:$0xf] %v2360
  %2363 = vst [vmem:[%s1192] sm:$0xf] %v2361
  %v2364 = vld [vmem:[%s1310] sm:$0xf]
  %v2365 = vld [vmem:[%s1428] sm:$0xf]
  %v2366 = vmin.f32 %v2364, %v2365
  %v2367 = vmax.f32 %v2364, %v2365
  %2368 = vst [vmem:[%s1310] sm:$0xf] %v2366
  %2369 = vst [vmem:[%s1428] sm:$0xf] %v2367
  %v2370 = vld [vmem:[%s1546] sm:$0xf]
  %v2371 = vld [vmem:[%s1664] sm:$0xf]
  %v2372 = vmin.f32 %v2370, %v2371
  %v2373 = vmax.f32 %v2370, %v2371
  %2374 = vst [vmem:[%s1546] sm:$0xf] %v2372
  %2375 = vst [vmem:[%s1664] sm:$0xf] %v2373
  %v2376 = vld [vmem:[%s1782] sm:$0xf]
  %v2377 = vld [vmem:[%s1900] sm:$0xf]
  %v2378 = vmin.f32 %v2376, %v2377
  %v2379 = vmax.f32 %v2376, %v2377
  %2380 = vst [vmem:[%s1782] sm:$0xf] %v2378
  %2381 = vst [vmem:[%s1900] sm:$0xf] %v2379
  %v2382 = vld [vmem:[#allocation2] sm:$0xf]
  %2383 = vst [vmem:[%s2] sm:$0xf] %v2382
  %v2384 = vld [vmem:[%s248] sm:$0xf]
  %s2385 = scalar_lea.vmem %s2, 4
  %2386 = vst [vmem:[%s2385] sm:$0xf] %v2384
  %v2387 = vld [vmem:[%s366] sm:$0xf]
  %s2388 = scalar_lea.vmem %s2, 8
  %2389 = vst [vmem:[%s2388] sm:$0xf] %v2387
  %v2390 = vld [vmem:[%s484] sm:$0xf]
  %s2391 = scalar_lea.vmem %s2, 12
  %2392 = vst [vmem:[%s2391] sm:$0xf] %v2390
  %v2393 = vld [vmem:[%s602] sm:$0xf]
  %s2394 = scalar_lea.vmem %s2, 16
  %2395 = vst [vmem:[%s2394] sm:$0xf] %v2393
  %v2396 = vld [vmem:[%s720] sm:$0xf]
  %s2397 = scalar_lea.vmem %s2, 20
  %2398 = vst [vmem:[%s2397] sm:$0xf] %v2396
  %v2399 = vld [vmem:[%s838] sm:$0xf]
  %s2400 = scalar_lea.vmem %s2, 24
  %2401 = vst [vmem:[%s2400] sm:$0xf] %v2399
  %v2402 = vld [vmem:[%s956] sm:$0xf]
  %s2403 = scalar_lea.vmem %s2, 28
  %2404 = vst [vmem:[%s2403] sm:$0xf] %v2402
  %v2405 = vld [vmem:[%s1074] sm:$0xf]
  %s2406 = scalar_lea.vmem %s2, 32
  %2407 = vst [vmem:[%s2406] sm:$0xf] %v2405
  %v2408 = vld [vmem:[%s1192] sm:$0xf]
  %s2409 = scalar_lea.vmem %s2, 36
  %2410 = vst [vmem:[%s2409] sm:$0xf] %v2408
  %v2411 = vld [vmem:[%s1310] sm:$0xf]
  %s2412 = scalar_lea.vmem %s2, 40
  %2413 = vst [vmem:[%s2412] sm:$0xf] %v2411
  %v2414 = vld [vmem:[%s1428] sm:$0xf]
  %s2415 = scalar_lea.vmem %s2, 44
  %2416 = vst [vmem:[%s2415] sm:$0xf] %v2414
  %v2417 = vld [vmem:[%s1546] sm:$0xf]
  %s2418 = scalar_lea.vmem %s2, 48
  %2419 = vst [vmem:[%s2418] sm:$0xf] %v2417
  %v2420 = vld [vmem:[%s1664] sm:$0xf]
  %s2421 = scalar_lea.vmem %s2, 52
  %2422 = vst [vmem:[%s2421] sm:$0xf] %v2420
  %v2423 = vld [vmem:[%s1782] sm:$0xf]
  %s2424 = scalar_lea.vmem %s2, 56
  %2425 = vst [vmem:[%s2424] sm:$0xf] %v2423
  %v2426 = vld [vmem:[%s1900] sm:$0xf]
  %s2427 = scalar_lea.vmem %s2, 60
  %2428 = vst [vmem:[%s2427] sm:$0xf] %v2426
  // Predicated region
  $region10: #{vvbp_forward.14} parent=0 // pred_check
    _
  $region11: #{vvbp_forward.14} parent=0 // pred_check_branch
    %2430 = sbr.rel (0) target = $region13
  $region12: #{vvbp_forward.14} parent=0 // pred_region
    _
  $region13: #{vvbp_forward.14} parent=0 // pred_fallthru
    _
  // Predicated region
  $region14: #{vvbp_forward.14} parent=0 // pred_check
    _
  $region15: #{vvbp_forward.14} parent=0 // pred_check_branch
    %2432 = sbr.rel (0) target = $region17
  $region16: #{vvbp_forward.14} parent=0 // pred_region
    _
  $region17: #{vvbp_forward.14} parent=0 // pred_fallthru
    _

// kernel: vvbp_forward.15
$region0: #{vvbp_forward.15}
  #allocation0 [shape = 'u32[]', space=smem, size = 0x4, offset = 0x4, fixed_abs, tag = 'smem constant byte address 0x4 - core index']
  #allocation1 [shape = 'u32[144,128]{1,0:T(1,128)}', space=vmem, size = 0x12000, scoped, tag = 'internal scratch']
  #allocation2 [shape = 'f32[1,512]{1,0:T(1,128)}', space=vmem, size = 0x800, scoped, tag = 'scratch operand']
  #allocation3 [shape = 'f32[1,1]{1,0:T(1,128)S(1)}', space=vmem, size = 0x200, scoped, tag = 'scoped memory for vvbp_forward.15']
  %s0 = inlined_call_operand.vmem [shape: bf16[1,144], index: 0, kind: input, shape index: {}]
  %s1 = inlined_call_operand.vmem [shape: bf16[144,512], index: 1, kind: input, shape index: {}]
  %s2 = inlined_call_operand.<no memory space> [shape: f32[1,1], index: 2, kind: input, shape index: {}]
  %s3 = inlined_call_operand.vmem [shape: f32[1,512], index: 3, kind: output, shape index: {}]
  %s4 = sld [smem:[#allocation0]]
  $region30: #{vvbp_forward.15} parent=0
    _
  %s6 = ssub.s32 1, %s4
  %s7 = scalar_select 0, %s6, %s4
  %v8 = vstv %s2
  %9 = vst [vmem:[#allocation3] sm:$0x1] %v8
  // Predicated region
  $region2: #{vvbp_forward.15} parent=0 // pred_check
    _
  $region3: #{vvbp_forward.15} parent=0 // pred_check_branch
    %11 = sbr.rel (0) target = $region5
  $region4: #{vvbp_forward.15} parent=0 // pred_region
    _
  $region5: #{vvbp_forward.15} parent=0 // pred_fallthru
    _
  // Predicated region
  $region6: #{vvbp_forward.15} parent=0 // pred_check
    _
  $region7: #{vvbp_forward.15} parent=0 // pred_check_branch
    %13 = sbr.rel (0) target = $region9
  $region8: #{vvbp_forward.15} parent=0 // pred_region
    _
  $region9: #{vvbp_forward.15} parent=0 // pred_fallthru
    _
  // Predicated region
  $region10: #{vvbp_forward.15} parent=0 // pred_check
    _
  $region11: #{vvbp_forward.15} parent=0 // pred_check_branch
    %15 = sbr.rel (0) target = $region13
  $region12: #{vvbp_forward.15} parent=0 // pred_region
    _
  $region13: #{vvbp_forward.15} parent=0 // pred_fallthru
    _
  %p17 = scmp.eq.s32.totalorder 0, 0
  // Predicated region
  $region14: #{vvbp_forward.15} parent=0 // pred_check
    %p18 = pneg %p17
  $region15: #{vvbp_forward.15} parent=0 // pred_check_branch
    %20 = sbr.rel (%p18) target = $region17
  $region16: #{vvbp_forward.15} parent=0 // pred_region
    %v21 = vlaneseq
    %vm22 = vcmp.ge.s32.totalorder %v21, 0
    %vm23 = vcmp.lt.s32.totalorder %v21, 512
    %vm24 = vmand %vm22, %vm23
    %25 = vst.msk [vmem:[#allocation2] sm:$0xf] %vm24, 0.0
  $region17: #{vvbp_forward.15} parent=0 // pred_fallthru
    _
  %v26 = vld [vmem:[#allocation2] sm:$0xf]
  %v27 = vld [vmem:[%s0] sm:$0x3]
  %v28 = vld [vmem:[%s1] sm:$0xff]
  %v29 = vld [vmem:[%s1 + $0x8] sm:$0xff]
  %v30 = vld [vmem:[%s1 + $0x10] sm:$0xff]
  %v31 = vld [vmem:[%s1 + $0x18] sm:$0xff]
  %v32 = vld [vmem:[%s1 + $0x20] sm:$0xff]
  %v33 = vld [vmem:[%s1 + $0x28] sm:$0xff]
  %v34 = vld [vmem:[%s1 + $0x30] sm:$0xff]
  %v35 = vld [vmem:[%s1 + $0x38] sm:$0xff]
  %v36 = vld [vmem:[%s1 + $0x40] sm:$0xff]
  %v37 = vld [vmem:[%s1 + $0x48] sm:$0xff]
  %v38 = vld [vmem:[%s1 + $0x50] sm:$0xff]
  %v39 = vld [vmem:[%s1 + $0x58] sm:$0xff]
  %v40 = vld [vmem:[%s1 + $0x60] sm:$0xff]
  %v41 = vld [vmem:[%s1 + $0x68] sm:$0xff]
  %v42 = vld [vmem:[%s1 + $0x70] sm:$0xff]
  %v43 = vld [vmem:[%s1 + $0x78] sm:$0xff]
  %v44 = vld [vmem:[%s1 + $0x80] sm:$0xff]
  %v45 = vld [vmem:[%s1 + $0x88] sm:$0xff]
  %v46 = vld [vmem:[%s1 + $0x90] sm:$0xff]
  %v47 = vld [vmem:[%s1 + $0x98] sm:$0xff]
  %v48 = vld [vmem:[%s1 + $0xa0] sm:$0xff]
  %v49 = vld [vmem:[%s1 + $0xa8] sm:$0xff]
  %v50 = vld [vmem:[%s1 + $0xb0] sm:$0xff]
  %v51 = vld [vmem:[%s1 + $0xb8] sm:$0xff]
  %v52 = vld [vmem:[%s1 + $0xc0] sm:$0xff]
  %v53 = vld [vmem:[%s1 + $0xc8] sm:$0xff]
  %v54 = vld [vmem:[%s1 + $0xd0] sm:$0xff]
  %v55 = vld [vmem:[%s1 + $0xd8] sm:$0xff]
  %v56 = vld [vmem:[%s1 + $0xe0] sm:$0xff]
  %v57 = vld [vmem:[%s1 + $0xe8] sm:$0xff]
  %v58 = vld [vmem:[%s1 + $0xf0] sm:$0xff]
  %v59 = vld [vmem:[%s1 + $0xf8] sm:$0xff]
  %v60 = vld [vmem:[%s1 + $0x100] sm:$0xff]
  %v61 = vld [vmem:[%s1 + $0x108] sm:$0xff]
  %v62 = vld [vmem:[%s1 + $0x110] sm:$0xff]
  %v63 = vld [vmem:[%s1 + $0x118] sm:$0xff]
  %v66 = vunpack.c.l.s4 1966171168
  %v67 = vunpack.c.0.s8 %v66
  %v68 = vlaneseq
  %v69 = vshrl.u32 %v68, 7
  %v70 = vsub.s32 %v67, %v69
  %v71 = vrot.slane %v27, %v70
  %v72 = vcombine.high %v71, %v71
  %v74 = vunpack.c.l.s4 1966171168
  %v75 = vunpack.c.0.s8 %v74
  %v76 = vlaneseq
  %v77 = vshrl.u32 %v76, 7
  %v78 = vsub.s32 %v75, %v77
  %v79 = vrot.slane %v71, %v78
  %v81 = vunpack.c.l.s4 1966171168
  %v82 = vunpack.c.0.s8 %v81
  %v83 = vlaneseq
  %v84 = vshrl.u32 %v83, 7
  %v85 = vsub.s32 %v82, %v84
  %v86 = vrot.slane %v72, %v85
  %v124 = vunpack.c.l.b16 %v28
  %v125 = vunpack.c.h.b16 %v28
  %v126 = vunpack.c.l.b16 %v29
  %v127 = vunpack.c.h.b16 %v29
  %v128 = vunpack.c.l.b16 %v30
  %v129 = vunpack.c.h.b16 %v30
  %v130 = vunpack.c.l.b16 %v31
  %v131 = vunpack.c.h.b16 %v31
  %v132 = vunpack.c.l.b16 %v32
  %v133 = vunpack.c.h.b16 %v32
  %v134 = vunpack.c.l.b16 %v33
  %v135 = vunpack.c.h.b16 %v33
  %v136 = vunpack.c.l.b16 %v34
  %v137 = vunpack.c.h.b16 %v34
  %v138 = vunpack.c.l.b16 %v35
  %v139 = vunpack.c.h.b16 %v35
  %v140 = vunpack.c.l.b16 %v36
  %v141 = vunpack.c.h.b16 %v36
  %v142 = vunpack.c.l.b16 %v37
  %v143 = vunpack.c.h.b16 %v37
  %v144 = vunpack.c.l.b16 %v38
  %v145 = vunpack.c.h.b16 %v38
  %v146 = vunpack.c.l.b16 %v39
  %v147 = vunpack.c.h.b16 %v39
  %v148 = vunpack.c.l.b16 %v40
  %v149 = vunpack.c.h.b16 %v40
  %v150 = vunpack.c.l.b16 %v41
  %v151 = vunpack.c.h.b16 %v41
  %v152 = vunpack.c.l.b16 %v42
  %v153 = vunpack.c.h.b16 %v42
  %v154 = vunpack.c.l.b16 %v43
  %v155 = vunpack.c.h.b16 %v43
  %v156 = vunpack.c.l.b16 %v44
  %v157 = vunpack.c.h.b16 %v44
  %v158 = vunpack.c.l.b16 %v45
  %v159 = vunpack.c.h.b16 %v45
  %v160 = vunpack.c.l.b16 %v46
  %v161 = vunpack.c.h.b16 %v46
  %v162 = vunpack.c.l.b16 %v47
  %v163 = vunpack.c.h.b16 %v47
  %v164 = vunpack.c.l.b16 %v48
  %v165 = vunpack.c.h.b16 %v48
  %v166 = vunpack.c.l.b16 %v49
  %v167 = vunpack.c.h.b16 %v49
  %v168 = vunpack.c.l.b16 %v50
  %v169 = vunpack.c.h.b16 %v50
  %v170 = vunpack.c.l.b16 %v51
  %v171 = vunpack.c.h.b16 %v51
  %v172 = vunpack.c.l.b16 %v52
  %v173 = vunpack.c.h.b16 %v52
  %v174 = vunpack.c.l.b16 %v53
  %v175 = vunpack.c.h.b16 %v53
  %v176 = vunpack.c.l.b16 %v54
  %v177 = vunpack.c.h.b16 %v54
  %v178 = vunpack.c.l.b16 %v55
  %v179 = vunpack.c.h.b16 %v55
  %v180 = vunpack.c.l.b16 %v56
  %v181 = vunpack.c.h.b16 %v56
  %v182 = vunpack.c.l.b16 %v57
  %v183 = vunpack.c.h.b16 %v57
  %v184 = vunpack.c.l.b16 %v58
  %v185 = vunpack.c.h.b16 %v58
  %v186 = vunpack.c.l.b16 %v59
  %v187 = vunpack.c.h.b16 %v59
  %v188 = vunpack.c.l.b16 %v60
  %v189 = vunpack.c.h.b16 %v60
  %v190 = vunpack.c.l.b16 %v61
  %v191 = vunpack.c.h.b16 %v61
  %v192 = vunpack.c.l.b16 %v62
  %v193 = vunpack.c.h.b16 %v62
  %v194 = vunpack.c.l.b16 %v63
  %v195 = vunpack.c.h.b16 %v63
  %v196 = vpack.c.b16 %v128, %v124
  %v197 = vpack.c.b16 %v129, %v125
  %v198 = vpack.c.b16 %v130, %v126
  %v199 = vpack.c.b16 %v131, %v127
  %v200 = vpack.c.b16 %v136, %v132
  %v201 = vpack.c.b16 %v137, %v133
  %v202 = vpack.c.b16 %v138, %v134
  %v203 = vpack.c.b16 %v139, %v135
  %v204 = vpack.c.b16 %v144, %v140
  %v205 = vpack.c.b16 %v145, %v141
  %v206 = vpack.c.b16 %v146, %v142
  %v207 = vpack.c.b16 %v147, %v143
  %v208 = vpack.c.b16 %v152, %v148
  %v209 = vpack.c.b16 %v153, %v149
  %v210 = vpack.c.b16 %v154, %v150
  %v211 = vpack.c.b16 %v155, %v151
  %v212 = vpack.c.b16 %v160, %v156
  %v213 = vpack.c.b16 %v161, %v157
  %v214 = vpack.c.b16 %v162, %v158
  %v215 = vpack.c.b16 %v163, %v159
  %v216 = vpack.c.b16 %v168, %v164
  %v217 = vpack.c.b16 %v169, %v165
  %v218 = vpack.c.b16 %v170, %v166
  %v219 = vpack.c.b16 %v171, %v167
  %v220 = vpack.c.b16 %v176, %v172
  %v221 = vpack.c.b16 %v177, %v173
  %v222 = vpack.c.b16 %v178, %v174
  %v223 = vpack.c.b16 %v179, %v175
  %v224 = vpack.c.b16 %v184, %v180
  %v225 = vpack.c.b16 %v185, %v181
  %v226 = vpack.c.b16 %v186, %v182
  %v227 = vpack.c.b16 %v187, %v183
  %v228 = vpack.c.b16 %v192, %v188
  %v229 = vpack.c.b16 %v193, %v189
  %v230 = vpack.c.b16 %v194, %v190
  %v231 = vpack.c.b16 %v195, %v191
  %vm268 = vcmask 130048
  %v270 = vsel %vm268, %v86, 0
  %272 = vmatprep.subr.bf16.mxu0 %v225
  %273 = vmatpush1.bf16.msra.mxu0 %v224
  %274 = vmatprep.subr.bf16.mxu0 %v221
  %275 = vmatpush1.bf16.msra.mxu0 %v220
  %276 = vmatprep.subr.bf16.mxu0 %v217
  %277 = vmatpush1.bf16.msra.mxu0 %v216
  %278 = vmatprep.subr.bf16.mxu0 %v213
  %279 = vmatpush1.bf16.msra.mxu0 %v212
  %280 = vmatprep.subr.bf16.mxu0 %v209
  %281 = vmatpush1.bf16.msra.mxu0 %v208
  %282 = vmatprep.subr.bf16.mxu0 %v205
  %283 = vmatpush1.bf16.msra.mxu0 %v204
  %284 = vmatprep.subr.bf16.mxu0 %v201
  %285 = vmatpush1.bf16.msra.mxu0 %v200
  %286 = vmatprep.subr.bf16.mxu0 %v197
  %287 = vmatpush1.bf16.msra.mxu0 %v196
  %288 = vmatprep.subr.bf16.mxu0 0
  %289 = vmatpush2.bf16.msra.mxu0 0
  %290 = vmatprep.subr.bf16.mxu0 0
  %291 = vmatpush2.bf16.msra.mxu0 0
  %292 = vmatprep.subr.bf16.mxu0 0
  %293 = vmatpush2.bf16.msra.mxu0 0
  %294 = vmatprep.subr.bf16.mxu0 0
  %295 = vmatpush2.bf16.msra.mxu0 0
  %296 = vmatprep.subr.bf16.mxu0 0
  %297 = vmatpush2.bf16.msra.mxu0 0
  %298 = vmatprep.subr.bf16.mxu0 0
  %299 = vmatpush2.bf16.msra.mxu0 0
  %300 = vmatprep.subr.bf16.mxu0 0
  %301 = vmatpush2.bf16.msra.mxu0 0
  %302 = vmatprep.subr.bf16.mxu0 %v229
  %303 = vmatpush2.bf16.msra.mxu0 %v228
  %304 = vmatprep.mubr.bf16.mxu0 %v270
  %305 = vmatmul.mubr.bf16.gmra.mxu0 %v79
  %v306 = vpop.f32.mrf.mxu0
  %v307 = vadd.f32 0.0, %v306
  %v308 = vpop.f32.mrf.mxu0
  %v309 = vadd.f32 0.0, %v308
  %v310 = vpop.f32.mrf.mxu0
  %v311 = vpop.f32.mrf.mxu0
  %312 = vdwg.mxu0
  %313 = vmatprep.subr.bf16.mxu0 %v227
  %314 = vmatpush1.bf16.msra.mxu0 %v226
  %315 = vmatprep.subr.bf16.mxu0 %v223
  %316 = vmatpush1.bf16.msra.mxu0 %v222
  %317 = vmatprep.subr.bf16.mxu0 %v219
  %318 = vmatpush1.bf16.msra.mxu0 %v218
  %319 = vmatprep.subr.bf16.mxu0 %v215
  %320 = vmatpush1.bf16.msra.mxu0 %v214
  %321 = vmatprep.subr.bf16.mxu0 %v211
  %322 = vmatpush1.bf16.msra.mxu0 %v210
  %323 = vmatprep.subr.bf16.mxu0 %v207
  %324 = vmatpush1.bf16.msra.mxu0 %v206
  %325 = vmatprep.subr.bf16.mxu0 %v203
  %326 = vmatpush1.bf16.msra.mxu0 %v202
  %327 = vmatprep.subr.bf16.mxu0 %v199
  %328 = vmatpush1.bf16.msra.mxu0 %v198
  %329 = vmatprep.subr.bf16.mxu0 0
  %330 = vmatpush2.bf16.msra.mxu0 0
  %331 = vmatprep.subr.bf16.mxu0 0
  %332 = vmatpush2.bf16.msra.mxu0 0
  %333 = vmatprep.subr.bf16.mxu0 0
  %334 = vmatpush2.bf16.msra.mxu0 0
  %335 = vmatprep.subr.bf16.mxu0 0
  %336 = vmatpush2.bf16.msra.mxu0 0
  %337 = vmatprep.subr.bf16.mxu0 0
  %338 = vmatpush2.bf16.msra.mxu0 0
  %339 = vmatprep.subr.bf16.mxu0 0
  %340 = vmatpush2.bf16.msra.mxu0 0
  %341 = vmatprep.subr.bf16.mxu0 0
  %342 = vmatpush2.bf16.msra.mxu0 0
  %343 = vmatprep.subr.bf16.mxu0 %v231
  %344 = vmatpush2.bf16.msra.mxu0 %v230
  %345 = vmatprep.mubr.bf16.mxu0 %v270
  %346 = vmatmul.mubr.bf16.gmra.mxu0 %v79
  %v347 = vpop.f32.mrf.mxu0
  %v348 = vadd.f32 0.0, %v347
  %v349 = vpop.f32.mrf.mxu0
  %v350 = vadd.f32 0.0, %v349
  %v351 = vpop.f32.mrf.mxu0
  %v352 = vpop.f32.mrf.mxu0
  %353 = vdwg.mxu0
  %v358 = vcombine.low %v307, %v309
  %v359 = vcombine.low %v348, %v350
  %v361 = vunpack.c.l.s4 1966171168
  %v362 = vunpack.c.0.s8 %v361
  %v363 = vlaneseq
  %v364 = vshrl.u32 %v363, 7
  %v365 = vsub.s32 %v362, %v364
  %v366 = vrot.slane %v358, %v365
  %v368 = vunpack.c.l.s4 1966171168
  %v369 = vunpack.c.0.s8 %v368
  %v370 = vlaneseq
  %v371 = vshrl.u32 %v370, 7
  %v372 = vsub.s32 %v369, %v371
  %v373 = vrot.slane %v359, %v372
  %v374 = vcombine.low %v366, %v373
  %v376 = vunpack.c.l.s4 1966171168
  %v377 = vunpack.c.0.s8 %v376
  %v378 = vlaneseq
  %v379 = vshrl.u32 %v378, 7
  %v380 = vsub.s32 %v377, %v379
  %v381 = vrot.slane %v374, %v380
  %v383 = vadd.f32 %v26, %v381
  %v384 = vlaneseq
  %vm385 = vcmp.ge.s32.totalorder %v384, 0
  %vm386 = vcmp.lt.s32.totalorder %v384, 512
  %vm387 = vmand %vm385, %vm386
  %388 = vst.msk [vmem:[#allocation2] sm:$0xf] %vm387, %v383
  // Predicated region
  $region18: #{vvbp_forward.15} parent=0 // pred_check
    %p389 = pneg %p17
  $region19: #{vvbp_forward.15} parent=0 // pred_check_branch
    %391 = sbr.rel (%p389) target = $region21
  $region20: #{vvbp_forward.15} parent=0 // pred_region
    %v392 = vld [vmem:[#allocation2] sm:$0xf]
    %v393 = vld [vmem:[#allocation3] sm:$0x1]
    %395 = vset.pattern.permute.xlu0 0
    %396 = vperm.xlu0 %395, %v393
    %v397 = vpop.permute.xlu0 %396
    %v399 = vlaneseq
    %v400 = vshrl.u32 %v399, 7
    %v401 = vsub.s32 0, %v400
    %v402 = vrot.slane %v397, %v401
    %v403 = vadd.f32 %v392, %v402
    %404 = vst.msk [vmem:[%s3] sm:$0xf] %vm387, %v403
  $region21: #{vvbp_forward.15} parent=0 // pred_fallthru
    _
  // Predicated region
  $region22: #{vvbp_forward.15} parent=0 // pred_check
    _
  $region23: #{vvbp_forward.15} parent=0 // pred_check_branch
    %406 = sbr.rel (0) target = $region25
  $region24: #{vvbp_forward.15} parent=0 // pred_region
    _
  $region25: #{vvbp_forward.15} parent=0 // pred_fallthru
    _
  // Predicated region
  $region26: #{vvbp_forward.15} parent=0 // pred_check
    _
  $region27: #{vvbp_forward.15} parent=0 // pred_check_branch
    %408 = sbr.rel (0) target = $region29
  $region28: #{vvbp_forward.15} parent=0 // pred_region
    _
  $region29: #{vvbp_forward.15} parent=0 // pred_fallthru
    _

// kernel: vvbp_forward.16
$region0: #{vvbp_forward.16}
  #allocation0 [shape = 'u32[]', space=smem, size = 0x4, offset = 0x4, fixed_abs, tag = 'smem constant byte address 0x4 - core index']
  #allocation1 [shape = 'u32[144,128]{1,0:T(1,128)}', space=vmem, size = 0x12000, scoped, tag = 'internal scratch']
  #allocation2 [shape = 'f32[16,512]{1,0:T(8,128)}', space=vmem, size = 0x8000, scoped, tag = 'scratch operand']
  %s0 = inlined_call_operand.vmem [shape: bf16[16,25], index: 0, kind: input, shape index: {}]
  %s1 = inlined_call_operand.vmem [shape: bf16[25,512], index: 1, kind: input, shape index: {}]
  %s2 = inlined_call_operand.vmem [shape: f32[16,1], index: 2, kind: input, shape index: {}]
  %s3 = inlined_call_operand.vmem [shape: f32[16,512], index: 3, kind: output, shape index: {}]
  %s4 = sld [smem:[#allocation0]]
  $region30: #{vvbp_forward.16} parent=0
    _
  %s6 = ssub.s32 1, %s4
  %s7 = scalar_select 0, %s6, %s4
  // Predicated region
  $region2: #{vvbp_forward.16} parent=0 // pred_check
    _
  $region3: #{vvbp_forward.16} parent=0 // pred_check_branch
    %9 = sbr.rel (0) target = $region5
  $region4: #{vvbp_forward.16} parent=0 // pred_region
    _
  $region5: #{vvbp_forward.16} parent=0 // pred_fallthru
    _
  // Predicated region
  $region6: #{vvbp_forward.16} parent=0 // pred_check
    _
  $region7: #{vvbp_forward.16} parent=0 // pred_check_branch
    %11 = sbr.rel (0) target = $region9
  $region8: #{vvbp_forward.16} parent=0 // pred_region
    _
  $region9: #{vvbp_forward.16} parent=0 // pred_fallthru
    _
  // Predicated region
  $region10: #{vvbp_forward.16} parent=0 // pred_check
    _
  $region11: #{vvbp_forward.16} parent=0 // pred_check_branch
    %13 = sbr.rel (0) target = $region13
  $region12: #{vvbp_forward.16} parent=0 // pred_region
    _
  $region13: #{vvbp_forward.16} parent=0 // pred_fallthru
    _
  %p15 = scmp.eq.s32.totalorder 0, 0
  // Predicated region
  $region14: #{vvbp_forward.16} parent=0 // pred_check
    %p16 = pneg %p15
  $region15: #{vvbp_forward.16} parent=0 // pred_check_branch
    %18 = sbr.rel (%p16) target = $region17
  $region16: #{vvbp_forward.16} parent=0 // pred_region
    %19 = vst [vmem:[#allocation2] sm:$0xff] 0.0
    %20 = vst [vmem:[#allocation2 + $0x8] sm:$0xff] 0.0
    %21 = vst [vmem:[#allocation2 + $0x10] sm:$0xff] 0.0
    %22 = vst [vmem:[#allocation2 + $0x18] sm:$0xff] 0.0
    %23 = vst [vmem:[#allocation2 + $0x20] sm:$0xff] 0.0
    %24 = vst [vmem:[#allocation2 + $0x28] sm:$0xff] 0.0
    %25 = vst [vmem:[#allocation2 + $0x30] sm:$0xff] 0.0
    %26 = vst [vmem:[#allocation2 + $0x38] sm:$0xff] 0.0
  $region17: #{vvbp_forward.16} parent=0 // pred_fallthru
    _
  %v27 = vld [vmem:[#allocation2] sm:$0xff]
  %v28 = vld [vmem:[#allocation2 + $0x8] sm:$0xff]
  %v29 = vld [vmem:[#allocation2 + $0x10] sm:$0xff]
  %v30 = vld [vmem:[#allocation2 + $0x18] sm:$0xff]
  %v31 = vld [vmem:[#allocation2 + $0x20] sm:$0xff]
  %v32 = vld [vmem:[#allocation2 + $0x28] sm:$0xff]
  %v33 = vld [vmem:[#allocation2 + $0x30] sm:$0xff]
  %v34 = vld [vmem:[#allocation2 + $0x38] sm:$0xff]
  %v35 = vld [vmem:[%s0] sm:$0xf]
  %v36 = vld [vmem:[%s0 + $0x4] sm:$0xf]
  %v37 = vld [vmem:[%s1] sm:$0xff]
  %v38 = vld [vmem:[%s1 + $0x8] sm:$0xff]
  %v39 = vld [vmem:[%s1 + $0x10] sm:$0xff]
  %v40 = vld [vmem:[%s1 + $0x18] sm:$0xff]
  %v41 = vld [vmem:[%s1 + $0x20] sm:$0xff]
  %v42 = vld [vmem:[%s1 + $0x28] sm:$0xff]
  %v43 = vld [vmem:[%s1 + $0x30] sm:$0x11]
  %v44 = vld [vmem:[%s1 + $0x38] sm:$0x11]
  %v47 = vunpack.c.l.b16 %v35
  %v48 = vunpack.c.l.b16 %v36
  %v49 = vpack.c.b16 %v48, %v47
  %v58 = vunpack.c.l.b16 %v37
  %v59 = vunpack.c.h.b16 %v37
  %v60 = vunpack.c.l.b16 %v38
  %v61 = vunpack.c.h.b16 %v38
  %v62 = vunpack.c.l.b16 %v39
  %v63 = vunpack.c.h.b16 %v39
  %v64 = vunpack.c.l.b16 %v40
  %v65 = vunpack.c.h.b16 %v40
  %v66 = vunpack.c.l.b16 %v41
  %v67 = vunpack.c.h.b16 %v41
  %v68 = vunpack.c.l.b16 %v42
  %v69 = vunpack.c.h.b16 %v42
  %v70 = vunpack.c.l.b16 %v43
  %v71 = vunpack.c.h.b16 %v43
  %v72 = vunpack.c.l.b16 %v44
  %v73 = vunpack.c.h.b16 %v44
  %v74 = vpack.c.b16 %v62, %v58
  %v75 = vpack.c.b16 %v63, %v59
  %v76 = vpack.c.b16 %v64, %v60
  %v77 = vpack.c.b16 %v65, %v61
  %v78 = vpack.c.b16 %v70, %v66
  %v79 = vpack.c.b16 %v71, %v67
  %v80 = vpack.c.b16 %v72, %v68
  %v81 = vpack.c.b16 %v73, %v69
  %vm86 = vcmask 203776
  %v88 = vsel %vm86, %v49, 0
  %vm90 = vcmask 1043456
  %vm91 = vcmask 1044480
  %v92 = vsel %vm90, 4294967295, 65535
  %v93 = vsel %vm91, %v92, 0
  %v95 = vand.u32 %v78, %v93
  %v98 = vand.u32 %v79, %v93
  %v101 = vand.u32 %v80, %v93
  %v104 = vand.u32 %v81, %v93
  %106 = vmatprep.subr.bf16.mxu0 0
  %107 = vmatpush1.bf16.msra.mxu0 0
  %108 = vmatprep.subr.bf16.mxu0 0
  %109 = vmatpush1.bf16.msra.mxu0 0
  %110 = vmatprep.subr.bf16.mxu0 0
  %111 = vmatpush1.bf16.msra.mxu0 0
  %112 = vmatprep.subr.bf16.mxu0 0
  %113 = vmatpush1.bf16.msra.mxu0 0
  %114 = vmatprep.subr.bf16.mxu0 0
  %115 = vmatpush1.bf16.msra.mxu0 0
  %116 = vmatprep.subr.bf16.mxu0 0
  %117 = vmatpush1.bf16.msra.mxu0 0
  %118 = vmatprep.subr.bf16.mxu0 %v98
  %119 = vmatpush1.bf16.msra.mxu0 %v95
  %120 = vmatprep.subr.bf16.mxu0 %v75
  %121 = vmatpush1.bf16.msra.mxu0 %v74
  %122 = vmatprep.subr.bf16.mxu0 0
  %123 = vmatpush2.bf16.msra.mxu0 0
  %124 = vmatprep.subr.bf16.mxu0 0
  %125 = vmatpush2.bf16.msra.mxu0 0
  %126 = vmatprep.subr.bf16.mxu0 0
  %127 = vmatpush2.bf16.msra.mxu0 0
  %128 = vmatprep.subr.bf16.mxu0 0
  %129 = vmatpush2.bf16.msra.mxu0 0
  %130 = vmatprep.subr.bf16.mxu0 0
  %131 = vmatpush2.bf16.msra.mxu0 0
  %132 = vmatprep.subr.bf16.mxu0 0
  %133 = vmatpush2.bf16.msra.mxu0 0
  %134 = vmatprep.subr.bf16.mxu0 0
  %135 = vmatpush2.bf16.msra.mxu0 0
  %136 = vmatprep.subr.bf16.mxu0 0
  %137 = vmatpush2.bf16.msra.mxu0 0
  %138 = vmatprep.mubr.bf16.mxu0 0
  %139 = vmatmul.mubr.bf16.gmra.mxu0 %v88
  %v140 = vpop.f32.mrf.mxu0
  %v141 = vadd.f32 0.0, %v140
  %v142 = vpop.f32.mrf.mxu0
  %v143 = vadd.f32 0.0, %v142
  %v144 = vpop.f32.mrf.mxu0
  %v145 = vadd.f32 0.0, %v144
  %v146 = vpop.f32.mrf.mxu0
  %v147 = vadd.f32 0.0, %v146
  %148 = vdwg.mxu0
  %149 = vmatprep.subr.bf16.mxu0 0
  %150 = vmatpush1.bf16.msra.mxu0 0
  %151 = vmatprep.subr.bf16.mxu0 0
  %152 = vmatpush1.bf16.msra.mxu0 0
  %153 = vmatprep.subr.bf16.mxu0 0
  %154 = vmatpush1.bf16.msra.mxu0 0
  %155 = vmatprep.subr.bf16.mxu0 0
  %156 = vmatpush1.bf16.msra.mxu0 0
  %157 = vmatprep.subr.bf16.mxu0 0
  %158 = vmatpush1.bf16.msra.mxu0 0
  %159 = vmatprep.subr.bf16.mxu0 0
  %160 = vmatpush1.bf16.msra.mxu0 0
  %161 = vmatprep.subr.bf16.mxu0 %v104
  %162 = vmatpush1.bf16.msra.mxu0 %v101
  %163 = vmatprep.subr.bf16.mxu0 %v77
  %164 = vmatpush1.bf16.msra.mxu0 %v76
  %165 = vmatprep.subr.bf16.mxu0 0
  %166 = vmatpush2.bf16.msra.mxu0 0
  %167 = vmatprep.subr.bf16.mxu0 0
  %168 = vmatpush2.bf16.msra.mxu0 0
  %169 = vmatprep.subr.bf16.mxu0 0
  %170 = vmatpush2.bf16.msra.mxu0 0
  %171 = vmatprep.subr.bf16.mxu0 0
  %172 = vmatpush2.bf16.msra.mxu0 0
  %173 = vmatprep.subr.bf16.mxu0 0
  %174 = vmatpush2.bf16.msra.mxu0 0
  %175 = vmatprep.subr.bf16.mxu0 0
  %176 = vmatpush2.bf16.msra.mxu0 0
  %177 = vmatprep.subr.bf16.mxu0 0
  %178 = vmatpush2.bf16.msra.mxu0 0
  %179 = vmatprep.subr.bf16.mxu0 0
  %180 = vmatpush2.bf16.msra.mxu0 0
  %181 = vmatprep.mubr.bf16.mxu0 0
  %182 = vmatmul.mubr.bf16.gmra.mxu0 %v88
  %v183 = vpop.f32.mrf.mxu0
  %v184 = vadd.f32 0.0, %v183
  %v185 = vpop.f32.mrf.mxu0
  %v186 = vadd.f32 0.0, %v185
  %v187 = vpop.f32.mrf.mxu0
  %v188 = vadd.f32 0.0, %v187
  %v189 = vpop.f32.mrf.mxu0
  %v190 = vadd.f32 0.0, %v189
  %191 = vdwg.mxu0
  %v192 = vadd.f32 %v27, %v141
  %v193 = vadd.f32 %v28, %v143
  %v194 = vadd.f32 %v29, %v184
  %v195 = vadd.f32 %v30, %v186
  %v196 = vadd.f32 %v31, %v145
  %v197 = vadd.f32 %v32, %v147
  %v198 = vadd.f32 %v33, %v188
  %v199 = vadd.f32 %v34, %v190
  %200 = vst [vmem:[#allocation2] sm:$0xff] %v192
  %201 = vst [vmem:[#allocation2 + $0x8] sm:$0xff] %v193
  %202 = vst [vmem:[#allocation2 + $0x10] sm:$0xff] %v194
  %203 = vst [vmem:[#allocation2 + $0x18] sm:$0xff] %v195
  %204 = vst [vmem:[#allocation2 + $0x20] sm:$0xff] %v196
  %205 = vst [vmem:[#allocation2 + $0x28] sm:$0xff] %v197
  %206 = vst [vmem:[#allocation2 + $0x30] sm:$0xff] %v198
  %207 = vst [vmem:[#allocation2 + $0x38] sm:$0xff] %v199
  // Predicated region
  $region18: #{vvbp_forward.16} parent=0 // pred_check
    %p208 = pneg %p15
  $region19: #{vvbp_forward.16} parent=0 // pred_check_branch
    %210 = sbr.rel (%p208) target = $region21
  $region20: #{vvbp_forward.16} parent=0 // pred_region
    %v211 = vld [vmem:[#allocation2] sm:$0xff]
    %v212 = vld [vmem:[#allocation2 + $0x8] sm:$0xff]
    %v213 = vld [vmem:[#allocation2 + $0x10] sm:$0xff]
    %v214 = vld [vmem:[#allocation2 + $0x18] sm:$0xff]
    %v215 = vld [vmem:[#allocation2 + $0x20] sm:$0xff]
    %v216 = vld [vmem:[#allocation2 + $0x28] sm:$0xff]
    %v217 = vld [vmem:[#allocation2 + $0x30] sm:$0xff]
    %v218 = vld [vmem:[#allocation2 + $0x38] sm:$0xff]
    %v219 = vld [vmem:[%s2] sm:$0xff]
    %v220 = vld [vmem:[%s2 + $0x8] sm:$0xff]
    %222 = vset.pattern.permute.xlu0 0
    %223 = vperm.xlu0 %222, %v219
    %v224 = vpop.permute.xlu0 %223
    %227 = vset.pattern.permute.xlu0 0
    %228 = vperm.xlu0 %227, %v220
    %v229 = vpop.permute.xlu0 %228
    %v231 = vadd.f32 %v211, %v224
    %v232 = vadd.f32 %v212, %v224
    %v233 = vadd.f32 %v213, %v224
    %v234 = vadd.f32 %v214, %v224
    %v235 = vadd.f32 %v215, %v229
    %v236 = vadd.f32 %v216, %v229
    %v237 = vadd.f32 %v217, %v229
    %v238 = vadd.f32 %v218, %v229
    %v239 = vmax.f32 %v231, 0.0
    %v240 = vmax.f32 %v232, 0.0
    %v241 = vmax.f32 %v233, 0.0
    %v242 = vmax.f32 %v234, 0.0
    %v243 = vmax.f32 %v235, 0.0
    %v244 = vmax.f32 %v236, 0.0
    %v245 = vmax.f32 %v237, 0.0
    %v246 = vmax.f32 %v238, 0.0
    %247 = vst [vmem:[%s3] sm:$0xff] %v239
    %248 = vst [vmem:[%s3 + $0x8] sm:$0xff] %v240
    %249 = vst [vmem:[%s3 + $0x10] sm:$0xff] %v241
    %250 = vst [vmem:[%s3 + $0x18] sm:$0xff] %v242
    %251 = vst [vmem:[%s3 + $0x20] sm:$0xff] %v243
    %252 = vst [vmem:[%s3 + $0x28] sm:$0xff] %v244
    %253 = vst [vmem:[%s3 + $0x30] sm:$0xff] %v245
    %254 = vst [vmem:[%s3 + $0x38] sm:$0xff] %v246
  $region21: #{vvbp_forward.16} parent=0 // pred_fallthru
    _
  // Predicated region
  $region22: #{vvbp_forward.16} parent=0 // pred_check
    _
  $region23: #{vvbp_forward.16} parent=0 // pred_check_branch
    %256 = sbr.rel (0) target = $region25
  $region24: #{vvbp_forward.16} parent=0 // pred_region
    _
  $region25: #{vvbp_forward.16} parent=0 // pred_fallthru
    _
  // Predicated region
  $region26: #{vvbp_forward.16} parent=0 // pred_check
    _
  $region27: #{vvbp_forward.16} parent=0 // pred_check_branch
    %258 = sbr.rel (0) target = $region29
  $region28: #{vvbp_forward.16} parent=0 // pred_region
    _
  $region29: #{vvbp_forward.16} parent=0 // pred_fallthru
    _

// kernel: vvbp_forward.17
$region0: #{vvbp_forward.17}
  #allocation0 [shape = 'u32[]', space=smem, size = 0x4, offset = 0x4, fixed_abs, tag = 'smem constant byte address 0x4 - core index']
  #allocation1 [shape = 'u32[144,128]{1,0:T(1,128)}', space=vmem, size = 0x12000, scoped, tag = 'internal scratch']
  #allocation2 [shape = 'f32[16,512]{1,0:T(8,128)}', space=vmem, size = 0x8000, scoped, tag = 'scratch operand']
  %s0 = inlined_call_operand.vmem [shape: bf16[16,400], index: 0, kind: input, shape index: {}]
  %s1 = inlined_call_operand.vmem [shape: bf16[400,512], index: 1, kind: input, shape index: {}]
  %s2 = inlined_call_operand.vmem [shape: f32[16,1], index: 2, kind: input, shape index: {}]
  %s3 = inlined_call_operand.vmem [shape: f32[16,512], index: 3, kind: output, shape index: {}]
  %s4 = sld [smem:[#allocation0]]
  $region30: #{vvbp_forward.17} parent=0
    _
  %s6 = ssub.s32 1, %s4
  %s7 = scalar_select 0, %s6, %s4
  // Predicated region
  $region2: #{vvbp_forward.17} parent=0 // pred_check
    _
  $region3: #{vvbp_forward.17} parent=0 // pred_check_branch
    %9 = sbr.rel (0) target = $region5
  $region4: #{vvbp_forward.17} parent=0 // pred_region
    _
  $region5: #{vvbp_forward.17} parent=0 // pred_fallthru
    _
  // Predicated region
  $region6: #{vvbp_forward.17} parent=0 // pred_check
    _
  $region7: #{vvbp_forward.17} parent=0 // pred_check_branch
    %11 = sbr.rel (0) target = $region9
  $region8: #{vvbp_forward.17} parent=0 // pred_region
    _
  $region9: #{vvbp_forward.17} parent=0 // pred_fallthru
    _
  // Predicated region
  $region10: #{vvbp_forward.17} parent=0 // pred_check
    _
  $region11: #{vvbp_forward.17} parent=0 // pred_check_branch
    %13 = sbr.rel (0) target = $region13
  $region12: #{vvbp_forward.17} parent=0 // pred_region
    _
  $region13: #{vvbp_forward.17} parent=0 // pred_fallthru
    _
  %p15 = scmp.eq.s32.totalorder 0, 0
  // Predicated region
  $region14: #{vvbp_forward.17} parent=0 // pred_check
    %p16 = pneg %p15
  $region15: #{vvbp_forward.17} parent=0 // pred_check_branch
    %18 = sbr.rel (%p16) target = $region17
  $region16: #{vvbp_forward.17} parent=0 // pred_region
    %19 = vst [vmem:[#allocation2] sm:$0xff] 0.0
    %20 = vst [vmem:[#allocation2 + $0x8] sm:$0xff] 0.0
    %21 = vst [vmem:[#allocation2 + $0x10] sm:$0xff] 0.0
    %22 = vst [vmem:[#allocation2 + $0x18] sm:$0xff] 0.0
    %23 = vst [vmem:[#allocation2 + $0x20] sm:$0xff] 0.0
    %24 = vst [vmem:[#allocation2 + $0x28] sm:$0xff] 0.0
    %25 = vst [vmem:[#allocation2 + $0x30] sm:$0xff] 0.0
    %26 = vst [vmem:[#allocation2 + $0x38] sm:$0xff] 0.0
  $region17: #{vvbp_forward.17} parent=0 // pred_fallthru
    _
  %v27 = vld [vmem:[#allocation2] sm:$0xff]
  %v28 = vld [vmem:[#allocation2 + $0x8] sm:$0xff]
  %v29 = vld [vmem:[#allocation2 + $0x10] sm:$0xff]
  %v30 = vld [vmem:[#allocation2 + $0x18] sm:$0xff]
  %v31 = vld [vmem:[#allocation2 + $0x20] sm:$0xff]
  %v32 = vld [vmem:[#allocation2 + $0x28] sm:$0xff]
  %v33 = vld [vmem:[#allocation2 + $0x30] sm:$0xff]
  %v34 = vld [vmem:[#allocation2 + $0x38] sm:$0xff]
  %v35 = vld [vmem:[%s0] sm:$0xff]
  %v36 = vld [vmem:[%s0 + $0x8] sm:$0xff]
  %v37 = vld [vmem:[%s0 + $0x10] sm:$0xff]
  %v38 = vld [vmem:[%s0 + $0x18] sm:$0xff]
  %v39 = vld [vmem:[%s1] sm:$0xff]
  %v40 = vld [vmem:[%s1 + $0x8] sm:$0xff]
  %v41 = vld [vmem:[%s1 + $0x10] sm:$0xff]
  %v42 = vld [vmem:[%s1 + $0x18] sm:$0xff]
  %v43 = vld [vmem:[%s1 + $0x20] sm:$0xff]
  %v44 = vld [vmem:[%s1 + $0x28] sm:$0xff]
  %v45 = vld [vmem:[%s1 + $0x30] sm:$0xff]
  %v46 = vld [vmem:[%s1 + $0x38] sm:$0xff]
  %v47 = vld [vmem:[%s1 + $0x40] sm:$0xff]
  %v48 = vld [vmem:[%s1 + $0x48] sm:$0xff]
  %v49 = vld [vmem:[%s1 + $0x50] sm:$0xff]
  %v50 = vld [vmem:[%s1 + $0x58] sm:$0xff]
  %v51 = vld [vmem:[%s1 + $0x60] sm:$0xff]
  %v52 = vld [vmem:[%s1 + $0x68] sm:$0xff]
  %v53 = vld [vmem:[%s1 + $0x70] sm:$0xff]
  %v54 = vld [vmem:[%s1 + $0x78] sm:$0xff]
  %v55 = vld [vmem:[%s1 + $0x80] sm:$0xff]
  %v56 = vld [vmem:[%s1 + $0x88] sm:$0xff]
  %v57 = vld [vmem:[%s1 + $0x90] sm:$0xff]
  %v58 = vld [vmem:[%s1 + $0x98] sm:$0xff]
  %v59 = vld [vmem:[%s1 + $0xa0] sm:$0xff]
  %v60 = vld [vmem:[%s1 + $0xa8] sm:$0xff]
  %v61 = vld [vmem:[%s1 + $0xb0] sm:$0xff]
  %v62 = vld [vmem:[%s1 + $0xb8] sm:$0xff]
  %v63 = vld [vmem:[%s1 + $0xc0] sm:$0xff]
  %v64 = vld [vmem:[%s1 + $0xc8] sm:$0xff]
  %v65 = vld [vmem:[%s1 + $0xd0] sm:$0xff]
  %v66 = vld [vmem:[%s1 + $0xd8] sm:$0xff]
  %v67 = vld [vmem:[%s1 + $0xe0] sm:$0xff]
  %v68 = vld [vmem:[%s1 + $0xe8] sm:$0xff]
  %v69 = vld [vmem:[%s1 + $0xf0] sm:$0xff]
  %v70 = vld [vmem:[%s1 + $0xf8] sm:$0xff]
  %v71 = vld [vmem:[%s1 + $0x100] sm:$0xff]
  %v72 = vld [vmem:[%s1 + $0x108] sm:$0xff]
  %v73 = vld [vmem:[%s1 + $0x110] sm:$0xff]
  %v74 = vld [vmem:[%s1 + $0x118] sm:$0xff]
  %v75 = vld [vmem:[%s1 + $0x120] sm:$0xff]
  %v76 = vld [vmem:[%s1 + $0x128] sm:$0xff]
  %v77 = vld [vmem:[%s1 + $0x130] sm:$0xff]
  %v78 = vld [vmem:[%s1 + $0x138] sm:$0xff]
  %v79 = vld [vmem:[%s1 + $0x140] sm:$0xff]
  %v80 = vld [vmem:[%s1 + $0x148] sm:$0xff]
  %v81 = vld [vmem:[%s1 + $0x150] sm:$0xff]
  %v82 = vld [vmem:[%s1 + $0x158] sm:$0xff]
  %v83 = vld [vmem:[%s1 + $0x160] sm:$0xff]
  %v84 = vld [vmem:[%s1 + $0x168] sm:$0xff]
  %v85 = vld [vmem:[%s1 + $0x170] sm:$0xff]
  %v86 = vld [vmem:[%s1 + $0x178] sm:$0xff]
  %v87 = vld [vmem:[%s1 + $0x180] sm:$0xff]
  %v88 = vld [vmem:[%s1 + $0x188] sm:$0xff]
  %v89 = vld [vmem:[%s1 + $0x190] sm:$0xff]
  %v90 = vld [vmem:[%s1 + $0x198] sm:$0xff]
  %v91 = vld [vmem:[%s1 + $0x1a0] sm:$0xff]
  %v92 = vld [vmem:[%s1 + $0x1a8] sm:$0xff]
  %v93 = vld [vmem:[%s1 + $0x1b0] sm:$0xff]
  %v94 = vld [vmem:[%s1 + $0x1b8] sm:$0xff]
  %v95 = vld [vmem:[%s1 + $0x1c0] sm:$0xff]
  %v96 = vld [vmem:[%s1 + $0x1c8] sm:$0xff]
  %v97 = vld [vmem:[%s1 + $0x1d0] sm:$0xff]
  %v98 = vld [vmem:[%s1 + $0x1d8] sm:$0xff]
  %v99 = vld [vmem:[%s1 + $0x1e0] sm:$0xff]
  %v100 = vld [vmem:[%s1 + $0x1e8] sm:$0xff]
  %v101 = vld [vmem:[%s1 + $0x1f0] sm:$0xff]
  %v102 = vld [vmem:[%s1 + $0x1f8] sm:$0xff]
  %v103 = vld [vmem:[%s1 + $0x200] sm:$0xff]
  %v104 = vld [vmem:[%s1 + $0x208] sm:$0xff]
  %v105 = vld [vmem:[%s1 + $0x210] sm:$0xff]
  %v106 = vld [vmem:[%s1 + $0x218] sm:$0xff]
  %v107 = vld [vmem:[%s1 + $0x220] sm:$0xff]
  %v108 = vld [vmem:[%s1 + $0x228] sm:$0xff]
  %v109 = vld [vmem:[%s1 + $0x230] sm:$0xff]
  %v110 = vld [vmem:[%s1 + $0x238] sm:$0xff]
  %v111 = vld [vmem:[%s1 + $0x240] sm:$0xff]
  %v112 = vld [vmem:[%s1 + $0x248] sm:$0xff]
  %v113 = vld [vmem:[%s1 + $0x250] sm:$0xff]
  %v114 = vld [vmem:[%s1 + $0x258] sm:$0xff]
  %v115 = vld [vmem:[%s1 + $0x260] sm:$0xff]
  %v116 = vld [vmem:[%s1 + $0x268] sm:$0xff]
  %v117 = vld [vmem:[%s1 + $0x270] sm:$0xff]
  %v118 = vld [vmem:[%s1 + $0x278] sm:$0xff]
  %v119 = vld [vmem:[%s1 + $0x280] sm:$0xff]
  %v120 = vld [vmem:[%s1 + $0x288] sm:$0xff]
  %v121 = vld [vmem:[%s1 + $0x290] sm:$0xff]
  %v122 = vld [vmem:[%s1 + $0x298] sm:$0xff]
  %v123 = vld [vmem:[%s1 + $0x2a0] sm:$0xff]
  %v124 = vld [vmem:[%s1 + $0x2a8] sm:$0xff]
  %v125 = vld [vmem:[%s1 + $0x2b0] sm:$0xff]
  %v126 = vld [vmem:[%s1 + $0x2b8] sm:$0xff]
  %v127 = vld [vmem:[%s1 + $0x2c0] sm:$0xff]
  %v128 = vld [vmem:[%s1 + $0x2c8] sm:$0xff]
  %v129 = vld [vmem:[%s1 + $0x2d0] sm:$0xff]
  %v130 = vld [vmem:[%s1 + $0x2d8] sm:$0xff]
  %v131 = vld [vmem:[%s1 + $0x2e0] sm:$0xff]
  %v132 = vld [vmem:[%s1 + $0x2e8] sm:$0xff]
  %v133 = vld [vmem:[%s1 + $0x2f0] sm:$0xff]
  %v134 = vld [vmem:[%s1 + $0x2f8] sm:$0xff]
  %v135 = vld [vmem:[%s1 + $0x300] sm:$0xff]
  %v136 = vld [vmem:[%s1 + $0x308] sm:$0xff]
  %v137 = vld [vmem:[%s1 + $0x310] sm:$0xff]
  %v138 = vld [vmem:[%s1 + $0x318] sm:$0xff]
  %v143 = vunpack.c.l.b16 %v35
  %v144 = vunpack.c.h.b16 %v35
  %v145 = vunpack.c.l.b16 %v36
  %v146 = vunpack.c.h.b16 %v36
  %v147 = vunpack.c.l.b16 %v37
  %v148 = vunpack.c.h.b16 %v37
  %v149 = vunpack.c.l.b16 %v38
  %v150 = vunpack.c.h.b16 %v38
  %v151 = vpack.c.b16 %v147, %v143
  %v152 = vpack.c.b16 %v148, %v144
  %v153 = vpack.c.b16 %v149, %v145
  %v154 = vpack.c.b16 %v150, %v146
  %v258 = vunpack.c.l.b16 %v39
  %v259 = vunpack.c.h.b16 %v39
  %v260 = vunpack.c.l.b16 %v40
  %v261 = vunpack.c.h.b16 %v40
  %v262 = vunpack.c.l.b16 %v41
  %v263 = vunpack.c.h.b16 %v41
  %v264 = vunpack.c.l.b16 %v42
  %v265 = vunpack.c.h.b16 %v42
  %v266 = vunpack.c.l.b16 %v43
  %v267 = vunpack.c.h.b16 %v43
  %v268 = vunpack.c.l.b16 %v44
  %v269 = vunpack.c.h.b16 %v44
  %v270 = vunpack.c.l.b16 %v45
  %v271 = vunpack.c.h.b16 %v45
  %v272 = vunpack.c.l.b16 %v46
  %v273 = vunpack.c.h.b16 %v46
  %v274 = vunpack.c.l.b16 %v47
  %v275 = vunpack.c.h.b16 %v47
  %v276 = vunpack.c.l.b16 %v48
  %v277 = vunpack.c.h.b16 %v48
  %v278 = vunpack.c.l.b16 %v49
  %v279 = vunpack.c.h.b16 %v49
  %v280 = vunpack.c.l.b16 %v50
  %v281 = vunpack.c.h.b16 %v50
  %v282 = vunpack.c.l.b16 %v51
  %v283 = vunpack.c.h.b16 %v51
  %v284 = vunpack.c.l.b16 %v52
  %v285 = vunpack.c.h.b16 %v52
  %v286 = vunpack.c.l.b16 %v53
  %v287 = vunpack.c.h.b16 %v53
  %v288 = vunpack.c.l.b16 %v54
  %v289 = vunpack.c.h.b16 %v54
  %v290 = vunpack.c.l.b16 %v55
  %v291 = vunpack.c.h.b16 %v55
  %v292 = vunpack.c.l.b16 %v56
  %v293 = vunpack.c.h.b16 %v56
  %v294 = vunpack.c.l.b16 %v57
  %v295 = vunpack.c.h.b16 %v57
  %v296 = vunpack.c.l.b16 %v58
  %v297 = vunpack.c.h.b16 %v58
  %v298 = vunpack.c.l.b16 %v59
  %v299 = vunpack.c.h.b16 %v59
  %v300 = vunpack.c.l.b16 %v60
  %v301 = vunpack.c.h.b16 %v60
  %v302 = vunpack.c.l.b16 %v61
  %v303 = vunpack.c.h.b16 %v61
  %v304 = vunpack.c.l.b16 %v62
  %v305 = vunpack.c.h.b16 %v62
  %v306 = vunpack.c.l.b16 %v63
  %v307 = vunpack.c.h.b16 %v63
  %v308 = vunpack.c.l.b16 %v64
  %v309 = vunpack.c.h.b16 %v64
  %v310 = vunpack.c.l.b16 %v65
  %v311 = vunpack.c.h.b16 %v65
  %v312 = vunpack.c.l.b16 %v66
  %v313 = vunpack.c.h.b16 %v66
  %v314 = vunpack.c.l.b16 %v67
  %v315 = vunpack.c.h.b16 %v67
  %v316 = vunpack.c.l.b16 %v68
  %v317 = vunpack.c.h.b16 %v68
  %v318 = vunpack.c.l.b16 %v69
  %v319 = vunpack.c.h.b16 %v69
  %v320 = vunpack.c.l.b16 %v70
  %v321 = vunpack.c.h.b16 %v70
  %v322 = vunpack.c.l.b16 %v71
  %v323 = vunpack.c.h.b16 %v71
  %v324 = vunpack.c.l.b16 %v72
  %v325 = vunpack.c.h.b16 %v72
  %v326 = vunpack.c.l.b16 %v73
  %v327 = vunpack.c.h.b16 %v73
  %v328 = vunpack.c.l.b16 %v74
  %v329 = vunpack.c.h.b16 %v74
  %v330 = vunpack.c.l.b16 %v75
  %v331 = vunpack.c.h.b16 %v75
  %v332 = vunpack.c.l.b16 %v76
  %v333 = vunpack.c.h.b16 %v76
  %v334 = vunpack.c.l.b16 %v77
  %v335 = vunpack.c.h.b16 %v77
  %v336 = vunpack.c.l.b16 %v78
  %v337 = vunpack.c.h.b16 %v78
  %v338 = vunpack.c.l.b16 %v79
  %v339 = vunpack.c.h.b16 %v79
  %v340 = vunpack.c.l.b16 %v80
  %v341 = vunpack.c.h.b16 %v80
  %v342 = vunpack.c.l.b16 %v81
  %v343 = vunpack.c.h.b16 %v81
  %v344 = vunpack.c.l.b16 %v82
  %v345 = vunpack.c.h.b16 %v82
  %v346 = vunpack.c.l.b16 %v83
  %v347 = vunpack.c.h.b16 %v83
  %v348 = vunpack.c.l.b16 %v84
  %v349 = vunpack.c.h.b16 %v84
  %v350 = vunpack.c.l.b16 %v85
  %v351 = vunpack.c.h.b16 %v85
  %v352 = vunpack.c.l.b16 %v86
  %v353 = vunpack.c.h.b16 %v86
  %v354 = vunpack.c.l.b16 %v87
  %v355 = vunpack.c.h.b16 %v87
  %v356 = vunpack.c.l.b16 %v88
  %v357 = vunpack.c.h.b16 %v88
  %v358 = vunpack.c.l.b16 %v89
  %v359 = vunpack.c.h.b16 %v89
  %v360 = vunpack.c.l.b16 %v90
  %v361 = vunpack.c.h.b16 %v90
  %v362 = vunpack.c.l.b16 %v91
  %v363 = vunpack.c.h.b16 %v91
  %v364 = vunpack.c.l.b16 %v92
  %v365 = vunpack.c.h.b16 %v92
  %v366 = vunpack.c.l.b16 %v93
  %v367 = vunpack.c.h.b16 %v93
  %v368 = vunpack.c.l.b16 %v94
  %v369 = vunpack.c.h.b16 %v94
  %v370 = vunpack.c.l.b16 %v95
  %v371 = vunpack.c.h.b16 %v95
  %v372 = vunpack.c.l.b16 %v96
  %v373 = vunpack.c.h.b16 %v96
  %v374 = vunpack.c.l.b16 %v97
  %v375 = vunpack.c.h.b16 %v97
  %v376 = vunpack.c.l.b16 %v98
  %v377 = vunpack.c.h.b16 %v98
  %v378 = vunpack.c.l.b16 %v99
  %v379 = vunpack.c.h.b16 %v99
  %v380 = vunpack.c.l.b16 %v100
  %v381 = vunpack.c.h.b16 %v100
  %v382 = vunpack.c.l.b16 %v101
  %v383 = vunpack.c.h.b16 %v101
  %v384 = vunpack.c.l.b16 %v102
  %v385 = vunpack.c.h.b16 %v102
  %v386 = vunpack.c.l.b16 %v103
  %v387 = vunpack.c.h.b16 %v103
  %v388 = vunpack.c.l.b16 %v104
  %v389 = vunpack.c.h.b16 %v104
  %v390 = vunpack.c.l.b16 %v105
  %v391 = vunpack.c.h.b16 %v105
  %v392 = vunpack.c.l.b16 %v106
  %v393 = vunpack.c.h.b16 %v106
  %v394 = vunpack.c.l.b16 %v107
  %v395 = vunpack.c.h.b16 %v107
  %v396 = vunpack.c.l.b16 %v108
  %v397 = vunpack.c.h.b16 %v108
  %v398 = vunpack.c.l.b16 %v109
  %v399 = vunpack.c.h.b16 %v109
  %v400 = vunpack.c.l.b16 %v110
  %v401 = vunpack.c.h.b16 %v110
  %v402 = vunpack.c.l.b16 %v111
  %v403 = vunpack.c.h.b16 %v111
  %v404 = vunpack.c.l.b16 %v112
  %v405 = vunpack.c.h.b16 %v112
  %v406 = vunpack.c.l.b16 %v113
  %v407 = vunpack.c.h.b16 %v113
  %v408 = vunpack.c.l.b16 %v114
  %v409 = vunpack.c.h.b16 %v114
  %v410 = vunpack.c.l.b16 %v115
  %v411 = vunpack.c.h.b16 %v115
  %v412 = vunpack.c.l.b16 %v116
  %v413 = vunpack.c.h.b16 %v116
  %v414 = vunpack.c.l.b16 %v117
  %v415 = vunpack.c.h.b16 %v117
  %v416 = vunpack.c.l.b16 %v118
  %v417 = vunpack.c.h.b16 %v118
  %v418 = vunpack.c.l.b16 %v119
  %v419 = vunpack.c.h.b16 %v119
  %v420 = vunpack.c.l.b16 %v120
  %v421 = vunpack.c.h.b16 %v120
  %v422 = vunpack.c.l.b16 %v121
  %v423 = vunpack.c.h.b16 %v121
  %v424 = vunpack.c.l.b16 %v122
  %v425 = vunpack.c.h.b16 %v122
  %v426 = vunpack.c.l.b16 %v123
  %v427 = vunpack.c.h.b16 %v123
  %v428 = vunpack.c.l.b16 %v124
  %v429 = vunpack.c.h.b16 %v124
  %v430 = vunpack.c.l.b16 %v125
  %v431 = vunpack.c.h.b16 %v125
  %v432 = vunpack.c.l.b16 %v126
  %v433 = vunpack.c.h.b16 %v126
  %v434 = vunpack.c.l.b16 %v127
  %v435 = vunpack.c.h.b16 %v127
  %v436 = vunpack.c.l.b16 %v128
  %v437 = vunpack.c.h.b16 %v128
  %v438 = vunpack.c.l.b16 %v129
  %v439 = vunpack.c.h.b16 %v129
  %v440 = vunpack.c.l.b16 %v130
  %v441 = vunpack.c.h.b16 %v130
  %v442 = vunpack.c.l.b16 %v131
  %v443 = vunpack.c.h.b16 %v131
  %v444 = vunpack.c.l.b16 %v132
  %v445 = vunpack.c.h.b16 %v132
  %v446 = vunpack.c.l.b16 %v133
  %v447 = vunpack.c.h.b16 %v133
  %v448 = vunpack.c.l.b16 %v134
  %v449 = vunpack.c.h.b16 %v134
  %v450 = vunpack.c.l.b16 %v135
  %v451 = vunpack.c.h.b16 %v135
  %v452 = vunpack.c.l.b16 %v136
  %v453 = vunpack.c.h.b16 %v136
  %v454 = vunpack.c.l.b16 %v137
  %v455 = vunpack.c.h.b16 %v137
  %v456 = vunpack.c.l.b16 %v138
  %v457 = vunpack.c.h.b16 %v138
  %v458 = vpack.c.b16 %v262, %v258
  %v459 = vpack.c.b16 %v263, %v259
  %v460 = vpack.c.b16 %v264, %v260
  %v461 = vpack.c.b16 %v265, %v261
  %v462 = vpack.c.b16 %v270, %v266
  %v463 = vpack.c.b16 %v271, %v267
  %v464 = vpack.c.b16 %v272, %v268
  %v465 = vpack.c.b16 %v273, %v269
  %v466 = vpack.c.b16 %v278, %v274
  %v467 = vpack.c.b16 %v279, %v275
  %v468 = vpack.c.b16 %v280, %v276
  %v469 = vpack.c.b16 %v281, %v277
  %v470 = vpack.c.b16 %v286, %v282
  %v471 = vpack.c.b16 %v287, %v283
  %v472 = vpack.c.b16 %v288, %v284
  %v473 = vpack.c.b16 %v289, %v285
  %v474 = vpack.c.b16 %v294, %v290
  %v475 = vpack.c.b16 %v295, %v291
  %v476 = vpack.c.b16 %v296, %v292
  %v477 = vpack.c.b16 %v297, %v293
  %v478 = vpack.c.b16 %v302, %v298
  %v479 = vpack.c.b16 %v303, %v299
  %v480 = vpack.c.b16 %v304, %v300
  %v481 = vpack.c.b16 %v305, %v301
  %v482 = vpack.c.b16 %v310, %v306
  %v483 = vpack.c.b16 %v311, %v307
  %v484 = vpack.c.b16 %v312, %v308
  %v485 = vpack.c.b16 %v313, %v309
  %v486 = vpack.c.b16 %v318, %v314
  %v487 = vpack.c.b16 %v319, %v315
  %v488 = vpack.c.b16 %v320, %v316
  %v489 = vpack.c.b16 %v321, %v317
  %v490 = vpack.c.b16 %v326, %v322
  %v491 = vpack.c.b16 %v327, %v323
  %v492 = vpack.c.b16 %v328, %v324
  %v493 = vpack.c.b16 %v329, %v325
  %v494 = vpack.c.b16 %v334, %v330
  %v495 = vpack.c.b16 %v335, %v331
  %v496 = vpack.c.b16 %v336, %v332
  %v497 = vpack.c.b16 %v337, %v333
  %v498 = vpack.c.b16 %v342, %v338
  %v499 = vpack.c.b16 %v343, %v339
  %v500 = vpack.c.b16 %v344, %v340
  %v501 = vpack.c.b16 %v345, %v341
  %v502 = vpack.c.b16 %v350, %v346
  %v503 = vpack.c.b16 %v351, %v347
  %v504 = vpack.c.b16 %v352, %v348
  %v505 = vpack.c.b16 %v353, %v349
  %v506 = vpack.c.b16 %v358, %v354
  %v507 = vpack.c.b16 %v359, %v355
  %v508 = vpack.c.b16 %v360, %v356
  %v509 = vpack.c.b16 %v361, %v357
  %v510 = vpack.c.b16 %v366, %v362
  %v511 = vpack.c.b16 %v367, %v363
  %v512 = vpack.c.b16 %v368, %v364
  %v513 = vpack.c.b16 %v369, %v365
  %v514 = vpack.c.b16 %v374, %v370
  %v515 = vpack.c.b16 %v375, %v371
  %v516 = vpack.c.b16 %v376, %v372
  %v517 = vpack.c.b16 %v377, %v373
  %v518 = vpack.c.b16 %v382, %v378
  %v519 = vpack.c.b16 %v383, %v379
  %v520 = vpack.c.b16 %v384, %v380
  %v521 = vpack.c.b16 %v385, %v381
  %v522 = vpack.c.b16 %v390, %v386
  %v523 = vpack.c.b16 %v391, %v387
  %v524 = vpack.c.b16 %v392, %v388
  %v525 = vpack.c.b16 %v393, %v389
  %v526 = vpack.c.b16 %v398, %v394
  %v527 = vpack.c.b16 %v399, %v395
  %v528 = vpack.c.b16 %v400, %v396
  %v529 = vpack.c.b16 %v401, %v397
  %v530 = vpack.c.b16 %v406, %v402
  %v531 = vpack.c.b16 %v407, %v403
  %v532 = vpack.c.b16 %v408, %v404
  %v533 = vpack.c.b16 %v409, %v405
  %v534 = vpack.c.b16 %v414, %v410
  %v535 = vpack.c.b16 %v415, %v411
  %v536 = vpack.c.b16 %v416, %v412
  %v537 = vpack.c.b16 %v417, %v413
  %v538 = vpack.c.b16 %v422, %v418
  %v539 = vpack.c.b16 %v423, %v419
  %v540 = vpack.c.b16 %v424, %v420
  %v541 = vpack.c.b16 %v425, %v421
  %v542 = vpack.c.b16 %v430, %v426
  %v543 = vpack.c.b16 %v431, %v427
  %v544 = vpack.c.b16 %v432, %v428
  %v545 = vpack.c.b16 %v433, %v429
  %v546 = vpack.c.b16 %v438, %v434
  %v547 = vpack.c.b16 %v439, %v435
  %v548 = vpack.c.b16 %v440, %v436
  %v549 = vpack.c.b16 %v441, %v437
  %v550 = vpack.c.b16 %v446, %v442
  %v551 = vpack.c.b16 %v447, %v443
  %v552 = vpack.c.b16 %v448, %v444
  %v553 = vpack.c.b16 %v449, %v445
  %v554 = vpack.c.b16 %v454, %v450
  %v555 = vpack.c.b16 %v455, %v451
  %v556 = vpack.c.b16 %v456, %v452
  %v557 = vpack.c.b16 %v457, %v453
  %vm658 = vcmask 130048
  %v660 = vsel %vm658, %v154, 0
  %662 = vmatprep.subr.bf16.mxu0 %v487
  %663 = vmatpush1.bf16.msra.mxu0 %v486
  %664 = vmatprep.subr.bf16.mxu0 %v483
  %665 = vmatpush1.bf16.msra.mxu0 %v482
  %666 = vmatprep.subr.bf16.mxu0 %v479
  %667 = vmatpush1.bf16.msra.mxu0 %v478
  %668 = vmatprep.subr.bf16.mxu0 %v475
  %669 = vmatpush1.bf16.msra.mxu0 %v474
  %670 = vmatprep.subr.bf16.mxu0 %v471
  %671 = vmatpush1.bf16.msra.mxu0 %v470
  %672 = vmatprep.subr.bf16.mxu0 %v467
  %673 = vmatpush1.bf16.msra.mxu0 %v466
  %674 = vmatprep.subr.bf16.mxu0 %v463
  %675 = vmatpush1.bf16.msra.mxu0 %v462
  %676 = vmatprep.subr.bf16.mxu0 %v459
  %677 = vmatpush1.bf16.msra.mxu0 %v458
  %678 = vmatprep.subr.bf16.mxu0 %v519
  %679 = vmatpush2.bf16.msra.mxu0 %v518
  %680 = vmatprep.subr.bf16.mxu0 %v515
  %681 = vmatpush2.bf16.msra.mxu0 %v514
  %682 = vmatprep.subr.bf16.mxu0 %v511
  %683 = vmatpush2.bf16.msra.mxu0 %v510
  %684 = vmatprep.subr.bf16.mxu0 %v507
  %685 = vmatpush2.bf16.msra.mxu0 %v506
  %686 = vmatprep.subr.bf16.mxu0 %v503
  %687 = vmatpush2.bf16.msra.mxu0 %v502
  %688 = vmatprep.subr.bf16.mxu0 %v499
  %689 = vmatpush2.bf16.msra.mxu0 %v498
  %690 = vmatprep.subr.bf16.mxu0 %v495
  %691 = vmatpush2.bf16.msra.mxu0 %v494
  %692 = vmatprep.subr.bf16.mxu0 %v491
  %693 = vmatpush2.bf16.msra.mxu0 %v490
  %694 = vmatprep.mubr.bf16.mxu0 %v152
  %695 = vmatmul.mubr.bf16.gmra.mxu0 %v151
  %v696 = vpop.f32.mrf.mxu0
  %v697 = vadd.f32 0.0, %v696
  %v698 = vpop.f32.mrf.mxu0
  %v699 = vadd.f32 0.0, %v698
  %v700 = vpop.f32.mrf.mxu0
  %v701 = vadd.f32 0.0, %v700
  %v702 = vpop.f32.mrf.mxu0
  %v703 = vadd.f32 0.0, %v702
  %704 = vdwg.mxu0
  %705 = vmatprep.subr.bf16.mxu0 %v551
  %706 = vmatpush1.bf16.msra.mxu0 %v550
  %707 = vmatprep.subr.bf16.mxu0 %v547
  %708 = vmatpush1.bf16.msra.mxu0 %v546
  %709 = vmatprep.subr.bf16.mxu0 %v543
  %710 = vmatpush1.bf16.msra.mxu0 %v542
  %711 = vmatprep.subr.bf16.mxu0 %v539
  %712 = vmatpush1.bf16.msra.mxu0 %v538
  %713 = vmatprep.subr.bf16.mxu0 %v535
  %714 = vmatpush1.bf16.msra.mxu0 %v534
  %715 = vmatprep.subr.bf16.mxu0 %v531
  %716 = vmatpush1.bf16.msra.mxu0 %v530
  %717 = vmatprep.subr.bf16.mxu0 %v527
  %718 = vmatpush1.bf16.msra.mxu0 %v526
  %719 = vmatprep.subr.bf16.mxu0 %v523
  %720 = vmatpush1.bf16.msra.mxu0 %v522
  %721 = vmatprep.subr.bf16.mxu0 0
  %722 = vmatpush2.bf16.msra.mxu0 0
  %723 = vmatprep.subr.bf16.mxu0 0
  %724 = vmatpush2.bf16.msra.mxu0 0
  %725 = vmatprep.subr.bf16.mxu0 0
  %726 = vmatpush2.bf16.msra.mxu0 0
  %727 = vmatprep.subr.bf16.mxu0 0
  %728 = vmatpush2.bf16.msra.mxu0 0
  %729 = vmatprep.subr.bf16.mxu0 0
  %730 = vmatpush2.bf16.msra.mxu0 0
  %731 = vmatprep.subr.bf16.mxu0 0
  %732 = vmatpush2.bf16.msra.mxu0 0
  %733 = vmatprep.subr.bf16.mxu0 0
  %734 = vmatpush2.bf16.msra.mxu0 0
  %735 = vmatprep.subr.bf16.mxu0 %v555
  %736 = vmatpush2.bf16.msra.mxu0 %v554
  %737 = vmatprep.mubr.bf16.mxu0 %v660
  %738 = vmatmul.mubr.bf16.gmra.mxu0 %v153
  %v739 = vpop.f32.mrf.mxu0
  %v740 = vadd.f32 %v697, %v739
  %v741 = vpop.f32.mrf.mxu0
  %v742 = vadd.f32 %v699, %v741
  %v743 = vpop.f32.mrf.mxu0
  %v744 = vadd.f32 %v701, %v743
  %v745 = vpop.f32.mrf.mxu0
  %v746 = vadd.f32 %v703, %v745
  %747 = vdwg.mxu0
  %748 = vmatprep.subr.bf16.mxu0 %v489
  %749 = vmatpush1.bf16.msra.mxu0 %v488
  %750 = vmatprep.subr.bf16.mxu0 %v485
  %751 = vmatpush1.bf16.msra.mxu0 %v484
  %752 = vmatprep.subr.bf16.mxu0 %v481
  %753 = vmatpush1.bf16.msra.mxu0 %v480
  %754 = vmatprep.subr.bf16.mxu0 %v477
  %755 = vmatpush1.bf16.msra.mxu0 %v476
  %756 = vmatprep.subr.bf16.mxu0 %v473
  %757 = vmatpush1.bf16.msra.mxu0 %v472
  %758 = vmatprep.subr.bf16.mxu0 %v469
  %759 = vmatpush1.bf16.msra.mxu0 %v468
  %760 = vmatprep.subr.bf16.mxu0 %v465
  %761 = vmatpush1.bf16.msra.mxu0 %v464
  %762 = vmatprep.subr.bf16.mxu0 %v461
  %763 = vmatpush1.bf16.msra.mxu0 %v460
  %764 = vmatprep.subr.bf16.mxu0 %v521
  %765 = vmatpush2.bf16.msra.mxu0 %v520
  %766 = vmatprep.subr.bf16.mxu0 %v517
  %767 = vmatpush2.bf16.msra.mxu0 %v516
  %768 = vmatprep.subr.bf16.mxu0 %v513
  %769 = vmatpush2.bf16.msra.mxu0 %v512
  %770 = vmatprep.subr.bf16.mxu0 %v509
  %771 = vmatpush2.bf16.msra.mxu0 %v508
  %772 = vmatprep.subr.bf16.mxu0 %v505
  %773 = vmatpush2.bf16.msra.mxu0 %v504
  %774 = vmatprep.subr.bf16.mxu0 %v501
  %775 = vmatpush2.bf16.msra.mxu0 %v500
  %776 = vmatprep.subr.bf16.mxu0 %v497
  %777 = vmatpush2.bf16.msra.mxu0 %v496
  %778 = vmatprep.subr.bf16.mxu0 %v493
  %779 = vmatpush2.bf16.msra.mxu0 %v492
  %780 = vmatprep.mubr.bf16.mxu0 %v152
  %781 = vmatmul.mubr.bf16.gmra.mxu0 %v151
  %v782 = vpop.f32.mrf.mxu0
  %v783 = vadd.f32 0.0, %v782
  %v784 = vpop.f32.mrf.mxu0
  %v785 = vadd.f32 0.0, %v784
  %v786 = vpop.f32.mrf.mxu0
  %v787 = vadd.f32 0.0, %v786
  %v788 = vpop.f32.mrf.mxu0
  %v789 = vadd.f32 0.0, %v788
  %790 = vdwg.mxu0
  %791 = vmatprep.subr.bf16.mxu0 %v553
  %792 = vmatpush1.bf16.msra.mxu0 %v552
  %793 = vmatprep.subr.bf16.mxu0 %v549
  %794 = vmatpush1.bf16.msra.mxu0 %v548
  %795 = vmatprep.subr.bf16.mxu0 %v545
  %796 = vmatpush1.bf16.msra.mxu0 %v544
  %797 = vmatprep.subr.bf16.mxu0 %v541
  %798 = vmatpush1.bf16.msra.mxu0 %v540
  %799 = vmatprep.subr.bf16.mxu0 %v537
  %800 = vmatpush1.bf16.msra.mxu0 %v536
  %801 = vmatprep.subr.bf16.mxu0 %v533
  %802 = vmatpush1.bf16.msra.mxu0 %v532
  %803 = vmatprep.subr.bf16.mxu0 %v529
  %804 = vmatpush1.bf16.msra.mxu0 %v528
  %805 = vmatprep.subr.bf16.mxu0 %v525
  %806 = vmatpush1.bf16.msra.mxu0 %v524
  %807 = vmatprep.subr.bf16.mxu0 0
  %808 = vmatpush2.bf16.msra.mxu0 0
  %809 = vmatprep.subr.bf16.mxu0 0
  %810 = vmatpush2.bf16.msra.mxu0 0
  %811 = vmatprep.subr.bf16.mxu0 0
  %812 = vmatpush2.bf16.msra.mxu0 0
  %813 = vmatprep.subr.bf16.mxu0 0
  %814 = vmatpush2.bf16.msra.mxu0 0
  %815 = vmatprep.subr.bf16.mxu0 0
  %816 = vmatpush2.bf16.msra.mxu0 0
  %817 = vmatprep.subr.bf16.mxu0 0
  %818 = vmatpush2.bf16.msra.mxu0 0
  %819 = vmatprep.subr.bf16.mxu0 0
  %820 = vmatpush2.bf16.msra.mxu0 0
  %821 = vmatprep.subr.bf16.mxu0 %v557
  %822 = vmatpush2.bf16.msra.mxu0 %v556
  %823 = vmatprep.mubr.bf16.mxu0 %v660
  %824 = vmatmul.mubr.bf16.gmra.mxu0 %v153
  %v825 = vpop.f32.mrf.mxu0
  %v826 = vadd.f32 %v783, %v825
  %v827 = vpop.f32.mrf.mxu0
  %v828 = vadd.f32 %v785, %v827
  %v829 = vpop.f32.mrf.mxu0
  %v830 = vadd.f32 %v787, %v829
  %v831 = vpop.f32.mrf.mxu0
  %v832 = vadd.f32 %v789, %v831
  %833 = vdwg.mxu0
  %v834 = vadd.f32 %v27, %v740
  %v835 = vadd.f32 %v28, %v742
  %v836 = vadd.f32 %v29, %v826
  %v837 = vadd.f32 %v30, %v828
  %v838 = vadd.f32 %v31, %v744
  %v839 = vadd.f32 %v32, %v746
  %v840 = vadd.f32 %v33, %v830
  %v841 = vadd.f32 %v34, %v832
  %842 = vst [vmem:[#allocation2] sm:$0xff] %v834
  %843 = vst [vmem:[#allocation2 + $0x8] sm:$0xff] %v835
  %844 = vst [vmem:[#allocation2 + $0x10] sm:$0xff] %v836
  %845 = vst [vmem:[#allocation2 + $0x18] sm:$0xff] %v837
  %846 = vst [vmem:[#allocation2 + $0x20] sm:$0xff] %v838
  %847 = vst [vmem:[#allocation2 + $0x28] sm:$0xff] %v839
  %848 = vst [vmem:[#allocation2 + $0x30] sm:$0xff] %v840
  %849 = vst [vmem:[#allocation2 + $0x38] sm:$0xff] %v841
  // Predicated region
  $region18: #{vvbp_forward.17} parent=0 // pred_check
    %p850 = pneg %p15
  $region19: #{vvbp_forward.17} parent=0 // pred_check_branch
    %852 = sbr.rel (%p850) target = $region21
  $region20: #{vvbp_forward.17} parent=0 // pred_region
    %v853 = vld [vmem:[#allocation2] sm:$0xff]
    %v854 = vld [vmem:[#allocation2 + $0x8] sm:$0xff]
    %v855 = vld [vmem:[#allocation2 + $0x10] sm:$0xff]
    %v856 = vld [vmem:[#allocation2 + $0x18] sm:$0xff]
    %v857 = vld [vmem:[#allocation2 + $0x20] sm:$0xff]
    %v858 = vld [vmem:[#allocation2 + $0x28] sm:$0xff]
    %v859 = vld [vmem:[#allocation2 + $0x30] sm:$0xff]
    %v860 = vld [vmem:[#allocation2 + $0x38] sm:$0xff]
    %v861 = vld [vmem:[%s2] sm:$0xff]
    %v862 = vld [vmem:[%s2 + $0x8] sm:$0xff]
    %864 = vset.pattern.permute.xlu0 0
    %865 = vperm.xlu0 %864, %v861
    %v866 = vpop.permute.xlu0 %865
    %869 = vset.pattern.permute.xlu0 0
    %870 = vperm.xlu0 %869, %v862
    %v871 = vpop.permute.xlu0 %870
    %v873 = vadd.f32 %v853, %v866
    %v874 = vadd.f32 %v854, %v866
    %v875 = vadd.f32 %v855, %v866
    %v876 = vadd.f32 %v856, %v866
    %v877 = vadd.f32 %v857, %v871
    %v878 = vadd.f32 %v858, %v871
    %v879 = vadd.f32 %v859, %v871
    %v880 = vadd.f32 %v860, %v871
    %v881 = vmax.f32 %v873, 0.0
    %v882 = vmax.f32 %v874, 0.0
    %v883 = vmax.f32 %v875, 0.0
    %v884 = vmax.f32 %v876, 0.0
    %v885 = vmax.f32 %v877, 0.0
    %v886 = vmax.f32 %v878, 0.0
    %v887 = vmax.f32 %v879, 0.0
    %v888 = vmax.f32 %v880, 0.0
    %889 = vst [vmem:[%s3] sm:$0xff] %v881
    %890 = vst [vmem:[%s3 + $0x8] sm:$0xff] %v882
    %891 = vst [vmem:[%s3 + $0x10] sm:$0xff] %v883
    %892 = vst [vmem:[%s3 + $0x18] sm:$0xff] %v884
    %893 = vst [vmem:[%s3 + $0x20] sm:$0xff] %v885
    %894 = vst [vmem:[%s3 + $0x28] sm:$0xff] %v886
    %895 = vst [vmem:[%s3 + $0x30] sm:$0xff] %v887
    %896 = vst [vmem:[%s3 + $0x38] sm:$0xff] %v888
  $region21: #{vvbp_forward.17} parent=0 // pred_fallthru
    _
  // Predicated region
  $region22: #{vvbp_forward.17} parent=0 // pred_check
    _
  $region23: #{vvbp_forward.17} parent=0 // pred_check_branch
    %898 = sbr.rel (0) target = $region25
  $region24: #{vvbp_forward.17} parent=0 // pred_region
    _
  $region25: #{vvbp_forward.17} parent=0 // pred_fallthru
    _
  // Predicated region
  $region26: #{vvbp_forward.17} parent=0 // pred_check
    _
  $region27: #{vvbp_forward.17} parent=0 // pred_check_branch
    %900 = sbr.rel (0) target = $region29
  $region28: #{vvbp_forward.17} parent=0 // pred_region
    _
  $region29: #{vvbp_forward.17} parent=0 // pred_fallthru
    _

// kernel: vvbp_forward.21
$region0: #{vvbp_forward.21}
  #allocation0 [shape = 'u32[]', space=smem, size = 0x4, offset = 0x4, fixed_abs, tag = 'smem constant byte address 0x4 - core index']
  #allocation1 [shape = 'u32[144,128]{1,0:T(1,128)}', space=vmem, size = 0x12000, scoped, tag = 'internal scratch']
  #allocation2 [shape = 'f32[16,512]{1,0:T(8,128)}', space=vmem, size = 0x8000, scoped, tag = 'scratch operand']
  %s0 = inlined_call_operand.vmem [shape: bf16[16,400], index: 0, kind: input, shape index: {}]
  %s1 = inlined_call_operand.vmem [shape: bf16[400,512], index: 1, kind: input, shape index: {}]
  %s2 = inlined_call_operand.vmem [shape: f32[16,1], index: 2, kind: input, shape index: {}]
  %s3 = inlined_call_operand.vmem [shape: f32[16,512], index: 3, kind: input, shape index: {}]
  %s4 = inlined_call_operand.vmem [shape: f32[16,512], index: 4, kind: output, shape index: {}]
  %s5 = sld [smem:[#allocation0]]
  $region34: #{vvbp_forward.21} parent=0
    _
  %s7 = ssub.s32 1, %s5
  %s8 = scalar_select 0, %s7, %s5
  // Predicated region
  $region2: #{vvbp_forward.21} parent=0 // pred_check
    _
  $region3: #{vvbp_forward.21} parent=0 // pred_check_branch
    %10 = sbr.rel (0) target = $region5
  $region4: #{vvbp_forward.21} parent=0 // pred_region
    _
  $region5: #{vvbp_forward.21} parent=0 // pred_fallthru
    _
  // Predicated region
  $region6: #{vvbp_forward.21} parent=0 // pred_check
    _
  $region7: #{vvbp_forward.21} parent=0 // pred_check_branch
    %12 = sbr.rel (0) target = $region9
  $region8: #{vvbp_forward.21} parent=0 // pred_region
    _
  $region9: #{vvbp_forward.21} parent=0 // pred_fallthru
    _
  // Predicated region
  $region10: #{vvbp_forward.21} parent=0 // pred_check
    _
  $region11: #{vvbp_forward.21} parent=0 // pred_check_branch
    %14 = sbr.rel (0) target = $region13
  $region12: #{vvbp_forward.21} parent=0 // pred_region
    _
  $region13: #{vvbp_forward.21} parent=0 // pred_fallthru
    _
  // Predicated region
  $region14: #{vvbp_forward.21} parent=0 // pred_check
    _
  $region15: #{vvbp_forward.21} parent=0 // pred_check_branch
    %16 = sbr.rel (0) target = $region17
  $region16: #{vvbp_forward.21} parent=0 // pred_region
    _
  $region17: #{vvbp_forward.21} parent=0 // pred_fallthru
    _
  %p18 = scmp.eq.s32.totalorder 0, 0
  // Predicated region
  $region18: #{vvbp_forward.21} parent=0 // pred_check
    %p19 = pneg %p18
  $region19: #{vvbp_forward.21} parent=0 // pred_check_branch
    %21 = sbr.rel (%p19) target = $region21
  $region20: #{vvbp_forward.21} parent=0 // pred_region
    %22 = vst [vmem:[#allocation2] sm:$0xff] 0.0
    %23 = vst [vmem:[#allocation2 + $0x8] sm:$0xff] 0.0
    %24 = vst [vmem:[#allocation2 + $0x10] sm:$0xff] 0.0
    %25 = vst [vmem:[#allocation2 + $0x18] sm:$0xff] 0.0
    %26 = vst [vmem:[#allocation2 + $0x20] sm:$0xff] 0.0
    %27 = vst [vmem:[#allocation2 + $0x28] sm:$0xff] 0.0
    %28 = vst [vmem:[#allocation2 + $0x30] sm:$0xff] 0.0
    %29 = vst [vmem:[#allocation2 + $0x38] sm:$0xff] 0.0
  $region21: #{vvbp_forward.21} parent=0 // pred_fallthru
    _
  %v30 = vld [vmem:[#allocation2] sm:$0xff]
  %v31 = vld [vmem:[#allocation2 + $0x8] sm:$0xff]
  %v32 = vld [vmem:[#allocation2 + $0x10] sm:$0xff]
  %v33 = vld [vmem:[#allocation2 + $0x18] sm:$0xff]
  %v34 = vld [vmem:[#allocation2 + $0x20] sm:$0xff]
  %v35 = vld [vmem:[#allocation2 + $0x28] sm:$0xff]
  %v36 = vld [vmem:[#allocation2 + $0x30] sm:$0xff]
  %v37 = vld [vmem:[#allocation2 + $0x38] sm:$0xff]
  %v38 = vld [vmem:[%s0] sm:$0xff]
  %v39 = vld [vmem:[%s0 + $0x8] sm:$0xff]
  %v40 = vld [vmem:[%s0 + $0x10] sm:$0xff]
  %v41 = vld [vmem:[%s0 + $0x18] sm:$0xff]
  %v42 = vld [vmem:[%s1] sm:$0xff]
  %v43 = vld [vmem:[%s1 + $0x8] sm:$0xff]
  %v44 = vld [vmem:[%s1 + $0x10] sm:$0xff]
  %v45 = vld [vmem:[%s1 + $0x18] sm:$0xff]
  %v46 = vld [vmem:[%s1 + $0x20] sm:$0xff]
  %v47 = vld [vmem:[%s1 + $0x28] sm:$0xff]
  %v48 = vld [vmem:[%s1 + $0x30] sm:$0xff]
  %v49 = vld [vmem:[%s1 + $0x38] sm:$0xff]
  %v50 = vld [vmem:[%s1 + $0x40] sm:$0xff]
  %v51 = vld [vmem:[%s1 + $0x48] sm:$0xff]
  %v52 = vld [vmem:[%s1 + $0x50] sm:$0xff]
  %v53 = vld [vmem:[%s1 + $0x58] sm:$0xff]
  %v54 = vld [vmem:[%s1 + $0x60] sm:$0xff]
  %v55 = vld [vmem:[%s1 + $0x68] sm:$0xff]
  %v56 = vld [vmem:[%s1 + $0x70] sm:$0xff]
  %v57 = vld [vmem:[%s1 + $0x78] sm:$0xff]
  %v58 = vld [vmem:[%s1 + $0x80] sm:$0xff]
  %v59 = vld [vmem:[%s1 + $0x88] sm:$0xff]
  %v60 = vld [vmem:[%s1 + $0x90] sm:$0xff]
  %v61 = vld [vmem:[%s1 + $0x98] sm:$0xff]
  %v62 = vld [vmem:[%s1 + $0xa0] sm:$0xff]
  %v63 = vld [vmem:[%s1 + $0xa8] sm:$0xff]
  %v64 = vld [vmem:[%s1 + $0xb0] sm:$0xff]
  %v65 = vld [vmem:[%s1 + $0xb8] sm:$0xff]
  %v66 = vld [vmem:[%s1 + $0xc0] sm:$0xff]
  %v67 = vld [vmem:[%s1 + $0xc8] sm:$0xff]
  %v68 = vld [vmem:[%s1 + $0xd0] sm:$0xff]
  %v69 = vld [vmem:[%s1 + $0xd8] sm:$0xff]
  %v70 = vld [vmem:[%s1 + $0xe0] sm:$0xff]
  %v71 = vld [vmem:[%s1 + $0xe8] sm:$0xff]
  %v72 = vld [vmem:[%s1 + $0xf0] sm:$0xff]
  %v73 = vld [vmem:[%s1 + $0xf8] sm:$0xff]
  %v74 = vld [vmem:[%s1 + $0x100] sm:$0xff]
  %v75 = vld [vmem:[%s1 + $0x108] sm:$0xff]
  %v76 = vld [vmem:[%s1 + $0x110] sm:$0xff]
  %v77 = vld [vmem:[%s1 + $0x118] sm:$0xff]
  %v78 = vld [vmem:[%s1 + $0x120] sm:$0xff]
  %v79 = vld [vmem:[%s1 + $0x128] sm:$0xff]
  %v80 = vld [vmem:[%s1 + $0x130] sm:$0xff]
  %v81 = vld [vmem:[%s1 + $0x138] sm:$0xff]
  %v82 = vld [vmem:[%s1 + $0x140] sm:$0xff]
  %v83 = vld [vmem:[%s1 + $0x148] sm:$0xff]
  %v84 = vld [vmem:[%s1 + $0x150] sm:$0xff]
  %v85 = vld [vmem:[%s1 + $0x158] sm:$0xff]
  %v86 = vld [vmem:[%s1 + $0x160] sm:$0xff]
  %v87 = vld [vmem:[%s1 + $0x168] sm:$0xff]
  %v88 = vld [vmem:[%s1 + $0x170] sm:$0xff]
  %v89 = vld [vmem:[%s1 + $0x178] sm:$0xff]
  %v90 = vld [vmem:[%s1 + $0x180] sm:$0xff]
  %v91 = vld [vmem:[%s1 + $0x188] sm:$0xff]
  %v92 = vld [vmem:[%s1 + $0x190] sm:$0xff]
  %v93 = vld [vmem:[%s1 + $0x198] sm:$0xff]
  %v94 = vld [vmem:[%s1 + $0x1a0] sm:$0xff]
  %v95 = vld [vmem:[%s1 + $0x1a8] sm:$0xff]
  %v96 = vld [vmem:[%s1 + $0x1b0] sm:$0xff]
  %v97 = vld [vmem:[%s1 + $0x1b8] sm:$0xff]
  %v98 = vld [vmem:[%s1 + $0x1c0] sm:$0xff]
  %v99 = vld [vmem:[%s1 + $0x1c8] sm:$0xff]
  %v100 = vld [vmem:[%s1 + $0x1d0] sm:$0xff]
  %v101 = vld [vmem:[%s1 + $0x1d8] sm:$0xff]
  %v102 = vld [vmem:[%s1 + $0x1e0] sm:$0xff]
  %v103 = vld [vmem:[%s1 + $0x1e8] sm:$0xff]
  %v104 = vld [vmem:[%s1 + $0x1f0] sm:$0xff]
  %v105 = vld [vmem:[%s1 + $0x1f8] sm:$0xff]
  %v106 = vld [vmem:[%s1 + $0x200] sm:$0xff]
  %v107 = vld [vmem:[%s1 + $0x208] sm:$0xff]
  %v108 = vld [vmem:[%s1 + $0x210] sm:$0xff]
  %v109 = vld [vmem:[%s1 + $0x218] sm:$0xff]
  %v110 = vld [vmem:[%s1 + $0x220] sm:$0xff]
  %v111 = vld [vmem:[%s1 + $0x228] sm:$0xff]
  %v112 = vld [vmem:[%s1 + $0x230] sm:$0xff]
  %v113 = vld [vmem:[%s1 + $0x238] sm:$0xff]
  %v114 = vld [vmem:[%s1 + $0x240] sm:$0xff]
  %v115 = vld [vmem:[%s1 + $0x248] sm:$0xff]
  %v116 = vld [vmem:[%s1 + $0x250] sm:$0xff]
  %v117 = vld [vmem:[%s1 + $0x258] sm:$0xff]
  %v118 = vld [vmem:[%s1 + $0x260] sm:$0xff]
  %v119 = vld [vmem:[%s1 + $0x268] sm:$0xff]
  %v120 = vld [vmem:[%s1 + $0x270] sm:$0xff]
  %v121 = vld [vmem:[%s1 + $0x278] sm:$0xff]
  %v122 = vld [vmem:[%s1 + $0x280] sm:$0xff]
  %v123 = vld [vmem:[%s1 + $0x288] sm:$0xff]
  %v124 = vld [vmem:[%s1 + $0x290] sm:$0xff]
  %v125 = vld [vmem:[%s1 + $0x298] sm:$0xff]
  %v126 = vld [vmem:[%s1 + $0x2a0] sm:$0xff]
  %v127 = vld [vmem:[%s1 + $0x2a8] sm:$0xff]
  %v128 = vld [vmem:[%s1 + $0x2b0] sm:$0xff]
  %v129 = vld [vmem:[%s1 + $0x2b8] sm:$0xff]
  %v130 = vld [vmem:[%s1 + $0x2c0] sm:$0xff]
  %v131 = vld [vmem:[%s1 + $0x2c8] sm:$0xff]
  %v132 = vld [vmem:[%s1 + $0x2d0] sm:$0xff]
  %v133 = vld [vmem:[%s1 + $0x2d8] sm:$0xff]
  %v134 = vld [vmem:[%s1 + $0x2e0] sm:$0xff]
  %v135 = vld [vmem:[%s1 + $0x2e8] sm:$0xff]
  %v136 = vld [vmem:[%s1 + $0x2f0] sm:$0xff]
  %v137 = vld [vmem:[%s1 + $0x2f8] sm:$0xff]
  %v138 = vld [vmem:[%s1 + $0x300] sm:$0xff]
  %v139 = vld [vmem:[%s1 + $0x308] sm:$0xff]
  %v140 = vld [vmem:[%s1 + $0x310] sm:$0xff]
  %v141 = vld [vmem:[%s1 + $0x318] sm:$0xff]
  %v146 = vunpack.c.l.b16 %v38
  %v147 = vunpack.c.h.b16 %v38
  %v148 = vunpack.c.l.b16 %v39
  %v149 = vunpack.c.h.b16 %v39
  %v150 = vunpack.c.l.b16 %v40
  %v151 = vunpack.c.h.b16 %v40
  %v152 = vunpack.c.l.b16 %v41
  %v153 = vunpack.c.h.b16 %v41
  %v154 = vpack.c.b16 %v150, %v146
  %v155 = vpack.c.b16 %v151, %v147
  %v156 = vpack.c.b16 %v152, %v148
  %v157 = vpack.c.b16 %v153, %v149
  %v261 = vunpack.c.l.b16 %v42
  %v262 = vunpack.c.h.b16 %v42
  %v263 = vunpack.c.l.b16 %v43
  %v264 = vunpack.c.h.b16 %v43
  %v265 = vunpack.c.l.b16 %v44
  %v266 = vunpack.c.h.b16 %v44
  %v267 = vunpack.c.l.b16 %v45
  %v268 = vunpack.c.h.b16 %v45
  %v269 = vunpack.c.l.b16 %v46
  %v270 = vunpack.c.h.b16 %v46
  %v271 = vunpack.c.l.b16 %v47
  %v272 = vunpack.c.h.b16 %v47
  %v273 = vunpack.c.l.b16 %v48
  %v274 = vunpack.c.h.b16 %v48
  %v275 = vunpack.c.l.b16 %v49
  %v276 = vunpack.c.h.b16 %v49
  %v277 = vunpack.c.l.b16 %v50
  %v278 = vunpack.c.h.b16 %v50
  %v279 = vunpack.c.l.b16 %v51
  %v280 = vunpack.c.h.b16 %v51
  %v281 = vunpack.c.l.b16 %v52
  %v282 = vunpack.c.h.b16 %v52
  %v283 = vunpack.c.l.b16 %v53
  %v284 = vunpack.c.h.b16 %v53
  %v285 = vunpack.c.l.b16 %v54
  %v286 = vunpack.c.h.b16 %v54
  %v287 = vunpack.c.l.b16 %v55
  %v288 = vunpack.c.h.b16 %v55
  %v289 = vunpack.c.l.b16 %v56
  %v290 = vunpack.c.h.b16 %v56
  %v291 = vunpack.c.l.b16 %v57
  %v292 = vunpack.c.h.b16 %v57
  %v293 = vunpack.c.l.b16 %v58
  %v294 = vunpack.c.h.b16 %v58
  %v295 = vunpack.c.l.b16 %v59
  %v296 = vunpack.c.h.b16 %v59
  %v297 = vunpack.c.l.b16 %v60
  %v298 = vunpack.c.h.b16 %v60
  %v299 = vunpack.c.l.b16 %v61
  %v300 = vunpack.c.h.b16 %v61
  %v301 = vunpack.c.l.b16 %v62
  %v302 = vunpack.c.h.b16 %v62
  %v303 = vunpack.c.l.b16 %v63
  %v304 = vunpack.c.h.b16 %v63
  %v305 = vunpack.c.l.b16 %v64
  %v306 = vunpack.c.h.b16 %v64
  %v307 = vunpack.c.l.b16 %v65
  %v308 = vunpack.c.h.b16 %v65
  %v309 = vunpack.c.l.b16 %v66
  %v310 = vunpack.c.h.b16 %v66
  %v311 = vunpack.c.l.b16 %v67
  %v312 = vunpack.c.h.b16 %v67
  %v313 = vunpack.c.l.b16 %v68
  %v314 = vunpack.c.h.b16 %v68
  %v315 = vunpack.c.l.b16 %v69
  %v316 = vunpack.c.h.b16 %v69
  %v317 = vunpack.c.l.b16 %v70
  %v318 = vunpack.c.h.b16 %v70
  %v319 = vunpack.c.l.b16 %v71
  %v320 = vunpack.c.h.b16 %v71
  %v321 = vunpack.c.l.b16 %v72
  %v322 = vunpack.c.h.b16 %v72
  %v323 = vunpack.c.l.b16 %v73
  %v324 = vunpack.c.h.b16 %v73
  %v325 = vunpack.c.l.b16 %v74
  %v326 = vunpack.c.h.b16 %v74
  %v327 = vunpack.c.l.b16 %v75
  %v328 = vunpack.c.h.b16 %v75
  %v329 = vunpack.c.l.b16 %v76
  %v330 = vunpack.c.h.b16 %v76
  %v331 = vunpack.c.l.b16 %v77
  %v332 = vunpack.c.h.b16 %v77
  %v333 = vunpack.c.l.b16 %v78
  %v334 = vunpack.c.h.b16 %v78
  %v335 = vunpack.c.l.b16 %v79
  %v336 = vunpack.c.h.b16 %v79
  %v337 = vunpack.c.l.b16 %v80
  %v338 = vunpack.c.h.b16 %v80
  %v339 = vunpack.c.l.b16 %v81
  %v340 = vunpack.c.h.b16 %v81
  %v341 = vunpack.c.l.b16 %v82
  %v342 = vunpack.c.h.b16 %v82
  %v343 = vunpack.c.l.b16 %v83
  %v344 = vunpack.c.h.b16 %v83
  %v345 = vunpack.c.l.b16 %v84
  %v346 = vunpack.c.h.b16 %v84
  %v347 = vunpack.c.l.b16 %v85
  %v348 = vunpack.c.h.b16 %v85
  %v349 = vunpack.c.l.b16 %v86
  %v350 = vunpack.c.h.b16 %v86
  %v351 = vunpack.c.l.b16 %v87
  %v352 = vunpack.c.h.b16 %v87
  %v353 = vunpack.c.l.b16 %v88
  %v354 = vunpack.c.h.b16 %v88
  %v355 = vunpack.c.l.b16 %v89
  %v356 = vunpack.c.h.b16 %v89
  %v357 = vunpack.c.l.b16 %v90
  %v358 = vunpack.c.h.b16 %v90
  %v359 = vunpack.c.l.b16 %v91
  %v360 = vunpack.c.h.b16 %v91
  %v361 = vunpack.c.l.b16 %v92
  %v362 = vunpack.c.h.b16 %v92
  %v363 = vunpack.c.l.b16 %v93
  %v364 = vunpack.c.h.b16 %v93
  %v365 = vunpack.c.l.b16 %v94
  %v366 = vunpack.c.h.b16 %v94
  %v367 = vunpack.c.l.b16 %v95
  %v368 = vunpack.c.h.b16 %v95
  %v369 = vunpack.c.l.b16 %v96
  %v370 = vunpack.c.h.b16 %v96
  %v371 = vunpack.c.l.b16 %v97
  %v372 = vunpack.c.h.b16 %v97
  %v373 = vunpack.c.l.b16 %v98
  %v374 = vunpack.c.h.b16 %v98
  %v375 = vunpack.c.l.b16 %v99
  %v376 = vunpack.c.h.b16 %v99
  %v377 = vunpack.c.l.b16 %v100
  %v378 = vunpack.c.h.b16 %v100
  %v379 = vunpack.c.l.b16 %v101
  %v380 = vunpack.c.h.b16 %v101
  %v381 = vunpack.c.l.b16 %v102
  %v382 = vunpack.c.h.b16 %v102
  %v383 = vunpack.c.l.b16 %v103
  %v384 = vunpack.c.h.b16 %v103
  %v385 = vunpack.c.l.b16 %v104
  %v386 = vunpack.c.h.b16 %v104
  %v387 = vunpack.c.l.b16 %v105
  %v388 = vunpack.c.h.b16 %v105
  %v389 = vunpack.c.l.b16 %v106
  %v390 = vunpack.c.h.b16 %v106
  %v391 = vunpack.c.l.b16 %v107
  %v392 = vunpack.c.h.b16 %v107
  %v393 = vunpack.c.l.b16 %v108
  %v394 = vunpack.c.h.b16 %v108
  %v395 = vunpack.c.l.b16 %v109
  %v396 = vunpack.c.h.b16 %v109
  %v397 = vunpack.c.l.b16 %v110
  %v398 = vunpack.c.h.b16 %v110
  %v399 = vunpack.c.l.b16 %v111
  %v400 = vunpack.c.h.b16 %v111
  %v401 = vunpack.c.l.b16 %v112
  %v402 = vunpack.c.h.b16 %v112
  %v403 = vunpack.c.l.b16 %v113
  %v404 = vunpack.c.h.b16 %v113
  %v405 = vunpack.c.l.b16 %v114
  %v406 = vunpack.c.h.b16 %v114
  %v407 = vunpack.c.l.b16 %v115
  %v408 = vunpack.c.h.b16 %v115
  %v409 = vunpack.c.l.b16 %v116
  %v410 = vunpack.c.h.b16 %v116
  %v411 = vunpack.c.l.b16 %v117
  %v412 = vunpack.c.h.b16 %v117
  %v413 = vunpack.c.l.b16 %v118
  %v414 = vunpack.c.h.b16 %v118
  %v415 = vunpack.c.l.b16 %v119
  %v416 = vunpack.c.h.b16 %v119
  %v417 = vunpack.c.l.b16 %v120
  %v418 = vunpack.c.h.b16 %v120
  %v419 = vunpack.c.l.b16 %v121
  %v420 = vunpack.c.h.b16 %v121
  %v421 = vunpack.c.l.b16 %v122
  %v422 = vunpack.c.h.b16 %v122
  %v423 = vunpack.c.l.b16 %v123
  %v424 = vunpack.c.h.b16 %v123
  %v425 = vunpack.c.l.b16 %v124
  %v426 = vunpack.c.h.b16 %v124
  %v427 = vunpack.c.l.b16 %v125
  %v428 = vunpack.c.h.b16 %v125
  %v429 = vunpack.c.l.b16 %v126
  %v430 = vunpack.c.h.b16 %v126
  %v431 = vunpack.c.l.b16 %v127
  %v432 = vunpack.c.h.b16 %v127
  %v433 = vunpack.c.l.b16 %v128
  %v434 = vunpack.c.h.b16 %v128
  %v435 = vunpack.c.l.b16 %v129
  %v436 = vunpack.c.h.b16 %v129
  %v437 = vunpack.c.l.b16 %v130
  %v438 = vunpack.c.h.b16 %v130
  %v439 = vunpack.c.l.b16 %v131
  %v440 = vunpack.c.h.b16 %v131
  %v441 = vunpack.c.l.b16 %v132
  %v442 = vunpack.c.h.b16 %v132
  %v443 = vunpack.c.l.b16 %v133
  %v444 = vunpack.c.h.b16 %v133
  %v445 = vunpack.c.l.b16 %v134
  %v446 = vunpack.c.h.b16 %v134
  %v447 = vunpack.c.l.b16 %v135
  %v448 = vunpack.c.h.b16 %v135
  %v449 = vunpack.c.l.b16 %v136
  %v450 = vunpack.c.h.b16 %v136
  %v451 = vunpack.c.l.b16 %v137
  %v452 = vunpack.c.h.b16 %v137
  %v453 = vunpack.c.l.b16 %v138
  %v454 = vunpack.c.h.b16 %v138
  %v455 = vunpack.c.l.b16 %v139
  %v456 = vunpack.c.h.b16 %v139
  %v457 = vunpack.c.l.b16 %v140
  %v458 = vunpack.c.h.b16 %v140
  %v459 = vunpack.c.l.b16 %v141
  %v460 = vunpack.c.h.b16 %v141
  %v461 = vpack.c.b16 %v265, %v261
  %v462 = vpack.c.b16 %v266, %v262
  %v463 = vpack.c.b16 %v267, %v263
  %v464 = vpack.c.b16 %v268, %v264
  %v465 = vpack.c.b16 %v273, %v269
  %v466 = vpack.c.b16 %v274, %v270
  %v467 = vpack.c.b16 %v275, %v271
  %v468 = vpack.c.b16 %v276, %v272
  %v469 = vpack.c.b16 %v281, %v277
  %v470 = vpack.c.b16 %v282, %v278
  %v471 = vpack.c.b16 %v283, %v279
  %v472 = vpack.c.b16 %v284, %v280
  %v473 = vpack.c.b16 %v289, %v285
  %v474 = vpack.c.b16 %v290, %v286
  %v475 = vpack.c.b16 %v291, %v287
  %v476 = vpack.c.b16 %v292, %v288
  %v477 = vpack.c.b16 %v297, %v293
  %v478 = vpack.c.b16 %v298, %v294
  %v479 = vpack.c.b16 %v299, %v295
  %v480 = vpack.c.b16 %v300, %v296
  %v481 = vpack.c.b16 %v305, %v301
  %v482 = vpack.c.b16 %v306, %v302
  %v483 = vpack.c.b16 %v307, %v303
  %v484 = vpack.c.b16 %v308, %v304
  %v485 = vpack.c.b16 %v313, %v309
  %v486 = vpack.c.b16 %v314, %v310
  %v487 = vpack.c.b16 %v315, %v311
  %v488 = vpack.c.b16 %v316, %v312
  %v489 = vpack.c.b16 %v321, %v317
  %v490 = vpack.c.b16 %v322, %v318
  %v491 = vpack.c.b16 %v323, %v319
  %v492 = vpack.c.b16 %v324, %v320
  %v493 = vpack.c.b16 %v329, %v325
  %v494 = vpack.c.b16 %v330, %v326
  %v495 = vpack.c.b16 %v331, %v327
  %v496 = vpack.c.b16 %v332, %v328
  %v497 = vpack.c.b16 %v337, %v333
  %v498 = vpack.c.b16 %v338, %v334
  %v499 = vpack.c.b16 %v339, %v335
  %v500 = vpack.c.b16 %v340, %v336
  %v501 = vpack.c.b16 %v345, %v341
  %v502 = vpack.c.b16 %v346, %v342
  %v503 = vpack.c.b16 %v347, %v343
  %v504 = vpack.c.b16 %v348, %v344
  %v505 = vpack.c.b16 %v353, %v349
  %v506 = vpack.c.b16 %v354, %v350
  %v507 = vpack.c.b16 %v355, %v351
  %v508 = vpack.c.b16 %v356, %v352
  %v509 = vpack.c.b16 %v361, %v357
  %v510 = vpack.c.b16 %v362, %v358
  %v511 = vpack.c.b16 %v363, %v359
  %v512 = vpack.c.b16 %v364, %v360
  %v513 = vpack.c.b16 %v369, %v365
  %v514 = vpack.c.b16 %v370, %v366
  %v515 = vpack.c.b16 %v371, %v367
  %v516 = vpack.c.b16 %v372, %v368
  %v517 = vpack.c.b16 %v377, %v373
  %v518 = vpack.c.b16 %v378, %v374
  %v519 = vpack.c.b16 %v379, %v375
  %v520 = vpack.c.b16 %v380, %v376
  %v521 = vpack.c.b16 %v385, %v381
  %v522 = vpack.c.b16 %v386, %v382
  %v523 = vpack.c.b16 %v387, %v383
  %v524 = vpack.c.b16 %v388, %v384
  %v525 = vpack.c.b16 %v393, %v389
  %v526 = vpack.c.b16 %v394, %v390
  %v527 = vpack.c.b16 %v395, %v391
  %v528 = vpack.c.b16 %v396, %v392
  %v529 = vpack.c.b16 %v401, %v397
  %v530 = vpack.c.b16 %v402, %v398
  %v531 = vpack.c.b16 %v403, %v399
  %v532 = vpack.c.b16 %v404, %v400
  %v533 = vpack.c.b16 %v409, %v405
  %v534 = vpack.c.b16 %v410, %v406
  %v535 = vpack.c.b16 %v411, %v407
  %v536 = vpack.c.b16 %v412, %v408
  %v537 = vpack.c.b16 %v417, %v413
  %v538 = vpack.c.b16 %v418, %v414
  %v539 = vpack.c.b16 %v419, %v415
  %v540 = vpack.c.b16 %v420, %v416
  %v541 = vpack.c.b16 %v425, %v421
  %v542 = vpack.c.b16 %v426, %v422
  %v543 = vpack.c.b16 %v427, %v423
  %v544 = vpack.c.b16 %v428, %v424
  %v545 = vpack.c.b16 %v433, %v429
  %v546 = vpack.c.b16 %v434, %v430
  %v547 = vpack.c.b16 %v435, %v431
  %v548 = vpack.c.b16 %v436, %v432
  %v549 = vpack.c.b16 %v441, %v437
  %v550 = vpack.c.b16 %v442, %v438
  %v551 = vpack.c.b16 %v443, %v439
  %v552 = vpack.c.b16 %v444, %v440
  %v553 = vpack.c.b16 %v449, %v445
  %v554 = vpack.c.b16 %v450, %v446
  %v555 = vpack.c.b16 %v451, %v447
  %v556 = vpack.c.b16 %v452, %v448
  %v557 = vpack.c.b16 %v457, %v453
  %v558 = vpack.c.b16 %v458, %v454
  %v559 = vpack.c.b16 %v459, %v455
  %v560 = vpack.c.b16 %v460, %v456
  %vm661 = vcmask 130048
  %v663 = vsel %vm661, %v157, 0
  %665 = vmatprep.subr.bf16.mxu0 %v490
  %666 = vmatpush1.bf16.msra.mxu0 %v489
  %667 = vmatprep.subr.bf16.mxu0 %v486
  %668 = vmatpush1.bf16.msra.mxu0 %v485
  %669 = vmatprep.subr.bf16.mxu0 %v482
  %670 = vmatpush1.bf16.msra.mxu0 %v481
  %671 = vmatprep.subr.bf16.mxu0 %v478
  %672 = vmatpush1.bf16.msra.mxu0 %v477
  %673 = vmatprep.subr.bf16.mxu0 %v474
  %674 = vmatpush1.bf16.msra.mxu0 %v473
  %675 = vmatprep.subr.bf16.mxu0 %v470
  %676 = vmatpush1.bf16.msra.mxu0 %v469
  %677 = vmatprep.subr.bf16.mxu0 %v466
  %678 = vmatpush1.bf16.msra.mxu0 %v465
  %679 = vmatprep.subr.bf16.mxu0 %v462
  %680 = vmatpush1.bf16.msra.mxu0 %v461
  %681 = vmatprep.subr.bf16.mxu0 %v522
  %682 = vmatpush2.bf16.msra.mxu0 %v521
  %683 = vmatprep.subr.bf16.mxu0 %v518
  %684 = vmatpush2.bf16.msra.mxu0 %v517
  %685 = vmatprep.subr.bf16.mxu0 %v514
  %686 = vmatpush2.bf16.msra.mxu0 %v513
  %687 = vmatprep.subr.bf16.mxu0 %v510
  %688 = vmatpush2.bf16.msra.mxu0 %v509
  %689 = vmatprep.subr.bf16.mxu0 %v506
  %690 = vmatpush2.bf16.msra.mxu0 %v505
  %691 = vmatprep.subr.bf16.mxu0 %v502
  %692 = vmatpush2.bf16.msra.mxu0 %v501
  %693 = vmatprep.subr.bf16.mxu0 %v498
  %694 = vmatpush2.bf16.msra.mxu0 %v497
  %695 = vmatprep.subr.bf16.mxu0 %v494
  %696 = vmatpush2.bf16.msra.mxu0 %v493
  %697 = vmatprep.mubr.bf16.mxu0 %v155
  %698 = vmatmul.mubr.bf16.gmra.mxu0 %v154
  %v699 = vpop.f32.mrf.mxu0
  %v700 = vadd.f32 0.0, %v699
  %v701 = vpop.f32.mrf.mxu0
  %v702 = vadd.f32 0.0, %v701
  %v703 = vpop.f32.mrf.mxu0
  %v704 = vadd.f32 0.0, %v703
  %v705 = vpop.f32.mrf.mxu0
  %v706 = vadd.f32 0.0, %v705
  %707 = vdwg.mxu0
  %708 = vmatprep.subr.bf16.mxu0 %v554
  %709 = vmatpush1.bf16.msra.mxu0 %v553
  %710 = vmatprep.subr.bf16.mxu0 %v550
  %711 = vmatpush1.bf16.msra.mxu0 %v549
  %712 = vmatprep.subr.bf16.mxu0 %v546
  %713 = vmatpush1.bf16.msra.mxu0 %v545
  %714 = vmatprep.subr.bf16.mxu0 %v542
  %715 = vmatpush1.bf16.msra.mxu0 %v541
  %716 = vmatprep.subr.bf16.mxu0 %v538
  %717 = vmatpush1.bf16.msra.mxu0 %v537
  %718 = vmatprep.subr.bf16.mxu0 %v534
  %719 = vmatpush1.bf16.msra.mxu0 %v533
  %720 = vmatprep.subr.bf16.mxu0 %v530
  %721 = vmatpush1.bf16.msra.mxu0 %v529
  %722 = vmatprep.subr.bf16.mxu0 %v526
  %723 = vmatpush1.bf16.msra.mxu0 %v525
  %724 = vmatprep.subr.bf16.mxu0 0
  %725 = vmatpush2.bf16.msra.mxu0 0
  %726 = vmatprep.subr.bf16.mxu0 0
  %727 = vmatpush2.bf16.msra.mxu0 0
  %728 = vmatprep.subr.bf16.mxu0 0
  %729 = vmatpush2.bf16.msra.mxu0 0
  %730 = vmatprep.subr.bf16.mxu0 0
  %731 = vmatpush2.bf16.msra.mxu0 0
  %732 = vmatprep.subr.bf16.mxu0 0
  %733 = vmatpush2.bf16.msra.mxu0 0
  %734 = vmatprep.subr.bf16.mxu0 0
  %735 = vmatpush2.bf16.msra.mxu0 0
  %736 = vmatprep.subr.bf16.mxu0 0
  %737 = vmatpush2.bf16.msra.mxu0 0
  %738 = vmatprep.subr.bf16.mxu0 %v558
  %739 = vmatpush2.bf16.msra.mxu0 %v557
  %740 = vmatprep.mubr.bf16.mxu0 %v663
  %741 = vmatmul.mubr.bf16.gmra.mxu0 %v156
  %v742 = vpop.f32.mrf.mxu0
  %v743 = vadd.f32 %v700, %v742
  %v744 = vpop.f32.mrf.mxu0
  %v745 = vadd.f32 %v702, %v744
  %v746 = vpop.f32.mrf.mxu0
  %v747 = vadd.f32 %v704, %v746
  %v748 = vpop.f32.mrf.mxu0
  %v749 = vadd.f32 %v706, %v748
  %750 = vdwg.mxu0
  %751 = vmatprep.subr.bf16.mxu0 %v492
  %752 = vmatpush1.bf16.msra.mxu0 %v491
  %753 = vmatprep.subr.bf16.mxu0 %v488
  %754 = vmatpush1.bf16.msra.mxu0 %v487
  %755 = vmatprep.subr.bf16.mxu0 %v484
  %756 = vmatpush1.bf16.msra.mxu0 %v483
  %757 = vmatprep.subr.bf16.mxu0 %v480
  %758 = vmatpush1.bf16.msra.mxu0 %v479
  %759 = vmatprep.subr.bf16.mxu0 %v476
  %760 = vmatpush1.bf16.msra.mxu0 %v475
  %761 = vmatprep.subr.bf16.mxu0 %v472
  %762 = vmatpush1.bf16.msra.mxu0 %v471
  %763 = vmatprep.subr.bf16.mxu0 %v468
  %764 = vmatpush1.bf16.msra.mxu0 %v467
  %765 = vmatprep.subr.bf16.mxu0 %v464
  %766 = vmatpush1.bf16.msra.mxu0 %v463
  %767 = vmatprep.subr.bf16.mxu0 %v524
  %768 = vmatpush2.bf16.msra.mxu0 %v523
  %769 = vmatprep.subr.bf16.mxu0 %v520
  %770 = vmatpush2.bf16.msra.mxu0 %v519
  %771 = vmatprep.subr.bf16.mxu0 %v516
  %772 = vmatpush2.bf16.msra.mxu0 %v515
  %773 = vmatprep.subr.bf16.mxu0 %v512
  %774 = vmatpush2.bf16.msra.mxu0 %v511
  %775 = vmatprep.subr.bf16.mxu0 %v508
  %776 = vmatpush2.bf16.msra.mxu0 %v507
  %777 = vmatprep.subr.bf16.mxu0 %v504
  %778 = vmatpush2.bf16.msra.mxu0 %v503
  %779 = vmatprep.subr.bf16.mxu0 %v500
  %780 = vmatpush2.bf16.msra.mxu0 %v499
  %781 = vmatprep.subr.bf16.mxu0 %v496
  %782 = vmatpush2.bf16.msra.mxu0 %v495
  %783 = vmatprep.mubr.bf16.mxu0 %v155
  %784 = vmatmul.mubr.bf16.gmra.mxu0 %v154
  %v785 = vpop.f32.mrf.mxu0
  %v786 = vadd.f32 0.0, %v785
  %v787 = vpop.f32.mrf.mxu0
  %v788 = vadd.f32 0.0, %v787
  %v789 = vpop.f32.mrf.mxu0
  %v790 = vadd.f32 0.0, %v789
  %v791 = vpop.f32.mrf.mxu0
  %v792 = vadd.f32 0.0, %v791
  %793 = vdwg.mxu0
  %794 = vmatprep.subr.bf16.mxu0 %v556
  %795 = vmatpush1.bf16.msra.mxu0 %v555
  %796 = vmatprep.subr.bf16.mxu0 %v552
  %797 = vmatpush1.bf16.msra.mxu0 %v551
  %798 = vmatprep.subr.bf16.mxu0 %v548
  %799 = vmatpush1.bf16.msra.mxu0 %v547
  %800 = vmatprep.subr.bf16.mxu0 %v544
  %801 = vmatpush1.bf16.msra.mxu0 %v543
  %802 = vmatprep.subr.bf16.mxu0 %v540
  %803 = vmatpush1.bf16.msra.mxu0 %v539
  %804 = vmatprep.subr.bf16.mxu0 %v536
  %805 = vmatpush1.bf16.msra.mxu0 %v535
  %806 = vmatprep.subr.bf16.mxu0 %v532
  %807 = vmatpush1.bf16.msra.mxu0 %v531
  %808 = vmatprep.subr.bf16.mxu0 %v528
  %809 = vmatpush1.bf16.msra.mxu0 %v527
  %810 = vmatprep.subr.bf16.mxu0 0
  %811 = vmatpush2.bf16.msra.mxu0 0
  %812 = vmatprep.subr.bf16.mxu0 0
  %813 = vmatpush2.bf16.msra.mxu0 0
  %814 = vmatprep.subr.bf16.mxu0 0
  %815 = vmatpush2.bf16.msra.mxu0 0
  %816 = vmatprep.subr.bf16.mxu0 0
  %817 = vmatpush2.bf16.msra.mxu0 0
  %818 = vmatprep.subr.bf16.mxu0 0
  %819 = vmatpush2.bf16.msra.mxu0 0
  %820 = vmatprep.subr.bf16.mxu0 0
  %821 = vmatpush2.bf16.msra.mxu0 0
  %822 = vmatprep.subr.bf16.mxu0 0
  %823 = vmatpush2.bf16.msra.mxu0 0
  %824 = vmatprep.subr.bf16.mxu0 %v560
  %825 = vmatpush2.bf16.msra.mxu0 %v559
  %826 = vmatprep.mubr.bf16.mxu0 %v663
  %827 = vmatmul.mubr.bf16.gmra.mxu0 %v156
  %v828 = vpop.f32.mrf.mxu0
  %v829 = vadd.f32 %v786, %v828
  %v830 = vpop.f32.mrf.mxu0
  %v831 = vadd.f32 %v788, %v830
  %v832 = vpop.f32.mrf.mxu0
  %v833 = vadd.f32 %v790, %v832
  %v834 = vpop.f32.mrf.mxu0
  %v835 = vadd.f32 %v792, %v834
  %836 = vdwg.mxu0
  %v837 = vadd.f32 %v30, %v743
  %v838 = vadd.f32 %v31, %v745
  %v839 = vadd.f32 %v32, %v829
  %v840 = vadd.f32 %v33, %v831
  %v841 = vadd.f32 %v34, %v747
  %v842 = vadd.f32 %v35, %v749
  %v843 = vadd.f32 %v36, %v833
  %v844 = vadd.f32 %v37, %v835
  %845 = vst [vmem:[#allocation2] sm:$0xff] %v837
  %846 = vst [vmem:[#allocation2 + $0x8] sm:$0xff] %v838
  %847 = vst [vmem:[#allocation2 + $0x10] sm:$0xff] %v839
  %848 = vst [vmem:[#allocation2 + $0x18] sm:$0xff] %v840
  %849 = vst [vmem:[#allocation2 + $0x20] sm:$0xff] %v841
  %850 = vst [vmem:[#allocation2 + $0x28] sm:$0xff] %v842
  %851 = vst [vmem:[#allocation2 + $0x30] sm:$0xff] %v843
  %852 = vst [vmem:[#allocation2 + $0x38] sm:$0xff] %v844
  // Predicated region
  $region22: #{vvbp_forward.21} parent=0 // pred_check
    %p853 = pneg %p18
  $region23: #{vvbp_forward.21} parent=0 // pred_check_branch
    %855 = sbr.rel (%p853) target = $region25
  $region24: #{vvbp_forward.21} parent=0 // pred_region
    %v856 = vld [vmem:[#allocation2] sm:$0xff]
    %v857 = vld [vmem:[#allocation2 + $0x8] sm:$0xff]
    %v858 = vld [vmem:[#allocation2 + $0x10] sm:$0xff]
    %v859 = vld [vmem:[#allocation2 + $0x18] sm:$0xff]
    %v860 = vld [vmem:[#allocation2 + $0x20] sm:$0xff]
    %v861 = vld [vmem:[#allocation2 + $0x28] sm:$0xff]
    %v862 = vld [vmem:[#allocation2 + $0x30] sm:$0xff]
    %v863 = vld [vmem:[#allocation2 + $0x38] sm:$0xff]
    %v864 = vld [vmem:[%s2] sm:$0xff]
    %v865 = vld [vmem:[%s2 + $0x8] sm:$0xff]
    %867 = vset.pattern.permute.xlu0 0
    %868 = vperm.xlu0 %867, %v864
    %v869 = vpop.permute.xlu0 %868
    %872 = vset.pattern.permute.xlu0 0
    %873 = vperm.xlu0 %872, %v865
    %v874 = vpop.permute.xlu0 %873
    %v876 = vadd.f32 %v856, %v869
    %v877 = vadd.f32 %v857, %v869
    %v878 = vadd.f32 %v858, %v869
    %v879 = vadd.f32 %v859, %v869
    %v880 = vadd.f32 %v860, %v874
    %v881 = vadd.f32 %v861, %v874
    %v882 = vadd.f32 %v862, %v874
    %v883 = vadd.f32 %v863, %v874
    %v884 = vld [vmem:[%s3] sm:$0xff]
    %v885 = vld [vmem:[%s3 + $0x8] sm:$0xff]
    %v886 = vld [vmem:[%s3 + $0x10] sm:$0xff]
    %v887 = vld [vmem:[%s3 + $0x18] sm:$0xff]
    %v888 = vld [vmem:[%s3 + $0x20] sm:$0xff]
    %v889 = vld [vmem:[%s3 + $0x28] sm:$0xff]
    %v890 = vld [vmem:[%s3 + $0x30] sm:$0xff]
    %v891 = vld [vmem:[%s3 + $0x38] sm:$0xff]
    %v892 = vadd.f32 %v876, %v884
    %v893 = vadd.f32 %v877, %v885
    %v894 = vadd.f32 %v878, %v886
    %v895 = vadd.f32 %v879, %v887
    %v896 = vadd.f32 %v880, %v888
    %v897 = vadd.f32 %v881, %v889
    %v898 = vadd.f32 %v882, %v890
    %v899 = vadd.f32 %v883, %v891
    %v900 = vmax.f32 %v892, 0.0
    %v901 = vmax.f32 %v893, 0.0
    %v902 = vmax.f32 %v894, 0.0
    %v903 = vmax.f32 %v895, 0.0
    %v904 = vmax.f32 %v896, 0.0
    %v905 = vmax.f32 %v897, 0.0
    %v906 = vmax.f32 %v898, 0.0
    %v907 = vmax.f32 %v899, 0.0
    %908 = vst [vmem:[%s4] sm:$0xff] %v900
    %909 = vst [vmem:[%s4 + $0x8] sm:$0xff] %v901
    %910 = vst [vmem:[%s4 + $0x10] sm:$0xff] %v902
    %911 = vst [vmem:[%s4 + $0x18] sm:$0xff] %v903
    %912 = vst [vmem:[%s4 + $0x20] sm:$0xff] %v904
    %913 = vst [vmem:[%s4 + $0x28] sm:$0xff] %v905
    %914 = vst [vmem:[%s4 + $0x30] sm:$0xff] %v906
    %915 = vst [vmem:[%s4 + $0x38] sm:$0xff] %v907
  $region25: #{vvbp_forward.21} parent=0 // pred_fallthru
    _
  // Predicated region
  $region26: #{vvbp_forward.21} parent=0 // pred_check
    _
  $region27: #{vvbp_forward.21} parent=0 // pred_check_branch
    %917 = sbr.rel (0) target = $region29
  $region28: #{vvbp_forward.21} parent=0 // pred_region
    _
  $region29: #{vvbp_forward.21} parent=0 // pred_fallthru
    _
  // Predicated region
  $region30: #{vvbp_forward.21} parent=0 // pred_check
    _
  $region31: #{vvbp_forward.21} parent=0 // pred_check_branch
    %919 = sbr.rel (0) target = $region33
  $region32: #{vvbp_forward.21} parent=0 // pred_region
    _
  $region33: #{vvbp_forward.21} parent=0 // pred_fallthru
    _

// kernel: vvbp_forward.25
$region0: #{vvbp_forward.25}
  #allocation0 [shape = 'u32[]', space=smem, size = 0x4, offset = 0x4, fixed_abs, tag = 'smem constant byte address 0x4 - core index']
  #allocation1 [shape = 'u32[144,128]{1,0:T(1,128)}', space=vmem, size = 0x12000, scoped, tag = 'internal scratch']
  #allocation2 [shape = 'f32[1,512]{1,0:T(1,128)}', space=vmem, size = 0x800, scoped, tag = 'scratch operand']
  #allocation3 [shape = 'f32[1,1]{1,0:T(1,128)S(1)}', space=vmem, size = 0x200, scoped, tag = 'scoped memory for vvbp_forward.25']
  %s0 = inlined_call_operand.vmem [shape: bf16[1,400], index: 0, kind: input, shape index: {}]
  %s1 = inlined_call_operand.vmem [shape: bf16[400,512], index: 1, kind: input, shape index: {}]
  %s2 = inlined_call_operand.<no memory space> [shape: f32[1,1], index: 2, kind: input, shape index: {}]
  %s3 = inlined_call_operand.vmem [shape: f32[1,512], index: 3, kind: input, shape index: {}]
  %s4 = inlined_call_operand.vmem [shape: f32[1,512], index: 4, kind: output, shape index: {}]
  %s5 = sld [smem:[#allocation0]]
  $region34: #{vvbp_forward.25} parent=0
    _
  %s7 = ssub.s32 1, %s5
  %s8 = scalar_select 0, %s7, %s5
  %v9 = vstv %s2
  %10 = vst [vmem:[#allocation3] sm:$0x1] %v9
  // Predicated region
  $region2: #{vvbp_forward.25} parent=0 // pred_check
    _
  $region3: #{vvbp_forward.25} parent=0 // pred_check_branch
    %12 = sbr.rel (0) target = $region5
  $region4: #{vvbp_forward.25} parent=0 // pred_region
    _
  $region5: #{vvbp_forward.25} parent=0 // pred_fallthru
    _
  // Predicated region
  $region6: #{vvbp_forward.25} parent=0 // pred_check
    _
  $region7: #{vvbp_forward.25} parent=0 // pred_check_branch
    %14 = sbr.rel (0) target = $region9
  $region8: #{vvbp_forward.25} parent=0 // pred_region
    _
  $region9: #{vvbp_forward.25} parent=0 // pred_fallthru
    _
  // Predicated region
  $region10: #{vvbp_forward.25} parent=0 // pred_check
    _
  $region11: #{vvbp_forward.25} parent=0 // pred_check_branch
    %16 = sbr.rel (0) target = $region13
  $region12: #{vvbp_forward.25} parent=0 // pred_region
    _
  $region13: #{vvbp_forward.25} parent=0 // pred_fallthru
    _
  // Predicated region
  $region14: #{vvbp_forward.25} parent=0 // pred_check
    _
  $region15: #{vvbp_forward.25} parent=0 // pred_check_branch
    %18 = sbr.rel (0) target = $region17
  $region16: #{vvbp_forward.25} parent=0 // pred_region
    _
  $region17: #{vvbp_forward.25} parent=0 // pred_fallthru
    _
  %p20 = scmp.eq.s32.totalorder 0, 0
  // Predicated region
  $region18: #{vvbp_forward.25} parent=0 // pred_check
    %p21 = pneg %p20
  $region19: #{vvbp_forward.25} parent=0 // pred_check_branch
    %23 = sbr.rel (%p21) target = $region21
  $region20: #{vvbp_forward.25} parent=0 // pred_region
    %v24 = vlaneseq
    %vm25 = vcmp.ge.s32.totalorder %v24, 0
    %vm26 = vcmp.lt.s32.totalorder %v24, 512
    %vm27 = vmand %vm25, %vm26
    %28 = vst.msk [vmem:[#allocation2] sm:$0xf] %vm27, 0.0
  $region21: #{vvbp_forward.25} parent=0 // pred_fallthru
    _
  %v29 = vld [vmem:[#allocation2] sm:$0xf]
  %v30 = vld [vmem:[%s0] sm:$0xf]
  %v31 = vld [vmem:[%s1] sm:$0xff]
  %v32 = vld [vmem:[%s1 + $0x8] sm:$0xff]
  %v33 = vld [vmem:[%s1 + $0x10] sm:$0xff]
  %v34 = vld [vmem:[%s1 + $0x18] sm:$0xff]
  %v35 = vld [vmem:[%s1 + $0x20] sm:$0xff]
  %v36 = vld [vmem:[%s1 + $0x28] sm:$0xff]
  %v37 = vld [vmem:[%s1 + $0x30] sm:$0xff]
  %v38 = vld [vmem:[%s1 + $0x38] sm:$0xff]
  %v39 = vld [vmem:[%s1 + $0x40] sm:$0xff]
  %v40 = vld [vmem:[%s1 + $0x48] sm:$0xff]
  %v41 = vld [vmem:[%s1 + $0x50] sm:$0xff]
  %v42 = vld [vmem:[%s1 + $0x58] sm:$0xff]
  %v43 = vld [vmem:[%s1 + $0x60] sm:$0xff]
  %v44 = vld [vmem:[%s1 + $0x68] sm:$0xff]
  %v45 = vld [vmem:[%s1 + $0x70] sm:$0xff]
  %v46 = vld [vmem:[%s1 + $0x78] sm:$0xff]
  %v47 = vld [vmem:[%s1 + $0x80] sm:$0xff]
  %v48 = vld [vmem:[%s1 + $0x88] sm:$0xff]
  %v49 = vld [vmem:[%s1 + $0x90] sm:$0xff]
  %v50 = vld [vmem:[%s1 + $0x98] sm:$0xff]
  %v51 = vld [vmem:[%s1 + $0xa0] sm:$0xff]
  %v52 = vld [vmem:[%s1 + $0xa8] sm:$0xff]
  %v53 = vld [vmem:[%s1 + $0xb0] sm:$0xff]
  %v54 = vld [vmem:[%s1 + $0xb8] sm:$0xff]
  %v55 = vld [vmem:[%s1 + $0xc0] sm:$0xff]
  %v56 = vld [vmem:[%s1 + $0xc8] sm:$0xff]
  %v57 = vld [vmem:[%s1 + $0xd0] sm:$0xff]
  %v58 = vld [vmem:[%s1 + $0xd8] sm:$0xff]
  %v59 = vld [vmem:[%s1 + $0xe0] sm:$0xff]
  %v60 = vld [vmem:[%s1 + $0xe8] sm:$0xff]
  %v61 = vld [vmem:[%s1 + $0xf0] sm:$0xff]
  %v62 = vld [vmem:[%s1 + $0xf8] sm:$0xff]
  %v63 = vld [vmem:[%s1 + $0x100] sm:$0xff]
  %v64 = vld [vmem:[%s1 + $0x108] sm:$0xff]
  %v65 = vld [vmem:[%s1 + $0x110] sm:$0xff]
  %v66 = vld [vmem:[%s1 + $0x118] sm:$0xff]
  %v67 = vld [vmem:[%s1 + $0x120] sm:$0xff]
  %v68 = vld [vmem:[%s1 + $0x128] sm:$0xff]
  %v69 = vld [vmem:[%s1 + $0x130] sm:$0xff]
  %v70 = vld [vmem:[%s1 + $0x138] sm:$0xff]
  %v71 = vld [vmem:[%s1 + $0x140] sm:$0xff]
  %v72 = vld [vmem:[%s1 + $0x148] sm:$0xff]
  %v73 = vld [vmem:[%s1 + $0x150] sm:$0xff]
  %v74 = vld [vmem:[%s1 + $0x158] sm:$0xff]
  %v75 = vld [vmem:[%s1 + $0x160] sm:$0xff]
  %v76 = vld [vmem:[%s1 + $0x168] sm:$0xff]
  %v77 = vld [vmem:[%s1 + $0x170] sm:$0xff]
  %v78 = vld [vmem:[%s1 + $0x178] sm:$0xff]
  %v79 = vld [vmem:[%s1 + $0x180] sm:$0xff]
  %v80 = vld [vmem:[%s1 + $0x188] sm:$0xff]
  %v81 = vld [vmem:[%s1 + $0x190] sm:$0xff]
  %v82 = vld [vmem:[%s1 + $0x198] sm:$0xff]
  %v83 = vld [vmem:[%s1 + $0x1a0] sm:$0xff]
  %v84 = vld [vmem:[%s1 + $0x1a8] sm:$0xff]
  %v85 = vld [vmem:[%s1 + $0x1b0] sm:$0xff]
  %v86 = vld [vmem:[%s1 + $0x1b8] sm:$0xff]
  %v87 = vld [vmem:[%s1 + $0x1c0] sm:$0xff]
  %v88 = vld [vmem:[%s1 + $0x1c8] sm:$0xff]
  %v89 = vld [vmem:[%s1 + $0x1d0] sm:$0xff]
  %v90 = vld [vmem:[%s1 + $0x1d8] sm:$0xff]
  %v91 = vld [vmem:[%s1 + $0x1e0] sm:$0xff]
  %v92 = vld [vmem:[%s1 + $0x1e8] sm:$0xff]
  %v93 = vld [vmem:[%s1 + $0x1f0] sm:$0xff]
  %v94 = vld [vmem:[%s1 + $0x1f8] sm:$0xff]
  %v95 = vld [vmem:[%s1 + $0x200] sm:$0xff]
  %v96 = vld [vmem:[%s1 + $0x208] sm:$0xff]
  %v97 = vld [vmem:[%s1 + $0x210] sm:$0xff]
  %v98 = vld [vmem:[%s1 + $0x218] sm:$0xff]
  %v99 = vld [vmem:[%s1 + $0x220] sm:$0xff]
  %v100 = vld [vmem:[%s1 + $0x228] sm:$0xff]
  %v101 = vld [vmem:[%s1 + $0x230] sm:$0xff]
  %v102 = vld [vmem:[%s1 + $0x238] sm:$0xff]
  %v103 = vld [vmem:[%s1 + $0x240] sm:$0xff]
  %v104 = vld [vmem:[%s1 + $0x248] sm:$0xff]
  %v105 = vld [vmem:[%s1 + $0x250] sm:$0xff]
  %v106 = vld [vmem:[%s1 + $0x258] sm:$0xff]
  %v107 = vld [vmem:[%s1 + $0x260] sm:$0xff]
  %v108 = vld [vmem:[%s1 + $0x268] sm:$0xff]
  %v109 = vld [vmem:[%s1 + $0x270] sm:$0xff]
  %v110 = vld [vmem:[%s1 + $0x278] sm:$0xff]
  %v111 = vld [vmem:[%s1 + $0x280] sm:$0xff]
  %v112 = vld [vmem:[%s1 + $0x288] sm:$0xff]
  %v113 = vld [vmem:[%s1 + $0x290] sm:$0xff]
  %v114 = vld [vmem:[%s1 + $0x298] sm:$0xff]
  %v115 = vld [vmem:[%s1 + $0x2a0] sm:$0xff]
  %v116 = vld [vmem:[%s1 + $0x2a8] sm:$0xff]
  %v117 = vld [vmem:[%s1 + $0x2b0] sm:$0xff]
  %v118 = vld [vmem:[%s1 + $0x2b8] sm:$0xff]
  %v119 = vld [vmem:[%s1 + $0x2c0] sm:$0xff]
  %v120 = vld [vmem:[%s1 + $0x2c8] sm:$0xff]
  %v121 = vld [vmem:[%s1 + $0x2d0] sm:$0xff]
  %v122 = vld [vmem:[%s1 + $0x2d8] sm:$0xff]
  %v123 = vld [vmem:[%s1 + $0x2e0] sm:$0xff]
  %v124 = vld [vmem:[%s1 + $0x2e8] sm:$0xff]
  %v125 = vld [vmem:[%s1 + $0x2f0] sm:$0xff]
  %v126 = vld [vmem:[%s1 + $0x2f8] sm:$0xff]
  %v127 = vld [vmem:[%s1 + $0x300] sm:$0xff]
  %v128 = vld [vmem:[%s1 + $0x308] sm:$0xff]
  %v129 = vld [vmem:[%s1 + $0x310] sm:$0xff]
  %v130 = vld [vmem:[%s1 + $0x318] sm:$0xff]
  %v133 = vunpack.c.l.s4 1966171168
  %v134 = vunpack.c.0.s8 %v133
  %v135 = vlaneseq
  %v136 = vshrl.u32 %v135, 7
  %v137 = vsub.s32 %v134, %v136
  %v138 = vrot.slane %v30, %v137
  %v139 = vcombine.high %v138, %v138
  %v141 = vunpack.c.l.s4 1966171168
  %v142 = vunpack.c.0.s8 %v141
  %v143 = vlaneseq
  %v144 = vshrl.u32 %v143, 7
  %v145 = vsub.s32 %v142, %v144
  %v146 = vrot.slane %v138, %v145
  %v148 = vunpack.c.l.s4 1966171168
  %v149 = vunpack.c.0.s8 %v148
  %v150 = vlaneseq
  %v151 = vshrl.u32 %v150, 7
  %v152 = vsub.s32 %v149, %v151
  %v153 = vrot.slane %v139, %v152
  %v154 = vcombine.high %v146, %v146
  %v155 = vcombine.high %v153, %v153
  %v259 = vunpack.c.l.b16 %v31
  %v260 = vunpack.c.h.b16 %v31
  %v261 = vunpack.c.l.b16 %v32
  %v262 = vunpack.c.h.b16 %v32
  %v263 = vunpack.c.l.b16 %v33
  %v264 = vunpack.c.h.b16 %v33
  %v265 = vunpack.c.l.b16 %v34
  %v266 = vunpack.c.h.b16 %v34
  %v267 = vunpack.c.l.b16 %v35
  %v268 = vunpack.c.h.b16 %v35
  %v269 = vunpack.c.l.b16 %v36
  %v270 = vunpack.c.h.b16 %v36
  %v271 = vunpack.c.l.b16 %v37
  %v272 = vunpack.c.h.b16 %v37
  %v273 = vunpack.c.l.b16 %v38
  %v274 = vunpack.c.h.b16 %v38
  %v275 = vunpack.c.l.b16 %v39
  %v276 = vunpack.c.h.b16 %v39
  %v277 = vunpack.c.l.b16 %v40
  %v278 = vunpack.c.h.b16 %v40
  %v279 = vunpack.c.l.b16 %v41
  %v280 = vunpack.c.h.b16 %v41
  %v281 = vunpack.c.l.b16 %v42
  %v282 = vunpack.c.h.b16 %v42
  %v283 = vunpack.c.l.b16 %v43
  %v284 = vunpack.c.h.b16 %v43
  %v285 = vunpack.c.l.b16 %v44
  %v286 = vunpack.c.h.b16 %v44
  %v287 = vunpack.c.l.b16 %v45
  %v288 = vunpack.c.h.b16 %v45
  %v289 = vunpack.c.l.b16 %v46
  %v290 = vunpack.c.h.b16 %v46
  %v291 = vunpack.c.l.b16 %v47
  %v292 = vunpack.c.h.b16 %v47
  %v293 = vunpack.c.l.b16 %v48
  %v294 = vunpack.c.h.b16 %v48
  %v295 = vunpack.c.l.b16 %v49
  %v296 = vunpack.c.h.b16 %v49
  %v297 = vunpack.c.l.b16 %v50
  %v298 = vunpack.c.h.b16 %v50
  %v299 = vunpack.c.l.b16 %v51
  %v300 = vunpack.c.h.b16 %v51
  %v301 = vunpack.c.l.b16 %v52
  %v302 = vunpack.c.h.b16 %v52
  %v303 = vunpack.c.l.b16 %v53
  %v304 = vunpack.c.h.b16 %v53
  %v305 = vunpack.c.l.b16 %v54
  %v306 = vunpack.c.h.b16 %v54
  %v307 = vunpack.c.l.b16 %v55
  %v308 = vunpack.c.h.b16 %v55
  %v309 = vunpack.c.l.b16 %v56
  %v310 = vunpack.c.h.b16 %v56
  %v311 = vunpack.c.l.b16 %v57
  %v312 = vunpack.c.h.b16 %v57
  %v313 = vunpack.c.l.b16 %v58
  %v314 = vunpack.c.h.b16 %v58
  %v315 = vunpack.c.l.b16 %v59
  %v316 = vunpack.c.h.b16 %v59
  %v317 = vunpack.c.l.b16 %v60
  %v318 = vunpack.c.h.b16 %v60
  %v319 = vunpack.c.l.b16 %v61
  %v320 = vunpack.c.h.b16 %v61
  %v321 = vunpack.c.l.b16 %v62
  %v322 = vunpack.c.h.b16 %v62
  %v323 = vunpack.c.l.b16 %v63
  %v324 = vunpack.c.h.b16 %v63
  %v325 = vunpack.c.l.b16 %v64
  %v326 = vunpack.c.h.b16 %v64
  %v327 = vunpack.c.l.b16 %v65
  %v328 = vunpack.c.h.b16 %v65
  %v329 = vunpack.c.l.b16 %v66
  %v330 = vunpack.c.h.b16 %v66
  %v331 = vunpack.c.l.b16 %v67
  %v332 = vunpack.c.h.b16 %v67
  %v333 = vunpack.c.l.b16 %v68
  %v334 = vunpack.c.h.b16 %v68
  %v335 = vunpack.c.l.b16 %v69
  %v336 = vunpack.c.h.b16 %v69
  %v337 = vunpack.c.l.b16 %v70
  %v338 = vunpack.c.h.b16 %v70
  %v339 = vunpack.c.l.b16 %v71
  %v340 = vunpack.c.h.b16 %v71
  %v341 = vunpack.c.l.b16 %v72
  %v342 = vunpack.c.h.b16 %v72
  %v343 = vunpack.c.l.b16 %v73
  %v344 = vunpack.c.h.b16 %v73
  %v345 = vunpack.c.l.b16 %v74
  %v346 = vunpack.c.h.b16 %v74
  %v347 = vunpack.c.l.b16 %v75
  %v348 = vunpack.c.h.b16 %v75
  %v349 = vunpack.c.l.b16 %v76
  %v350 = vunpack.c.h.b16 %v76
  %v351 = vunpack.c.l.b16 %v77
  %v352 = vunpack.c.h.b16 %v77
  %v353 = vunpack.c.l.b16 %v78
  %v354 = vunpack.c.h.b16 %v78
  %v355 = vunpack.c.l.b16 %v79
  %v356 = vunpack.c.h.b16 %v79
  %v357 = vunpack.c.l.b16 %v80
  %v358 = vunpack.c.h.b16 %v80
  %v359 = vunpack.c.l.b16 %v81
  %v360 = vunpack.c.h.b16 %v81
  %v361 = vunpack.c.l.b16 %v82
  %v362 = vunpack.c.h.b16 %v82
  %v363 = vunpack.c.l.b16 %v83
  %v364 = vunpack.c.h.b16 %v83
  %v365 = vunpack.c.l.b16 %v84
  %v366 = vunpack.c.h.b16 %v84
  %v367 = vunpack.c.l.b16 %v85
  %v368 = vunpack.c.h.b16 %v85
  %v369 = vunpack.c.l.b16 %v86
  %v370 = vunpack.c.h.b16 %v86
  %v371 = vunpack.c.l.b16 %v87
  %v372 = vunpack.c.h.b16 %v87
  %v373 = vunpack.c.l.b16 %v88
  %v374 = vunpack.c.h.b16 %v88
  %v375 = vunpack.c.l.b16 %v89
  %v376 = vunpack.c.h.b16 %v89
  %v377 = vunpack.c.l.b16 %v90
  %v378 = vunpack.c.h.b16 %v90
  %v379 = vunpack.c.l.b16 %v91
  %v380 = vunpack.c.h.b16 %v91
  %v381 = vunpack.c.l.b16 %v92
  %v382 = vunpack.c.h.b16 %v92
  %v383 = vunpack.c.l.b16 %v93
  %v384 = vunpack.c.h.b16 %v93
  %v385 = vunpack.c.l.b16 %v94
  %v386 = vunpack.c.h.b16 %v94
  %v387 = vunpack.c.l.b16 %v95
  %v388 = vunpack.c.h.b16 %v95
  %v389 = vunpack.c.l.b16 %v96
  %v390 = vunpack.c.h.b16 %v96
  %v391 = vunpack.c.l.b16 %v97
  %v392 = vunpack.c.h.b16 %v97
  %v393 = vunpack.c.l.b16 %v98
  %v394 = vunpack.c.h.b16 %v98
  %v395 = vunpack.c.l.b16 %v99
  %v396 = vunpack.c.h.b16 %v99
  %v397 = vunpack.c.l.b16 %v100
  %v398 = vunpack.c.h.b16 %v100
  %v399 = vunpack.c.l.b16 %v101
  %v400 = vunpack.c.h.b16 %v101
  %v401 = vunpack.c.l.b16 %v102
  %v402 = vunpack.c.h.b16 %v102
  %v403 = vunpack.c.l.b16 %v103
  %v404 = vunpack.c.h.b16 %v103
  %v405 = vunpack.c.l.b16 %v104
  %v406 = vunpack.c.h.b16 %v104
  %v407 = vunpack.c.l.b16 %v105
  %v408 = vunpack.c.h.b16 %v105
  %v409 = vunpack.c.l.b16 %v106
  %v410 = vunpack.c.h.b16 %v106
  %v411 = vunpack.c.l.b16 %v107
  %v412 = vunpack.c.h.b16 %v107
  %v413 = vunpack.c.l.b16 %v108
  %v414 = vunpack.c.h.b16 %v108
  %v415 = vunpack.c.l.b16 %v109
  %v416 = vunpack.c.h.b16 %v109
  %v417 = vunpack.c.l.b16 %v110
  %v418 = vunpack.c.h.b16 %v110
  %v419 = vunpack.c.l.b16 %v111
  %v420 = vunpack.c.h.b16 %v111
  %v421 = vunpack.c.l.b16 %v112
  %v422 = vunpack.c.h.b16 %v112
  %v423 = vunpack.c.l.b16 %v113
  %v424 = vunpack.c.h.b16 %v113
  %v425 = vunpack.c.l.b16 %v114
  %v426 = vunpack.c.h.b16 %v114
  %v427 = vunpack.c.l.b16 %v115
  %v428 = vunpack.c.h.b16 %v115
  %v429 = vunpack.c.l.b16 %v116
  %v430 = vunpack.c.h.b16 %v116
  %v431 = vunpack.c.l.b16 %v117
  %v432 = vunpack.c.h.b16 %v117
  %v433 = vunpack.c.l.b16 %v118
  %v434 = vunpack.c.h.b16 %v118
  %v435 = vunpack.c.l.b16 %v119
  %v436 = vunpack.c.h.b16 %v119
  %v437 = vunpack.c.l.b16 %v120
  %v438 = vunpack.c.h.b16 %v120
  %v439 = vunpack.c.l.b16 %v121
  %v440 = vunpack.c.h.b16 %v121
  %v441 = vunpack.c.l.b16 %v122
  %v442 = vunpack.c.h.b16 %v122
  %v443 = vunpack.c.l.b16 %v123
  %v444 = vunpack.c.h.b16 %v123
  %v445 = vunpack.c.l.b16 %v124
  %v446 = vunpack.c.h.b16 %v124
  %v447 = vunpack.c.l.b16 %v125
  %v448 = vunpack.c.h.b16 %v125
  %v449 = vunpack.c.l.b16 %v126
  %v450 = vunpack.c.h.b16 %v126
  %v451 = vunpack.c.l.b16 %v127
  %v452 = vunpack.c.h.b16 %v127
  %v453 = vunpack.c.l.b16 %v128
  %v454 = vunpack.c.h.b16 %v128
  %v455 = vunpack.c.l.b16 %v129
  %v456 = vunpack.c.h.b16 %v129
  %v457 = vunpack.c.l.b16 %v130
  %v458 = vunpack.c.h.b16 %v130
  %v459 = vpack.c.b16 %v263, %v259
  %v460 = vpack.c.b16 %v264, %v260
  %v461 = vpack.c.b16 %v265, %v261
  %v462 = vpack.c.b16 %v266, %v262
  %v463 = vpack.c.b16 %v271, %v267
  %v464 = vpack.c.b16 %v272, %v268
  %v465 = vpack.c.b16 %v273, %v269
  %v466 = vpack.c.b16 %v274, %v270
  %v467 = vpack.c.b16 %v279, %v275
  %v468 = vpack.c.b16 %v280, %v276
  %v469 = vpack.c.b16 %v281, %v277
  %v470 = vpack.c.b16 %v282, %v278
  %v471 = vpack.c.b16 %v287, %v283
  %v472 = vpack.c.b16 %v288, %v284
  %v473 = vpack.c.b16 %v289, %v285
  %v474 = vpack.c.b16 %v290, %v286
  %v475 = vpack.c.b16 %v295, %v291
  %v476 = vpack.c.b16 %v296, %v292
  %v477 = vpack.c.b16 %v297, %v293
  %v478 = vpack.c.b16 %v298, %v294
  %v479 = vpack.c.b16 %v303, %v299
  %v480 = vpack.c.b16 %v304, %v300
  %v481 = vpack.c.b16 %v305, %v301
  %v482 = vpack.c.b16 %v306, %v302
  %v483 = vpack.c.b16 %v311, %v307
  %v484 = vpack.c.b16 %v312, %v308
  %v485 = vpack.c.b16 %v313, %v309
  %v486 = vpack.c.b16 %v314, %v310
  %v487 = vpack.c.b16 %v319, %v315
  %v488 = vpack.c.b16 %v320, %v316
  %v489 = vpack.c.b16 %v321, %v317
  %v490 = vpack.c.b16 %v322, %v318
  %v491 = vpack.c.b16 %v327, %v323
  %v492 = vpack.c.b16 %v328, %v324
  %v493 = vpack.c.b16 %v329, %v325
  %v494 = vpack.c.b16 %v330, %v326
  %v495 = vpack.c.b16 %v335, %v331
  %v496 = vpack.c.b16 %v336, %v332
  %v497 = vpack.c.b16 %v337, %v333
  %v498 = vpack.c.b16 %v338, %v334
  %v499 = vpack.c.b16 %v343, %v339
  %v500 = vpack.c.b16 %v344, %v340
  %v501 = vpack.c.b16 %v345, %v341
  %v502 = vpack.c.b16 %v346, %v342
  %v503 = vpack.c.b16 %v351, %v347
  %v504 = vpack.c.b16 %v352, %v348
  %v505 = vpack.c.b16 %v353, %v349
  %v506 = vpack.c.b16 %v354, %v350
  %v507 = vpack.c.b16 %v359, %v355
  %v508 = vpack.c.b16 %v360, %v356
  %v509 = vpack.c.b16 %v361, %v357
  %v510 = vpack.c.b16 %v362, %v358
  %v511 = vpack.c.b16 %v367, %v363
  %v512 = vpack.c.b16 %v368, %v364
  %v513 = vpack.c.b16 %v369, %v365
  %v514 = vpack.c.b16 %v370, %v366
  %v515 = vpack.c.b16 %v375, %v371
  %v516 = vpack.c.b16 %v376, %v372
  %v517 = vpack.c.b16 %v377, %v373
  %v518 = vpack.c.b16 %v378, %v374
  %v519 = vpack.c.b16 %v383, %v379
  %v520 = vpack.c.b16 %v384, %v380
  %v521 = vpack.c.b16 %v385, %v381
  %v522 = vpack.c.b16 %v386, %v382
  %v523 = vpack.c.b16 %v391, %v387
  %v524 = vpack.c.b16 %v392, %v388
  %v525 = vpack.c.b16 %v393, %v389
  %v526 = vpack.c.b16 %v394, %v390
  %v527 = vpack.c.b16 %v399, %v395
  %v528 = vpack.c.b16 %v400, %v396
  %v529 = vpack.c.b16 %v401, %v397
  %v530 = vpack.c.b16 %v402, %v398
  %v531 = vpack.c.b16 %v407, %v403
  %v532 = vpack.c.b16 %v408, %v404
  %v533 = vpack.c.b16 %v409, %v405
  %v534 = vpack.c.b16 %v410, %v406
  %v535 = vpack.c.b16 %v415, %v411
  %v536 = vpack.c.b16 %v416, %v412
  %v537 = vpack.c.b16 %v417, %v413
  %v538 = vpack.c.b16 %v418, %v414
  %v539 = vpack.c.b16 %v423, %v419
  %v540 = vpack.c.b16 %v424, %v420
  %v541 = vpack.c.b16 %v425, %v421
  %v542 = vpack.c.b16 %v426, %v422
  %v543 = vpack.c.b16 %v431, %v427
  %v544 = vpack.c.b16 %v432, %v428
  %v545 = vpack.c.b16 %v433, %v429
  %v546 = vpack.c.b16 %v434, %v430
  %v547 = vpack.c.b16 %v439, %v435
  %v548 = vpack.c.b16 %v440, %v436
  %v549 = vpack.c.b16 %v441, %v437
  %v550 = vpack.c.b16 %v442, %v438
  %v551 = vpack.c.b16 %v447, %v443
  %v552 = vpack.c.b16 %v448, %v444
  %v553 = vpack.c.b16 %v449, %v445
  %v554 = vpack.c.b16 %v450, %v446
  %v555 = vpack.c.b16 %v455, %v451
  %v556 = vpack.c.b16 %v456, %v452
  %v557 = vpack.c.b16 %v457, %v453
  %v558 = vpack.c.b16 %v458, %v454
  %vm659 = vcmask 130048
  %v661 = vsel %vm659, %v155, 0
  %663 = vmatprep.subr.bf16.mxu0 %v488
  %664 = vmatpush1.bf16.msra.mxu0 %v487
  %665 = vmatprep.subr.bf16.mxu0 %v484
  %666 = vmatpush1.bf16.msra.mxu0 %v483
  %667 = vmatprep.subr.bf16.mxu0 %v480
  %668 = vmatpush1.bf16.msra.mxu0 %v479
  %669 = vmatprep.subr.bf16.mxu0 %v476
  %670 = vmatpush1.bf16.msra.mxu0 %v475
  %671 = vmatprep.subr.bf16.mxu0 %v472
  %672 = vmatpush1.bf16.msra.mxu0 %v471
  %673 = vmatprep.subr.bf16.mxu0 %v468
  %674 = vmatpush1.bf16.msra.mxu0 %v467
  %675 = vmatprep.subr.bf16.mxu0 %v464
  %676 = vmatpush1.bf16.msra.mxu0 %v463
  %677 = vmatprep.subr.bf16.mxu0 %v460
  %678 = vmatpush1.bf16.msra.mxu0 %v459
  %679 = vmatprep.subr.bf16.mxu0 %v520
  %680 = vmatpush2.bf16.msra.mxu0 %v519
  %681 = vmatprep.subr.bf16.mxu0 %v516
  %682 = vmatpush2.bf16.msra.mxu0 %v515
  %683 = vmatprep.subr.bf16.mxu0 %v512
  %684 = vmatpush2.bf16.msra.mxu0 %v511
  %685 = vmatprep.subr.bf16.mxu0 %v508
  %686 = vmatpush2.bf16.msra.mxu0 %v507
  %687 = vmatprep.subr.bf16.mxu0 %v504
  %688 = vmatpush2.bf16.msra.mxu0 %v503
  %689 = vmatprep.subr.bf16.mxu0 %v500
  %690 = vmatpush2.bf16.msra.mxu0 %v499
  %691 = vmatprep.subr.bf16.mxu0 %v496
  %692 = vmatpush2.bf16.msra.mxu0 %v495
  %693 = vmatprep.subr.bf16.mxu0 %v492
  %694 = vmatpush2.bf16.msra.mxu0 %v491
  %695 = vmatprep.mubr.bf16.mxu0 %v153
  %696 = vmatmul.mubr.bf16.gmra.mxu0 %v146
  %v697 = vpop.f32.mrf.mxu0
  %v698 = vadd.f32 0.0, %v697
  %v699 = vpop.f32.mrf.mxu0
  %v700 = vadd.f32 0.0, %v699
  %v701 = vpop.f32.mrf.mxu0
  %v702 = vpop.f32.mrf.mxu0
  %703 = vdwg.mxu0
  %704 = vmatprep.subr.bf16.mxu0 %v552
  %705 = vmatpush1.bf16.msra.mxu0 %v551
  %706 = vmatprep.subr.bf16.mxu0 %v548
  %707 = vmatpush1.bf16.msra.mxu0 %v547
  %708 = vmatprep.subr.bf16.mxu0 %v544
  %709 = vmatpush1.bf16.msra.mxu0 %v543
  %710 = vmatprep.subr.bf16.mxu0 %v540
  %711 = vmatpush1.bf16.msra.mxu0 %v539
  %712 = vmatprep.subr.bf16.mxu0 %v536
  %713 = vmatpush1.bf16.msra.mxu0 %v535
  %714 = vmatprep.subr.bf16.mxu0 %v532
  %715 = vmatpush1.bf16.msra.mxu0 %v531
  %716 = vmatprep.subr.bf16.mxu0 %v528
  %717 = vmatpush1.bf16.msra.mxu0 %v527
  %718 = vmatprep.subr.bf16.mxu0 %v524
  %719 = vmatpush1.bf16.msra.mxu0 %v523
  %720 = vmatprep.subr.bf16.mxu0 0
  %721 = vmatpush2.bf16.msra.mxu0 0
  %722 = vmatprep.subr.bf16.mxu0 0
  %723 = vmatpush2.bf16.msra.mxu0 0
  %724 = vmatprep.subr.bf16.mxu0 0
  %725 = vmatpush2.bf16.msra.mxu0 0
  %726 = vmatprep.subr.bf16.mxu0 0
  %727 = vmatpush2.bf16.msra.mxu0 0
  %728 = vmatprep.subr.bf16.mxu0 0
  %729 = vmatpush2.bf16.msra.mxu0 0
  %730 = vmatprep.subr.bf16.mxu0 0
  %731 = vmatpush2.bf16.msra.mxu0 0
  %732 = vmatprep.subr.bf16.mxu0 0
  %733 = vmatpush2.bf16.msra.mxu0 0
  %734 = vmatprep.subr.bf16.mxu0 %v556
  %735 = vmatpush2.bf16.msra.mxu0 %v555
  %736 = vmatprep.mubr.bf16.mxu0 %v661
  %737 = vmatmul.mubr.bf16.gmra.mxu0 %v154
  %v738 = vpop.f32.mrf.mxu0
  %v739 = vadd.f32 %v698, %v738
  %v740 = vpop.f32.mrf.mxu0
  %v741 = vadd.f32 %v700, %v740
  %v742 = vpop.f32.mrf.mxu0
  %v743 = vpop.f32.mrf.mxu0
  %744 = vdwg.mxu0
  %745 = vmatprep.subr.bf16.mxu0 %v490
  %746 = vmatpush1.bf16.msra.mxu0 %v489
  %747 = vmatprep.subr.bf16.mxu0 %v486
  %748 = vmatpush1.bf16.msra.mxu0 %v485
  %749 = vmatprep.subr.bf16.mxu0 %v482
  %750 = vmatpush1.bf16.msra.mxu0 %v481
  %751 = vmatprep.subr.bf16.mxu0 %v478
  %752 = vmatpush1.bf16.msra.mxu0 %v477
  %753 = vmatprep.subr.bf16.mxu0 %v474
  %754 = vmatpush1.bf16.msra.mxu0 %v473
  %755 = vmatprep.subr.bf16.mxu0 %v470
  %756 = vmatpush1.bf16.msra.mxu0 %v469
  %757 = vmatprep.subr.bf16.mxu0 %v466
  %758 = vmatpush1.bf16.msra.mxu0 %v465
  %759 = vmatprep.subr.bf16.mxu0 %v462
  %760 = vmatpush1.bf16.msra.mxu0 %v461
  %761 = vmatprep.subr.bf16.mxu0 %v522
  %762 = vmatpush2.bf16.msra.mxu0 %v521
  %763 = vmatprep.subr.bf16.mxu0 %v518
  %764 = vmatpush2.bf16.msra.mxu0 %v517
  %765 = vmatprep.subr.bf16.mxu0 %v514
  %766 = vmatpush2.bf16.msra.mxu0 %v513
  %767 = vmatprep.subr.bf16.mxu0 %v510
  %768 = vmatpush2.bf16.msra.mxu0 %v509
  %769 = vmatprep.subr.bf16.mxu0 %v506
  %770 = vmatpush2.bf16.msra.mxu0 %v505
  %771 = vmatprep.subr.bf16.mxu0 %v502
  %772 = vmatpush2.bf16.msra.mxu0 %v501
  %773 = vmatprep.subr.bf16.mxu0 %v498
  %774 = vmatpush2.bf16.msra.mxu0 %v497
  %775 = vmatprep.subr.bf16.mxu0 %v494
  %776 = vmatpush2.bf16.msra.mxu0 %v493
  %777 = vmatprep.mubr.bf16.mxu0 %v153
  %778 = vmatmul.mubr.bf16.gmra.mxu0 %v146
  %v779 = vpop.f32.mrf.mxu0
  %v780 = vadd.f32 0.0, %v779
  %v781 = vpop.f32.mrf.mxu0
  %v782 = vadd.f32 0.0, %v781
  %v783 = vpop.f32.mrf.mxu0
  %v784 = vpop.f32.mrf.mxu0
  %785 = vdwg.mxu0
  %786 = vmatprep.subr.bf16.mxu0 %v554
  %787 = vmatpush1.bf16.msra.mxu0 %v553
  %788 = vmatprep.subr.bf16.mxu0 %v550
  %789 = vmatpush1.bf16.msra.mxu0 %v549
  %790 = vmatprep.subr.bf16.mxu0 %v546
  %791 = vmatpush1.bf16.msra.mxu0 %v545
  %792 = vmatprep.subr.bf16.mxu0 %v542
  %793 = vmatpush1.bf16.msra.mxu0 %v541
  %794 = vmatprep.subr.bf16.mxu0 %v538
  %795 = vmatpush1.bf16.msra.mxu0 %v537
  %796 = vmatprep.subr.bf16.mxu0 %v534
  %797 = vmatpush1.bf16.msra.mxu0 %v533
  %798 = vmatprep.subr.bf16.mxu0 %v530
  %799 = vmatpush1.bf16.msra.mxu0 %v529
  %800 = vmatprep.subr.bf16.mxu0 %v526
  %801 = vmatpush1.bf16.msra.mxu0 %v525
  %802 = vmatprep.subr.bf16.mxu0 0
  %803 = vmatpush2.bf16.msra.mxu0 0
  %804 = vmatprep.subr.bf16.mxu0 0
  %805 = vmatpush2.bf16.msra.mxu0 0
  %806 = vmatprep.subr.bf16.mxu0 0
  %807 = vmatpush2.bf16.msra.mxu0 0
  %808 = vmatprep.subr.bf16.mxu0 0
  %809 = vmatpush2.bf16.msra.mxu0 0
  %810 = vmatprep.subr.bf16.mxu0 0
  %811 = vmatpush2.bf16.msra.mxu0 0
  %812 = vmatprep.subr.bf16.mxu0 0
  %813 = vmatpush2.bf16.msra.mxu0 0
  %814 = vmatprep.subr.bf16.mxu0 0
  %815 = vmatpush2.bf16.msra.mxu0 0
  %816 = vmatprep.subr.bf16.mxu0 %v558
  %817 = vmatpush2.bf16.msra.mxu0 %v557
  %818 = vmatprep.mubr.bf16.mxu0 %v661
  %819 = vmatmul.mubr.bf16.gmra.mxu0 %v154
  %v820 = vpop.f32.mrf.mxu0
  %v821 = vadd.f32 %v780, %v820
  %v822 = vpop.f32.mrf.mxu0
  %v823 = vadd.f32 %v782, %v822
  %v824 = vpop.f32.mrf.mxu0
  %v825 = vpop.f32.mrf.mxu0
  %826 = vdwg.mxu0
  %v831 = vcombine.low %v739, %v741
  %v832 = vcombine.low %v821, %v823
  %v834 = vunpack.c.l.s4 1966171168
  %v835 = vunpack.c.0.s8 %v834
  %v836 = vlaneseq
  %v837 = vshrl.u32 %v836, 7
  %v838 = vsub.s32 %v835, %v837
  %v839 = vrot.slane %v831, %v838
  %v841 = vunpack.c.l.s4 1966171168
  %v842 = vunpack.c.0.s8 %v841
  %v843 = vlaneseq
  %v844 = vshrl.u32 %v843, 7
  %v845 = vsub.s32 %v842, %v844
  %v846 = vrot.slane %v832, %v845
  %v847 = vcombine.low %v839, %v846
  %v849 = vunpack.c.l.s4 1966171168
  %v850 = vunpack.c.0.s8 %v849
  %v851 = vlaneseq
  %v852 = vshrl.u32 %v851, 7
  %v853 = vsub.s32 %v850, %v852
  %v854 = vrot.slane %v847, %v853
  %v856 = vadd.f32 %v29, %v854
  %v857 = vlaneseq
  %vm858 = vcmp.ge.s32.totalorder %v857, 0
  %vm859 = vcmp.lt.s32.totalorder %v857, 512
  %vm860 = vmand %vm858, %vm859
  %861 = vst.msk [vmem:[#allocation2] sm:$0xf] %vm860, %v856
  // Predicated region
  $region22: #{vvbp_forward.25} parent=0 // pred_check
    %p862 = pneg %p20
  $region23: #{vvbp_forward.25} parent=0 // pred_check_branch
    %864 = sbr.rel (%p862) target = $region25
  $region24: #{vvbp_forward.25} parent=0 // pred_region
    %v865 = vld [vmem:[#allocation2] sm:$0xf]
    %v866 = vld [vmem:[#allocation3] sm:$0x1]
    %868 = vset.pattern.permute.xlu0 0
    %869 = vperm.xlu0 %868, %v866
    %v870 = vpop.permute.xlu0 %869
    %v872 = vlaneseq
    %v873 = vshrl.u32 %v872, 7
    %v874 = vsub.s32 0, %v873
    %v875 = vrot.slane %v870, %v874
    %v876 = vadd.f32 %v865, %v875
    %v877 = vld [vmem:[%s3] sm:$0xf]
    %v878 = vadd.f32 %v876, %v877
    %v879 = vmax.f32 %v878, 0.0
    %880 = vst.msk [vmem:[%s4] sm:$0xf] %vm860, %v879
  $region25: #{vvbp_forward.25} parent=0 // pred_fallthru
    _
  // Predicated region
  $region26: #{vvbp_forward.25} parent=0 // pred_check
    _
  $region27: #{vvbp_forward.25} parent=0 // pred_check_branch
    %882 = sbr.rel (0) target = $region29
  $region28: #{vvbp_forward.25} parent=0 // pred_region
    _
  $region29: #{vvbp_forward.25} parent=0 // pred_fallthru
    _
  // Predicated region
  $region30: #{vvbp_forward.25} parent=0 // pred_check
    _
  $region31: #{vvbp_forward.25} parent=0 // pred_check_branch
    %884 = sbr.rel (0) target = $region33
  $region32: #{vvbp_forward.25} parent=0 // pred_region
    _
  $region33: #{vvbp_forward.25} parent=0 // pred_fallthru
    _

</llo_original>
